<compile_context>
chip_gen: v7x
topology: tpu7x:2x2x1
jax: 0.10.0
libtpu: 0.0.40
codegen_flags: <defaults>
</compile_context>

<pallas_src>
import functools
import math

import jax
import jax.numpy as jnp
from jax import lax
from jax.experimental import pallas as pl
from jax.experimental.pallas import tpu as pltpu


def _silu(v):
    # sigmoid = 1 / (1 + exp(-v)); exp + approx reciprocal both run on the EUP
    return v * pl.reciprocal(1.0 + jnp.exp(-v), approx=True)


# ----------------------------------------------------------------------------
# Pallas kernel: fused mini-UNet forward for ONE batch element (grid over B)
# ----------------------------------------------------------------------------
def unet_kernel(H, W,
                xcol_ref, temb_ref, ctx_ref, gmat_ref, gmatt_ref,
                w_in_ref, b_in_ref,
                wt0_ref, bt0_ref, wt1_ref, bt1_ref,
                gn1g_ref, gn1b_ref, w1_ref, b1_ref,
                wemb_ref, bemb_ref,
                gn2g_ref, gn2b_ref, w2_ref, b2_ref,
                gnag_ref, gnab_ref,
                wq_ref, wk_ref, wv_ref, wo_ref, bo_ref,
                gnog_ref, gnob_ref, wout_t_ref, bout_ref,
                o_ref):
    HW = H * W
    C = wt0_ref.shape[0]
    G = gmat_ref.shape[1]
    bf16 = jnp.bfloat16

    # Narrow border masks ([1, W, 1], broadcast over H and C) for the conv
    # W-shifts -- avoids holding two full [H, W, C] compare results live.
    w_idx = lax.broadcasted_iota(jnp.int32, (1, W, 1), 1)
    x_first = w_idx == 0
    x_last = w_idx == W - 1

    def group_norm(hflat, g_ref, b_ref, eps=1e-5):
        # hflat: [HW, C] f32.  Group pooling with ONE [2,C]x[C,G] dot (stacked
        # sum / sum-of-squares) and ONE [2,G]x[G,C] dot back; folded affine.
        s_c = jnp.sum(hflat, axis=0, keepdims=True)                    # [1,C]
        ss_c = jnp.sum(hflat * hflat, axis=0, keepdims=True)           # [1,C]
        stats_c = jnp.concatenate([s_c, ss_c], axis=0)                 # [2,C]
        stats_g = jnp.dot(stats_c, gmat_ref[...],
                          preferred_element_type=jnp.float32)          # [2,G]
        n = jnp.float32(HW * (C // G))
        mean_g = stats_g[0:1] / n
        var_g = jnp.maximum(stats_g[1:2] / n - mean_g * mean_g, 0.0)   # clamp
        inv_g = lax.rsqrt(var_g + eps)
        back_c = jnp.dot(jnp.concatenate([mean_g, inv_g], axis=0),
                         gmatt_ref[...],
                         preferred_element_type=jnp.float32)           # [2,C]
        scale = back_c[1:2] * g_ref[...]
        shift = b_ref[...] - back_c[0:1] * scale
        return hflat * scale + shift

    def tap_patches(hflat):
        # Yields the 9 zero-padded 3x3 taps as [HW, C] bf16 tiles.
        # W-shifts: pltpu.roll (non-negative shift only -> W-1 for "+1") with
        # border masks; H-shifts: major-dim slices + a zero row.
        # Roll/mask stay in f32 (safe on v5e; on v6e/v7x doing them in bf16
        # would halve XLU/VALU volume).
        h3 = hflat.reshape(H, W, C)
        left = jnp.where(x_first, 0.0, pltpu.roll(h3, shift=1, axis=1))
        right = jnp.where(x_last, 0.0, pltpu.roll(h3, shift=W - 1, axis=1))
        shifted = tuple(s.astype(bf16) for s in (left, h3, right))
        zrow = jnp.zeros((1, W, C), dtype=bf16)
        tap = 0
        for dy in (-1, 0, 1):
            for sx in shifted:
                if dy == -1:
                    patch = jnp.concatenate([zrow, sx[:H - 1]], axis=0)
                elif dy == 1:
                    patch = jnp.concatenate([sx[1:], zrow], axis=0)
                else:
                    patch = sx
                yield tap, patch.reshape(HW, C)
                tap += 1

    def conv3x3(hflat, w_ref, b_ref):
        # 9 accumulated per-tap MXU dots against resident weight slices; no
        # [HW, 9C] im2col materialization through VMEM.
        acc = None
        for tap, patch in tap_patches(hflat):
            contrib = jnp.dot(patch, w_ref[pl.ds(tap * C, C), :],
                              preferred_element_type=jnp.float32)
            acc = contrib if acc is None else acc + contrib
        return acc + b_ref[...]

    def conv3x3_out(hflat, wt_ref, b_ref):
        # Output conv, emitted lane-dense as [Cout, HW].
        acc = None
        for tap, patch in tap_patches(hflat):
            contrib = lax.dot_general(wt_ref[:, pl.ds(tap * C, C)], patch,
                                      (((1,), (1,)), ((), ())),
                                      preferred_element_type=jnp.float32)
            acc = contrib if acc is None else acc + contrib
        return acc + b_ref[...]

    # --- timestep embedding MLP: Linear -> SiLU -> Linear --------------------
    temb = temb_ref[0].astype(bf16)                                    # [1,C]
    e = jnp.dot(temb, wt0_ref[...],
                preferred_element_type=jnp.float32) + bt0_ref[...]
    e = _silu(e)
    emb = jnp.dot(e.astype(bf16), wt1_ref[...],
                  preferred_element_type=jnp.float32) + bt1_ref[...]   # [1,C]

    # --- input conv (3x3, Cin -> C); im2col done wrapper-side ----------------
    h = jnp.dot(xcol_ref[0], w_in_ref[...],
                preferred_element_type=jnp.float32) + b_in_ref[...]    # [HW,C]

    # --- ResBlock with timestep injection ------------------------------------
    r = conv3x3(_silu(group_norm(h, gn1g_ref, gn1b_ref)), w1_ref, b1_ref)
    emb_out = jnp.dot(_silu(emb).astype(bf16), wemb_ref[...],
                      preferred_element_type=jnp.float32) + bemb_ref[...]
    r = r + emb_out                                                    # bcast
    r = conv3x3(_silu(group_norm(r, gn2g_ref, gn2b_ref)), w2_ref, b2_ref)
    h = h + r

    # --- cross-attention: scores in [L, HW] so softmax is lane-dense ---------
    # (1/sqrt(C) scale is folded into wq at init time.)
    hn = group_norm(h, gnag_ref, gnab_ref)                             # [HW,C]
    q = jnp.dot(hn.astype(bf16), wq_ref[...],
                preferred_element_type=jnp.float32)                    # [HW,C]
    ctx = ctx_ref[0]                                                   # [L,d] bf16
    kmat = jnp.dot(ctx, wk_ref[...], preferred_element_type=jnp.float32)
    vmat = jnp.dot(ctx, wv_ref[...], preferred_element_type=jnp.float32)
    scores = lax.dot_general(kmat.astype(bf16), q.astype(bf16),
                             (((1,), (1,)), ((), ())),
                             preferred_element_type=jnp.float32)       # [L,HW]
    m = jnp.max(scores, axis=0, keepdims=True)                         # [1,HW]
    p = jnp.exp(scores - m)
    attn = p * pl.reciprocal(jnp.sum(p, axis=0, keepdims=True), approx=True)
    av = lax.dot_general(attn.astype(bf16), vmat.astype(bf16),
                         (((0,), (0,)), ((), ())),
                         preferred_element_type=jnp.float32)           # [HW,C]
    ao = jnp.dot(av.astype(bf16), wo_ref[...],
                 preferred_element_type=jnp.float32) + bo_ref[...]
    h = h + ao

    # --- output head: GN -> SiLU -> 3x3 conv, emitted lane-dense [Cout, HW] --
    o_ref[0] = conv3x3_out(_silu(group_norm(h, gnog_ref, gnob_ref)),
                           wout_t_ref, bout_ref)


# ----------------------------------------------------------------------------
# Glue: parameters, timestep embedding, wrapper
# ----------------------------------------------------------------------------
def timestep_embedding(t, dim, max_period=10000.0):
    half = dim // 2
    freqs = jnp.exp(-jnp.log(max_period)
                    * jnp.arange(half, dtype=jnp.float32) / half)
    args = t.astype(jnp.float32)[:, None] * freqs[None, :]
    return jnp.concatenate([jnp.cos(args), jnp.sin(args)], axis=-1)


def init_params(key, C=128, Cin=4, Cout=4, d_cond=128, G=4):
    ks = jax.random.split(key, 12)
    bf16 = jnp.bfloat16

    def w(k, shape, fan_in):
        return jax.random.normal(k, shape, jnp.float32) / jnp.sqrt(float(fan_in))

    p = {}
    # conv weights stored K-folded ([9*Cin, Cout]) and in bf16 for the MXU
    p['w_in'] = w(ks[0], (9, Cin, C), 9 * Cin).reshape(9 * Cin, C).astype(bf16)
    p['b_in'] = jnp.zeros((1, C), jnp.float32)
    p['wt0'] = w(ks[1], (C, C), C).astype(bf16)
    p['bt0'] = jnp.zeros((1, C), jnp.float32)
    p['wt1'] = w(ks[2], (C, C), C).astype(bf16)
    p['bt1'] = jnp.zeros((1, C), jnp.float32)
    p['gn1_g'] = jnp.ones((1, C), jnp.float32)
    p['gn1_b'] = jnp.zeros((1, C), jnp.float32)
    p['w1'] = w(ks[3], (9, C, C), 9 * C).reshape(9 * C, C).astype(bf16)
    p['b1'] = jnp.zeros((1, C), jnp.float32)
    p['w_emb'] = w(ks[4], (C, C), C).astype(bf16)
    p['b_emb'] = jnp.zeros((1, C), jnp.float32)
    p['gn2_g'] = jnp.ones((1, C), jnp.float32)
    p['gn2_b'] = jnp.zeros((1, C), jnp.float32)
    p['w2'] = w(ks[5], (9, C, C), 9 * C).reshape(9 * C, C).astype(bf16)
    p['b2'] = jnp.zeros((1, C), jnp.float32)
    p['gna_g'] = jnp.ones((1, C), jnp.float32)
    p['gna_b'] = jnp.zeros((1, C), jnp.float32)
    # attention 1/sqrt(C) scale folded into wq (one-time parameter transform)
    p['wq'] = (w(ks[6], (C, C), C) * (1.0 / math.sqrt(C))).astype(bf16)
    p['wk'] = w(ks[7], (d_cond, C), d_cond).astype(bf16)
    p['wv'] = w(ks[8], (d_cond, C), d_cond).astype(bf16)
    p['wo'] = w(ks[9], (C, C), C).astype(bf16)
    p['bo'] = jnp.zeros((1, C), jnp.float32)
    p['gno_g'] = jnp.ones((1, C), jnp.float32)
    p['gno_b'] = jnp.zeros((1, C), jnp.float32)
    # output conv weight pre-transposed -> lane-dense [Cout, HW] kernel output
    p['w_out_t'] = (w(ks[10], (9, C, Cout), 9 * C)
                    .reshape(9 * C, Cout).T.astype(bf16))
    p['b_out'] = jnp.zeros((Cout, 1), jnp.float32)
    gmat = (jnp.arange(C)[:, None] // (C // G)
            == jnp.arange(G)[None, :]).astype(jnp.float32)
    p['gmat'] = gmat
    p['gmat_t'] = gmat.T
    return p


def _batched_spec(arr):
    nd = arr.ndim
    return pl.BlockSpec((1,) + arr.shape[1:],
                        lambda b, _nd=nd: (b,) + (0,) * (_nd - 1))


def _const_spec(arr):
    nd = arr.ndim
    return pl.BlockSpec(arr.shape, lambda b, _nd=nd: (0,) * _nd)


def unet_forward(params, x_nchw, t, context):
    p = params
    B, Cin, H, W = x_nchw.shape
    C = p['wt0'].shape[0]
    Cout = p['b_out'].shape[0]
    HW = H * W

    # Wrapper-side layout plumbing: NCHW -> NHWC, pad, im2col for the input
    # conv (K = 9*Cin), lane-dense bf16 operands for the kernel.
    x_nhwc = jnp.transpose(x_nchw, (0, 2, 3, 1)).astype(jnp.float32)
    xp = jnp.pad(x_nhwc, ((0, 0), (1, 1), (1, 1), (0, 0)))
    patches = [xp[:, dy:dy + H, dx:dx + W, :]
               for dy in range(3) for dx in range(3)]
    x_col = (jnp.concatenate(patches, axis=-1)
             .reshape(B, HW, 9 * Cin).astype(jnp.bfloat16))

    temb = timestep_embedding(t, C).reshape(B, 1, C)
    ctx = context.astype(jnp.bfloat16)

    args = (x_col, temb, ctx, p['gmat'], p['gmat_t'],
            p['w_in'], p['b_in'],
            p['wt0'], p['bt0'], p['wt1'], p['bt1'],
            p['gn1_g'], p['gn1_b'], p['w1'], p['b1'],
            p['w_emb'], p['b_emb'],
            p['gn2_g'], p['gn2_b'], p['w2'], p['b2'],
            p['gna_g'], p['gna_b'],
            p['wq'], p['wk'], p['wv'], p['wo'], p['bo'],
            p['gno_g'], p['gno_b'], p['w_out_t'], p['b_out'])

    n_batched = 3  # x_col, temb, ctx are tiled over batch; the rest stay resident
    in_specs = ([_batched_spec(a) for a in args[:n_batched]]
                + [_const_spec(a) for a in args[n_batched:]])

    out = pl.pallas_call(
        functools.partial(unet_kernel, H, W),
        grid=(B,),
        out_shape=jax.ShapeDtypeStruct((B, Cout, HW), jnp.float32),
        in_specs=in_specs,
        out_specs=pl.BlockSpec((1, Cout, HW), lambda b: (b, 0, 0)),
        compiler_params=pltpu.CompilerParams(
            dimension_semantics=("parallel",),
            vmem_limit_bytes=16 * 1024 * 1024),
    )(*args)

    # [B, Cout, H*W] -> NCHW
    return out.reshape(B, Cout, H, W)


class LatentDiffusion:
    """JAX/Pallas analog of the PyTorch LatentDiffusion module."""

    def __init__(self, params, latent_scaling_factor, n_steps,
                 linear_start, linear_end):
        self.params = params
        self.latent_scaling_factor = latent_scaling_factor
        self.n_steps = n_steps
        # TODO(synk): reference computes the schedule in float64; computed in
        # float32 here since jax_enable_x64 is off (schedule unused in forward).
        beta = jnp.linspace(linear_start ** 0.5, linear_end ** 0.5,
                            n_steps, dtype=jnp.float32) ** 2
        self.beta = beta
        self.alpha_bar = jnp.cumprod(1.0 - beta)
        self._fwd = jax.jit(unet_forward)
        # TODO(synk): Autoencoder encode/decode and CLIPTextEmbedder are not
        # part of forward(); not implemented here.

    def forward(self, x, t, context):
        return self._fwd(self.params, x, t, context)


if __name__ == "__main__":
    key = jax.random.PRNGKey(0)
    kp, kx, kt, kc = jax.random.split(key, 4)

    B, Cin, H, W = 2, 4, 16, 16        # latent: [2, 4, 16, 16] (NCHW)
    L, d_cond, C = 8, 128, 128         # context: [2, 8, 128]

    params = init_params(kp, C=C, Cin=Cin, Cout=Cin, d_cond=d_cond, G=4)
    model = LatentDiffusion(params, latent_scaling_factor=0.18215,
                            n_steps=1000, linear_start=0.00085,
                            linear_end=0.0120)

    x = jax.random.normal(kx, (B, Cin, H, W), jnp.float32)
    t = jax.random.randint(kt, (B,), 0, model.n_steps).astype(jnp.int32)
    context = jax.random.normal(kc, (B, L, d_cond), jnp.float32)

    eps = model.forward(x, t, context)
    eps = jax.block_until_ready(eps)

    assert eps.shape == x.shape, (eps.shape, x.shape)
    assert bool(jnp.all(jnp.isfinite(eps)))
    print("KERNEL_OK")
</pallas_src>

<mosaic_0001>
module attributes {stable_mosaic.version = 11 : i64} {
  func.func @unet_kernel(%arg0: i32, %arg1: memref<1x256x36xbf16, #tpu.memory_space<vmem>>, %arg2: memref<1x1x128xf32, #tpu.memory_space<vmem>>, %arg3: memref<1x8x128xbf16, #tpu.memory_space<vmem>>, %arg4: memref<128x4xf32, #tpu.memory_space<vmem>>, %arg5: memref<4x128xf32, #tpu.memory_space<vmem>>, %arg6: memref<36x128xbf16, #tpu.memory_space<vmem>>, %arg7: memref<1x128xf32, #tpu.memory_space<vmem>>, %arg8: memref<128x128xbf16, #tpu.memory_space<vmem>>, %arg9: memref<1x128xf32, #tpu.memory_space<vmem>>, %arg10: memref<128x128xbf16, #tpu.memory_space<vmem>>, %arg11: memref<1x128xf32, #tpu.memory_space<vmem>>, %arg12: memref<1x128xf32, #tpu.memory_space<vmem>>, %arg13: memref<1x128xf32, #tpu.memory_space<vmem>>, %arg14: memref<1152x128xbf16, #tpu.memory_space<vmem>>, %arg15: memref<1x128xf32, #tpu.memory_space<vmem>>, %arg16: memref<128x128xbf16, #tpu.memory_space<vmem>>, %arg17: memref<1x128xf32, #tpu.memory_space<vmem>>, %arg18: memref<1x128xf32, #tpu.memory_space<vmem>>, %arg19: memref<1x128xf32, #tpu.memory_space<vmem>>, %arg20: memref<1152x128xbf16, #tpu.memory_space<vmem>>, %arg21: memref<1x128xf32, #tpu.memory_space<vmem>>, %arg22: memref<1x128xf32, #tpu.memory_space<vmem>>, %arg23: memref<1x128xf32, #tpu.memory_space<vmem>>, %arg24: memref<128x128xbf16, #tpu.memory_space<vmem>>, %arg25: memref<128x128xbf16, #tpu.memory_space<vmem>>, %arg26: memref<128x128xbf16, #tpu.memory_space<vmem>>, %arg27: memref<128x128xbf16, #tpu.memory_space<vmem>>, %arg28: memref<1x128xf32, #tpu.memory_space<vmem>>, %arg29: memref<1x128xf32, #tpu.memory_space<vmem>>, %arg30: memref<1x128xf32, #tpu.memory_space<vmem>>, %arg31: memref<4x1152xbf16, #tpu.memory_space<vmem>>, %arg32: memref<4x1xf32, #tpu.memory_space<vmem>>, %arg33: memref<1x4x256xf32, #tpu.memory_space<vmem>>) attributes {dimension_semantics = [#tpu.dimension_semantics<parallel>], iteration_bounds = array<i64: 2>, scalar_prefetch = 0 : i64, scratch_operands = 0 : i64, tpu.core_type = #tpu.core_type<tc>, window_params = [{transform_indices = @transform_0, window_bounds = array<i64: 1, 256, 36>}, {transform_indices = @transform_1, window_bounds = array<i64: 1, 1, 128>}, {transform_indices = @transform_2, window_bounds = array<i64: 1, 8, 128>}, {pipeline_mode = #tpu.pipeline_mode<synchronous>, transform_indices = @transform_3, window_bounds = array<i64: 128, 4>}, {pipeline_mode = #tpu.pipeline_mode<synchronous>, transform_indices = @transform_4, window_bounds = array<i64: 4, 128>}, {pipeline_mode = #tpu.pipeline_mode<synchronous>, transform_indices = @transform_5, window_bounds = array<i64: 36, 128>}, {pipeline_mode = #tpu.pipeline_mode<synchronous>, transform_indices = @transform_6, window_bounds = array<i64: 1, 128>}, {pipeline_mode = #tpu.pipeline_mode<synchronous>, transform_indices = @transform_7, window_bounds = array<i64: 128, 128>}, {pipeline_mode = #tpu.pipeline_mode<synchronous>, transform_indices = @transform_8, window_bounds = array<i64: 1, 128>}, {pipeline_mode = #tpu.pipeline_mode<synchronous>, transform_indices = @transform_9, window_bounds = array<i64: 128, 128>}, {pipeline_mode = #tpu.pipeline_mode<synchronous>, transform_indices = @transform_10, window_bounds = array<i64: 1, 128>}, {pipeline_mode = #tpu.pipeline_mode<synchronous>, transform_indices = @transform_11, window_bounds = array<i64: 1, 128>}, {pipeline_mode = #tpu.pipeline_mode<synchronous>, transform_indices = @transform_12, window_bounds = array<i64: 1, 128>}, {pipeline_mode = #tpu.pipeline_mode<synchronous>, transform_indices = @transform_13, window_bounds = array<i64: 1152, 128>}, {pipeline_mode = #tpu.pipeline_mode<synchronous>, transform_indices = @transform_14, window_bounds = array<i64: 1, 128>}, {pipeline_mode = #tpu.pipeline_mode<synchronous>, transform_indices = @transform_15, window_bounds = array<i64: 128, 128>}, {pipeline_mode = #tpu.pipeline_mode<synchronous>, transform_indices = @transform_16, window_bounds = array<i64: 1, 128>}, {pipeline_mode = #tpu.pipeline_mode<synchronous>, transform_indices = @transform_17, window_bounds = array<i64: 1, 128>}, {pipeline_mode = #tpu.pipeline_mode<synchronous>, transform_indices = @transform_18, window_bounds = array<i64: 1, 128>}, {pipeline_mode = #tpu.pipeline_mode<synchronous>, transform_indices = @transform_19, window_bounds = array<i64: 1152, 128>}, {pipeline_mode = #tpu.pipeline_mode<synchronous>, transform_indices = @transform_20, window_bounds = array<i64: 1, 128>}, {pipeline_mode = #tpu.pipeline_mode<synchronous>, transform_indices = @transform_21, window_bounds = array<i64: 1, 128>}, {pipeline_mode = #tpu.pipeline_mode<synchronous>, transform_indices = @transform_22, window_bounds = array<i64: 1, 128>}, {pipeline_mode = #tpu.pipeline_mode<synchronous>, transform_indices = @transform_23, window_bounds = array<i64: 128, 128>}, {pipeline_mode = #tpu.pipeline_mode<synchronous>, transform_indices = @transform_24, window_bounds = array<i64: 128, 128>}, {pipeline_mode = #tpu.pipeline_mode<synchronous>, transform_indices = @transform_25, window_bounds = array<i64: 128, 128>}, {pipeline_mode = #tpu.pipeline_mode<synchronous>, transform_indices = @transform_26, window_bounds = array<i64: 128, 128>}, {pipeline_mode = #tpu.pipeline_mode<synchronous>, transform_indices = @transform_27, window_bounds = array<i64: 1, 128>}, {pipeline_mode = #tpu.pipeline_mode<synchronous>, transform_indices = @transform_28, window_bounds = array<i64: 1, 128>}, {pipeline_mode = #tpu.pipeline_mode<synchronous>, transform_indices = @transform_29, window_bounds = array<i64: 1, 128>}, {pipeline_mode = #tpu.pipeline_mode<synchronous>, transform_indices = @transform_30, window_bounds = array<i64: 4, 1152>}, {pipeline_mode = #tpu.pipeline_mode<synchronous>, transform_indices = @transform_31, window_bounds = array<i64: 4, 1>}, {transform_indices = @transform_32, window_bounds = array<i64: 1, 4, 256>}]} {
    %0 = tpu.iota {dimensions = array<i32: 1>} : vector<1x16x1xi32>
    %c0_i32 = arith.constant 0 : i32
    %1 = vector.broadcast %c0_i32 : i32 to vector<1x16x1xi32>
    %2 = arith.cmpi eq, %0, %1 : vector<1x16x1xi32>
    %c15_i32 = arith.constant 15 : i32
    %3 = vector.broadcast %c15_i32 : i32 to vector<1x16x1xi32>
    %4 = arith.cmpi eq, %0, %3 : vector<1x16x1xi32>
    %c0 = arith.constant 0 : index
    %c0_0 = arith.constant 0 : index
    %c0_1 = arith.constant 0 : index
    %5 = vector.load %arg2[%c0, %c0_0, %c0_1] : memref<1x1x128xf32, #tpu.memory_space<vmem>>, vector<1x1x128xf32>
    %6 = vector.shape_cast %5 : vector<1x1x128xf32> to vector<1x128xf32>
    %7 = arith.truncf %6 : vector<1x128xf32> to vector<1x128xbf16>
    %c0_2 = arith.constant 0 : index
    %c0_3 = arith.constant 0 : index
    %8 = vector.load %arg8[%c0_2, %c0_3] : memref<128x128xbf16, #tpu.memory_space<vmem>>, vector<128x128xbf16>
    %cst = arith.constant dense<0.000000e+00> : vector<1x128xf32>
    %9 = tpu.matmul %7, %8, %cst {dimension_numbers = #tpu.dot_dimension_numbers<[1], [0], [0], [1], [0, 0, 1, 1], [], []>} : vector<1x128xbf16>, vector<128x128xbf16>, vector<1x128xf32> -> vector<1x128xf32>
    %c0_4 = arith.constant 0 : index
    %c0_5 = arith.constant 0 : index
    %10 = vector.load %arg9[%c0_4, %c0_5] : memref<1x128xf32, #tpu.memory_space<vmem>>, vector<1x128xf32>
    %11 = arith.addf %9, %10 : vector<1x128xf32>
    %cst_6 = arith.constant 0.000000e+00 : f32
    %12 = vector.broadcast %cst_6 : f32 to vector<1x128xf32>
    %13 = arith.subf %12, %11 : vector<1x128xf32>
    %14 = math.exp %13 : vector<1x128xf32>
    %cst_7 = arith.constant 1.000000e+00 : f32
    %15 = vector.broadcast %cst_7 : f32 to vector<1x128xf32>
    %16 = arith.addf %15, %14 : vector<1x128xf32>
    %17 = tpu.reciprocal %16 {approx = true} : vector<1x128xf32> -> vector<1x128xf32>
    %18 = arith.mulf %11, %17 : vector<1x128xf32>
    %19 = arith.truncf %18 : vector<1x128xf32> to vector<1x128xbf16>
    %c0_8 = arith.constant 0 : index
    %c0_9 = arith.constant 0 : index
    %20 = vector.load %arg10[%c0_8, %c0_9] : memref<128x128xbf16, #tpu.memory_space<vmem>>, vector<128x128xbf16>
    %cst_10 = arith.constant dense<0.000000e+00> : vector<1x128xf32>
    %21 = tpu.matmul %19, %20, %cst_10 {dimension_numbers = #tpu.dot_dimension_numbers<[1], [0], [0], [1], [0, 0, 1, 1], [], []>} : vector<1x128xbf16>, vector<128x128xbf16>, vector<1x128xf32> -> vector<1x128xf32>
    %c0_11 = arith.constant 0 : index
    %c0_12 = arith.constant 0 : index
    %22 = vector.load %arg11[%c0_11, %c0_12] : memref<1x128xf32, #tpu.memory_space<vmem>>, vector<1x128xf32>
    %23 = arith.addf %21, %22 : vector<1x128xf32>
    %c0_13 = arith.constant 0 : index
    %c0_14 = arith.constant 0 : index
    %c0_15 = arith.constant 0 : index
    %24 = vector.load %arg1[%c0_13, %c0_14, %c0_15] : memref<1x256x36xbf16, #tpu.memory_space<vmem>>, vector<1x256x36xbf16>
    %25 = vector.shape_cast %24 : vector<1x256x36xbf16> to vector<256x36xbf16>
    %c0_16 = arith.constant 0 : index
    %c0_17 = arith.constant 0 : index
    %26 = vector.load %arg6[%c0_16, %c0_17] : memref<36x128xbf16, #tpu.memory_space<vmem>>, vector<36x128xbf16>
    %cst_18 = arith.constant dense<0.000000e+00> : vector<256x128xf32>
    %27 = tpu.matmul %25, %26, %cst_18 {dimension_numbers = #tpu.dot_dimension_numbers<[1], [0], [0], [1], [0, 0, 1, 1], [], []>} : vector<256x36xbf16>, vector<36x128xbf16>, vector<256x128xf32> -> vector<256x128xf32>
    %c0_19 = arith.constant 0 : index
    %c0_20 = arith.constant 0 : index
    %28 = vector.load %arg7[%c0_19, %c0_20] : memref<1x128xf32, #tpu.memory_space<vmem>>, vector<1x128xf32>
    %29 = vector.broadcast %28 : vector<1x128xf32> to vector<256x128xf32>
    %30 = arith.addf %27, %29 : vector<256x128xf32>
    %cst_21 = arith.constant dense<0.000000e+00> : vector<128xf32>
    %31 = vector.multi_reduction <add>, %30, %cst_21 [0] : vector<256x128xf32> to vector<128xf32>
    %32 = vector.shape_cast %31 : vector<128xf32> to vector<1x128xf32>
    %33 = arith.mulf %30, %30 : vector<256x128xf32>
    %cst_22 = arith.constant dense<0.000000e+00> : vector<128xf32>
    %34 = vector.multi_reduction <add>, %33, %cst_22 [0] : vector<256x128xf32> to vector<128xf32>
    %35 = vector.shape_cast %34 : vector<128xf32> to vector<1x128xf32>
    %36 = tpu.concatenate %32, %35 in 0 : vector<1x128xf32>, vector<1x128xf32> -> vector<2x128xf32>
    %c0_23 = arith.constant 0 : index
    %c0_24 = arith.constant 0 : index
    %37 = vector.load %arg4[%c0_23, %c0_24] : memref<128x4xf32, #tpu.memory_space<vmem>>, vector<128x4xf32>
    %cst_25 = arith.constant dense<0.000000e+00> : vector<2x4xf32>
    %38 = tpu.matmul %36, %37, %cst_25 {dimension_numbers = #tpu.dot_dimension_numbers<[1], [0], [0], [1], [0, 0, 1, 1], [], []>} : vector<2x128xf32>, vector<128x4xf32>, vector<2x4xf32> -> vector<2x4xf32>
    %39 = vector.extract_strided_slice %38 {offsets = [0, 0], sizes = [1, 4], strides = [1, 1]} : vector<2x4xf32> to vector<1x4xf32>
    %cst_26 = arith.constant 8.192000e+03 : f32
    %40 = vector.broadcast %cst_26 : f32 to vector<1x4xf32>
    %41 = arith.divf %39, %40 : vector<1x4xf32>
    %42 = vector.extract_strided_slice %38 {offsets = [1, 0], sizes = [1, 4], strides = [1, 1]} : vector<2x4xf32> to vector<1x4xf32>
    %cst_27 = arith.constant 8.192000e+03 : f32
    %43 = vector.broadcast %cst_27 : f32 to vector<1x4xf32>
    %44 = arith.divf %42, %43 : vector<1x4xf32>
    %45 = arith.mulf %41, %41 : vector<1x4xf32>
    %46 = arith.subf %44, %45 : vector<1x4xf32>
    %cst_28 = arith.constant 0.000000e+00 : f32
    %47 = vector.broadcast %cst_28 : f32 to vector<1x4xf32>
    %48 = arith.maximumf %46, %47 : vector<1x4xf32>
    %cst_29 = arith.constant 9.99999974E-6 : f32
    %49 = vector.broadcast %cst_29 : f32 to vector<1x4xf32>
    %50 = arith.addf %48, %49 : vector<1x4xf32>
    %51 = math.rsqrt %50 : vector<1x4xf32>
    %52 = tpu.concatenate %41, %51 in 0 : vector<1x4xf32>, vector<1x4xf32> -> vector<2x4xf32>
    %c0_30 = arith.constant 0 : index
    %c0_31 = arith.constant 0 : index
    %53 = vector.load %arg5[%c0_30, %c0_31] : memref<4x128xf32, #tpu.memory_space<vmem>>, vector<4x128xf32>
    %cst_32 = arith.constant dense<0.000000e+00> : vector<2x128xf32>
    %54 = tpu.matmul %52, %53, %cst_32 {dimension_numbers = #tpu.dot_dimension_numbers<[1], [0], [0], [1], [0, 0, 1, 1], [], []>} : vector<2x4xf32>, vector<4x128xf32>, vector<2x128xf32> -> vector<2x128xf32>
    %55 = vector.extract_strided_slice %54 {offsets = [1, 0], sizes = [1, 128], strides = [1, 1]} : vector<2x128xf32> to vector<1x128xf32>
    %c0_33 = arith.constant 0 : index
    %c0_34 = arith.constant 0 : index
    %56 = vector.load %arg12[%c0_33, %c0_34] : memref<1x128xf32, #tpu.memory_space<vmem>>, vector<1x128xf32>
    %57 = arith.mulf %55, %56 : vector<1x128xf32>
    %c0_35 = arith.constant 0 : index
    %c0_36 = arith.constant 0 : index
    %58 = vector.load %arg13[%c0_35, %c0_36] : memref<1x128xf32, #tpu.memory_space<vmem>>, vector<1x128xf32>
    %59 = vector.extract_strided_slice %54 {offsets = [0, 0], sizes = [1, 128], strides = [1, 1]} : vector<2x128xf32> to vector<1x128xf32>
    %60 = arith.mulf %59, %57 : vector<1x128xf32>
    %61 = arith.subf %58, %60 : vector<1x128xf32>
    %62 = vector.broadcast %57 : vector<1x128xf32> to vector<256x128xf32>
    %63 = arith.mulf %30, %62 : vector<256x128xf32>
    %64 = vector.broadcast %61 : vector<1x128xf32> to vector<256x128xf32>
    %65 = arith.addf %63, %64 : vector<256x128xf32>
    %cst_37 = arith.constant 0.000000e+00 : f32
    %66 = vector.broadcast %cst_37 : f32 to vector<256x128xf32>
    %67 = arith.subf %66, %65 : vector<256x128xf32>
    %68 = math.exp %67 : vector<256x128xf32>
    %cst_38 = arith.constant 1.000000e+00 : f32
    %69 = vector.broadcast %cst_38 : f32 to vector<256x128xf32>
    %70 = arith.addf %69, %68 : vector<256x128xf32>
    %71 = tpu.reciprocal %70 {approx = true} : vector<256x128xf32> -> vector<256x128xf32>
    %72 = arith.mulf %65, %71 : vector<256x128xf32>
    %73 = vector.shape_cast %72 : vector<256x128xf32> to vector<16x16x128xf32>
    %c1_i32 = arith.constant 1 : i32
    %74 = tpu.dynamic_rotate %73 by %c1_i32 dim 1 : vector<16x16x128xf32>, i32 -> vector<16x16x128xf32>
    %cst_39 = arith.constant 0.000000e+00 : f32
    %75 = vector.shape_cast %2 : vector<1x16x1xi1> to vector<1x16x1xi1>
    %76 = vector.broadcast %75 : vector<1x16x1xi1> to vector<16x16x128xi1>
    %77 = vector.broadcast %cst_39 : f32 to vector<16x16x128xf32>
    %78 = arith.select %76, %77, %74 : vector<16x16x128xi1>, vector<16x16x128xf32>
    %c15_i32_40 = arith.constant 15 : i32
    %79 = tpu.dynamic_rotate %73 by %c15_i32_40 dim 1 : vector<16x16x128xf32>, i32 -> vector<16x16x128xf32>
    %cst_41 = arith.constant 0.000000e+00 : f32
    %80 = vector.shape_cast %4 : vector<1x16x1xi1> to vector<1x16x1xi1>
    %81 = vector.broadcast %80 : vector<1x16x1xi1> to vector<16x16x128xi1>
    %82 = vector.broadcast %cst_41 : f32 to vector<16x16x128xf32>
    %83 = arith.select %81, %82, %79 : vector<16x16x128xi1>, vector<16x16x128xf32>
    %84 = arith.truncf %78 : vector<16x16x128xf32> to vector<16x16x128xbf16>
    %85 = arith.truncf %73 : vector<16x16x128xf32> to vector<16x16x128xbf16>
    %86 = arith.truncf %83 : vector<16x16x128xf32> to vector<16x16x128xbf16>
    %cst_42 = arith.constant 0.000000e+00 : bf16
    %87 = vector.broadcast %cst_42 : bf16 to vector<1x16x128xbf16>
    %88 = vector.extract_strided_slice %84 {offsets = [0, 0, 0], sizes = [15, 16, 128], strides = [1, 1, 1]} : vector<16x16x128xbf16> to vector<15x16x128xbf16>
    %89 = tpu.concatenate %87, %88 in 0 : vector<1x16x128xbf16>, vector<15x16x128xbf16> -> vector<16x16x128xbf16>
    %90 = vector.shape_cast %89 : vector<16x16x128xbf16> to vector<256x128xbf16>
    %c0_43 = arith.constant 0 : index
    %c0_44 = arith.constant 0 : index
    %91 = vector.load %arg14[%c0_43, %c0_44] : memref<1152x128xbf16, #tpu.memory_space<vmem>>, vector<128x128xbf16>
    %cst_45 = arith.constant dense<0.000000e+00> : vector<256x128xf32>
    %92 = tpu.matmul %90, %91, %cst_45 {dimension_numbers = #tpu.dot_dimension_numbers<[1], [0], [0], [1], [0, 0, 1, 1], [], []>} : vector<256x128xbf16>, vector<128x128xbf16>, vector<256x128xf32> -> vector<256x128xf32>
    %93 = vector.extract_strided_slice %85 {offsets = [0, 0, 0], sizes = [15, 16, 128], strides = [1, 1, 1]} : vector<16x16x128xbf16> to vector<15x16x128xbf16>
    %94 = tpu.concatenate %87, %93 in 0 : vector<1x16x128xbf16>, vector<15x16x128xbf16> -> vector<16x16x128xbf16>
    %95 = vector.shape_cast %94 : vector<16x16x128xbf16> to vector<256x128xbf16>
    %c128 = arith.constant 128 : index
    %c0_46 = arith.constant 0 : index
    %96 = vector.load %arg14[%c128, %c0_46] : memref<1152x128xbf16, #tpu.memory_space<vmem>>, vector<128x128xbf16>
    %cst_47 = arith.constant dense<0.000000e+00> : vector<256x128xf32>
    %97 = tpu.matmul %95, %96, %cst_47 {dimension_numbers = #tpu.dot_dimension_numbers<[1], [0], [0], [1], [0, 0, 1, 1], [], []>} : vector<256x128xbf16>, vector<128x128xbf16>, vector<256x128xf32> -> vector<256x128xf32>
    %98 = arith.addf %92, %97 : vector<256x128xf32>
    %99 = vector.extract_strided_slice %86 {offsets = [0, 0, 0], sizes = [15, 16, 128], strides = [1, 1, 1]} : vector<16x16x128xbf16> to vector<15x16x128xbf16>
    %100 = tpu.concatenate %87, %99 in 0 : vector<1x16x128xbf16>, vector<15x16x128xbf16> -> vector<16x16x128xbf16>
    %101 = vector.shape_cast %100 : vector<16x16x128xbf16> to vector<256x128xbf16>
    %c256 = arith.constant 256 : index
    %c0_48 = arith.constant 0 : index
    %102 = vector.load %arg14[%c256, %c0_48] : memref<1152x128xbf16, #tpu.memory_space<vmem>>, vector<128x128xbf16>
    %cst_49 = arith.constant dense<0.000000e+00> : vector<256x128xf32>
    %103 = tpu.matmul %101, %102, %cst_49 {dimension_numbers = #tpu.dot_dimension_numbers<[1], [0], [0], [1], [0, 0, 1, 1], [], []>} : vector<256x128xbf16>, vector<128x128xbf16>, vector<256x128xf32> -> vector<256x128xf32>
    %104 = arith.addf %98, %103 : vector<256x128xf32>
    %105 = vector.shape_cast %84 : vector<16x16x128xbf16> to vector<256x128xbf16>
    %c384 = arith.constant 384 : index
    %c0_50 = arith.constant 0 : index
    %106 = vector.load %arg14[%c384, %c0_50] : memref<1152x128xbf16, #tpu.memory_space<vmem>>, vector<128x128xbf16>
    %cst_51 = arith.constant dense<0.000000e+00> : vector<256x128xf32>
    %107 = tpu.matmul %105, %106, %cst_51 {dimension_numbers = #tpu.dot_dimension_numbers<[1], [0], [0], [1], [0, 0, 1, 1], [], []>} : vector<256x128xbf16>, vector<128x128xbf16>, vector<256x128xf32> -> vector<256x128xf32>
    %108 = arith.addf %104, %107 : vector<256x128xf32>
    %109 = vector.shape_cast %85 : vector<16x16x128xbf16> to vector<256x128xbf16>
    %c512 = arith.constant 512 : index
    %c0_52 = arith.constant 0 : index
    %110 = vector.load %arg14[%c512, %c0_52] : memref<1152x128xbf16, #tpu.memory_space<vmem>>, vector<128x128xbf16>
    %cst_53 = arith.constant dense<0.000000e+00> : vector<256x128xf32>
    %111 = tpu.matmul %109, %110, %cst_53 {dimension_numbers = #tpu.dot_dimension_numbers<[1], [0], [0], [1], [0, 0, 1, 1], [], []>} : vector<256x128xbf16>, vector<128x128xbf16>, vector<256x128xf32> -> vector<256x128xf32>
    %112 = arith.addf %108, %111 : vector<256x128xf32>
    %113 = vector.shape_cast %86 : vector<16x16x128xbf16> to vector<256x128xbf16>
    %c640 = arith.constant 640 : index
    %c0_54 = arith.constant 0 : index
    %114 = vector.load %arg14[%c640, %c0_54] : memref<1152x128xbf16, #tpu.memory_space<vmem>>, vector<128x128xbf16>
    %cst_55 = arith.constant dense<0.000000e+00> : vector<256x128xf32>
    %115 = tpu.matmul %113, %114, %cst_55 {dimension_numbers = #tpu.dot_dimension_numbers<[1], [0], [0], [1], [0, 0, 1, 1], [], []>} : vector<256x128xbf16>, vector<128x128xbf16>, vector<256x128xf32> -> vector<256x128xf32>
    %116 = arith.addf %112, %115 : vector<256x128xf32>
    %117 = vector.extract_strided_slice %84 {offsets = [1, 0, 0], sizes = [15, 16, 128], strides = [1, 1, 1]} : vector<16x16x128xbf16> to vector<15x16x128xbf16>
    %118 = tpu.concatenate %117, %87 in 0 : vector<15x16x128xbf16>, vector<1x16x128xbf16> -> vector<16x16x128xbf16>
    %119 = vector.shape_cast %118 : vector<16x16x128xbf16> to vector<256x128xbf16>
    %c768 = arith.constant 768 : index
    %c0_56 = arith.constant 0 : index
    %120 = vector.load %arg14[%c768, %c0_56] : memref<1152x128xbf16, #tpu.memory_space<vmem>>, vector<128x128xbf16>
    %cst_57 = arith.constant dense<0.000000e+00> : vector<256x128xf32>
    %121 = tpu.matmul %119, %120, %cst_57 {dimension_numbers = #tpu.dot_dimension_numbers<[1], [0], [0], [1], [0, 0, 1, 1], [], []>} : vector<256x128xbf16>, vector<128x128xbf16>, vector<256x128xf32> -> vector<256x128xf32>
    %122 = arith.addf %116, %121 : vector<256x128xf32>
    %123 = vector.extract_strided_slice %85 {offsets = [1, 0, 0], sizes = [15, 16, 128], strides = [1, 1, 1]} : vector<16x16x128xbf16> to vector<15x16x128xbf16>
    %124 = tpu.concatenate %123, %87 in 0 : vector<15x16x128xbf16>, vector<1x16x128xbf16> -> vector<16x16x128xbf16>
    %125 = vector.shape_cast %124 : vector<16x16x128xbf16> to vector<256x128xbf16>
    %c896 = arith.constant 896 : index
    %c0_58 = arith.constant 0 : index
    %126 = vector.load %arg14[%c896, %c0_58] : memref<1152x128xbf16, #tpu.memory_space<vmem>>, vector<128x128xbf16>
    %cst_59 = arith.constant dense<0.000000e+00> : vector<256x128xf32>
    %127 = tpu.matmul %125, %126, %cst_59 {dimension_numbers = #tpu.dot_dimension_numbers<[1], [0], [0], [1], [0, 0, 1, 1], [], []>} : vector<256x128xbf16>, vector<128x128xbf16>, vector<256x128xf32> -> vector<256x128xf32>
    %128 = arith.addf %122, %127 : vector<256x128xf32>
    %129 = vector.extract_strided_slice %86 {offsets = [1, 0, 0], sizes = [15, 16, 128], strides = [1, 1, 1]} : vector<16x16x128xbf16> to vector<15x16x128xbf16>
    %130 = tpu.concatenate %129, %87 in 0 : vector<15x16x128xbf16>, vector<1x16x128xbf16> -> vector<16x16x128xbf16>
    %131 = vector.shape_cast %130 : vector<16x16x128xbf16> to vector<256x128xbf16>
    %c1024 = arith.constant 1024 : index
    %c0_60 = arith.constant 0 : index
    %132 = vector.load %arg14[%c1024, %c0_60] : memref<1152x128xbf16, #tpu.memory_space<vmem>>, vector<128x128xbf16>
    %cst_61 = arith.constant dense<0.000000e+00> : vector<256x128xf32>
    %133 = tpu.matmul %131, %132, %cst_61 {dimension_numbers = #tpu.dot_dimension_numbers<[1], [0], [0], [1], [0, 0, 1, 1], [], []>} : vector<256x128xbf16>, vector<128x128xbf16>, vector<256x128xf32> -> vector<256x128xf32>
    %134 = arith.addf %128, %133 : vector<256x128xf32>
    %c0_62 = arith.constant 0 : index
    %c0_63 = arith.constant 0 : index
    %135 = vector.load %arg15[%c0_62, %c0_63] : memref<1x128xf32, #tpu.memory_space<vmem>>, vector<1x128xf32>
    %136 = vector.broadcast %135 : vector<1x128xf32> to vector<256x128xf32>
    %137 = arith.addf %134, %136 : vector<256x128xf32>
    %cst_64 = arith.constant 0.000000e+00 : f32
    %138 = vector.broadcast %cst_64 : f32 to vector<1x128xf32>
    %139 = arith.subf %138, %23 : vector<1x128xf32>
    %140 = math.exp %139 : vector<1x128xf32>
    %cst_65 = arith.constant 1.000000e+00 : f32
    %141 = vector.broadcast %cst_65 : f32 to vector<1x128xf32>
    %142 = arith.addf %141, %140 : vector<1x128xf32>
    %143 = tpu.reciprocal %142 {approx = true} : vector<1x128xf32> -> vector<1x128xf32>
    %144 = arith.mulf %23, %143 : vector<1x128xf32>
    %145 = arith.truncf %144 : vector<1x128xf32> to vector<1x128xbf16>
    %c0_66 = arith.constant 0 : index
    %c0_67 = arith.constant 0 : index
    %146 = vector.load %arg16[%c0_66, %c0_67] : memref<128x128xbf16, #tpu.memory_space<vmem>>, vector<128x128xbf16>
    %cst_68 = arith.constant dense<0.000000e+00> : vector<1x128xf32>
    %147 = tpu.matmul %145, %146, %cst_68 {dimension_numbers = #tpu.dot_dimension_numbers<[1], [0], [0], [1], [0, 0, 1, 1], [], []>} : vector<1x128xbf16>, vector<128x128xbf16>, vector<1x128xf32> -> vector<1x128xf32>
    %c0_69 = arith.constant 0 : index
    %c0_70 = arith.constant 0 : index
    %148 = vector.load %arg17[%c0_69, %c0_70] : memref<1x128xf32, #tpu.memory_space<vmem>>, vector<1x128xf32>
    %149 = arith.addf %147, %148 : vector<1x128xf32>
    %150 = vector.broadcast %149 : vector<1x128xf32> to vector<256x128xf32>
    %151 = arith.addf %137, %150 : vector<256x128xf32>
    %cst_71 = arith.constant dense<0.000000e+00> : vector<128xf32>
    %152 = vector.multi_reduction <add>, %151, %cst_71 [0] : vector<256x128xf32> to vector<128xf32>
    %153 = vector.shape_cast %152 : vector<128xf32> to vector<1x128xf32>
    %154 = arith.mulf %151, %151 : vector<256x128xf32>
    %cst_72 = arith.constant dense<0.000000e+00> : vector<128xf32>
    %155 = vector.multi_reduction <add>, %154, %cst_72 [0] : vector<256x128xf32> to vector<128xf32>
    %156 = vector.shape_cast %155 : vector<128xf32> to vector<1x128xf32>
    %157 = tpu.concatenate %153, %156 in 0 : vector<1x128xf32>, vector<1x128xf32> -> vector<2x128xf32>
    %c0_73 = arith.constant 0 : index
    %c0_74 = arith.constant 0 : index
    %158 = vector.load %arg4[%c0_73, %c0_74] : memref<128x4xf32, #tpu.memory_space<vmem>>, vector<128x4xf32>
    %cst_75 = arith.constant dense<0.000000e+00> : vector<2x4xf32>
    %159 = tpu.matmul %157, %158, %cst_75 {dimension_numbers = #tpu.dot_dimension_numbers<[1], [0], [0], [1], [0, 0, 1, 1], [], []>} : vector<2x128xf32>, vector<128x4xf32>, vector<2x4xf32> -> vector<2x4xf32>
    %160 = vector.extract_strided_slice %159 {offsets = [0, 0], sizes = [1, 4], strides = [1, 1]} : vector<2x4xf32> to vector<1x4xf32>
    %cst_76 = arith.constant 8.192000e+03 : f32
    %161 = vector.broadcast %cst_76 : f32 to vector<1x4xf32>
    %162 = arith.divf %160, %161 : vector<1x4xf32>
    %163 = vector.extract_strided_slice %159 {offsets = [1, 0], sizes = [1, 4], strides = [1, 1]} : vector<2x4xf32> to vector<1x4xf32>
    %cst_77 = arith.constant 8.192000e+03 : f32
    %164 = vector.broadcast %cst_77 : f32 to vector<1x4xf32>
    %165 = arith.divf %163, %164 : vector<1x4xf32>
    %166 = arith.mulf %162, %162 : vector<1x4xf32>
    %167 = arith.subf %165, %166 : vector<1x4xf32>
    %cst_78 = arith.constant 0.000000e+00 : f32
    %168 = vector.broadcast %cst_78 : f32 to vector<1x4xf32>
    %169 = arith.maximumf %167, %168 : vector<1x4xf32>
    %cst_79 = arith.constant 9.99999974E-6 : f32
    %170 = vector.broadcast %cst_79 : f32 to vector<1x4xf32>
    %171 = arith.addf %169, %170 : vector<1x4xf32>
    %172 = math.rsqrt %171 : vector<1x4xf32>
    %173 = tpu.concatenate %162, %172 in 0 : vector<1x4xf32>, vector<1x4xf32> -> vector<2x4xf32>
    %c0_80 = arith.constant 0 : index
    %c0_81 = arith.constant 0 : index
    %174 = vector.load %arg5[%c0_80, %c0_81] : memref<4x128xf32, #tpu.memory_space<vmem>>, vector<4x128xf32>
    %cst_82 = arith.constant dense<0.000000e+00> : vector<2x128xf32>
    %175 = tpu.matmul %173, %174, %cst_82 {dimension_numbers = #tpu.dot_dimension_numbers<[1], [0], [0], [1], [0, 0, 1, 1], [], []>} : vector<2x4xf32>, vector<4x128xf32>, vector<2x128xf32> -> vector<2x128xf32>
    %176 = vector.extract_strided_slice %175 {offsets = [1, 0], sizes = [1, 128], strides = [1, 1]} : vector<2x128xf32> to vector<1x128xf32>
    %c0_83 = arith.constant 0 : index
    %c0_84 = arith.constant 0 : index
    %177 = vector.load %arg18[%c0_83, %c0_84] : memref<1x128xf32, #tpu.memory_space<vmem>>, vector<1x128xf32>
    %178 = arith.mulf %176, %177 : vector<1x128xf32>
    %c0_85 = arith.constant 0 : index
    %c0_86 = arith.constant 0 : index
    %179 = vector.load %arg19[%c0_85, %c0_86] : memref<1x128xf32, #tpu.memory_space<vmem>>, vector<1x128xf32>
    %180 = vector.extract_strided_slice %175 {offsets = [0, 0], sizes = [1, 128], strides = [1, 1]} : vector<2x128xf32> to vector<1x128xf32>
    %181 = arith.mulf %180, %178 : vector<1x128xf32>
    %182 = arith.subf %179, %181 : vector<1x128xf32>
    %183 = vector.broadcast %178 : vector<1x128xf32> to vector<256x128xf32>
    %184 = arith.mulf %151, %183 : vector<256x128xf32>
    %185 = vector.broadcast %182 : vector<1x128xf32> to vector<256x128xf32>
    %186 = arith.addf %184, %185 : vector<256x128xf32>
    %cst_87 = arith.constant 0.000000e+00 : f32
    %187 = vector.broadcast %cst_87 : f32 to vector<256x128xf32>
    %188 = arith.subf %187, %186 : vector<256x128xf32>
    %189 = math.exp %188 : vector<256x128xf32>
    %cst_88 = arith.constant 1.000000e+00 : f32
    %190 = vector.broadcast %cst_88 : f32 to vector<256x128xf32>
    %191 = arith.addf %190, %189 : vector<256x128xf32>
    %192 = tpu.reciprocal %191 {approx = true} : vector<256x128xf32> -> vector<256x128xf32>
    %193 = arith.mulf %186, %192 : vector<256x128xf32>
    %194 = vector.shape_cast %193 : vector<256x128xf32> to vector<16x16x128xf32>
    %c1_i32_89 = arith.constant 1 : i32
    %195 = tpu.dynamic_rotate %194 by %c1_i32_89 dim 1 : vector<16x16x128xf32>, i32 -> vector<16x16x128xf32>
    %cst_90 = arith.constant 0.000000e+00 : f32
    %196 = vector.shape_cast %2 : vector<1x16x1xi1> to vector<1x16x1xi1>
    %197 = vector.broadcast %196 : vector<1x16x1xi1> to vector<16x16x128xi1>
    %198 = vector.broadcast %cst_90 : f32 to vector<16x16x128xf32>
    %199 = arith.select %197, %198, %195 : vector<16x16x128xi1>, vector<16x16x128xf32>
    %c15_i32_91 = arith.constant 15 : i32
    %200 = tpu.dynamic_rotate %194 by %c15_i32_91 dim 1 : vector<16x16x128xf32>, i32 -> vector<16x16x128xf32>
    %cst_92 = arith.constant 0.000000e+00 : f32
    %201 = vector.shape_cast %4 : vector<1x16x1xi1> to vector<1x16x1xi1>
    %202 = vector.broadcast %201 : vector<1x16x1xi1> to vector<16x16x128xi1>
    %203 = vector.broadcast %cst_92 : f32 to vector<16x16x128xf32>
    %204 = arith.select %202, %203, %200 : vector<16x16x128xi1>, vector<16x16x128xf32>
    %205 = arith.truncf %199 : vector<16x16x128xf32> to vector<16x16x128xbf16>
    %206 = arith.truncf %194 : vector<16x16x128xf32> to vector<16x16x128xbf16>
    %207 = arith.truncf %204 : vector<16x16x128xf32> to vector<16x16x128xbf16>
    %cst_93 = arith.constant 0.000000e+00 : bf16
    %208 = vector.broadcast %cst_93 : bf16 to vector<1x16x128xbf16>
    %209 = vector.extract_strided_slice %205 {offsets = [0, 0, 0], sizes = [15, 16, 128], strides = [1, 1, 1]} : vector<16x16x128xbf16> to vector<15x16x128xbf16>
    %210 = tpu.concatenate %208, %209 in 0 : vector<1x16x128xbf16>, vector<15x16x128xbf16> -> vector<16x16x128xbf16>
    %211 = vector.shape_cast %210 : vector<16x16x128xbf16> to vector<256x128xbf16>
    %c0_94 = arith.constant 0 : index
    %c0_95 = arith.constant 0 : index
    %212 = vector.load %arg20[%c0_94, %c0_95] : memref<1152x128xbf16, #tpu.memory_space<vmem>>, vector<128x128xbf16>
    %cst_96 = arith.constant dense<0.000000e+00> : vector<256x128xf32>
    %213 = tpu.matmul %211, %212, %cst_96 {dimension_numbers = #tpu.dot_dimension_numbers<[1], [0], [0], [1], [0, 0, 1, 1], [], []>} : vector<256x128xbf16>, vector<128x128xbf16>, vector<256x128xf32> -> vector<256x128xf32>
    %214 = vector.extract_strided_slice %206 {offsets = [0, 0, 0], sizes = [15, 16, 128], strides = [1, 1, 1]} : vector<16x16x128xbf16> to vector<15x16x128xbf16>
    %215 = tpu.concatenate %208, %214 in 0 : vector<1x16x128xbf16>, vector<15x16x128xbf16> -> vector<16x16x128xbf16>
    %216 = vector.shape_cast %215 : vector<16x16x128xbf16> to vector<256x128xbf16>
    %c128_97 = arith.constant 128 : index
    %c0_98 = arith.constant 0 : index
    %217 = vector.load %arg20[%c128_97, %c0_98] : memref<1152x128xbf16, #tpu.memory_space<vmem>>, vector<128x128xbf16>
    %cst_99 = arith.constant dense<0.000000e+00> : vector<256x128xf32>
    %218 = tpu.matmul %216, %217, %cst_99 {dimension_numbers = #tpu.dot_dimension_numbers<[1], [0], [0], [1], [0, 0, 1, 1], [], []>} : vector<256x128xbf16>, vector<128x128xbf16>, vector<256x128xf32> -> vector<256x128xf32>
    %219 = arith.addf %213, %218 : vector<256x128xf32>
    %220 = vector.extract_strided_slice %207 {offsets = [0, 0, 0], sizes = [15, 16, 128], strides = [1, 1, 1]} : vector<16x16x128xbf16> to vector<15x16x128xbf16>
    %221 = tpu.concatenate %208, %220 in 0 : vector<1x16x128xbf16>, vector<15x16x128xbf16> -> vector<16x16x128xbf16>
    %222 = vector.shape_cast %221 : vector<16x16x128xbf16> to vector<256x128xbf16>
    %c256_100 = arith.constant 256 : index
    %c0_101 = arith.constant 0 : index
    %223 = vector.load %arg20[%c256_100, %c0_101] : memref<1152x128xbf16, #tpu.memory_space<vmem>>, vector<128x128xbf16>
    %cst_102 = arith.constant dense<0.000000e+00> : vector<256x128xf32>
    %224 = tpu.matmul %222, %223, %cst_102 {dimension_numbers = #tpu.dot_dimension_numbers<[1], [0], [0], [1], [0, 0, 1, 1], [], []>} : vector<256x128xbf16>, vector<128x128xbf16>, vector<256x128xf32> -> vector<256x128xf32>
    %225 = arith.addf %219, %224 : vector<256x128xf32>
    %226 = vector.shape_cast %205 : vector<16x16x128xbf16> to vector<256x128xbf16>
    %c384_103 = arith.constant 384 : index
    %c0_104 = arith.constant 0 : index
    %227 = vector.load %arg20[%c384_103, %c0_104] : memref<1152x128xbf16, #tpu.memory_space<vmem>>, vector<128x128xbf16>
    %cst_105 = arith.constant dense<0.000000e+00> : vector<256x128xf32>
    %228 = tpu.matmul %226, %227, %cst_105 {dimension_numbers = #tpu.dot_dimension_numbers<[1], [0], [0], [1], [0, 0, 1, 1], [], []>} : vector<256x128xbf16>, vector<128x128xbf16>, vector<256x128xf32> -> vector<256x128xf32>
    %229 = arith.addf %225, %228 : vector<256x128xf32>
    %230 = vector.shape_cast %206 : vector<16x16x128xbf16> to vector<256x128xbf16>
    %c512_106 = arith.constant 512 : index
    %c0_107 = arith.constant 0 : index
    %231 = vector.load %arg20[%c512_106, %c0_107] : memref<1152x128xbf16, #tpu.memory_space<vmem>>, vector<128x128xbf16>
    %cst_108 = arith.constant dense<0.000000e+00> : vector<256x128xf32>
    %232 = tpu.matmul %230, %231, %cst_108 {dimension_numbers = #tpu.dot_dimension_numbers<[1], [0], [0], [1], [0, 0, 1, 1], [], []>} : vector<256x128xbf16>, vector<128x128xbf16>, vector<256x128xf32> -> vector<256x128xf32>
    %233 = arith.addf %229, %232 : vector<256x128xf32>
    %234 = vector.shape_cast %207 : vector<16x16x128xbf16> to vector<256x128xbf16>
    %c640_109 = arith.constant 640 : index
    %c0_110 = arith.constant 0 : index
    %235 = vector.load %arg20[%c640_109, %c0_110] : memref<1152x128xbf16, #tpu.memory_space<vmem>>, vector<128x128xbf16>
    %cst_111 = arith.constant dense<0.000000e+00> : vector<256x128xf32>
    %236 = tpu.matmul %234, %235, %cst_111 {dimension_numbers = #tpu.dot_dimension_numbers<[1], [0], [0], [1], [0, 0, 1, 1], [], []>} : vector<256x128xbf16>, vector<128x128xbf16>, vector<256x128xf32> -> vector<256x128xf32>
    %237 = arith.addf %233, %236 : vector<256x128xf32>
    %238 = vector.extract_strided_slice %205 {offsets = [1, 0, 0], sizes = [15, 16, 128], strides = [1, 1, 1]} : vector<16x16x128xbf16> to vector<15x16x128xbf16>
    %239 = tpu.concatenate %238, %208 in 0 : vector<15x16x128xbf16>, vector<1x16x128xbf16> -> vector<16x16x128xbf16>
    %240 = vector.shape_cast %239 : vector<16x16x128xbf16> to vector<256x128xbf16>
    %c768_112 = arith.constant 768 : index
    %c0_113 = arith.constant 0 : index
    %241 = vector.load %arg20[%c768_112, %c0_113] : memref<1152x128xbf16, #tpu.memory_space<vmem>>, vector<128x128xbf16>
    %cst_114 = arith.constant dense<0.000000e+00> : vector<256x128xf32>
    %242 = tpu.matmul %240, %241, %cst_114 {dimension_numbers = #tpu.dot_dimension_numbers<[1], [0], [0], [1], [0, 0, 1, 1], [], []>} : vector<256x128xbf16>, vector<128x128xbf16>, vector<256x128xf32> -> vector<256x128xf32>
    %243 = arith.addf %237, %242 : vector<256x128xf32>
    %244 = vector.extract_strided_slice %206 {offsets = [1, 0, 0], sizes = [15, 16, 128], strides = [1, 1, 1]} : vector<16x16x128xbf16> to vector<15x16x128xbf16>
    %245 = tpu.concatenate %244, %208 in 0 : vector<15x16x128xbf16>, vector<1x16x128xbf16> -> vector<16x16x128xbf16>
    %246 = vector.shape_cast %245 : vector<16x16x128xbf16> to vector<256x128xbf16>
    %c896_115 = arith.constant 896 : index
    %c0_116 = arith.constant 0 : index
    %247 = vector.load %arg20[%c896_115, %c0_116] : memref<1152x128xbf16, #tpu.memory_space<vmem>>, vector<128x128xbf16>
    %cst_117 = arith.constant dense<0.000000e+00> : vector<256x128xf32>
    %248 = tpu.matmul %246, %247, %cst_117 {dimension_numbers = #tpu.dot_dimension_numbers<[1], [0], [0], [1], [0, 0, 1, 1], [], []>} : vector<256x128xbf16>, vector<128x128xbf16>, vector<256x128xf32> -> vector<256x128xf32>
    %249 = arith.addf %243, %248 : vector<256x128xf32>
    %250 = vector.extract_strided_slice %207 {offsets = [1, 0, 0], sizes = [15, 16, 128], strides = [1, 1, 1]} : vector<16x16x128xbf16> to vector<15x16x128xbf16>
    %251 = tpu.concatenate %250, %208 in 0 : vector<15x16x128xbf16>, vector<1x16x128xbf16> -> vector<16x16x128xbf16>
    %252 = vector.shape_cast %251 : vector<16x16x128xbf16> to vector<256x128xbf16>
    %c1024_118 = arith.constant 1024 : index
    %c0_119 = arith.constant 0 : index
    %253 = vector.load %arg20[%c1024_118, %c0_119] : memref<1152x128xbf16, #tpu.memory_space<vmem>>, vector<128x128xbf16>
    %cst_120 = arith.constant dense<0.000000e+00> : vector<256x128xf32>
    %254 = tpu.matmul %252, %253, %cst_120 {dimension_numbers = #tpu.dot_dimension_numbers<[1], [0], [0], [1], [0, 0, 1, 1], [], []>} : vector<256x128xbf16>, vector<128x128xbf16>, vector<256x128xf32> -> vector<256x128xf32>
    %255 = arith.addf %249, %254 : vector<256x128xf32>
    %c0_121 = arith.constant 0 : index
    %c0_122 = arith.constant 0 : index
    %256 = vector.load %arg21[%c0_121, %c0_122] : memref<1x128xf32, #tpu.memory_space<vmem>>, vector<1x128xf32>
    %257 = vector.broadcast %256 : vector<1x128xf32> to vector<256x128xf32>
    %258 = arith.addf %255, %257 : vector<256x128xf32>
    %259 = arith.addf %30, %258 : vector<256x128xf32>
    %cst_123 = arith.constant dense<0.000000e+00> : vector<128xf32>
    %260 = vector.multi_reduction <add>, %259, %cst_123 [0] : vector<256x128xf32> to vector<128xf32>
    %261 = vector.shape_cast %260 : vector<128xf32> to vector<1x128xf32>
    %262 = arith.mulf %259, %259 : vector<256x128xf32>
    %cst_124 = arith.constant dense<0.000000e+00> : vector<128xf32>
    %263 = vector.multi_reduction <add>, %262, %cst_124 [0] : vector<256x128xf32> to vector<128xf32>
    %264 = vector.shape_cast %263 : vector<128xf32> to vector<1x128xf32>
    %265 = tpu.concatenate %261, %264 in 0 : vector<1x128xf32>, vector<1x128xf32> -> vector<2x128xf32>
    %c0_125 = arith.constant 0 : index
    %c0_126 = arith.constant 0 : index
    %266 = vector.load %arg4[%c0_125, %c0_126] : memref<128x4xf32, #tpu.memory_space<vmem>>, vector<128x4xf32>
    %cst_127 = arith.constant dense<0.000000e+00> : vector<2x4xf32>
    %267 = tpu.matmul %265, %266, %cst_127 {dimension_numbers = #tpu.dot_dimension_numbers<[1], [0], [0], [1], [0, 0, 1, 1], [], []>} : vector<2x128xf32>, vector<128x4xf32>, vector<2x4xf32> -> vector<2x4xf32>
    %268 = vector.extract_strided_slice %267 {offsets = [0, 0], sizes = [1, 4], strides = [1, 1]} : vector<2x4xf32> to vector<1x4xf32>
    %cst_128 = arith.constant 8.192000e+03 : f32
    %269 = vector.broadcast %cst_128 : f32 to vector<1x4xf32>
    %270 = arith.divf %268, %269 : vector<1x4xf32>
    %271 = vector.extract_strided_slice %267 {offsets = [1, 0], sizes = [1, 4], strides = [1, 1]} : vector<2x4xf32> to vector<1x4xf32>
    %cst_129 = arith.constant 8.192000e+03 : f32
    %272 = vector.broadcast %cst_129 : f32 to vector<1x4xf32>
    %273 = arith.divf %271, %272 : vector<1x4xf32>
    %274 = arith.mulf %270, %270 : vector<1x4xf32>
    %275 = arith.subf %273, %274 : vector<1x4xf32>
    %cst_130 = arith.constant 0.000000e+00 : f32
    %276 = vector.broadcast %cst_130 : f32 to vector<1x4xf32>
    %277 = arith.maximumf %275, %276 : vector<1x4xf32>
    %cst_131 = arith.constant 9.99999974E-6 : f32
    %278 = vector.broadcast %cst_131 : f32 to vector<1x4xf32>
    %279 = arith.addf %277, %278 : vector<1x4xf32>
    %280 = math.rsqrt %279 : vector<1x4xf32>
    %281 = tpu.concatenate %270, %280 in 0 : vector<1x4xf32>, vector<1x4xf32> -> vector<2x4xf32>
    %c0_132 = arith.constant 0 : index
    %c0_133 = arith.constant 0 : index
    %282 = vector.load %arg5[%c0_132, %c0_133] : memref<4x128xf32, #tpu.memory_space<vmem>>, vector<4x128xf32>
    %cst_134 = arith.constant dense<0.000000e+00> : vector<2x128xf32>
    %283 = tpu.matmul %281, %282, %cst_134 {dimension_numbers = #tpu.dot_dimension_numbers<[1], [0], [0], [1], [0, 0, 1, 1], [], []>} : vector<2x4xf32>, vector<4x128xf32>, vector<2x128xf32> -> vector<2x128xf32>
    %284 = vector.extract_strided_slice %283 {offsets = [1, 0], sizes = [1, 128], strides = [1, 1]} : vector<2x128xf32> to vector<1x128xf32>
    %c0_135 = arith.constant 0 : index
    %c0_136 = arith.constant 0 : index
    %285 = vector.load %arg22[%c0_135, %c0_136] : memref<1x128xf32, #tpu.memory_space<vmem>>, vector<1x128xf32>
    %286 = arith.mulf %284, %285 : vector<1x128xf32>
    %c0_137 = arith.constant 0 : index
    %c0_138 = arith.constant 0 : index
    %287 = vector.load %arg23[%c0_137, %c0_138] : memref<1x128xf32, #tpu.memory_space<vmem>>, vector<1x128xf32>
    %288 = vector.extract_strided_slice %283 {offsets = [0, 0], sizes = [1, 128], strides = [1, 1]} : vector<2x128xf32> to vector<1x128xf32>
    %289 = arith.mulf %288, %286 : vector<1x128xf32>
    %290 = arith.subf %287, %289 : vector<1x128xf32>
    %291 = vector.broadcast %286 : vector<1x128xf32> to vector<256x128xf32>
    %292 = arith.mulf %259, %291 : vector<256x128xf32>
    %293 = vector.broadcast %290 : vector<1x128xf32> to vector<256x128xf32>
    %294 = arith.addf %292, %293 : vector<256x128xf32>
    %295 = arith.truncf %294 : vector<256x128xf32> to vector<256x128xbf16>
    %c0_139 = arith.constant 0 : index
    %c0_140 = arith.constant 0 : index
    %296 = vector.load %arg24[%c0_139, %c0_140] : memref<128x128xbf16, #tpu.memory_space<vmem>>, vector<128x128xbf16>
    %cst_141 = arith.constant dense<0.000000e+00> : vector<256x128xf32>
    %297 = tpu.matmul %295, %296, %cst_141 {dimension_numbers = #tpu.dot_dimension_numbers<[1], [0], [0], [1], [0, 0, 1, 1], [], []>} : vector<256x128xbf16>, vector<128x128xbf16>, vector<256x128xf32> -> vector<256x128xf32>
    %c0_142 = arith.constant 0 : index
    %c0_143 = arith.constant 0 : index
    %c0_144 = arith.constant 0 : index
    %298 = vector.load %arg3[%c0_142, %c0_143, %c0_144] : memref<1x8x128xbf16, #tpu.memory_space<vmem>>, vector<1x8x128xbf16>
    %299 = vector.shape_cast %298 : vector<1x8x128xbf16> to vector<8x128xbf16>
    %c0_145 = arith.constant 0 : index
    %c0_146 = arith.constant 0 : index
    %300 = vector.load %arg25[%c0_145, %c0_146] : memref<128x128xbf16, #tpu.memory_space<vmem>>, vector<128x128xbf16>
    %cst_147 = arith.constant dense<0.000000e+00> : vector<8x128xf32>
    %301 = tpu.matmul %299, %300, %cst_147 {dimension_numbers = #tpu.dot_dimension_numbers<[1], [0], [0], [1], [0, 0, 1, 1], [], []>} : vector<8x128xbf16>, vector<128x128xbf16>, vector<8x128xf32> -> vector<8x128xf32>
    %c0_148 = arith.constant 0 : index
    %c0_149 = arith.constant 0 : index
    %302 = vector.load %arg26[%c0_148, %c0_149] : memref<128x128xbf16, #tpu.memory_space<vmem>>, vector<128x128xbf16>
    %cst_150 = arith.constant dense<0.000000e+00> : vector<8x128xf32>
    %303 = tpu.matmul %299, %302, %cst_150 {dimension_numbers = #tpu.dot_dimension_numbers<[1], [0], [0], [1], [0, 0, 1, 1], [], []>} : vector<8x128xbf16>, vector<128x128xbf16>, vector<8x128xf32> -> vector<8x128xf32>
    %304 = arith.truncf %301 : vector<8x128xf32> to vector<8x128xbf16>
    %305 = arith.truncf %297 : vector<256x128xf32> to vector<256x128xbf16>
    %cst_151 = arith.constant dense<0.000000e+00> : vector<8x256xf32>
    %306 = tpu.matmul %304, %305, %cst_151 {dimension_numbers = #tpu.dot_dimension_numbers<[1], [1], [0], [0], [0, 0, 1, 0], [], []>} : vector<8x128xbf16>, vector<256x128xbf16>, vector<8x256xf32> -> vector<8x256xf32>
    %cst_152 = arith.constant dense<0xFF800000> : vector<256xf32>
    %307 = vector.multi_reduction <maximumf>, %306, %cst_152 [0] : vector<8x256xf32> to vector<256xf32>
    %308 = vector.shape_cast %307 : vector<256xf32> to vector<1x256xf32>
    %309 = vector.broadcast %308 : vector<1x256xf32> to vector<8x256xf32>
    %310 = arith.subf %306, %309 : vector<8x256xf32>
    %311 = math.exp %310 : vector<8x256xf32>
    %cst_153 = arith.constant dense<0.000000e+00> : vector<256xf32>
    %312 = vector.multi_reduction <add>, %311, %cst_153 [0] : vector<8x256xf32> to vector<256xf32>
    %313 = vector.shape_cast %312 : vector<256xf32> to vector<1x256xf32>
    %314 = tpu.reciprocal %313 {approx = true} : vector<1x256xf32> -> vector<1x256xf32>
    %315 = vector.broadcast %314 : vector<1x256xf32> to vector<8x256xf32>
    %316 = arith.mulf %311, %315 : vector<8x256xf32>
    %317 = arith.truncf %316 : vector<8x256xf32> to vector<8x256xbf16>
    %318 = arith.truncf %303 : vector<8x128xf32> to vector<8x128xbf16>
    %cst_154 = arith.constant dense<0.000000e+00> : vector<256x128xf32>
    %319 = tpu.matmul %317, %318, %cst_154 {dimension_numbers = #tpu.dot_dimension_numbers<[0], [0], [1], [1], [0, 1, 1, 1], [], []>} : vector<8x256xbf16>, vector<8x128xbf16>, vector<256x128xf32> -> vector<256x128xf32>
    %320 = arith.truncf %319 : vector<256x128xf32> to vector<256x128xbf16>
    %c0_155 = arith.constant 0 : index
    %c0_156 = arith.constant 0 : index
    %321 = vector.load %arg27[%c0_155, %c0_156] : memref<128x128xbf16, #tpu.memory_space<vmem>>, vector<128x128xbf16>
    %cst_157 = arith.constant dense<0.000000e+00> : vector<256x128xf32>
    %322 = tpu.matmul %320, %321, %cst_157 {dimension_numbers = #tpu.dot_dimension_numbers<[1], [0], [0], [1], [0, 0, 1, 1], [], []>} : vector<256x128xbf16>, vector<128x128xbf16>, vector<256x128xf32> -> vector<256x128xf32>
    %c0_158 = arith.constant 0 : index
    %c0_159 = arith.constant 0 : index
    %323 = vector.load %arg28[%c0_158, %c0_159] : memref<1x128xf32, #tpu.memory_space<vmem>>, vector<1x128xf32>
    %324 = vector.broadcast %323 : vector<1x128xf32> to vector<256x128xf32>
    %325 = arith.addf %322, %324 : vector<256x128xf32>
    %326 = arith.addf %259, %325 : vector<256x128xf32>
    %cst_160 = arith.constant dense<0.000000e+00> : vector<128xf32>
    %327 = vector.multi_reduction <add>, %326, %cst_160 [0] : vector<256x128xf32> to vector<128xf32>
    %328 = vector.shape_cast %327 : vector<128xf32> to vector<1x128xf32>
    %329 = arith.mulf %326, %326 : vector<256x128xf32>
    %cst_161 = arith.constant dense<0.000000e+00> : vector<128xf32>
    %330 = vector.multi_reduction <add>, %329, %cst_161 [0] : vector<256x128xf32> to vector<128xf32>
    %331 = vector.shape_cast %330 : vector<128xf32> to vector<1x128xf32>
    %332 = tpu.concatenate %328, %331 in 0 : vector<1x128xf32>, vector<1x128xf32> -> vector<2x128xf32>
    %c0_162 = arith.constant 0 : index
    %c0_163 = arith.constant 0 : index
    %333 = vector.load %arg4[%c0_162, %c0_163] : memref<128x4xf32, #tpu.memory_space<vmem>>, vector<128x4xf32>
    %cst_164 = arith.constant dense<0.000000e+00> : vector<2x4xf32>
    %334 = tpu.matmul %332, %333, %cst_164 {dimension_numbers = #tpu.dot_dimension_numbers<[1], [0], [0], [1], [0, 0, 1, 1], [], []>} : vector<2x128xf32>, vector<128x4xf32>, vector<2x4xf32> -> vector<2x4xf32>
    %335 = vector.extract_strided_slice %334 {offsets = [0, 0], sizes = [1, 4], strides = [1, 1]} : vector<2x4xf32> to vector<1x4xf32>
    %cst_165 = arith.constant 8.192000e+03 : f32
    %336 = vector.broadcast %cst_165 : f32 to vector<1x4xf32>
    %337 = arith.divf %335, %336 : vector<1x4xf32>
    %338 = vector.extract_strided_slice %334 {offsets = [1, 0], sizes = [1, 4], strides = [1, 1]} : vector<2x4xf32> to vector<1x4xf32>
    %cst_166 = arith.constant 8.192000e+03 : f32
    %339 = vector.broadcast %cst_166 : f32 to vector<1x4xf32>
    %340 = arith.divf %338, %339 : vector<1x4xf32>
    %341 = arith.mulf %337, %337 : vector<1x4xf32>
    %342 = arith.subf %340, %341 : vector<1x4xf32>
    %cst_167 = arith.constant 0.000000e+00 : f32
    %343 = vector.broadcast %cst_167 : f32 to vector<1x4xf32>
    %344 = arith.maximumf %342, %343 : vector<1x4xf32>
    %cst_168 = arith.constant 9.99999974E-6 : f32
    %345 = vector.broadcast %cst_168 : f32 to vector<1x4xf32>
    %346 = arith.addf %344, %345 : vector<1x4xf32>
    %347 = math.rsqrt %346 : vector<1x4xf32>
    %348 = tpu.concatenate %337, %347 in 0 : vector<1x4xf32>, vector<1x4xf32> -> vector<2x4xf32>
    %c0_169 = arith.constant 0 : index
    %c0_170 = arith.constant 0 : index
    %349 = vector.load %arg5[%c0_169, %c0_170] : memref<4x128xf32, #tpu.memory_space<vmem>>, vector<4x128xf32>
    %cst_171 = arith.constant dense<0.000000e+00> : vector<2x128xf32>
    %350 = tpu.matmul %348, %349, %cst_171 {dimension_numbers = #tpu.dot_dimension_numbers<[1], [0], [0], [1], [0, 0, 1, 1], [], []>} : vector<2x4xf32>, vector<4x128xf32>, vector<2x128xf32> -> vector<2x128xf32>
    %351 = vector.extract_strided_slice %350 {offsets = [1, 0], sizes = [1, 128], strides = [1, 1]} : vector<2x128xf32> to vector<1x128xf32>
    %c0_172 = arith.constant 0 : index
    %c0_173 = arith.constant 0 : index
    %352 = vector.load %arg29[%c0_172, %c0_173] : memref<1x128xf32, #tpu.memory_space<vmem>>, vector<1x128xf32>
    %353 = arith.mulf %351, %352 : vector<1x128xf32>
    %c0_174 = arith.constant 0 : index
    %c0_175 = arith.constant 0 : index
    %354 = vector.load %arg30[%c0_174, %c0_175] : memref<1x128xf32, #tpu.memory_space<vmem>>, vector<1x128xf32>
    %355 = vector.extract_strided_slice %350 {offsets = [0, 0], sizes = [1, 128], strides = [1, 1]} : vector<2x128xf32> to vector<1x128xf32>
    %356 = arith.mulf %355, %353 : vector<1x128xf32>
    %357 = arith.subf %354, %356 : vector<1x128xf32>
    %358 = vector.broadcast %353 : vector<1x128xf32> to vector<256x128xf32>
    %359 = arith.mulf %326, %358 : vector<256x128xf32>
    %360 = vector.broadcast %357 : vector<1x128xf32> to vector<256x128xf32>
    %361 = arith.addf %359, %360 : vector<256x128xf32>
    %cst_176 = arith.constant 0.000000e+00 : f32
    %362 = vector.broadcast %cst_176 : f32 to vector<256x128xf32>
    %363 = arith.subf %362, %361 : vector<256x128xf32>
    %364 = math.exp %363 : vector<256x128xf32>
    %cst_177 = arith.constant 1.000000e+00 : f32
    %365 = vector.broadcast %cst_177 : f32 to vector<256x128xf32>
    %366 = arith.addf %365, %364 : vector<256x128xf32>
    %367 = tpu.reciprocal %366 {approx = true} : vector<256x128xf32> -> vector<256x128xf32>
    %368 = arith.mulf %361, %367 : vector<256x128xf32>
    %369 = vector.shape_cast %368 : vector<256x128xf32> to vector<16x16x128xf32>
    %c1_i32_178 = arith.constant 1 : i32
    %370 = tpu.dynamic_rotate %369 by %c1_i32_178 dim 1 : vector<16x16x128xf32>, i32 -> vector<16x16x128xf32>
    %cst_179 = arith.constant 0.000000e+00 : f32
    %371 = vector.shape_cast %2 : vector<1x16x1xi1> to vector<1x16x1xi1>
    %372 = vector.broadcast %371 : vector<1x16x1xi1> to vector<16x16x128xi1>
    %373 = vector.broadcast %cst_179 : f32 to vector<16x16x128xf32>
    %374 = arith.select %372, %373, %370 : vector<16x16x128xi1>, vector<16x16x128xf32>
    %c15_i32_180 = arith.constant 15 : i32
    %375 = tpu.dynamic_rotate %369 by %c15_i32_180 dim 1 : vector<16x16x128xf32>, i32 -> vector<16x16x128xf32>
    %cst_181 = arith.constant 0.000000e+00 : f32
    %376 = vector.shape_cast %4 : vector<1x16x1xi1> to vector<1x16x1xi1>
    %377 = vector.broadcast %376 : vector<1x16x1xi1> to vector<16x16x128xi1>
    %378 = vector.broadcast %cst_181 : f32 to vector<16x16x128xf32>
    %379 = arith.select %377, %378, %375 : vector<16x16x128xi1>, vector<16x16x128xf32>
    %380 = arith.truncf %374 : vector<16x16x128xf32> to vector<16x16x128xbf16>
    %381 = arith.truncf %369 : vector<16x16x128xf32> to vector<16x16x128xbf16>
    %382 = arith.truncf %379 : vector<16x16x128xf32> to vector<16x16x128xbf16>
    %cst_182 = arith.constant 0.000000e+00 : bf16
    %383 = vector.broadcast %cst_182 : bf16 to vector<1x16x128xbf16>
    %384 = vector.extract_strided_slice %380 {offsets = [0, 0, 0], sizes = [15, 16, 128], strides = [1, 1, 1]} : vector<16x16x128xbf16> to vector<15x16x128xbf16>
    %385 = tpu.concatenate %383, %384 in 0 : vector<1x16x128xbf16>, vector<15x16x128xbf16> -> vector<16x16x128xbf16>
    %386 = vector.shape_cast %385 : vector<16x16x128xbf16> to vector<256x128xbf16>
    %c0_183 = arith.constant 0 : index
    %c0_184 = arith.constant 0 : index
    %387 = vector.load %arg31[%c0_183, %c0_184] : memref<4x1152xbf16, #tpu.memory_space<vmem>>, vector<4x128xbf16>
    %cst_185 = arith.constant dense<0.000000e+00> : vector<4x256xf32>
    %388 = tpu.matmul %387, %386, %cst_185 {dimension_numbers = #tpu.dot_dimension_numbers<[1], [1], [0], [0], [0, 0, 1, 0], [], []>} : vector<4x128xbf16>, vector<256x128xbf16>, vector<4x256xf32> -> vector<4x256xf32>
    %389 = vector.extract_strided_slice %381 {offsets = [0, 0, 0], sizes = [15, 16, 128], strides = [1, 1, 1]} : vector<16x16x128xbf16> to vector<15x16x128xbf16>
    %390 = tpu.concatenate %383, %389 in 0 : vector<1x16x128xbf16>, vector<15x16x128xbf16> -> vector<16x16x128xbf16>
    %391 = vector.shape_cast %390 : vector<16x16x128xbf16> to vector<256x128xbf16>
    %c0_186 = arith.constant 0 : index
    %c128_187 = arith.constant 128 : index
    %392 = vector.load %arg31[%c0_186, %c128_187] : memref<4x1152xbf16, #tpu.memory_space<vmem>>, vector<4x128xbf16>
    %cst_188 = arith.constant dense<0.000000e+00> : vector<4x256xf32>
    %393 = tpu.matmul %392, %391, %cst_188 {dimension_numbers = #tpu.dot_dimension_numbers<[1], [1], [0], [0], [0, 0, 1, 0], [], []>} : vector<4x128xbf16>, vector<256x128xbf16>, vector<4x256xf32> -> vector<4x256xf32>
    %394 = arith.addf %388, %393 : vector<4x256xf32>
    %395 = vector.extract_strided_slice %382 {offsets = [0, 0, 0], sizes = [15, 16, 128], strides = [1, 1, 1]} : vector<16x16x128xbf16> to vector<15x16x128xbf16>
    %396 = tpu.concatenate %383, %395 in 0 : vector<1x16x128xbf16>, vector<15x16x128xbf16> -> vector<16x16x128xbf16>
    %397 = vector.shape_cast %396 : vector<16x16x128xbf16> to vector<256x128xbf16>
    %c0_189 = arith.constant 0 : index
    %c256_190 = arith.constant 256 : index
    %398 = vector.load %arg31[%c0_189, %c256_190] : memref<4x1152xbf16, #tpu.memory_space<vmem>>, vector<4x128xbf16>
    %cst_191 = arith.constant dense<0.000000e+00> : vector<4x256xf32>
    %399 = tpu.matmul %398, %397, %cst_191 {dimension_numbers = #tpu.dot_dimension_numbers<[1], [1], [0], [0], [0, 0, 1, 0], [], []>} : vector<4x128xbf16>, vector<256x128xbf16>, vector<4x256xf32> -> vector<4x256xf32>
    %400 = arith.addf %394, %399 : vector<4x256xf32>
    %401 = vector.shape_cast %380 : vector<16x16x128xbf16> to vector<256x128xbf16>
    %c0_192 = arith.constant 0 : index
    %c384_193 = arith.constant 384 : index
    %402 = vector.load %arg31[%c0_192, %c384_193] : memref<4x1152xbf16, #tpu.memory_space<vmem>>, vector<4x128xbf16>
    %cst_194 = arith.constant dense<0.000000e+00> : vector<4x256xf32>
    %403 = tpu.matmul %402, %401, %cst_194 {dimension_numbers = #tpu.dot_dimension_numbers<[1], [1], [0], [0], [0, 0, 1, 0], [], []>} : vector<4x128xbf16>, vector<256x128xbf16>, vector<4x256xf32> -> vector<4x256xf32>
    %404 = arith.addf %400, %403 : vector<4x256xf32>
    %405 = vector.shape_cast %381 : vector<16x16x128xbf16> to vector<256x128xbf16>
    %c0_195 = arith.constant 0 : index
    %c512_196 = arith.constant 512 : index
    %406 = vector.load %arg31[%c0_195, %c512_196] : memref<4x1152xbf16, #tpu.memory_space<vmem>>, vector<4x128xbf16>
    %cst_197 = arith.constant dense<0.000000e+00> : vector<4x256xf32>
    %407 = tpu.matmul %406, %405, %cst_197 {dimension_numbers = #tpu.dot_dimension_numbers<[1], [1], [0], [0], [0, 0, 1, 0], [], []>} : vector<4x128xbf16>, vector<256x128xbf16>, vector<4x256xf32> -> vector<4x256xf32>
    %408 = arith.addf %404, %407 : vector<4x256xf32>
    %409 = vector.shape_cast %382 : vector<16x16x128xbf16> to vector<256x128xbf16>
    %c0_198 = arith.constant 0 : index
    %c640_199 = arith.constant 640 : index
    %410 = vector.load %arg31[%c0_198, %c640_199] : memref<4x1152xbf16, #tpu.memory_space<vmem>>, vector<4x128xbf16>
    %cst_200 = arith.constant dense<0.000000e+00> : vector<4x256xf32>
    %411 = tpu.matmul %410, %409, %cst_200 {dimension_numbers = #tpu.dot_dimension_numbers<[1], [1], [0], [0], [0, 0, 1, 0], [], []>} : vector<4x128xbf16>, vector<256x128xbf16>, vector<4x256xf32> -> vector<4x256xf32>
    %412 = arith.addf %408, %411 : vector<4x256xf32>
    %413 = vector.extract_strided_slice %380 {offsets = [1, 0, 0], sizes = [15, 16, 128], strides = [1, 1, 1]} : vector<16x16x128xbf16> to vector<15x16x128xbf16>
    %414 = tpu.concatenate %413, %383 in 0 : vector<15x16x128xbf16>, vector<1x16x128xbf16> -> vector<16x16x128xbf16>
    %415 = vector.shape_cast %414 : vector<16x16x128xbf16> to vector<256x128xbf16>
    %c0_201 = arith.constant 0 : index
    %c768_202 = arith.constant 768 : index
    %416 = vector.load %arg31[%c0_201, %c768_202] : memref<4x1152xbf16, #tpu.memory_space<vmem>>, vector<4x128xbf16>
    %cst_203 = arith.constant dense<0.000000e+00> : vector<4x256xf32>
    %417 = tpu.matmul %416, %415, %cst_203 {dimension_numbers = #tpu.dot_dimension_numbers<[1], [1], [0], [0], [0, 0, 1, 0], [], []>} : vector<4x128xbf16>, vector<256x128xbf16>, vector<4x256xf32> -> vector<4x256xf32>
    %418 = arith.addf %412, %417 : vector<4x256xf32>
    %419 = vector.extract_strided_slice %381 {offsets = [1, 0, 0], sizes = [15, 16, 128], strides = [1, 1, 1]} : vector<16x16x128xbf16> to vector<15x16x128xbf16>
    %420 = tpu.concatenate %419, %383 in 0 : vector<15x16x128xbf16>, vector<1x16x128xbf16> -> vector<16x16x128xbf16>
    %421 = vector.shape_cast %420 : vector<16x16x128xbf16> to vector<256x128xbf16>
    %c0_204 = arith.constant 0 : index
    %c896_205 = arith.constant 896 : index
    %422 = vector.load %arg31[%c0_204, %c896_205] : memref<4x1152xbf16, #tpu.memory_space<vmem>>, vector<4x128xbf16>
    %cst_206 = arith.constant dense<0.000000e+00> : vector<4x256xf32>
    %423 = tpu.matmul %422, %421, %cst_206 {dimension_numbers = #tpu.dot_dimension_numbers<[1], [1], [0], [0], [0, 0, 1, 0], [], []>} : vector<4x128xbf16>, vector<256x128xbf16>, vector<4x256xf32> -> vector<4x256xf32>
    %424 = arith.addf %418, %423 : vector<4x256xf32>
    %425 = vector.extract_strided_slice %382 {offsets = [1, 0, 0], sizes = [15, 16, 128], strides = [1, 1, 1]} : vector<16x16x128xbf16> to vector<15x16x128xbf16>
    %426 = tpu.concatenate %425, %383 in 0 : vector<15x16x128xbf16>, vector<1x16x128xbf16> -> vector<16x16x128xbf16>
    %427 = vector.shape_cast %426 : vector<16x16x128xbf16> to vector<256x128xbf16>
    %c0_207 = arith.constant 0 : index
    %c1024_208 = arith.constant 1024 : index
    %428 = vector.load %arg31[%c0_207, %c1024_208] : memref<4x1152xbf16, #tpu.memory_space<vmem>>, vector<4x128xbf16>
    %cst_209 = arith.constant dense<0.000000e+00> : vector<4x256xf32>
    %429 = tpu.matmul %428, %427, %cst_209 {dimension_numbers = #tpu.dot_dimension_numbers<[1], [1], [0], [0], [0, 0, 1, 0], [], []>} : vector<4x128xbf16>, vector<256x128xbf16>, vector<4x256xf32> -> vector<4x256xf32>
    %430 = arith.addf %424, %429 : vector<4x256xf32>
    %c0_210 = arith.constant 0 : index
    %c0_211 = arith.constant 0 : index
    %431 = vector.load %arg32[%c0_210, %c0_211] : memref<4x1xf32, #tpu.memory_space<vmem>>, vector<4x1xf32>
    %432 = vector.broadcast %431 : vector<4x1xf32> to vector<4x256xf32>
    %433 = arith.addf %430, %432 : vector<4x256xf32>
    %c0_212 = arith.constant 0 : index
    %c0_213 = arith.constant 0 : index
    %c0_214 = arith.constant 0 : index
    %434 = vector.load %arg33[%c0_212, %c0_213, %c0_214] : memref<1x4x256xf32, #tpu.memory_space<vmem>>, vector<1x4x256xf32>
    %435 = vector.shape_cast %434 : vector<1x4x256xf32> to vector<4x256xf32>
    %436 = vector.shape_cast %433 : vector<4x256xf32> to vector<1x4x256xf32>
    tpu.vector_store %arg33[%c0_212, %c0_213, %c0_214], %436 {strides = array<i32>} : memref<1x4x256xf32, #tpu.memory_space<vmem>>, vector<1x4x256xf32>,
    return
  }
  func.func @transform_0(%arg0: i32) -> (i32, i32, i32) {
    %c0_i32 = arith.constant 0 : i32
    %c0_i32_0 = arith.constant 0 : i32
    %c0_i32_1 = arith.constant 0 : i32
    return %arg0, %c0_i32, %c0_i32_0 : i32, i32, i32
  }
  func.func @transform_1(%arg0: i32) -> (i32, i32, i32) {
    %c0_i32 = arith.constant 0 : i32
    %c0_i32_0 = arith.constant 0 : i32
    %c0_i32_1 = arith.constant 0 : i32
    return %arg0, %c0_i32, %c0_i32_0 : i32, i32, i32
  }
  func.func @transform_2(%arg0: i32) -> (i32, i32, i32) {
    %c0_i32 = arith.constant 0 : i32
    %c0_i32_0 = arith.constant 0 : i32
    %c0_i32_1 = arith.constant 0 : i32
    return %arg0, %c0_i32, %c0_i32_0 : i32, i32, i32
  }
  func.func @transform_3(%arg0: i32) -> (i32, i32) {
    %c0_i32 = arith.constant 0 : i32
    %c0_i32_0 = arith.constant 0 : i32
    %c0_i32_1 = arith.constant 0 : i32
    return %c0_i32, %c0_i32_0 : i32, i32
  }
  func.func @transform_4(%arg0: i32) -> (i32, i32) {
    %c0_i32 = arith.constant 0 : i32
    %c0_i32_0 = arith.constant 0 : i32
    %c0_i32_1 = arith.constant 0 : i32
    return %c0_i32, %c0_i32_0 : i32, i32
  }
  func.func @transform_5(%arg0: i32) -> (i32, i32) {
    %c0_i32 = arith.constant 0 : i32
    %c0_i32_0 = arith.constant 0 : i32
    %c0_i32_1 = arith.constant 0 : i32
    return %c0_i32, %c0_i32_0 : i32, i32
  }
  func.func @transform_6(%arg0: i32) -> (i32, i32) {
    %c0_i32 = arith.constant 0 : i32
    %c0_i32_0 = arith.constant 0 : i32
    %c0_i32_1 = arith.constant 0 : i32
    return %c0_i32, %c0_i32_0 : i32, i32
  }
  func.func @transform_7(%arg0: i32) -> (i32, i32) {
    %c0_i32 = arith.constant 0 : i32
    %c0_i32_0 = arith.constant 0 : i32
    %c0_i32_1 = arith.constant 0 : i32
    return %c0_i32, %c0_i32_0 : i32, i32
  }
  func.func @transform_8(%arg0: i32) -> (i32, i32) {
    %c0_i32 = arith.constant 0 : i32
    %c0_i32_0 = arith.constant 0 : i32
    %c0_i32_1 = arith.constant 0 : i32
    return %c0_i32, %c0_i32_0 : i32, i32
  }
  func.func @transform_9(%arg0: i32) -> (i32, i32) {
    %c0_i32 = arith.constant 0 : i32
    %c0_i32_0 = arith.constant 0 : i32
    %c0_i32_1 = arith.constant 0 : i32
    return %c0_i32, %c0_i32_0 : i32, i32
  }
  func.func @transform_10(%arg0: i32) -> (i32, i32) {
    %c0_i32 = arith.constant 0 : i32
    %c0_i32_0 = arith.constant 0 : i32
    %c0_i32_1 = arith.constant 0 : i32
    return %c0_i32, %c0_i32_0 : i32, i32
  }
  func.func @transform_11(%arg0: i32) -> (i32, i32) {
    %c0_i32 = arith.constant 0 : i32
    %c0_i32_0 = arith.constant 0 : i32
    %c0_i32_1 = arith.constant 0 : i32
    return %c0_i32, %c0_i32_0 : i32, i32
  }
  func.func @transform_12(%arg0: i32) -> (i32, i32) {
    %c0_i32 = arith.constant 0 : i32
    %c0_i32_0 = arith.constant 0 : i32
    %c0_i32_1 = arith.constant 0 : i32
    return %c0_i32, %c0_i32_0 : i32, i32
  }
  func.func @transform_13(%arg0: i32) -> (i32, i32) {
    %c0_i32 = arith.constant 0 : i32
    %c0_i32_0 = arith.constant 0 : i32
    %c0_i32_1 = arith.constant 0 : i32
    return %c0_i32, %c0_i32_0 : i32, i32
  }
  func.func @transform_14(%arg0: i32) -> (i32, i32) {
    %c0_i32 = arith.constant 0 : i32
    %c0_i32_0 = arith.constant 0 : i32
    %c0_i32_1 = arith.constant 0 : i32
    return %c0_i32, %c0_i32_0 : i32, i32
  }
  func.func @transform_15(%arg0: i32) -> (i32, i32) {
    %c0_i32 = arith.constant 0 : i32
    %c0_i32_0 = arith.constant 0 : i32
    %c0_i32_1 = arith.constant 0 : i32
    return %c0_i32, %c0_i32_0 : i32, i32
  }
  func.func @transform_16(%arg0: i32) -> (i32, i32) {
    %c0_i32 = arith.constant 0 : i32
    %c0_i32_0 = arith.constant 0 : i32
    %c0_i32_1 = arith.constant 0 : i32
    return %c0_i32, %c0_i32_0 : i32, i32
  }
  func.func @transform_17(%arg0: i32) -> (i32, i32) {
    %c0_i32 = arith.constant 0 : i32
    %c0_i32_0 = arith.constant 0 : i32
    %c0_i32_1 = arith.constant 0 : i32
    return %c0_i32, %c0_i32_0 : i32, i32
  }
  func.func @transform_18(%arg0: i32) -> (i32, i32) {
    %c0_i32 = arith.constant 0 : i32
    %c0_i32_0 = arith.constant 0 : i32
    %c0_i32_1 = arith.constant 0 : i32
    return %c0_i32, %c0_i32_0 : i32, i32
  }
  func.func @transform_19(%arg0: i32) -> (i32, i32) {
    %c0_i32 = arith.constant 0 : i32
    %c0_i32_0 = arith.constant 0 : i32
    %c0_i32_1 = arith.constant 0 : i32
    return %c0_i32, %c0_i32_0 : i32, i32
  }
  func.func @transform_20(%arg0: i32) -> (i32, i32) {
    %c0_i32 = arith.constant 0 : i32
    %c0_i32_0 = arith.constant 0 : i32
    %c0_i32_1 = arith.constant 0 : i32
    return %c0_i32, %c0_i32_0 : i32, i32
  }
  func.func @transform_21(%arg0: i32) -> (i32, i32) {
    %c0_i32 = arith.constant 0 : i32
    %c0_i32_0 = arith.constant 0 : i32
    %c0_i32_1 = arith.constant 0 : i32
    return %c0_i32, %c0_i32_0 : i32, i32
  }
  func.func @transform_22(%arg0: i32) -> (i32, i32) {
    %c0_i32 = arith.constant 0 : i32
    %c0_i32_0 = arith.constant 0 : i32
    %c0_i32_1 = arith.constant 0 : i32
    return %c0_i32, %c0_i32_0 : i32, i32
  }
  func.func @transform_23(%arg0: i32) -> (i32, i32) {
    %c0_i32 = arith.constant 0 : i32
    %c0_i32_0 = arith.constant 0 : i32
    %c0_i32_1 = arith.constant 0 : i32
    return %c0_i32, %c0_i32_0 : i32, i32
  }
  func.func @transform_24(%arg0: i32) -> (i32, i32) {
    %c0_i32 = arith.constant 0 : i32
    %c0_i32_0 = arith.constant 0 : i32
    %c0_i32_1 = arith.constant 0 : i32
    return %c0_i32, %c0_i32_0 : i32, i32
  }
  func.func @transform_25(%arg0: i32) -> (i32, i32) {
    %c0_i32 = arith.constant 0 : i32
    %c0_i32_0 = arith.constant 0 : i32
    %c0_i32_1 = arith.constant 0 : i32
    return %c0_i32, %c0_i32_0 : i32, i32
  }
  func.func @transform_26(%arg0: i32) -> (i32, i32) {
    %c0_i32 = arith.constant 0 : i32
    %c0_i32_0 = arith.constant 0 : i32
    %c0_i32_1 = arith.constant 0 : i32
    return %c0_i32, %c0_i32_0 : i32, i32
  }
  func.func @transform_27(%arg0: i32) -> (i32, i32) {
    %c0_i32 = arith.constant 0 : i32
    %c0_i32_0 = arith.constant 0 : i32
    %c0_i32_1 = arith.constant 0 : i32
    return %c0_i32, %c0_i32_0 : i32, i32
  }
  func.func @transform_28(%arg0: i32) -> (i32, i32) {
    %c0_i32 = arith.constant 0 : i32
    %c0_i32_0 = arith.constant 0 : i32
    %c0_i32_1 = arith.constant 0 : i32
    return %c0_i32, %c0_i32_0 : i32, i32
  }
  func.func @transform_29(%arg0: i32) -> (i32, i32) {
    %c0_i32 = arith.constant 0 : i32
    %c0_i32_0 = arith.constant 0 : i32
    %c0_i32_1 = arith.constant 0 : i32
    return %c0_i32, %c0_i32_0 : i32, i32
  }
  func.func @transform_30(%arg0: i32) -> (i32, i32) {
    %c0_i32 = arith.constant 0 : i32
    %c0_i32_0 = arith.constant 0 : i32
    %c0_i32_1 = arith.constant 0 : i32
    return %c0_i32, %c0_i32_0 : i32, i32
  }
  func.func @transform_31(%arg0: i32) -> (i32, i32) {
    %c0_i32 = arith.constant 0 : i32
    %c0_i32_0 = arith.constant 0 : i32
    %c0_i32_1 = arith.constant 0 : i32
    return %c0_i32, %c0_i32_0 : i32, i32
  }
  func.func @transform_32(%arg0: i32) -> (i32, i32, i32) {
    %c0_i32 = arith.constant 0 : i32
    %c0_i32_0 = arith.constant 0 : i32
    %c0_i32_1 = arith.constant 0 : i32
    return %arg0, %c0_i32, %c0_i32_0 : i32, i32, i32
  }
}

</mosaic_0001>

<llo_original>
// kernel: unet_forward.1
$region0: #{unet_forward.1}
  #allocation0 [shape = 'u32[]', space=smem, size = 0x4, offset = 0x4, fixed_abs, tag = 'smem constant byte address 0x4 - core index']
  #allocation1 [shape = 'u32[144,128]{1,0:T(1,128)}', space=vmem, size = 0x12000, scoped, tag = 'internal scratch']
  %s0 = inlined_call_operand.smem [shape: u32[33], index: -1, kind: input, shape index: {}]
  %s1 = sld [smem:[%s0]]
  %s2 = scalar_lea.smem %s0, 1
  %s3 = sld [smem:[%s2]]
  %s4 = scalar_lea.smem %s0, 2
  %s5 = sld [smem:[%s4]]
  %s6 = scalar_lea.smem %s0, 3
  %s7 = sld [smem:[%s6]]
  %s8 = scalar_lea.smem %s0, 4
  %s9 = sld [smem:[%s8]]
  %s10 = scalar_lea.smem %s0, 5
  %s11 = sld [smem:[%s10]]
  %s12 = scalar_lea.smem %s0, 6
  %s13 = sld [smem:[%s12]]
  %s14 = scalar_lea.smem %s0, 7
  %s15 = sld [smem:[%s14]]
  %s16 = scalar_lea.smem %s0, 8
  %s17 = sld [smem:[%s16]]
  %s18 = scalar_lea.smem %s0, 9
  %s19 = sld [smem:[%s18]]
  %s20 = scalar_lea.smem %s0, 10
  %s21 = sld [smem:[%s20]]
  %s22 = scalar_lea.smem %s0, 11
  %s23 = sld [smem:[%s22]]
  %s24 = scalar_lea.smem %s0, 12
  %s25 = sld [smem:[%s24]]
  %s26 = scalar_lea.smem %s0, 13
  %s27 = sld [smem:[%s26]]
  %s28 = scalar_lea.smem %s0, 14
  %s29 = sld [smem:[%s28]]
  %s30 = scalar_lea.smem %s0, 15
  %s31 = sld [smem:[%s30]]
  %s32 = scalar_lea.smem %s0, 16
  %s33 = sld [smem:[%s32]]
  %s34 = scalar_lea.smem %s0, 17
  %s35 = sld [smem:[%s34]]
  %s36 = scalar_lea.smem %s0, 18
  %s37 = sld [smem:[%s36]]
  %s38 = scalar_lea.smem %s0, 19
  %s39 = sld [smem:[%s38]]
  %s40 = scalar_lea.smem %s0, 20
  %s41 = sld [smem:[%s40]]
  %s42 = scalar_lea.smem %s0, 21
  %s43 = sld [smem:[%s42]]
  %s44 = scalar_lea.smem %s0, 22
  %s45 = sld [smem:[%s44]]
  %s46 = scalar_lea.smem %s0, 23
  %s47 = sld [smem:[%s46]]
  %s48 = scalar_lea.smem %s0, 24
  %s49 = sld [smem:[%s48]]
  %s50 = scalar_lea.smem %s0, 25
  %s51 = sld [smem:[%s50]]
  %s52 = scalar_lea.smem %s0, 26
  %s53 = sld [smem:[%s52]]
  %s54 = scalar_lea.smem %s0, 27
  %s55 = sld [smem:[%s54]]
  %s56 = scalar_lea.smem %s0, 28
  %s57 = sld [smem:[%s56]]
  %s58 = scalar_lea.smem %s0, 29
  %s59 = sld [smem:[%s58]]
  %s60 = scalar_lea.smem %s0, 30
  %s61 = sld [smem:[%s60]]
  %s62 = scalar_lea.smem %s0, 31
  %s63 = sld [smem:[%s62]]
  %s64 = scalar_lea.smem %s0, 32
  %s65 = sld [smem:[%s64]]
  %s66 = sld [smem:[#allocation0]]
  $region161: #{unet_forward.1} parent=0
    _
  %s68 = ssub.s32 1, %s66
  %s69 = scalar_select 0, %s68, %s66
  loop: start=0, step=1, limit=4
  $region2: #{unet_forward.1} parent=0 // loop_pre_header
    _
  $region3: #{unet_forward.1} parent=0 // loop_header
    %s71 = sphi 0, %s75
    %p72 = scmp.ge.s32.totalorder %s71, 4
    %s81 = sphi 0, %s83
    %s84 = sphi 0, %s81
    %s85 = sphi 0, %s84
    %s101 = sphi 0, %s85
    %s107 = sphi 0, %s109
    %s110 = sphi 0, %s107
    %s111 = sphi 0, %s110
    %s127 = sphi 0, %s111
    %s133 = sphi 0, %s135
    %s136 = sphi 0, %s133
    %s137 = sphi 0, %s136
    %s153 = sphi 0, %s137
    %s157 = sphi 0, %s157
    %s159 = sphi 0, %s157
    %s160 = sphi 0, %s159
    %s174 = sphi 0, %s160
    %s178 = sphi 0, %s178
    %s180 = sphi 0, %s178
    %s181 = sphi 0, %s180
    %s195 = sphi 0, %s181
    %s199 = sphi 0, %s199
    %s201 = sphi 0, %s199
    %s202 = sphi 0, %s201
    %s216 = sphi 0, %s202
    %s220 = sphi 0, %s220
    %s222 = sphi 0, %s220
    %s223 = sphi 0, %s222
    %s237 = sphi 0, %s223
    %s241 = sphi 0, %s241
    %s243 = sphi 0, %s241
    %s244 = sphi 0, %s243
    %s258 = sphi 0, %s244
    %s262 = sphi 0, %s262
    %s264 = sphi 0, %s262
    %s265 = sphi 0, %s264
    %s279 = sphi 0, %s265
    %s283 = sphi 0, %s283
    %s285 = sphi 0, %s283
    %s286 = sphi 0, %s285
    %s300 = sphi 0, %s286
    %s304 = sphi 0, %s304
    %s306 = sphi 0, %s304
    %s307 = sphi 0, %s306
    %s321 = sphi 0, %s307
    %s325 = sphi 0, %s325
    %s327 = sphi 0, %s325
    %s328 = sphi 0, %s327
    %s342 = sphi 0, %s328
    %s346 = sphi 0, %s346
    %s348 = sphi 0, %s346
    %s349 = sphi 0, %s348
    %s363 = sphi 0, %s349
    %s367 = sphi 0, %s367
    %s369 = sphi 0, %s367
    %s370 = sphi 0, %s369
    %s384 = sphi 0, %s370
    %s388 = sphi 0, %s388
    %s390 = sphi 0, %s388
    %s391 = sphi 0, %s390
    %s405 = sphi 0, %s391
    %s409 = sphi 0, %s409
    %s411 = sphi 0, %s409
    %s412 = sphi 0, %s411
    %s426 = sphi 0, %s412
    %s430 = sphi 0, %s430
    %s432 = sphi 0, %s430
    %s433 = sphi 0, %s432
    %s447 = sphi 0, %s433
    %s451 = sphi 0, %s451
    %s453 = sphi 0, %s451
    %s454 = sphi 0, %s453
    %s468 = sphi 0, %s454
    %s472 = sphi 0, %s472
    %s474 = sphi 0, %s472
    %s475 = sphi 0, %s474
    %s489 = sphi 0, %s475
    %s493 = sphi 0, %s493
    %s495 = sphi 0, %s493
    %s496 = sphi 0, %s495
    %s510 = sphi 0, %s496
    %s514 = sphi 0, %s514
    %s516 = sphi 0, %s514
    %s517 = sphi 0, %s516
    %s531 = sphi 0, %s517
    %s535 = sphi 0, %s535
    %s537 = sphi 0, %s535
    %s538 = sphi 0, %s537
    %s552 = sphi 0, %s538
    %s556 = sphi 0, %s556
    %s558 = sphi 0, %s556
    %s559 = sphi 0, %s558
    %s573 = sphi 0, %s559
    %s577 = sphi 0, %s577
    %s579 = sphi 0, %s577
    %s580 = sphi 0, %s579
    %s594 = sphi 0, %s580
    %s598 = sphi 0, %s598
    %s600 = sphi 0, %s598
    %s601 = sphi 0, %s600
    %s615 = sphi 0, %s601
    %s619 = sphi 0, %s619
    %s621 = sphi 0, %s619
    %s622 = sphi 0, %s621
    %s636 = sphi 0, %s622
    %s640 = sphi 0, %s640
    %s642 = sphi 0, %s640
    %s643 = sphi 0, %s642
    %s657 = sphi 0, %s643
    %s661 = sphi 0, %s661
    %s663 = sphi 0, %s661
    %s664 = sphi 0, %s663
    %s678 = sphi 0, %s664
    %s682 = sphi 0, %s682
    %s684 = sphi 0, %s682
    %s685 = sphi 0, %s684
    %s699 = sphi 0, %s685
    %s703 = sphi 0, %s703
    %s705 = sphi 0, %s703
    %s706 = sphi 0, %s705
    %s720 = sphi 0, %s706
    %s724 = sphi 0, %s724
    %s726 = sphi 0, %s724
    %s727 = sphi 0, %s726
    %s741 = sphi 0, %s727
    %s745 = sphi 0, %s745
    %s747 = sphi 0, %s745
    %s748 = sphi 0, %s747
    %s762 = sphi 0, %s748
    %s768 = sphi 0, %s770
    %s771 = sphi 0, %s768
    %s772 = sphi 0, %s771
    %s788 = sphi 0, %s772
  $region4: #{unet_forward.1} parent=0 // loop_header_branch
    %74 = sbr.rel (%p72) target = $region8
  $region5: #{unet_forward.1} parent=0 // loop_body
    %s76 = ssub.s32 %s71, 1
    %s77 = ssub.s32 %s71, 2
    %s78 = sadd.s32 %s71, 1
    %s79 = ssub.s32 %s71, %s78
    %p80 = scmp.eq.s32.totalorder %s79, 0
    %s82 = sadd.s32 %s81, 1
    %s83 = scalar_select %p80, %s81, %s82
    %p86 = pneg %p80
    %p87 = scmp.eq.s32.totalorder %s71, 1
    %p88 = por %p86, %p87
    %p89 = scmp.ne.s32.totalorder %s81, %s84
    %p90 = scmp.eq.s32.totalorder %s71, 0
    %p91 = por %p89, %p90
    %p92 = scmp.ne.s32.totalorder %s81, %s84
    %p93 = scmp.eq.s32.totalorder %s76, 1
    %p94 = por %p92, %p93
    %p95 = scmp.ne.s32.totalorder %s84, %s85
    %p96 = scmp.eq.s32.totalorder %s76, 0
    %p97 = por %p95, %p96
    %p98 = scmp.ne.s32.totalorder %s84, %s85
    %p99 = scmp.eq.s32.totalorder %s77, 1
    %p100 = por %p98, %p99
    %p102 = scmp.ne.s32.totalorder %s85, %s101
    %p103 = scmp.eq.s32.totalorder %s77, 0
    %p104 = por %p102, %p103
    %s105 = ssub.s32 %s71, %s78
    %p106 = scmp.eq.s32.totalorder %s105, 0
    %s108 = sadd.s32 %s107, 1
    %s109 = scalar_select %p106, %s107, %s108
    %p112 = pneg %p106
    %p113 = scmp.eq.s32.totalorder %s71, 1
    %p114 = por %p112, %p113
    %p115 = scmp.ne.s32.totalorder %s107, %s110
    %p116 = scmp.eq.s32.totalorder %s71, 0
    %p117 = por %p115, %p116
    %p118 = scmp.ne.s32.totalorder %s107, %s110
    %p119 = scmp.eq.s32.totalorder %s76, 1
    %p120 = por %p118, %p119
    %p121 = scmp.ne.s32.totalorder %s110, %s111
    %p122 = scmp.eq.s32.totalorder %s76, 0
    %p123 = por %p121, %p122
    %p124 = scmp.ne.s32.totalorder %s110, %s111
    %p125 = scmp.eq.s32.totalorder %s77, 1
    %p126 = por %p124, %p125
    %p128 = scmp.ne.s32.totalorder %s111, %s127
    %p129 = scmp.eq.s32.totalorder %s77, 0
    %p130 = por %p128, %p129
    %s131 = ssub.s32 %s71, %s78
    %p132 = scmp.eq.s32.totalorder %s131, 0
    %s134 = sadd.s32 %s133, 1
    %s135 = scalar_select %p132, %s133, %s134
    %p138 = pneg %p132
    %p139 = scmp.eq.s32.totalorder %s71, 1
    %p140 = por %p138, %p139
    %p141 = scmp.ne.s32.totalorder %s133, %s136
    %p142 = scmp.eq.s32.totalorder %s71, 0
    %p143 = por %p141, %p142
    %p144 = scmp.ne.s32.totalorder %s133, %s136
    %p145 = scmp.eq.s32.totalorder %s76, 1
    %p146 = por %p144, %p145
    %p147 = scmp.ne.s32.totalorder %s136, %s137
    %p148 = scmp.eq.s32.totalorder %s76, 0
    %p149 = por %p147, %p148
    %p150 = scmp.ne.s32.totalorder %s136, %s137
    %p151 = scmp.eq.s32.totalorder %s77, 1
    %p152 = por %p150, %p151
    %p154 = scmp.ne.s32.totalorder %s137, %s153
    %p155 = scmp.eq.s32.totalorder %s77, 0
    %p156 = por %p154, %p155
    %s158 = sadd.s32 %s157, 1
    %p161 = scmp.eq.s32.totalorder %s71, 1
    %p162 = scmp.ne.s32.totalorder %s157, %s159
    %p163 = scmp.eq.s32.totalorder %s71, 0
    %p164 = por %p162, %p163
    %p165 = scmp.ne.s32.totalorder %s157, %s159
    %p166 = scmp.eq.s32.totalorder %s76, 1
    %p167 = por %p165, %p166
    %p168 = scmp.ne.s32.totalorder %s159, %s160
    %p169 = scmp.eq.s32.totalorder %s76, 0
    %p170 = por %p168, %p169
    %p171 = scmp.ne.s32.totalorder %s159, %s160
    %p172 = scmp.eq.s32.totalorder %s77, 1
    %p173 = por %p171, %p172
    %p175 = scmp.ne.s32.totalorder %s160, %s174
    %p176 = scmp.eq.s32.totalorder %s77, 0
    %p177 = por %p175, %p176
    %s179 = sadd.s32 %s178, 1
    %p182 = scmp.eq.s32.totalorder %s71, 1
    %p183 = scmp.ne.s32.totalorder %s178, %s180
    %p184 = scmp.eq.s32.totalorder %s71, 0
    %p185 = por %p183, %p184
    %p186 = scmp.ne.s32.totalorder %s178, %s180
    %p187 = scmp.eq.s32.totalorder %s76, 1
    %p188 = por %p186, %p187
    %p189 = scmp.ne.s32.totalorder %s180, %s181
    %p190 = scmp.eq.s32.totalorder %s76, 0
    %p191 = por %p189, %p190
    %p192 = scmp.ne.s32.totalorder %s180, %s181
    %p193 = scmp.eq.s32.totalorder %s77, 1
    %p194 = por %p192, %p193
    %p196 = scmp.ne.s32.totalorder %s181, %s195
    %p197 = scmp.eq.s32.totalorder %s77, 0
    %p198 = por %p196, %p197
    %s200 = sadd.s32 %s199, 1
    %p203 = scmp.eq.s32.totalorder %s71, 1
    %p204 = scmp.ne.s32.totalorder %s199, %s201
    %p205 = scmp.eq.s32.totalorder %s71, 0
    %p206 = por %p204, %p205
    %p207 = scmp.ne.s32.totalorder %s199, %s201
    %p208 = scmp.eq.s32.totalorder %s76, 1
    %p209 = por %p207, %p208
    %p210 = scmp.ne.s32.totalorder %s201, %s202
    %p211 = scmp.eq.s32.totalorder %s76, 0
    %p212 = por %p210, %p211
    %p213 = scmp.ne.s32.totalorder %s201, %s202
    %p214 = scmp.eq.s32.totalorder %s77, 1
    %p215 = por %p213, %p214
    %p217 = scmp.ne.s32.totalorder %s202, %s216
    %p218 = scmp.eq.s32.totalorder %s77, 0
    %p219 = por %p217, %p218
    %s221 = sadd.s32 %s220, 1
    %p224 = scmp.eq.s32.totalorder %s71, 1
    %p225 = scmp.ne.s32.totalorder %s220, %s222
    %p226 = scmp.eq.s32.totalorder %s71, 0
    %p227 = por %p225, %p226
    %p228 = scmp.ne.s32.totalorder %s220, %s222
    %p229 = scmp.eq.s32.totalorder %s76, 1
    %p230 = por %p228, %p229
    %p231 = scmp.ne.s32.totalorder %s222, %s223
    %p232 = scmp.eq.s32.totalorder %s76, 0
    %p233 = por %p231, %p232
    %p234 = scmp.ne.s32.totalorder %s222, %s223
    %p235 = scmp.eq.s32.totalorder %s77, 1
    %p236 = por %p234, %p235
    %p238 = scmp.ne.s32.totalorder %s223, %s237
    %p239 = scmp.eq.s32.totalorder %s77, 0
    %p240 = por %p238, %p239
    %s242 = sadd.s32 %s241, 1
    %p245 = scmp.eq.s32.totalorder %s71, 1
    %p246 = scmp.ne.s32.totalorder %s241, %s243
    %p247 = scmp.eq.s32.totalorder %s71, 0
    %p248 = por %p246, %p247
    %p249 = scmp.ne.s32.totalorder %s241, %s243
    %p250 = scmp.eq.s32.totalorder %s76, 1
    %p251 = por %p249, %p250
    %p252 = scmp.ne.s32.totalorder %s243, %s244
    %p253 = scmp.eq.s32.totalorder %s76, 0
    %p254 = por %p252, %p253
    %p255 = scmp.ne.s32.totalorder %s243, %s244
    %p256 = scmp.eq.s32.totalorder %s77, 1
    %p257 = por %p255, %p256
    %p259 = scmp.ne.s32.totalorder %s244, %s258
    %p260 = scmp.eq.s32.totalorder %s77, 0
    %p261 = por %p259, %p260
    %s263 = sadd.s32 %s262, 1
    %p266 = scmp.eq.s32.totalorder %s71, 1
    %p267 = scmp.ne.s32.totalorder %s262, %s264
    %p268 = scmp.eq.s32.totalorder %s71, 0
    %p269 = por %p267, %p268
    %p270 = scmp.ne.s32.totalorder %s262, %s264
    %p271 = scmp.eq.s32.totalorder %s76, 1
    %p272 = por %p270, %p271
    %p273 = scmp.ne.s32.totalorder %s264, %s265
    %p274 = scmp.eq.s32.totalorder %s76, 0
    %p275 = por %p273, %p274
    %p276 = scmp.ne.s32.totalorder %s264, %s265
    %p277 = scmp.eq.s32.totalorder %s77, 1
    %p278 = por %p276, %p277
    %p280 = scmp.ne.s32.totalorder %s265, %s279
    %p281 = scmp.eq.s32.totalorder %s77, 0
    %p282 = por %p280, %p281
    %s284 = sadd.s32 %s283, 1
    %p287 = scmp.eq.s32.totalorder %s71, 1
    %p288 = scmp.ne.s32.totalorder %s283, %s285
    %p289 = scmp.eq.s32.totalorder %s71, 0
    %p290 = por %p288, %p289
    %p291 = scmp.ne.s32.totalorder %s283, %s285
    %p292 = scmp.eq.s32.totalorder %s76, 1
    %p293 = por %p291, %p292
    %p294 = scmp.ne.s32.totalorder %s285, %s286
    %p295 = scmp.eq.s32.totalorder %s76, 0
    %p296 = por %p294, %p295
    %p297 = scmp.ne.s32.totalorder %s285, %s286
    %p298 = scmp.eq.s32.totalorder %s77, 1
    %p299 = por %p297, %p298
    %p301 = scmp.ne.s32.totalorder %s286, %s300
    %p302 = scmp.eq.s32.totalorder %s77, 0
    %p303 = por %p301, %p302
    %s305 = sadd.s32 %s304, 1
    %p308 = scmp.eq.s32.totalorder %s71, 1
    %p309 = scmp.ne.s32.totalorder %s304, %s306
    %p310 = scmp.eq.s32.totalorder %s71, 0
    %p311 = por %p309, %p310
    %p312 = scmp.ne.s32.totalorder %s304, %s306
    %p313 = scmp.eq.s32.totalorder %s76, 1
    %p314 = por %p312, %p313
    %p315 = scmp.ne.s32.totalorder %s306, %s307
    %p316 = scmp.eq.s32.totalorder %s76, 0
    %p317 = por %p315, %p316
    %p318 = scmp.ne.s32.totalorder %s306, %s307
    %p319 = scmp.eq.s32.totalorder %s77, 1
    %p320 = por %p318, %p319
    %p322 = scmp.ne.s32.totalorder %s307, %s321
    %p323 = scmp.eq.s32.totalorder %s77, 0
    %p324 = por %p322, %p323
    %s326 = sadd.s32 %s325, 1
    %p329 = scmp.eq.s32.totalorder %s71, 1
    %p330 = scmp.ne.s32.totalorder %s325, %s327
    %p331 = scmp.eq.s32.totalorder %s71, 0
    %p332 = por %p330, %p331
    %p333 = scmp.ne.s32.totalorder %s325, %s327
    %p334 = scmp.eq.s32.totalorder %s76, 1
    %p335 = por %p333, %p334
    %p336 = scmp.ne.s32.totalorder %s327, %s328
    %p337 = scmp.eq.s32.totalorder %s76, 0
    %p338 = por %p336, %p337
    %p339 = scmp.ne.s32.totalorder %s327, %s328
    %p340 = scmp.eq.s32.totalorder %s77, 1
    %p341 = por %p339, %p340
    %p343 = scmp.ne.s32.totalorder %s328, %s342
    %p344 = scmp.eq.s32.totalorder %s77, 0
    %p345 = por %p343, %p344
    %s347 = sadd.s32 %s346, 1
    %p350 = scmp.eq.s32.totalorder %s71, 1
    %p351 = scmp.ne.s32.totalorder %s346, %s348
    %p352 = scmp.eq.s32.totalorder %s71, 0
    %p353 = por %p351, %p352
    %p354 = scmp.ne.s32.totalorder %s346, %s348
    %p355 = scmp.eq.s32.totalorder %s76, 1
    %p356 = por %p354, %p355
    %p357 = scmp.ne.s32.totalorder %s348, %s349
    %p358 = scmp.eq.s32.totalorder %s76, 0
    %p359 = por %p357, %p358
    %p360 = scmp.ne.s32.totalorder %s348, %s349
    %p361 = scmp.eq.s32.totalorder %s77, 1
    %p362 = por %p360, %p361
    %p364 = scmp.ne.s32.totalorder %s349, %s363
    %p365 = scmp.eq.s32.totalorder %s77, 0
    %p366 = por %p364, %p365
    %s368 = sadd.s32 %s367, 1
    %p371 = scmp.eq.s32.totalorder %s71, 1
    %p372 = scmp.ne.s32.totalorder %s367, %s369
    %p373 = scmp.eq.s32.totalorder %s71, 0
    %p374 = por %p372, %p373
    %p375 = scmp.ne.s32.totalorder %s367, %s369
    %p376 = scmp.eq.s32.totalorder %s76, 1
    %p377 = por %p375, %p376
    %p378 = scmp.ne.s32.totalorder %s369, %s370
    %p379 = scmp.eq.s32.totalorder %s76, 0
    %p380 = por %p378, %p379
    %p381 = scmp.ne.s32.totalorder %s369, %s370
    %p382 = scmp.eq.s32.totalorder %s77, 1
    %p383 = por %p381, %p382
    %p385 = scmp.ne.s32.totalorder %s370, %s384
    %p386 = scmp.eq.s32.totalorder %s77, 0
    %p387 = por %p385, %p386
    %s389 = sadd.s32 %s388, 1
    %p392 = scmp.eq.s32.totalorder %s71, 1
    %p393 = scmp.ne.s32.totalorder %s388, %s390
    %p394 = scmp.eq.s32.totalorder %s71, 0
    %p395 = por %p393, %p394
    %p396 = scmp.ne.s32.totalorder %s388, %s390
    %p397 = scmp.eq.s32.totalorder %s76, 1
    %p398 = por %p396, %p397
    %p399 = scmp.ne.s32.totalorder %s390, %s391
    %p400 = scmp.eq.s32.totalorder %s76, 0
    %p401 = por %p399, %p400
    %p402 = scmp.ne.s32.totalorder %s390, %s391
    %p403 = scmp.eq.s32.totalorder %s77, 1
    %p404 = por %p402, %p403
    %p406 = scmp.ne.s32.totalorder %s391, %s405
    %p407 = scmp.eq.s32.totalorder %s77, 0
    %p408 = por %p406, %p407
    %s410 = sadd.s32 %s409, 1
    %p413 = scmp.eq.s32.totalorder %s71, 1
    %p414 = scmp.ne.s32.totalorder %s409, %s411
    %p415 = scmp.eq.s32.totalorder %s71, 0
    %p416 = por %p414, %p415
    %p417 = scmp.ne.s32.totalorder %s409, %s411
    %p418 = scmp.eq.s32.totalorder %s76, 1
    %p419 = por %p417, %p418
    %p420 = scmp.ne.s32.totalorder %s411, %s412
    %p421 = scmp.eq.s32.totalorder %s76, 0
    %p422 = por %p420, %p421
    %p423 = scmp.ne.s32.totalorder %s411, %s412
    %p424 = scmp.eq.s32.totalorder %s77, 1
    %p425 = por %p423, %p424
    %p427 = scmp.ne.s32.totalorder %s412, %s426
    %p428 = scmp.eq.s32.totalorder %s77, 0
    %p429 = por %p427, %p428
    %s431 = sadd.s32 %s430, 1
    %p434 = scmp.eq.s32.totalorder %s71, 1
    %p435 = scmp.ne.s32.totalorder %s430, %s432
    %p436 = scmp.eq.s32.totalorder %s71, 0
    %p437 = por %p435, %p436
    %p438 = scmp.ne.s32.totalorder %s430, %s432
    %p439 = scmp.eq.s32.totalorder %s76, 1
    %p440 = por %p438, %p439
    %p441 = scmp.ne.s32.totalorder %s432, %s433
    %p442 = scmp.eq.s32.totalorder %s76, 0
    %p443 = por %p441, %p442
    %p444 = scmp.ne.s32.totalorder %s432, %s433
    %p445 = scmp.eq.s32.totalorder %s77, 1
    %p446 = por %p444, %p445
    %p448 = scmp.ne.s32.totalorder %s433, %s447
    %p449 = scmp.eq.s32.totalorder %s77, 0
    %p450 = por %p448, %p449
    %s452 = sadd.s32 %s451, 1
    %p455 = scmp.eq.s32.totalorder %s71, 1
    %p456 = scmp.ne.s32.totalorder %s451, %s453
    %p457 = scmp.eq.s32.totalorder %s71, 0
    %p458 = por %p456, %p457
    %p459 = scmp.ne.s32.totalorder %s451, %s453
    %p460 = scmp.eq.s32.totalorder %s76, 1
    %p461 = por %p459, %p460
    %p462 = scmp.ne.s32.totalorder %s453, %s454
    %p463 = scmp.eq.s32.totalorder %s76, 0
    %p464 = por %p462, %p463
    %p465 = scmp.ne.s32.totalorder %s453, %s454
    %p466 = scmp.eq.s32.totalorder %s77, 1
    %p467 = por %p465, %p466
    %p469 = scmp.ne.s32.totalorder %s454, %s468
    %p470 = scmp.eq.s32.totalorder %s77, 0
    %p471 = por %p469, %p470
    %s473 = sadd.s32 %s472, 1
    %p476 = scmp.eq.s32.totalorder %s71, 1
    %p477 = scmp.ne.s32.totalorder %s472, %s474
    %p478 = scmp.eq.s32.totalorder %s71, 0
    %p479 = por %p477, %p478
    %p480 = scmp.ne.s32.totalorder %s472, %s474
    %p481 = scmp.eq.s32.totalorder %s76, 1
    %p482 = por %p480, %p481
    %p483 = scmp.ne.s32.totalorder %s474, %s475
    %p484 = scmp.eq.s32.totalorder %s76, 0
    %p485 = por %p483, %p484
    %p486 = scmp.ne.s32.totalorder %s474, %s475
    %p487 = scmp.eq.s32.totalorder %s77, 1
    %p488 = por %p486, %p487
    %p490 = scmp.ne.s32.totalorder %s475, %s489
    %p491 = scmp.eq.s32.totalorder %s77, 0
    %p492 = por %p490, %p491
    %s494 = sadd.s32 %s493, 1
    %p497 = scmp.eq.s32.totalorder %s71, 1
    %p498 = scmp.ne.s32.totalorder %s493, %s495
    %p499 = scmp.eq.s32.totalorder %s71, 0
    %p500 = por %p498, %p499
    %p501 = scmp.ne.s32.totalorder %s493, %s495
    %p502 = scmp.eq.s32.totalorder %s76, 1
    %p503 = por %p501, %p502
    %p504 = scmp.ne.s32.totalorder %s495, %s496
    %p505 = scmp.eq.s32.totalorder %s76, 0
    %p506 = por %p504, %p505
    %p507 = scmp.ne.s32.totalorder %s495, %s496
    %p508 = scmp.eq.s32.totalorder %s77, 1
    %p509 = por %p507, %p508
    %p511 = scmp.ne.s32.totalorder %s496, %s510
    %p512 = scmp.eq.s32.totalorder %s77, 0
    %p513 = por %p511, %p512
    %s515 = sadd.s32 %s514, 1
    %p518 = scmp.eq.s32.totalorder %s71, 1
    %p519 = scmp.ne.s32.totalorder %s514, %s516
    %p520 = scmp.eq.s32.totalorder %s71, 0
    %p521 = por %p519, %p520
    %p522 = scmp.ne.s32.totalorder %s514, %s516
    %p523 = scmp.eq.s32.totalorder %s76, 1
    %p524 = por %p522, %p523
    %p525 = scmp.ne.s32.totalorder %s516, %s517
    %p526 = scmp.eq.s32.totalorder %s76, 0
    %p527 = por %p525, %p526
    %p528 = scmp.ne.s32.totalorder %s516, %s517
    %p529 = scmp.eq.s32.totalorder %s77, 1
    %p530 = por %p528, %p529
    %p532 = scmp.ne.s32.totalorder %s517, %s531
    %p533 = scmp.eq.s32.totalorder %s77, 0
    %p534 = por %p532, %p533
    %s536 = sadd.s32 %s535, 1
    %p539 = scmp.eq.s32.totalorder %s71, 1
    %p540 = scmp.ne.s32.totalorder %s535, %s537
    %p541 = scmp.eq.s32.totalorder %s71, 0
    %p542 = por %p540, %p541
    %p543 = scmp.ne.s32.totalorder %s535, %s537
    %p544 = scmp.eq.s32.totalorder %s76, 1
    %p545 = por %p543, %p544
    %p546 = scmp.ne.s32.totalorder %s537, %s538
    %p547 = scmp.eq.s32.totalorder %s76, 0
    %p548 = por %p546, %p547
    %p549 = scmp.ne.s32.totalorder %s537, %s538
    %p550 = scmp.eq.s32.totalorder %s77, 1
    %p551 = por %p549, %p550
    %p553 = scmp.ne.s32.totalorder %s538, %s552
    %p554 = scmp.eq.s32.totalorder %s77, 0
    %p555 = por %p553, %p554
    %s557 = sadd.s32 %s556, 1
    %p560 = scmp.eq.s32.totalorder %s71, 1
    %p561 = scmp.ne.s32.totalorder %s556, %s558
    %p562 = scmp.eq.s32.totalorder %s71, 0
    %p563 = por %p561, %p562
    %p564 = scmp.ne.s32.totalorder %s556, %s558
    %p565 = scmp.eq.s32.totalorder %s76, 1
    %p566 = por %p564, %p565
    %p567 = scmp.ne.s32.totalorder %s558, %s559
    %p568 = scmp.eq.s32.totalorder %s76, 0
    %p569 = por %p567, %p568
    %p570 = scmp.ne.s32.totalorder %s558, %s559
    %p571 = scmp.eq.s32.totalorder %s77, 1
    %p572 = por %p570, %p571
    %p574 = scmp.ne.s32.totalorder %s559, %s573
    %p575 = scmp.eq.s32.totalorder %s77, 0
    %p576 = por %p574, %p575
    %s578 = sadd.s32 %s577, 1
    %p581 = scmp.eq.s32.totalorder %s71, 1
    %p582 = scmp.ne.s32.totalorder %s577, %s579
    %p583 = scmp.eq.s32.totalorder %s71, 0
    %p584 = por %p582, %p583
    %p585 = scmp.ne.s32.totalorder %s577, %s579
    %p586 = scmp.eq.s32.totalorder %s76, 1
    %p587 = por %p585, %p586
    %p588 = scmp.ne.s32.totalorder %s579, %s580
    %p589 = scmp.eq.s32.totalorder %s76, 0
    %p590 = por %p588, %p589
    %p591 = scmp.ne.s32.totalorder %s579, %s580
    %p592 = scmp.eq.s32.totalorder %s77, 1
    %p593 = por %p591, %p592
    %p595 = scmp.ne.s32.totalorder %s580, %s594
    %p596 = scmp.eq.s32.totalorder %s77, 0
    %p597 = por %p595, %p596
    %s599 = sadd.s32 %s598, 1
    %p602 = scmp.eq.s32.totalorder %s71, 1
    %p603 = scmp.ne.s32.totalorder %s598, %s600
    %p604 = scmp.eq.s32.totalorder %s71, 0
    %p605 = por %p603, %p604
    %p606 = scmp.ne.s32.totalorder %s598, %s600
    %p607 = scmp.eq.s32.totalorder %s76, 1
    %p608 = por %p606, %p607
    %p609 = scmp.ne.s32.totalorder %s600, %s601
    %p610 = scmp.eq.s32.totalorder %s76, 0
    %p611 = por %p609, %p610
    %p612 = scmp.ne.s32.totalorder %s600, %s601
    %p613 = scmp.eq.s32.totalorder %s77, 1
    %p614 = por %p612, %p613
    %p616 = scmp.ne.s32.totalorder %s601, %s615
    %p617 = scmp.eq.s32.totalorder %s77, 0
    %p618 = por %p616, %p617
    %s620 = sadd.s32 %s619, 1
    %p623 = scmp.eq.s32.totalorder %s71, 1
    %p624 = scmp.ne.s32.totalorder %s619, %s621
    %p625 = scmp.eq.s32.totalorder %s71, 0
    %p626 = por %p624, %p625
    %p627 = scmp.ne.s32.totalorder %s619, %s621
    %p628 = scmp.eq.s32.totalorder %s76, 1
    %p629 = por %p627, %p628
    %p630 = scmp.ne.s32.totalorder %s621, %s622
    %p631 = scmp.eq.s32.totalorder %s76, 0
    %p632 = por %p630, %p631
    %p633 = scmp.ne.s32.totalorder %s621, %s622
    %p634 = scmp.eq.s32.totalorder %s77, 1
    %p635 = por %p633, %p634
    %p637 = scmp.ne.s32.totalorder %s622, %s636
    %p638 = scmp.eq.s32.totalorder %s77, 0
    %p639 = por %p637, %p638
    %s641 = sadd.s32 %s640, 1
    %p644 = scmp.eq.s32.totalorder %s71, 1
    %p645 = scmp.ne.s32.totalorder %s640, %s642
    %p646 = scmp.eq.s32.totalorder %s71, 0
    %p647 = por %p645, %p646
    %p648 = scmp.ne.s32.totalorder %s640, %s642
    %p649 = scmp.eq.s32.totalorder %s76, 1
    %p650 = por %p648, %p649
    %p651 = scmp.ne.s32.totalorder %s642, %s643
    %p652 = scmp.eq.s32.totalorder %s76, 0
    %p653 = por %p651, %p652
    %p654 = scmp.ne.s32.totalorder %s642, %s643
    %p655 = scmp.eq.s32.totalorder %s77, 1
    %p656 = por %p654, %p655
    %p658 = scmp.ne.s32.totalorder %s643, %s657
    %p659 = scmp.eq.s32.totalorder %s77, 0
    %p660 = por %p658, %p659
    %s662 = sadd.s32 %s661, 1
    %p665 = scmp.eq.s32.totalorder %s71, 1
    %p666 = scmp.ne.s32.totalorder %s661, %s663
    %p667 = scmp.eq.s32.totalorder %s71, 0
    %p668 = por %p666, %p667
    %p669 = scmp.ne.s32.totalorder %s661, %s663
    %p670 = scmp.eq.s32.totalorder %s76, 1
    %p671 = por %p669, %p670
    %p672 = scmp.ne.s32.totalorder %s663, %s664
    %p673 = scmp.eq.s32.totalorder %s76, 0
    %p674 = por %p672, %p673
    %p675 = scmp.ne.s32.totalorder %s663, %s664
    %p676 = scmp.eq.s32.totalorder %s77, 1
    %p677 = por %p675, %p676
    %p679 = scmp.ne.s32.totalorder %s664, %s678
    %p680 = scmp.eq.s32.totalorder %s77, 0
    %p681 = por %p679, %p680
    %s683 = sadd.s32 %s682, 1
    %p686 = scmp.eq.s32.totalorder %s71, 1
    %p687 = scmp.ne.s32.totalorder %s682, %s684
    %p688 = scmp.eq.s32.totalorder %s71, 0
    %p689 = por %p687, %p688
    %p690 = scmp.ne.s32.totalorder %s682, %s684
    %p691 = scmp.eq.s32.totalorder %s76, 1
    %p692 = por %p690, %p691
    %p693 = scmp.ne.s32.totalorder %s684, %s685
    %p694 = scmp.eq.s32.totalorder %s76, 0
    %p695 = por %p693, %p694
    %p696 = scmp.ne.s32.totalorder %s684, %s685
    %p697 = scmp.eq.s32.totalorder %s77, 1
    %p698 = por %p696, %p697
    %p700 = scmp.ne.s32.totalorder %s685, %s699
    %p701 = scmp.eq.s32.totalorder %s77, 0
    %p702 = por %p700, %p701
    %s704 = sadd.s32 %s703, 1
    %p707 = scmp.eq.s32.totalorder %s71, 1
    %p708 = scmp.ne.s32.totalorder %s703, %s705
    %p709 = scmp.eq.s32.totalorder %s71, 0
    %p710 = por %p708, %p709
    %p711 = scmp.ne.s32.totalorder %s703, %s705
    %p712 = scmp.eq.s32.totalorder %s76, 1
    %p713 = por %p711, %p712
    %p714 = scmp.ne.s32.totalorder %s705, %s706
    %p715 = scmp.eq.s32.totalorder %s76, 0
    %p716 = por %p714, %p715
    %p717 = scmp.ne.s32.totalorder %s705, %s706
    %p718 = scmp.eq.s32.totalorder %s77, 1
    %p719 = por %p717, %p718
    %p721 = scmp.ne.s32.totalorder %s706, %s720
    %p722 = scmp.eq.s32.totalorder %s77, 0
    %p723 = por %p721, %p722
    %s725 = sadd.s32 %s724, 1
    %p728 = scmp.eq.s32.totalorder %s71, 1
    %p729 = scmp.ne.s32.totalorder %s724, %s726
    %p730 = scmp.eq.s32.totalorder %s71, 0
    %p731 = por %p729, %p730
    %p732 = scmp.ne.s32.totalorder %s724, %s726
    %p733 = scmp.eq.s32.totalorder %s76, 1
    %p734 = por %p732, %p733
    %p735 = scmp.ne.s32.totalorder %s726, %s727
    %p736 = scmp.eq.s32.totalorder %s76, 0
    %p737 = por %p735, %p736
    %p738 = scmp.ne.s32.totalorder %s726, %s727
    %p739 = scmp.eq.s32.totalorder %s77, 1
    %p740 = por %p738, %p739
    %p742 = scmp.ne.s32.totalorder %s727, %s741
    %p743 = scmp.eq.s32.totalorder %s77, 0
    %p744 = por %p742, %p743
    %s746 = sadd.s32 %s745, 1
    %p749 = scmp.eq.s32.totalorder %s71, 1
    %p750 = scmp.ne.s32.totalorder %s745, %s747
    %p751 = scmp.eq.s32.totalorder %s71, 0
    %p752 = por %p750, %p751
    %p753 = scmp.ne.s32.totalorder %s745, %s747
    %p754 = scmp.eq.s32.totalorder %s76, 1
    %p755 = por %p753, %p754
    %p756 = scmp.ne.s32.totalorder %s747, %s748
    %p757 = scmp.eq.s32.totalorder %s76, 0
    %p758 = por %p756, %p757
    %p759 = scmp.ne.s32.totalorder %s747, %s748
    %p760 = scmp.eq.s32.totalorder %s77, 1
    %p761 = por %p759, %p760
    %p763 = scmp.ne.s32.totalorder %s748, %s762
    %p764 = scmp.eq.s32.totalorder %s77, 0
    %p765 = por %p763, %p764
    %s766 = ssub.s32 %s71, %s78
    %p767 = scmp.eq.s32.totalorder %s766, 0
    %s769 = sadd.s32 %s768, 1
    %s770 = scalar_select %p767, %s768, %s769
    %p773 = pneg %p767
    %p774 = scmp.eq.s32.totalorder %s71, 1
    %p775 = por %p773, %p774
    %p776 = scmp.ne.s32.totalorder %s768, %s771
    %p777 = scmp.eq.s32.totalorder %s71, 0
    %p778 = por %p776, %p777
    %p779 = scmp.ne.s32.totalorder %s768, %s771
    %p780 = scmp.eq.s32.totalorder %s76, 1
    %p781 = por %p779, %p780
    %p782 = scmp.ne.s32.totalorder %s771, %s772
    %p783 = scmp.eq.s32.totalorder %s76, 0
    %p784 = por %p782, %p783
    %p785 = scmp.ne.s32.totalorder %s771, %s772
    %p786 = scmp.eq.s32.totalorder %s77, 1
    %p787 = por %p785, %p786
    %p789 = scmp.ne.s32.totalorder %s772, %s788
    %p790 = scmp.eq.s32.totalorder %s77, 0
    %p791 = por %p789, %p790
    %p792 = scmp.le.s32.totalorder 1, %s71
    %p793 = scmp.lt.s32.totalorder %s71, 3
    %p794 = pnand %p792, %p793
    %p795 = pneg %p794
    // Predicated region
    $region9: #{unet_forward.1} parent=5 // pred_check
      _
    $region10: #{unet_forward.1} parent=5 // pred_check_branch
      %797 = sbr.rel (%p794) target = $region12
    $region11: #{unet_forward.1} parent=5 // pred_region
      %s798 = ssub.s32 %s71, 1
      // Predicated region
      $region13: #{unet_forward.1} parent=11 // pred_check
        %p799 = pneg %p170
      $region14: #{unet_forward.1} parent=11 // pred_check_branch
        %801 = sbr.rel (%p799) target = $region16
      $region15: #{unet_forward.1} parent=11 // pred_region
        _
      $region16: #{unet_forward.1} parent=11 // pred_fallthru
        _
      // Predicated region
      $region17: #{unet_forward.1} parent=11 // pred_check
        %p802 = pneg %p191
      $region18: #{unet_forward.1} parent=11 // pred_check_branch
        %804 = sbr.rel (%p802) target = $region20
      $region19: #{unet_forward.1} parent=11 // pred_region
        _
      $region20: #{unet_forward.1} parent=11 // pred_fallthru
        _
      // Predicated region
      $region21: #{unet_forward.1} parent=11 // pred_check
        %p805 = pneg %p212
      $region22: #{unet_forward.1} parent=11 // pred_check_branch
        %807 = sbr.rel (%p805) target = $region24
      $region23: #{unet_forward.1} parent=11 // pred_region
        _
      $region24: #{unet_forward.1} parent=11 // pred_fallthru
        _
      // Predicated region
      $region25: #{unet_forward.1} parent=11 // pred_check
        %p808 = pneg %p233
      $region26: #{unet_forward.1} parent=11 // pred_check_branch
        %810 = sbr.rel (%p808) target = $region28
      $region27: #{unet_forward.1} parent=11 // pred_region
        _
      $region28: #{unet_forward.1} parent=11 // pred_fallthru
        _
      // Predicated region
      $region29: #{unet_forward.1} parent=11 // pred_check
        %p811 = pneg %p254
      $region30: #{unet_forward.1} parent=11 // pred_check_branch
        %813 = sbr.rel (%p811) target = $region32
      $region31: #{unet_forward.1} parent=11 // pred_region
        _
      $region32: #{unet_forward.1} parent=11 // pred_fallthru
        _
      // Predicated region
      $region33: #{unet_forward.1} parent=11 // pred_check
        %p814 = pneg %p275
      $region34: #{unet_forward.1} parent=11 // pred_check_branch
        %816 = sbr.rel (%p814) target = $region36
      $region35: #{unet_forward.1} parent=11 // pred_region
        _
      $region36: #{unet_forward.1} parent=11 // pred_fallthru
        _
      // Predicated region
      $region37: #{unet_forward.1} parent=11 // pred_check
        %p817 = pneg %p296
      $region38: #{unet_forward.1} parent=11 // pred_check_branch
        %819 = sbr.rel (%p817) target = $region40
      $region39: #{unet_forward.1} parent=11 // pred_region
        _
      $region40: #{unet_forward.1} parent=11 // pred_fallthru
        _
      // Predicated region
      $region41: #{unet_forward.1} parent=11 // pred_check
        %p820 = pneg %p317
      $region42: #{unet_forward.1} parent=11 // pred_check_branch
        %822 = sbr.rel (%p820) target = $region44
      $region43: #{unet_forward.1} parent=11 // pred_region
        _
      $region44: #{unet_forward.1} parent=11 // pred_fallthru
        _
      // Predicated region
      $region45: #{unet_forward.1} parent=11 // pred_check
        %p823 = pneg %p338
      $region46: #{unet_forward.1} parent=11 // pred_check_branch
        %825 = sbr.rel (%p823) target = $region48
      $region47: #{unet_forward.1} parent=11 // pred_region
        _
      $region48: #{unet_forward.1} parent=11 // pred_fallthru
        _
      // Predicated region
      $region49: #{unet_forward.1} parent=11 // pred_check
        %p826 = pneg %p359
      $region50: #{unet_forward.1} parent=11 // pred_check_branch
        %828 = sbr.rel (%p826) target = $region52
      $region51: #{unet_forward.1} parent=11 // pred_region
        _
      $region52: #{unet_forward.1} parent=11 // pred_fallthru
        _
      // Predicated region
      $region53: #{unet_forward.1} parent=11 // pred_check
        %p829 = pneg %p380
      $region54: #{unet_forward.1} parent=11 // pred_check_branch
        %831 = sbr.rel (%p829) target = $region56
      $region55: #{unet_forward.1} parent=11 // pred_region
        _
      $region56: #{unet_forward.1} parent=11 // pred_fallthru
        _
      // Predicated region
      $region57: #{unet_forward.1} parent=11 // pred_check
        %p832 = pneg %p401
      $region58: #{unet_forward.1} parent=11 // pred_check_branch
        %834 = sbr.rel (%p832) target = $region60
      $region59: #{unet_forward.1} parent=11 // pred_region
        _
      $region60: #{unet_forward.1} parent=11 // pred_fallthru
        _
      // Predicated region
      $region61: #{unet_forward.1} parent=11 // pred_check
        %p835 = pneg %p422
      $region62: #{unet_forward.1} parent=11 // pred_check_branch
        %837 = sbr.rel (%p835) target = $region64
      $region63: #{unet_forward.1} parent=11 // pred_region
        _
      $region64: #{unet_forward.1} parent=11 // pred_fallthru
        _
      // Predicated region
      $region65: #{unet_forward.1} parent=11 // pred_check
        %p838 = pneg %p443
      $region66: #{unet_forward.1} parent=11 // pred_check_branch
        %840 = sbr.rel (%p838) target = $region68
      $region67: #{unet_forward.1} parent=11 // pred_region
        _
      $region68: #{unet_forward.1} parent=11 // pred_fallthru
        _
      // Predicated region
      $region69: #{unet_forward.1} parent=11 // pred_check
        %p841 = pneg %p464
      $region70: #{unet_forward.1} parent=11 // pred_check_branch
        %843 = sbr.rel (%p841) target = $region72
      $region71: #{unet_forward.1} parent=11 // pred_region
        _
      $region72: #{unet_forward.1} parent=11 // pred_fallthru
        _
      // Predicated region
      $region73: #{unet_forward.1} parent=11 // pred_check
        %p844 = pneg %p485
      $region74: #{unet_forward.1} parent=11 // pred_check_branch
        %846 = sbr.rel (%p844) target = $region76
      $region75: #{unet_forward.1} parent=11 // pred_region
        _
      $region76: #{unet_forward.1} parent=11 // pred_fallthru
        _
      // Predicated region
      $region77: #{unet_forward.1} parent=11 // pred_check
        %p847 = pneg %p506
      $region78: #{unet_forward.1} parent=11 // pred_check_branch
        %849 = sbr.rel (%p847) target = $region80
      $region79: #{unet_forward.1} parent=11 // pred_region
        _
      $region80: #{unet_forward.1} parent=11 // pred_fallthru
        _
      // Predicated region
      $region81: #{unet_forward.1} parent=11 // pred_check
        %p850 = pneg %p527
      $region82: #{unet_forward.1} parent=11 // pred_check_branch
        %852 = sbr.rel (%p850) target = $region84
      $region83: #{unet_forward.1} parent=11 // pred_region
        _
      $region84: #{unet_forward.1} parent=11 // pred_fallthru
        _
      // Predicated region
      $region85: #{unet_forward.1} parent=11 // pred_check
        %p853 = pneg %p548
      $region86: #{unet_forward.1} parent=11 // pred_check_branch
        %855 = sbr.rel (%p853) target = $region88
      $region87: #{unet_forward.1} parent=11 // pred_region
        _
      $region88: #{unet_forward.1} parent=11 // pred_fallthru
        _
      // Predicated region
      $region89: #{unet_forward.1} parent=11 // pred_check
        %p856 = pneg %p569
      $region90: #{unet_forward.1} parent=11 // pred_check_branch
        %858 = sbr.rel (%p856) target = $region92
      $region91: #{unet_forward.1} parent=11 // pred_region
        _
      $region92: #{unet_forward.1} parent=11 // pred_fallthru
        _
      // Predicated region
      $region93: #{unet_forward.1} parent=11 // pred_check
        %p859 = pneg %p590
      $region94: #{unet_forward.1} parent=11 // pred_check_branch
        %861 = sbr.rel (%p859) target = $region96
      $region95: #{unet_forward.1} parent=11 // pred_region
        _
      $region96: #{unet_forward.1} parent=11 // pred_fallthru
        _
      // Predicated region
      $region97: #{unet_forward.1} parent=11 // pred_check
        %p862 = pneg %p611
      $region98: #{unet_forward.1} parent=11 // pred_check_branch
        %864 = sbr.rel (%p862) target = $region100
      $region99: #{unet_forward.1} parent=11 // pred_region
        _
      $region100: #{unet_forward.1} parent=11 // pred_fallthru
        _
      // Predicated region
      $region101: #{unet_forward.1} parent=11 // pred_check
        %p865 = pneg %p632
      $region102: #{unet_forward.1} parent=11 // pred_check_branch
        %867 = sbr.rel (%p865) target = $region104
      $region103: #{unet_forward.1} parent=11 // pred_region
        _
      $region104: #{unet_forward.1} parent=11 // pred_fallthru
        _
      // Predicated region
      $region105: #{unet_forward.1} parent=11 // pred_check
        %p868 = pneg %p653
      $region106: #{unet_forward.1} parent=11 // pred_check_branch
        %870 = sbr.rel (%p868) target = $region108
      $region107: #{unet_forward.1} parent=11 // pred_region
        _
      $region108: #{unet_forward.1} parent=11 // pred_fallthru
        _
      // Predicated region
      $region109: #{unet_forward.1} parent=11 // pred_check
        %p871 = pneg %p674
      $region110: #{unet_forward.1} parent=11 // pred_check_branch
        %873 = sbr.rel (%p871) target = $region112
      $region111: #{unet_forward.1} parent=11 // pred_region
        _
      $region112: #{unet_forward.1} parent=11 // pred_fallthru
        _
      // Predicated region
      $region113: #{unet_forward.1} parent=11 // pred_check
        %p874 = pneg %p695
      $region114: #{unet_forward.1} parent=11 // pred_check_branch
        %876 = sbr.rel (%p874) target = $region116
      $region115: #{unet_forward.1} parent=11 // pred_region
        _
      $region116: #{unet_forward.1} parent=11 // pred_fallthru
        _
      // Predicated region
      $region117: #{unet_forward.1} parent=11 // pred_check
        %p877 = pneg %p716
      $region118: #{unet_forward.1} parent=11 // pred_check_branch
        %879 = sbr.rel (%p877) target = $region120
      $region119: #{unet_forward.1} parent=11 // pred_region
        _
      $region120: #{unet_forward.1} parent=11 // pred_fallthru
        _
      // Predicated region
      $region121: #{unet_forward.1} parent=11 // pred_check
        %p880 = pneg %p737
      $region122: #{unet_forward.1} parent=11 // pred_check_branch
        %882 = sbr.rel (%p880) target = $region124
      $region123: #{unet_forward.1} parent=11 // pred_region
        _
      $region124: #{unet_forward.1} parent=11 // pred_fallthru
        _
      // Predicated region
      $region125: #{unet_forward.1} parent=11 // pred_check
        %p883 = pneg %p758
      $region126: #{unet_forward.1} parent=11 // pred_check_branch
        %885 = sbr.rel (%p883) target = $region128
      $region127: #{unet_forward.1} parent=11 // pred_region
        _
      $region128: #{unet_forward.1} parent=11 // pred_fallthru
        _
    $region12: #{unet_forward.1} parent=5 // pred_fallthru
      _
    %p886 = scmp.lt.s32.totalorder %s71, 2
    // Predicated region
    $region129: #{unet_forward.1} parent=5 // pred_check
      %p887 = pneg %p886
    $region130: #{unet_forward.1} parent=5 // pred_check_branch
      %889 = sbr.rel (%p887) target = $region132
    $region131: #{unet_forward.1} parent=5 // pred_region
      // Predicated region
      $region133: #{unet_forward.1} parent=131 // pred_check
        %p890 = pneg %p91
      $region134: #{unet_forward.1} parent=131 // pred_check_branch
        %892 = sbr.rel (%p890) target = $region136
      $region135: #{unet_forward.1} parent=131 // pred_region
        %p893 = scmp.lt.s32.totalorder %s71, 1
        %s894 = scalar_select %p893, %s71, 1
        %s895 = smul.addr %s894, 32
        %s896 = smul.addr %s895, 4
        %s897 = scalar_lea.vmem %s1, %s896
      $region136: #{unet_forward.1} parent=131 // pred_fallthru
        _
      // Predicated region
      $region137: #{unet_forward.1} parent=131 // pred_check
        %p898 = pneg %p117
      $region138: #{unet_forward.1} parent=131 // pred_check_branch
        %900 = sbr.rel (%p898) target = $region140
      $region139: #{unet_forward.1} parent=131 // pred_region
        %p901 = scmp.lt.s32.totalorder %s71, 1
        %s902 = scalar_select %p901, %s71, 1
        %s903 = scalar_lea.vmem %s3, %s902
      $region140: #{unet_forward.1} parent=131 // pred_fallthru
        _
      // Predicated region
      $region141: #{unet_forward.1} parent=131 // pred_check
        %p904 = pneg %p143
      $region142: #{unet_forward.1} parent=131 // pred_check_branch
        %906 = sbr.rel (%p904) target = $region144
      $region143: #{unet_forward.1} parent=131 // pred_region
        %p907 = scmp.lt.s32.totalorder %s71, 1
        %s908 = scalar_select %p907, %s71, 1
        %s909 = smul.addr %s908, 4
        %s910 = scalar_lea.vmem %s5, %s909
      $region144: #{unet_forward.1} parent=131 // pred_fallthru
        _
    $region132: #{unet_forward.1} parent=5 // pred_fallthru
      _
    %p911 = scmp.le.s32.totalorder 1, %s71
    %p912 = scmp.lt.s32.totalorder %s71, 3
    %p913 = pnand %p911, %p912
    %p914 = pneg %p913
    // Predicated region
    $region145: #{unet_forward.1} parent=5 // pred_check
      _
    $region146: #{unet_forward.1} parent=5 // pred_check_branch
      %916 = sbr.rel (%p913) target = $region148
    $region147: #{unet_forward.1} parent=5 // pred_region
      %s917 = ssub.s32 %s71, 1
      %p918 = scmp.lt.s32.totalorder %s76, 1
      %s919 = scalar_select %p918, %s76, 1
      %s920 = smul.addr %s919, 32
      %s921 = smul.addr %s920, 4
      %s922 = scalar_lea.vmem %s1, %s921
      %p923 = pneg %p97
      %p924 = pneg %p94
      %p925 = scmp.lt.s32.totalorder %s76, 1
      %s926 = scalar_select %p925, %s76, 1
      %s927 = scalar_lea.vmem %s3, %s926
      %p928 = pneg %p123
      %p929 = pneg %p120
      %p930 = scmp.lt.s32.totalorder %s76, 1
      %s931 = scalar_select %p930, %s76, 1
      %s932 = smul.addr %s931, 4
      %s933 = scalar_lea.vmem %s5, %s932
      %p934 = pneg %p149
      %p935 = pneg %p146
      %p936 = pneg %p170
      %p937 = pneg %p167
      %p938 = pneg %p191
      %p939 = pneg %p188
      %p940 = pneg %p212
      %p941 = pneg %p209
      %p942 = pneg %p233
      %p943 = pneg %p230
      %p944 = pneg %p254
      %p945 = pneg %p251
      %p946 = pneg %p275
      %p947 = pneg %p272
      %p948 = pneg %p296
      %p949 = pneg %p293
      %p950 = pneg %p317
      %p951 = pneg %p314
      %p952 = pneg %p338
      %p953 = pneg %p335
      %p954 = pneg %p359
      %p955 = pneg %p356
      %p956 = pneg %p380
      %p957 = pneg %p377
      %p958 = pneg %p401
      %p959 = pneg %p398
      %p960 = pneg %p422
      %p961 = pneg %p419
      %p962 = pneg %p443
      %p963 = pneg %p440
      %p964 = pneg %p464
      %p965 = pneg %p461
      %p966 = pneg %p485
      %p967 = pneg %p482
      %p968 = pneg %p506
      %p969 = pneg %p503
      %p970 = pneg %p527
      %p971 = pneg %p524
      %p972 = pneg %p548
      %p973 = pneg %p545
      %p974 = pneg %p569
      %p975 = pneg %p566
      %p976 = pneg %p590
      %p977 = pneg %p587
      %p978 = pneg %p611
      %p979 = pneg %p608
      %p980 = pneg %p632
      %p981 = pneg %p629
      %p982 = pneg %p653
      %p983 = pneg %p650
      %p984 = pneg %p674
      %p985 = pneg %p671
      %p986 = pneg %p695
      %p987 = pneg %p692
      %p988 = pneg %p716
      %p989 = pneg %p713
      %p990 = pneg %p737
      %p991 = pneg %p734
      %p992 = pneg %p758
      %p993 = pneg %p755
      %p994 = pneg %p784
      %p995 = pneg %p781
      %p996 = scmp.lt.s32.totalorder %s76, 1
      %s997 = scalar_select %p996, %s76, 1
      %s998 = smul.addr %s997, 2
      %s999 = smul.addr %s998, 4
      %s1000 = scalar_lea.vmem %s65, %s999
      %p1001 = scmp.lt.s32.totalorder %s76, 1
      %s1002 = scalar_select %p1001, %s76, 1
      %s1003 = smul.addr %s1002, 32
      %s1004 = smul.addr %s1003, 4
      %s1005 = scalar_lea.vmem %s1, %s1004
      %p1006 = scmp.lt.s32.totalorder %s76, 1
      %s1007 = scalar_select %p1006, %s76, 1
      %s1008 = scalar_lea.vmem %s3, %s1007
      %p1009 = scmp.lt.s32.totalorder %s76, 1
      %s1010 = scalar_select %p1009, %s76, 1
      %s1011 = smul.addr %s1010, 4
      %s1012 = scalar_lea.vmem %s5, %s1011
      %p1013 = scmp.lt.s32.totalorder %s76, 1
      %s1014 = scalar_select %p1013, %s76, 1
      %s1015 = smul.addr %s1014, 2
      %s1016 = smul.addr %s1015, 4
      %s1017 = scalar_lea.vmem %s65, %s1016
      %v1019 = vlaneseq
      %v1020 = vshrl.u32 %v1019, 7
      %v1021 = vadd.s32 %v1020, 8
      %vm1022 = vcmp.eq.s32.totalorder %v1020, 0
      %vm1023 = vcmp.eq.s32.totalorder %v1021, 0
      %vm1024 = vcmp.eq.s32.totalorder %v1020, 15
      %vm1025 = vcmp.eq.s32.totalorder %v1021, 15
      %v1026 = vld [vmem:[%s1008] sm:$0x1]
      %v1027 = vpack.c.bf16 %v1026, %v1026
      %v1028 = vld [vmem:[%s15] sm:$0xf]
      %v1029 = vld [vmem:[%s15 + $0x4] sm:$0xf]
      %v1030 = vld [vmem:[%s15 + $0x8] sm:$0xf]
      %v1031 = vld [vmem:[%s15 + $0xc] sm:$0xf]
      %v1032 = vld [vmem:[%s15 + $0x10] sm:$0xf]
      %v1033 = vld [vmem:[%s15 + $0x14] sm:$0xf]
      %v1034 = vld [vmem:[%s15 + $0x18] sm:$0xf]
      %v1035 = vld [vmem:[%s15 + $0x1c] sm:$0xf]
      %v1036 = vld [vmem:[%s15 + $0x20] sm:$0xf]
      %v1037 = vld [vmem:[%s15 + $0x24] sm:$0xf]
      %v1038 = vld [vmem:[%s15 + $0x28] sm:$0xf]
      %v1039 = vld [vmem:[%s15 + $0x2c] sm:$0xf]
      %v1040 = vld [vmem:[%s15 + $0x30] sm:$0xf]
      %v1041 = vld [vmem:[%s15 + $0x34] sm:$0xf]
      %v1042 = vld [vmem:[%s15 + $0x38] sm:$0xf]
      %v1043 = vld [vmem:[%s15 + $0x3c] sm:$0xf]
      %v1044 = vld [vmem:[%s17] sm:$0x1]
      %v1061 = vunpack.c.l.b16 %v1028
      %v1062 = vunpack.c.l.b16 %v1029
      %v1063 = vunpack.c.l.b16 %v1030
      %v1064 = vunpack.c.l.b16 %v1031
      %v1065 = vunpack.c.l.b16 %v1032
      %v1066 = vunpack.c.l.b16 %v1033
      %v1067 = vunpack.c.l.b16 %v1034
      %v1068 = vunpack.c.l.b16 %v1035
      %v1069 = vunpack.c.l.b16 %v1036
      %v1070 = vunpack.c.l.b16 %v1037
      %v1071 = vunpack.c.l.b16 %v1038
      %v1072 = vunpack.c.l.b16 %v1039
      %v1073 = vunpack.c.l.b16 %v1040
      %v1074 = vunpack.c.l.b16 %v1041
      %v1075 = vunpack.c.l.b16 %v1042
      %v1076 = vunpack.c.l.b16 %v1043
      %v1077 = vpack.c.b16 %v1062, %v1061
      %v1078 = vpack.c.b16 %v1064, %v1063
      %v1079 = vpack.c.b16 %v1066, %v1065
      %v1080 = vpack.c.b16 %v1068, %v1067
      %v1081 = vpack.c.b16 %v1070, %v1069
      %v1082 = vpack.c.b16 %v1072, %v1071
      %v1083 = vpack.c.b16 %v1074, %v1073
      %v1084 = vpack.c.b16 %v1076, %v1075
      %1093 = vmatprep.subr.bf16.mxu0 0
      %1094 = vmatpush1.bf16.msra.mxu0 %v1077
      %1095 = vmatprep.subr.bf16.mxu0 0
      %1096 = vmatpush1.bf16.msra.mxu0 %v1078
      %1097 = vmatprep.subr.bf16.mxu0 0
      %1098 = vmatpush1.bf16.msra.mxu0 %v1079
      %1099 = vmatprep.subr.bf16.mxu0 0
      %1100 = vmatpush1.bf16.msra.mxu0 %v1080
      %1101 = vmatprep.subr.bf16.mxu0 0
      %1102 = vmatpush1.bf16.msra.mxu0 %v1081
      %1103 = vmatprep.subr.bf16.mxu0 0
      %1104 = vmatpush1.bf16.msra.mxu0 %v1082
      %1105 = vmatprep.subr.bf16.mxu0 0
      %1106 = vmatpush1.bf16.msra.mxu0 %v1083
      %1107 = vmatprep.subr.bf16.mxu0 0
      %1108 = vmatpush1.bf16.msra.mxu0 %v1084
      %1109 = vmatprep.subr.bf16.mxu0 0
      %1110 = vmatpush1.bf16.msra.mxu0 0
      %1111 = vmatprep.subr.bf16.mxu0 0
      %1112 = vmatpush1.bf16.msra.mxu0 0
      %1113 = vmatprep.subr.bf16.mxu0 0
      %1114 = vmatpush1.bf16.msra.mxu0 0
      %1115 = vmatprep.subr.bf16.mxu0 0
      %1116 = vmatpush1.bf16.msra.mxu0 0
      %1117 = vmatprep.subr.bf16.mxu0 0
      %1118 = vmatpush1.bf16.msra.mxu0 0
      %1119 = vmatprep.subr.bf16.mxu0 0
      %1120 = vmatpush1.bf16.msra.mxu0 0
      %1121 = vmatprep.subr.bf16.mxu0 0
      %1122 = vmatpush1.bf16.msra.mxu0 0
      %1123 = vmatprep.subr.bf16.mxu0 0
      %1124 = vmatpush1.bf16.msra.mxu0 0
      %1125 = vmatprep.mubr.bf16.mxu0 0
      %1126 = vmatmul.mubr.bf16.gmra.mrb[0].mxu0 %v1027
      %v1127 = vpop.f32.mrb[0].mxu0
      %v1128 = vadd.f32 %v1044, %v1127
      %v1129 = vpop.f32.mrb[0].mxu0
      %v1130 = vpop.f32.mrb[0].mxu0
      %v1131 = vpop.f32.mrb[0].mxu0
      %1132 = vdwg.mxu0
      %v1133 = vsub.f32 0.0, %v1128
      %v1134 = vmul.f32 %v1133, 1.442695
      %v1135 = vpow.pop %v1134
      %v1136 = vadd.f32 %v1135, 1.0
      %v1137 = vrcp.pop %v1136
      %v1138 = vmul.f32 %v1128, %v1137
      %v1139 = vpack.c.bf16 %v1138, %v1138
      %v1140 = vld [vmem:[%s19] sm:$0xf]
      %v1141 = vld [vmem:[%s19 + $0x4] sm:$0xf]
      %v1142 = vld [vmem:[%s19 + $0x8] sm:$0xf]
      %v1143 = vld [vmem:[%s19 + $0xc] sm:$0xf]
      %v1144 = vld [vmem:[%s19 + $0x10] sm:$0xf]
      %v1145 = vld [vmem:[%s19 + $0x14] sm:$0xf]
      %v1146 = vld [vmem:[%s19 + $0x18] sm:$0xf]
      %v1147 = vld [vmem:[%s19 + $0x1c] sm:$0xf]
      %v1148 = vld [vmem:[%s19 + $0x20] sm:$0xf]
      %v1149 = vld [vmem:[%s19 + $0x24] sm:$0xf]
      %v1150 = vld [vmem:[%s19 + $0x28] sm:$0xf]
      %v1151 = vld [vmem:[%s19 + $0x2c] sm:$0xf]
      %v1152 = vld [vmem:[%s19 + $0x30] sm:$0xf]
      %v1153 = vld [vmem:[%s19 + $0x34] sm:$0xf]
      %v1154 = vld [vmem:[%s19 + $0x38] sm:$0xf]
      %v1155 = vld [vmem:[%s19 + $0x3c] sm:$0xf]
      %v1156 = vld [vmem:[%s21] sm:$0x1]
      %v1173 = vunpack.c.l.b16 %v1140
      %v1174 = vunpack.c.l.b16 %v1141
      %v1175 = vunpack.c.l.b16 %v1142
      %v1176 = vunpack.c.l.b16 %v1143
      %v1177 = vunpack.c.l.b16 %v1144
      %v1178 = vunpack.c.l.b16 %v1145
      %v1179 = vunpack.c.l.b16 %v1146
      %v1180 = vunpack.c.l.b16 %v1147
      %v1181 = vunpack.c.l.b16 %v1148
      %v1182 = vunpack.c.l.b16 %v1149
      %v1183 = vunpack.c.l.b16 %v1150
      %v1184 = vunpack.c.l.b16 %v1151
      %v1185 = vunpack.c.l.b16 %v1152
      %v1186 = vunpack.c.l.b16 %v1153
      %v1187 = vunpack.c.l.b16 %v1154
      %v1188 = vunpack.c.l.b16 %v1155
      %v1189 = vpack.c.b16 %v1174, %v1173
      %v1190 = vpack.c.b16 %v1176, %v1175
      %v1191 = vpack.c.b16 %v1178, %v1177
      %v1192 = vpack.c.b16 %v1180, %v1179
      %v1193 = vpack.c.b16 %v1182, %v1181
      %v1194 = vpack.c.b16 %v1184, %v1183
      %v1195 = vpack.c.b16 %v1186, %v1185
      %v1196 = vpack.c.b16 %v1188, %v1187
      %1205 = vmatprep.subr.bf16.mxu0 0
      %1206 = vmatpush1.bf16.msra.mxu0 %v1189
      %1207 = vmatprep.subr.bf16.mxu0 0
      %1208 = vmatpush1.bf16.msra.mxu0 %v1190
      %1209 = vmatprep.subr.bf16.mxu0 0
      %1210 = vmatpush1.bf16.msra.mxu0 %v1191
      %1211 = vmatprep.subr.bf16.mxu0 0
      %1212 = vmatpush1.bf16.msra.mxu0 %v1192
      %1213 = vmatprep.subr.bf16.mxu0 0
      %1214 = vmatpush1.bf16.msra.mxu0 %v1193
      %1215 = vmatprep.subr.bf16.mxu0 0
      %1216 = vmatpush1.bf16.msra.mxu0 %v1194
      %1217 = vmatprep.subr.bf16.mxu0 0
      %1218 = vmatpush1.bf16.msra.mxu0 %v1195
      %1219 = vmatprep.subr.bf16.mxu0 0
      %1220 = vmatpush1.bf16.msra.mxu0 %v1196
      %1221 = vmatprep.subr.bf16.mxu0 0
      %1222 = vmatpush1.bf16.msra.mxu0 0
      %1223 = vmatprep.subr.bf16.mxu0 0
      %1224 = vmatpush1.bf16.msra.mxu0 0
      %1225 = vmatprep.subr.bf16.mxu0 0
      %1226 = vmatpush1.bf16.msra.mxu0 0
      %1227 = vmatprep.subr.bf16.mxu0 0
      %1228 = vmatpush1.bf16.msra.mxu0 0
      %1229 = vmatprep.subr.bf16.mxu0 0
      %1230 = vmatpush1.bf16.msra.mxu0 0
      %1231 = vmatprep.subr.bf16.mxu0 0
      %1232 = vmatpush1.bf16.msra.mxu0 0
      %1233 = vmatprep.subr.bf16.mxu0 0
      %1234 = vmatpush1.bf16.msra.mxu0 0
      %1235 = vmatprep.subr.bf16.mxu0 0
      %1236 = vmatpush1.bf16.msra.mxu0 0
      %1237 = vmatprep.mubr.bf16.mxu0 0
      %1238 = vmatmul.mubr.bf16.gmra.mrb[0].mxu0 %v1139
      %v1239 = vpop.f32.mrb[0].mxu0
      %v1240 = vadd.f32 %v1156, %v1239
      %v1241 = vpop.f32.mrb[0].mxu0
      %v1242 = vpop.f32.mrb[0].mxu0
      %v1243 = vpop.f32.mrb[0].mxu0
      %1244 = vdwg.mxu0
      %v1245 = vld [vmem:[%s1005] sm:$0xf]
      %v1246 = vld [vmem:[%s1005 + $0x4] sm:$0xf]
      %v1247 = vld [vmem:[%s1005 + $0x8] sm:$0xf]
      %v1248 = vld [vmem:[%s1005 + $0xc] sm:$0xf]
      %v1249 = vld [vmem:[%s1005 + $0x10] sm:$0xf]
      %v1250 = vld [vmem:[%s1005 + $0x14] sm:$0xf]
      %v1251 = vld [vmem:[%s1005 + $0x18] sm:$0xf]
      %v1252 = vld [vmem:[%s1005 + $0x1c] sm:$0xf]
      %v1253 = vld [vmem:[%s1005 + $0x20] sm:$0xf]
      %v1254 = vld [vmem:[%s1005 + $0x24] sm:$0xf]
      %v1255 = vld [vmem:[%s1005 + $0x28] sm:$0xf]
      %v1256 = vld [vmem:[%s1005 + $0x2c] sm:$0xf]
      %v1257 = vld [vmem:[%s1005 + $0x30] sm:$0xf]
      %v1258 = vld [vmem:[%s1005 + $0x34] sm:$0xf]
      %v1259 = vld [vmem:[%s1005 + $0x38] sm:$0xf]
      %v1260 = vld [vmem:[%s1005 + $0x3c] sm:$0xf]
      %v1261 = vld [vmem:[%s1005 + $0x40] sm:$0xf]
      %v1262 = vld [vmem:[%s1005 + $0x44] sm:$0xf]
      %v1263 = vld [vmem:[%s1005 + $0x48] sm:$0xf]
      %v1264 = vld [vmem:[%s1005 + $0x4c] sm:$0xf]
      %v1265 = vld [vmem:[%s1005 + $0x50] sm:$0xf]
      %v1266 = vld [vmem:[%s1005 + $0x54] sm:$0xf]
      %v1267 = vld [vmem:[%s1005 + $0x58] sm:$0xf]
      %v1268 = vld [vmem:[%s1005 + $0x5c] sm:$0xf]
      %v1269 = vld [vmem:[%s1005 + $0x60] sm:$0xf]
      %v1270 = vld [vmem:[%s1005 + $0x64] sm:$0xf]
      %v1271 = vld [vmem:[%s1005 + $0x68] sm:$0xf]
      %v1272 = vld [vmem:[%s1005 + $0x6c] sm:$0xf]
      %v1273 = vld [vmem:[%s1005 + $0x70] sm:$0xf]
      %v1274 = vld [vmem:[%s1005 + $0x74] sm:$0xf]
      %v1275 = vld [vmem:[%s1005 + $0x78] sm:$0xf]
      %v1276 = vld [vmem:[%s1005 + $0x7c] sm:$0xf]
      %v1277 = vld [vmem:[%s11] sm:$0xf]
      %v1278 = vld [vmem:[%s11 + $0x4] sm:$0xf]
      %v1279 = vld [vmem:[%s11 + $0x8] sm:$0xf]
      %v1280 = vld [vmem:[%s11 + $0xc] sm:$0xf]
      %v1281 = vld [vmem:[%s11 + $0x10] sm:$0x3]
      %v1282 = vld [vmem:[%s13] sm:$0x1]
      %v1284 = vlaneseq
      %v1285 = vshrl.u32 %v1284, 7
      %v1286 = vsub.s32 0, %v1285
      %v1287 = vrot.slane %v1282, %v1286
      %v1321 = vunpack.c.l.b16 %v1245
      %v1322 = vunpack.c.l.b16 %v1246
      %v1323 = vunpack.c.l.b16 %v1247
      %v1324 = vunpack.c.l.b16 %v1248
      %v1325 = vunpack.c.l.b16 %v1249
      %v1326 = vunpack.c.l.b16 %v1250
      %v1327 = vunpack.c.l.b16 %v1251
      %v1328 = vunpack.c.l.b16 %v1252
      %v1329 = vunpack.c.l.b16 %v1253
      %v1330 = vunpack.c.l.b16 %v1254
      %v1331 = vunpack.c.l.b16 %v1255
      %v1332 = vunpack.c.l.b16 %v1256
      %v1333 = vunpack.c.l.b16 %v1257
      %v1334 = vunpack.c.l.b16 %v1258
      %v1335 = vunpack.c.l.b16 %v1259
      %v1336 = vunpack.c.l.b16 %v1260
      %v1337 = vunpack.c.l.b16 %v1261
      %v1338 = vunpack.c.l.b16 %v1262
      %v1339 = vunpack.c.l.b16 %v1263
      %v1340 = vunpack.c.l.b16 %v1264
      %v1341 = vunpack.c.l.b16 %v1265
      %v1342 = vunpack.c.l.b16 %v1266
      %v1343 = vunpack.c.l.b16 %v1267
      %v1344 = vunpack.c.l.b16 %v1268
      %v1345 = vunpack.c.l.b16 %v1269
      %v1346 = vunpack.c.l.b16 %v1270
      %v1347 = vunpack.c.l.b16 %v1271
      %v1348 = vunpack.c.l.b16 %v1272
      %v1349 = vunpack.c.l.b16 %v1273
      %v1350 = vunpack.c.l.b16 %v1274
      %v1351 = vunpack.c.l.b16 %v1275
      %v1352 = vunpack.c.l.b16 %v1276
      %v1353 = vpack.c.b16 %v1322, %v1321
      %v1354 = vpack.c.b16 %v1324, %v1323
      %v1355 = vpack.c.b16 %v1326, %v1325
      %v1356 = vpack.c.b16 %v1328, %v1327
      %v1357 = vpack.c.b16 %v1330, %v1329
      %v1358 = vpack.c.b16 %v1332, %v1331
      %v1359 = vpack.c.b16 %v1334, %v1333
      %v1360 = vpack.c.b16 %v1336, %v1335
      %v1361 = vpack.c.b16 %v1338, %v1337
      %v1362 = vpack.c.b16 %v1340, %v1339
      %v1363 = vpack.c.b16 %v1342, %v1341
      %v1364 = vpack.c.b16 %v1344, %v1343
      %v1365 = vpack.c.b16 %v1346, %v1345
      %v1366 = vpack.c.b16 %v1348, %v1347
      %v1367 = vpack.c.b16 %v1350, %v1349
      %v1368 = vpack.c.b16 %v1352, %v1351
      %v1374 = vunpack.c.l.b16 %v1277
      %v1375 = vunpack.c.l.b16 %v1278
      %v1376 = vunpack.c.l.b16 %v1279
      %v1377 = vunpack.c.l.b16 %v1280
      %v1378 = vunpack.c.l.b16 %v1281
      %v1379 = vpack.c.b16 %v1375, %v1374
      %v1380 = vpack.c.b16 %v1377, %v1376
      %v1381 = vpack.c.b16 %v1378, %v1378
      %vm1384 = vcmask 293888
      %v1386 = vsel %vm1384, %v1353, 0
      %v1389 = vsel %vm1384, %v1354, 0
      %v1392 = vsel %vm1384, %v1355, 0
      %v1395 = vsel %vm1384, %v1356, 0
      %v1398 = vsel %vm1384, %v1357, 0
      %v1401 = vsel %vm1384, %v1358, 0
      %v1404 = vsel %vm1384, %v1359, 0
      %v1407 = vsel %vm1384, %v1360, 0
      %v1410 = vsel %vm1384, %v1361, 0
      %v1413 = vsel %vm1384, %v1362, 0
      %v1416 = vsel %vm1384, %v1363, 0
      %v1419 = vsel %vm1384, %v1364, 0
      %v1422 = vsel %vm1384, %v1365, 0
      %v1425 = vsel %vm1384, %v1366, 0
      %v1428 = vsel %vm1384, %v1367, 0
      %v1431 = vsel %vm1384, %v1368, 0
      %vm1433 = vcmask 1041408
      %v1435 = vsel %vm1433, %v1381, 0
      %1437 = vmatprep.subr.bf16.mxu0 0
      %1438 = vmatpush1.bf16.msra.mxu0 %v1379
      %1439 = vmatprep.subr.bf16.mxu0 0
      %1440 = vmatpush1.bf16.msra.mxu0 %v1380
      %1441 = vmatprep.subr.bf16.mxu0 0
      %1442 = vmatpush1.bf16.msra.mxu0 %v1435
      %1443 = vmatprep.subr.bf16.mxu0 0
      %1444 = vmatpush1.bf16.msra.mxu0 0
      %1445 = vmatprep.subr.bf16.mxu0 0
      %1446 = vmatpush1.bf16.msra.mxu0 0
      %1447 = vmatprep.subr.bf16.mxu0 0
      %1448 = vmatpush1.bf16.msra.mxu0 0
      %1449 = vmatprep.subr.bf16.mxu0 0
      %1450 = vmatpush1.bf16.msra.mxu0 0
      %1451 = vmatprep.subr.bf16.mxu0 0
      %1452 = vmatpush1.bf16.msra.mxu0 0
      %1453 = vmatprep.subr.bf16.mxu0 0
      %1454 = vmatpush1.bf16.msra.mxu0 0
      %1455 = vmatprep.subr.bf16.mxu0 0
      %1456 = vmatpush1.bf16.msra.mxu0 0
      %1457 = vmatprep.subr.bf16.mxu0 0
      %1458 = vmatpush1.bf16.msra.mxu0 0
      %1459 = vmatprep.subr.bf16.mxu0 0
      %1460 = vmatpush1.bf16.msra.mxu0 0
      %1461 = vmatprep.subr.bf16.mxu0 0
      %1462 = vmatpush1.bf16.msra.mxu0 0
      %1463 = vmatprep.subr.bf16.mxu0 0
      %1464 = vmatpush1.bf16.msra.mxu0 0
      %1465 = vmatprep.subr.bf16.mxu0 0
      %1466 = vmatpush1.bf16.msra.mxu0 0
      %1467 = vmatprep.subr.bf16.mxu0 0
      %1468 = vmatpush1.bf16.msra.mxu0 0
      %1469 = vmatprep.mubr.bf16.mxu0 0
      %1470 = vmatmul.mubr.bf16.gmra.mrb[0].mxu0 %v1386
      %v1471 = vpop.f32.mrb[0].mxu0
      %v1472 = vadd.f32 %v1287, %v1471
      %v1473 = vpop.f32.mrb[0].mxu0
      %v1474 = vpop.f32.mrb[0].mxu0
      %v1475 = vadd.f32 %v1287, %v1474
      %v1476 = vpop.f32.mrb[0].mxu0
      %1477 = vmatprep.mubr.bf16.mxu0 0
      %1478 = vmatmul.mubr.bf16.gmra.mrb[0].mxu0 %v1389
      %v1479 = vpop.f32.mrb[0].mxu0
      %v1480 = vadd.f32 %v1287, %v1479
      %v1481 = vpop.f32.mrb[0].mxu0
      %v1482 = vpop.f32.mrb[0].mxu0
      %v1483 = vadd.f32 %v1287, %v1482
      %v1484 = vpop.f32.mrb[0].mxu0
      %1485 = vmatprep.mubr.bf16.mxu0 0
      %1486 = vmatmul.mubr.bf16.gmra.mrb[0].mxu0 %v1392
      %v1487 = vpop.f32.mrb[0].mxu0
      %v1488 = vadd.f32 %v1287, %v1487
      %v1489 = vpop.f32.mrb[0].mxu0
      %v1490 = vpop.f32.mrb[0].mxu0
      %v1491 = vadd.f32 %v1287, %v1490
      %v1492 = vpop.f32.mrb[0].mxu0
      %1493 = vmatprep.mubr.bf16.mxu0 0
      %1494 = vmatmul.mubr.bf16.gmra.mrb[0].mxu0 %v1395
      %v1495 = vpop.f32.mrb[0].mxu0
      %v1496 = vadd.f32 %v1287, %v1495
      %v1497 = vpop.f32.mrb[0].mxu0
      %v1498 = vpop.f32.mrb[0].mxu0
      %v1499 = vadd.f32 %v1287, %v1498
      %v1500 = vpop.f32.mrb[0].mxu0
      %1501 = vmatprep.mubr.bf16.mxu0 0
      %1502 = vmatmul.mubr.bf16.gmra.mrb[0].mxu0 %v1398
      %v1503 = vpop.f32.mrb[0].mxu0
      %v1504 = vadd.f32 %v1287, %v1503
      %v1505 = vpop.f32.mrb[0].mxu0
      %v1506 = vpop.f32.mrb[0].mxu0
      %v1507 = vadd.f32 %v1287, %v1506
      %v1508 = vpop.f32.mrb[0].mxu0
      %1509 = vmatprep.mubr.bf16.mxu0 0
      %1510 = vmatmul.mubr.bf16.gmra.mrb[0].mxu0 %v1401
      %v1511 = vpop.f32.mrb[0].mxu0
      %v1512 = vadd.f32 %v1287, %v1511
      %v1513 = vpop.f32.mrb[0].mxu0
      %v1514 = vpop.f32.mrb[0].mxu0
      %v1515 = vadd.f32 %v1287, %v1514
      %v1516 = vpop.f32.mrb[0].mxu0
      %1517 = vmatprep.mubr.bf16.mxu0 0
      %1518 = vmatmul.mubr.bf16.gmra.mrb[0].mxu0 %v1404
      %v1519 = vpop.f32.mrb[0].mxu0
      %v1520 = vadd.f32 %v1287, %v1519
      %v1521 = vpop.f32.mrb[0].mxu0
      %v1522 = vpop.f32.mrb[0].mxu0
      %v1523 = vadd.f32 %v1287, %v1522
      %v1524 = vpop.f32.mrb[0].mxu0
      %1525 = vmatprep.mubr.bf16.mxu0 0
      %1526 = vmatmul.mubr.bf16.gmra.mrb[0].mxu0 %v1407
      %v1527 = vpop.f32.mrb[0].mxu0
      %v1528 = vadd.f32 %v1287, %v1527
      %v1529 = vpop.f32.mrb[0].mxu0
      %v1530 = vpop.f32.mrb[0].mxu0
      %v1531 = vadd.f32 %v1287, %v1530
      %v1532 = vpop.f32.mrb[0].mxu0
      %1533 = vmatprep.mubr.bf16.mxu0 0
      %1534 = vmatmul.mubr.bf16.gmra.mrb[0].mxu0 %v1410
      %v1535 = vpop.f32.mrb[0].mxu0
      %v1536 = vadd.f32 %v1287, %v1535
      %v1537 = vpop.f32.mrb[0].mxu0
      %v1538 = vpop.f32.mrb[0].mxu0
      %v1539 = vadd.f32 %v1287, %v1538
      %v1540 = vpop.f32.mrb[0].mxu0
      %1541 = vmatprep.mubr.bf16.mxu0 0
      %1542 = vmatmul.mubr.bf16.gmra.mrb[0].mxu0 %v1413
      %v1543 = vpop.f32.mrb[0].mxu0
      %v1544 = vadd.f32 %v1287, %v1543
      %v1545 = vpop.f32.mrb[0].mxu0
      %v1546 = vpop.f32.mrb[0].mxu0
      %v1547 = vadd.f32 %v1287, %v1546
      %v1548 = vpop.f32.mrb[0].mxu0
      %1549 = vmatprep.mubr.bf16.mxu0 0
      %1550 = vmatmul.mubr.bf16.gmra.mrb[0].mxu0 %v1416
      %v1551 = vpop.f32.mrb[0].mxu0
      %v1552 = vadd.f32 %v1287, %v1551
      %v1553 = vpop.f32.mrb[0].mxu0
      %v1554 = vpop.f32.mrb[0].mxu0
      %v1555 = vadd.f32 %v1287, %v1554
      %v1556 = vpop.f32.mrb[0].mxu0
      %1557 = vmatprep.mubr.bf16.mxu0 0
      %1558 = vmatmul.mubr.bf16.gmra.mrb[0].mxu0 %v1419
      %v1559 = vpop.f32.mrb[0].mxu0
      %v1560 = vadd.f32 %v1287, %v1559
      %v1561 = vpop.f32.mrb[0].mxu0
      %v1562 = vpop.f32.mrb[0].mxu0
      %v1563 = vadd.f32 %v1287, %v1562
      %v1564 = vpop.f32.mrb[0].mxu0
      %1565 = vmatprep.mubr.bf16.mxu0 0
      %1566 = vmatmul.mubr.bf16.gmra.mrb[0].mxu0 %v1422
      %v1567 = vpop.f32.mrb[0].mxu0
      %v1568 = vadd.f32 %v1287, %v1567
      %v1569 = vpop.f32.mrb[0].mxu0
      %v1570 = vpop.f32.mrb[0].mxu0
      %v1571 = vadd.f32 %v1287, %v1570
      %v1572 = vpop.f32.mrb[0].mxu0
      %1573 = vmatprep.mubr.bf16.mxu0 0
      %1574 = vmatmul.mubr.bf16.gmra.mrb[0].mxu0 %v1425
      %v1575 = vpop.f32.mrb[0].mxu0
      %v1576 = vadd.f32 %v1287, %v1575
      %v1577 = vpop.f32.mrb[0].mxu0
      %v1578 = vpop.f32.mrb[0].mxu0
      %v1579 = vadd.f32 %v1287, %v1578
      %v1580 = vpop.f32.mrb[0].mxu0
      %1581 = vmatprep.mubr.bf16.mxu0 0
      %1582 = vmatmul.mubr.bf16.gmra.mrb[0].mxu0 %v1428
      %v1583 = vpop.f32.mrb[0].mxu0
      %v1584 = vadd.f32 %v1287, %v1583
      %v1585 = vpop.f32.mrb[0].mxu0
      %v1586 = vpop.f32.mrb[0].mxu0
      %v1587 = vadd.f32 %v1287, %v1586
      %v1588 = vpop.f32.mrb[0].mxu0
      %1589 = vmatprep.mubr.bf16.mxu0 0
      %1590 = vmatmul.mubr.bf16.gmra.mrb[0].mxu0 %v1431
      %v1591 = vpop.f32.mrb[0].mxu0
      %v1592 = vadd.f32 %v1287, %v1591
      %v1593 = vpop.f32.mrb[0].mxu0
      %v1594 = vpop.f32.mrb[0].mxu0
      %v1595 = vadd.f32 %v1287, %v1594
      %v1596 = vpop.f32.mrb[0].mxu0
      %1597 = vdwg.mxu0
      %v1598 = vadd.f32 %v1472, %v1475
      %v1599 = vadd.f32 %v1598, %v1480
      %v1600 = vadd.f32 %v1599, %v1483
      %v1601 = vadd.f32 %v1600, %v1488
      %v1602 = vadd.f32 %v1601, %v1491
      %v1603 = vadd.f32 %v1602, %v1496
      %v1604 = vadd.f32 %v1603, %v1499
      %v1605 = vadd.f32 %v1604, %v1504
      %v1606 = vadd.f32 %v1605, %v1507
      %v1607 = vadd.f32 %v1606, %v1512
      %v1608 = vadd.f32 %v1607, %v1515
      %v1609 = vadd.f32 %v1608, %v1520
      %v1610 = vadd.f32 %v1609, %v1523
      %v1611 = vadd.f32 %v1610, %v1528
      %v1612 = vadd.f32 %v1611, %v1531
      %v1613 = vadd.f32 %v1612, %v1536
      %v1614 = vadd.f32 %v1613, %v1539
      %v1615 = vadd.f32 %v1614, %v1544
      %v1616 = vadd.f32 %v1615, %v1547
      %v1617 = vadd.f32 %v1616, %v1552
      %v1618 = vadd.f32 %v1617, %v1555
      %v1619 = vadd.f32 %v1618, %v1560
      %v1620 = vadd.f32 %v1619, %v1563
      %v1621 = vadd.f32 %v1620, %v1568
      %v1622 = vadd.f32 %v1621, %v1571
      %v1623 = vadd.f32 %v1622, %v1576
      %v1624 = vadd.f32 %v1623, %v1579
      %v1625 = vadd.f32 %v1624, %v1584
      %v1626 = vadd.f32 %v1625, %v1587
      %v1627 = vadd.f32 %v1626, %v1592
      %v1628 = vadd.f32 %v1627, %v1595
      %v1629 = vrot.slane %v1628, 4
      %v1630 = vadd.f32 %v1628, %v1629
      %v1631 = vrot.slane %v1630, 2
      %v1632 = vadd.f32 %v1630, %v1631
      %v1633 = vrot.slane %v1632, 1
      %v1634 = vadd.f32 %v1632, %v1633
      %v1635 = vmul.f32 %v1472, %v1472
      %v1636 = vmul.f32 %v1475, %v1475
      %v1637 = vmul.f32 %v1480, %v1480
      %v1638 = vmul.f32 %v1483, %v1483
      %v1639 = vmul.f32 %v1488, %v1488
      %v1640 = vmul.f32 %v1491, %v1491
      %v1641 = vmul.f32 %v1496, %v1496
      %v1642 = vmul.f32 %v1499, %v1499
      %v1643 = vmul.f32 %v1504, %v1504
      %v1644 = vmul.f32 %v1507, %v1507
      %v1645 = vmul.f32 %v1512, %v1512
      %v1646 = vmul.f32 %v1515, %v1515
      %v1647 = vmul.f32 %v1520, %v1520
      %v1648 = vmul.f32 %v1523, %v1523
      %v1649 = vmul.f32 %v1528, %v1528
      %v1650 = vmul.f32 %v1531, %v1531
      %v1651 = vmul.f32 %v1536, %v1536
      %v1652 = vmul.f32 %v1539, %v1539
      %v1653 = vmul.f32 %v1544, %v1544
      %v1654 = vmul.f32 %v1547, %v1547
      %v1655 = vmul.f32 %v1552, %v1552
      %v1656 = vmul.f32 %v1555, %v1555
      %v1657 = vmul.f32 %v1560, %v1560
      %v1658 = vmul.f32 %v1563, %v1563
      %v1659 = vmul.f32 %v1568, %v1568
      %v1660 = vmul.f32 %v1571, %v1571
      %v1661 = vmul.f32 %v1576, %v1576
      %v1662 = vmul.f32 %v1579, %v1579
      %v1663 = vmul.f32 %v1584, %v1584
      %v1664 = vmul.f32 %v1587, %v1587
      %v1665 = vmul.f32 %v1592, %v1592
      %v1666 = vmul.f32 %v1595, %v1595
      %v1667 = vadd.f32 %v1635, %v1636
      %v1668 = vadd.f32 %v1667, %v1637
      %v1669 = vadd.f32 %v1668, %v1638
      %v1670 = vadd.f32 %v1669, %v1639
      %v1671 = vadd.f32 %v1670, %v1640
      %v1672 = vadd.f32 %v1671, %v1641
      %v1673 = vadd.f32 %v1672, %v1642
      %v1674 = vadd.f32 %v1673, %v1643
      %v1675 = vadd.f32 %v1674, %v1644
      %v1676 = vadd.f32 %v1675, %v1645
      %v1677 = vadd.f32 %v1676, %v1646
      %v1678 = vadd.f32 %v1677, %v1647
      %v1679 = vadd.f32 %v1678, %v1648
      %v1680 = vadd.f32 %v1679, %v1649
      %v1681 = vadd.f32 %v1680, %v1650
      %v1682 = vadd.f32 %v1681, %v1651
      %v1683 = vadd.f32 %v1682, %v1652
      %v1684 = vadd.f32 %v1683, %v1653
      %v1685 = vadd.f32 %v1684, %v1654
      %v1686 = vadd.f32 %v1685, %v1655
      %v1687 = vadd.f32 %v1686, %v1656
      %v1688 = vadd.f32 %v1687, %v1657
      %v1689 = vadd.f32 %v1688, %v1658
      %v1690 = vadd.f32 %v1689, %v1659
      %v1691 = vadd.f32 %v1690, %v1660
      %v1692 = vadd.f32 %v1691, %v1661
      %v1693 = vadd.f32 %v1692, %v1662
      %v1694 = vadd.f32 %v1693, %v1663
      %v1695 = vadd.f32 %v1694, %v1664
      %v1696 = vadd.f32 %v1695, %v1665
      %v1697 = vadd.f32 %v1696, %v1666
      %v1698 = vrot.slane %v1697, 4
      %v1699 = vadd.f32 %v1697, %v1698
      %v1700 = vrot.slane %v1699, 2
      %v1701 = vadd.f32 %v1699, %v1700
      %v1702 = vrot.slane %v1701, 1
      %v1703 = vadd.f32 %v1701, %v1702
      %vm1704 = vcmask 1040384
      %v1705 = vsel %vm1704, %v1634, %v1703
      %v1706 = vld [vmem:[%s7] sm:$0xff]
      %v1707 = vld [vmem:[%s7 + $0x8] sm:$0xff]
      %v1708 = vld [vmem:[%s7 + $0x10] sm:$0xff]
      %v1709 = vld [vmem:[%s7 + $0x18] sm:$0xff]
      %v1710 = vld [vmem:[%s7 + $0x20] sm:$0xff]
      %v1711 = vld [vmem:[%s7 + $0x28] sm:$0xff]
      %v1712 = vld [vmem:[%s7 + $0x30] sm:$0xff]
      %v1713 = vld [vmem:[%s7 + $0x38] sm:$0xff]
      %v1714 = vld [vmem:[%s7 + $0x40] sm:$0xff]
      %v1715 = vld [vmem:[%s7 + $0x48] sm:$0xff]
      %v1716 = vld [vmem:[%s7 + $0x50] sm:$0xff]
      %v1717 = vld [vmem:[%s7 + $0x58] sm:$0xff]
      %v1718 = vld [vmem:[%s7 + $0x60] sm:$0xff]
      %v1719 = vld [vmem:[%s7 + $0x68] sm:$0xff]
      %v1720 = vld [vmem:[%s7 + $0x70] sm:$0xff]
      %v1721 = vld [vmem:[%s7 + $0x78] sm:$0xff]
      %1722 = vmatprep.subr.mxu0 0.0
      %1723 = vmatpush1.msra.mxu0 %v1706
      %1724 = vmatprep.subr.mxu0 0.0
      %1725 = vmatpush1.msra.mxu0 %v1707
      %1726 = vmatprep.subr.mxu0 0.0
      %1727 = vmatpush1.msra.mxu0 %v1708
      %1728 = vmatprep.subr.mxu0 0.0
      %1729 = vmatpush1.msra.mxu0 %v1709
      %1730 = vmatprep.subr.mxu0 0.0
      %1731 = vmatpush1.msra.mxu0 %v1710
      %1732 = vmatprep.subr.mxu0 0.0
      %1733 = vmatpush1.msra.mxu0 %v1711
      %1734 = vmatprep.subr.mxu0 0.0
      %1735 = vmatpush1.msra.mxu0 %v1712
      %1736 = vmatprep.subr.mxu0 0.0
      %1737 = vmatpush1.msra.mxu0 %v1713
      %1738 = vmatprep.subr.mxu0 0.0
      %1739 = vmatpush1.msra.mxu0 %v1714
      %1740 = vmatprep.subr.mxu0 0.0
      %1741 = vmatpush1.msra.mxu0 %v1715
      %1742 = vmatprep.subr.mxu0 0.0
      %1743 = vmatpush1.msra.mxu0 %v1716
      %1744 = vmatprep.subr.mxu0 0.0
      %1745 = vmatpush1.msra.mxu0 %v1717
      %1746 = vmatprep.subr.mxu0 0.0
      %1747 = vmatpush1.msra.mxu0 %v1718
      %1748 = vmatprep.subr.mxu0 0.0
      %1749 = vmatpush1.msra.mxu0 %v1719
      %1750 = vmatprep.subr.mxu0 0.0
      %1751 = vmatpush1.msra.mxu0 %v1720
      %1752 = vmatprep.subr.mxu0 0.0
      %1753 = vmatpush1.msra.mxu0 %v1721
      %1754 = vmatprep.subr.mxu0 0.0
      %1755 = vmatpush1.msra.mxu0 0.0
      %1756 = vmatprep.subr.mxu0 0.0
      %1757 = vmatpush1.msra.mxu0 0.0
      %1758 = vmatprep.subr.mxu0 0.0
      %1759 = vmatpush1.msra.mxu0 0.0
      %1760 = vmatprep.subr.mxu0 0.0
      %1761 = vmatpush1.msra.mxu0 0.0
      %1762 = vmatprep.subr.mxu0 0.0
      %1763 = vmatpush1.msra.mxu0 0.0
      %1764 = vmatprep.subr.mxu0 0.0
      %1765 = vmatpush1.msra.mxu0 0.0
      %1766 = vmatprep.subr.mxu0 0.0
      %1767 = vmatpush1.msra.mxu0 0.0
      %1768 = vmatprep.subr.mxu0 0.0
      %1769 = vmatpush1.msra.mxu0 0.0
      %1770 = vmatprep.subr.mxu0 0.0
      %1771 = vmatpush1.msra.mxu0 0.0
      %1772 = vmatprep.subr.mxu0 0.0
      %1773 = vmatpush1.msra.mxu0 0.0
      %1774 = vmatprep.subr.mxu0 0.0
      %1775 = vmatpush1.msra.mxu0 0.0
      %1776 = vmatprep.subr.mxu0 0.0
      %1777 = vmatpush1.msra.mxu0 0.0
      %1778 = vmatprep.subr.mxu0 0.0
      %1779 = vmatpush1.msra.mxu0 0.0
      %1780 = vmatprep.subr.mxu0 0.0
      %1781 = vmatpush1.msra.mxu0 0.0
      %1782 = vmatprep.subr.mxu0 0.0
      %1783 = vmatpush1.msra.mxu0 0.0
      %1784 = vmatprep.subr.mxu0 0.0
      %1785 = vmatpush1.msra.mxu0 0.0
      %1786 = vmatprep.mubr.f32.mxu0 0.0
      %1787 = vmatmul.mubr.f32.gmra.mrb[0].mxu0 %v1705
      %v1788 = vpop.f32.mrb[0].mxu0
      %v1789 = vadd.f32 0.0, %v1788
      %v1790 = vpop.f32.mrb[0].mxu0
      %1791 = vdwg.mxu0
      %v1792 = vrcp.pop 8192.0
      %v1793 = vmul.f32 %v1789, %v1792
      %v1794 = vmul.f32 %v1793, %v1793
      %v1796 = vrot.slane %v1794, 7
      %v1798 = vsub.f32 %v1793, %v1796
      %v1799 = vmax.f32 %v1798, 0.0
      %v1800 = vadd.f32 %v1799, 1e-05
      %v1801 = vrsqrt.pop %v1800
      %v1802 = vsel %vm1704, %v1793, %v1801
      %v1803 = vld [vmem:[%s9] sm:$0xf]
      %vm1804 = vcmask 31744
      %v1806 = vsel %vm1804, %v1802, 0
      %vm1808 = vcmask 1043456
      %v1810 = vsel %vm1808, %v1803, 0
      %1812 = vmatprep.subr.mxu0 0.0
      %1813 = vmatpush1.msra.mxu0 %v1810
      %1814 = vmatprep.subr.mxu0 0.0
      %1815 = vmatpush1.msra.mxu0 0.0
      %1816 = vmatprep.subr.mxu0 0.0
      %1817 = vmatpush1.msra.mxu0 0.0
      %1818 = vmatprep.subr.mxu0 0.0
      %1819 = vmatpush1.msra.mxu0 0.0
      %1820 = vmatprep.subr.mxu0 0.0
      %1821 = vmatpush1.msra.mxu0 0.0
      %1822 = vmatprep.subr.mxu0 0.0
      %1823 = vmatpush1.msra.mxu0 0.0
      %1824 = vmatprep.subr.mxu0 0.0
      %1825 = vmatpush1.msra.mxu0 0.0
      %1826 = vmatprep.subr.mxu0 0.0
      %1827 = vmatpush1.msra.mxu0 0.0
      %1828 = vmatprep.subr.mxu0 0.0
      %1829 = vmatpush1.msra.mxu0 0.0
      %1830 = vmatprep.subr.mxu0 0.0
      %1831 = vmatpush1.msra.mxu0 0.0
      %1832 = vmatprep.subr.mxu0 0.0
      %1833 = vmatpush1.msra.mxu0 0.0
      %1834 = vmatprep.subr.mxu0 0.0
      %1835 = vmatpush1.msra.mxu0 0.0
      %1836 = vmatprep.subr.mxu0 0.0
      %1837 = vmatpush1.msra.mxu0 0.0
      %1838 = vmatprep.subr.mxu0 0.0
      %1839 = vmatpush1.msra.mxu0 0.0
      %1840 = vmatprep.subr.mxu0 0.0
      %1841 = vmatpush1.msra.mxu0 0.0
      %1842 = vmatprep.subr.mxu0 0.0
      %1843 = vmatpush1.msra.mxu0 0.0
      %1844 = vmatprep.subr.mxu0 0.0
      %1845 = vmatpush1.msra.mxu0 0.0
      %1846 = vmatprep.subr.mxu0 0.0
      %1847 = vmatpush1.msra.mxu0 0.0
      %1848 = vmatprep.subr.mxu0 0.0
      %1849 = vmatpush1.msra.mxu0 0.0
      %1850 = vmatprep.subr.mxu0 0.0
      %1851 = vmatpush1.msra.mxu0 0.0
      %1852 = vmatprep.subr.mxu0 0.0
      %1853 = vmatpush1.msra.mxu0 0.0
      %1854 = vmatprep.subr.mxu0 0.0
      %1855 = vmatpush1.msra.mxu0 0.0
      %1856 = vmatprep.subr.mxu0 0.0
      %1857 = vmatpush1.msra.mxu0 0.0
      %1858 = vmatprep.subr.mxu0 0.0
      %1859 = vmatpush1.msra.mxu0 0.0
      %1860 = vmatprep.subr.mxu0 0.0
      %1861 = vmatpush1.msra.mxu0 0.0
      %1862 = vmatprep.subr.mxu0 0.0
      %1863 = vmatpush1.msra.mxu0 0.0
      %1864 = vmatprep.subr.mxu0 0.0
      %1865 = vmatpush1.msra.mxu0 0.0
      %1866 = vmatprep.subr.mxu0 0.0
      %1867 = vmatpush1.msra.mxu0 0.0
      %1868 = vmatprep.subr.mxu0 0.0
      %1869 = vmatpush1.msra.mxu0 0.0
      %1870 = vmatprep.subr.mxu0 0.0
      %1871 = vmatpush1.msra.mxu0 0.0
      %1872 = vmatprep.subr.mxu0 0.0
      %1873 = vmatpush1.msra.mxu0 0.0
      %1874 = vmatprep.subr.mxu0 0.0
      %1875 = vmatpush1.msra.mxu0 0.0
      %1876 = vmatprep.mubr.f32.mxu0 0.0
      %1877 = vmatmul.mubr.f32.gmra.mrb[0].mxu0 %v1806
      %v1878 = vpop.f32.mrb[0].mxu0
      %v1879 = vadd.f32 0.0, %v1878
      %v1880 = vpop.f32.mrb[0].mxu0
      %1881 = vdwg.mxu0
      %v1882 = vld [vmem:[%s23] sm:$0x1]
      %v1884 = vlaneseq
      %v1885 = vshrl.u32 %v1884, 7
      %v1886 = vsub.s32 0, %v1885
      %v1887 = vrot.slane %v1882, %v1886
      %v1889 = vmul.f32 %v1879, %v1887
      %v1890 = vld [vmem:[%s25] sm:$0x1]
      %v1892 = vrot.slane %v1889, 1
      %v1894 = vmul.f32 %v1879, %v1892
      %v1895 = vsub.f32 %v1890, %v1894
      %v1896 = vlaneseq
      %v1897 = vshrl.u32 %v1896, 7
      %v1898 = vsub.s32 1, %v1897
      %v1899 = vrot.slane %v1889, %v1898
      %v1900 = vmul.f32 %v1472, %v1899
      %v1901 = vmul.f32 %v1475, %v1899
      %v1902 = vmul.f32 %v1480, %v1899
      %v1903 = vmul.f32 %v1483, %v1899
      %v1904 = vmul.f32 %v1488, %v1899
      %v1905 = vmul.f32 %v1491, %v1899
      %v1906 = vmul.f32 %v1496, %v1899
      %v1907 = vmul.f32 %v1499, %v1899
      %v1908 = vmul.f32 %v1504, %v1899
      %v1909 = vmul.f32 %v1507, %v1899
      %v1910 = vmul.f32 %v1512, %v1899
      %v1911 = vmul.f32 %v1515, %v1899
      %v1912 = vmul.f32 %v1520, %v1899
      %v1913 = vmul.f32 %v1523, %v1899
      %v1914 = vmul.f32 %v1528, %v1899
      %v1915 = vmul.f32 %v1531, %v1899
      %v1916 = vmul.f32 %v1536, %v1899
      %v1917 = vmul.f32 %v1539, %v1899
      %v1918 = vmul.f32 %v1544, %v1899
      %v1919 = vmul.f32 %v1547, %v1899
      %v1920 = vmul.f32 %v1552, %v1899
      %v1921 = vmul.f32 %v1555, %v1899
      %v1922 = vmul.f32 %v1560, %v1899
      %v1923 = vmul.f32 %v1563, %v1899
      %v1924 = vmul.f32 %v1568, %v1899
      %v1925 = vmul.f32 %v1571, %v1899
      %v1926 = vmul.f32 %v1576, %v1899
      %v1927 = vmul.f32 %v1579, %v1899
      %v1928 = vmul.f32 %v1584, %v1899
      %v1929 = vmul.f32 %v1587, %v1899
      %v1930 = vmul.f32 %v1592, %v1899
      %v1931 = vmul.f32 %v1595, %v1899
      %v1933 = vlaneseq
      %v1934 = vshrl.u32 %v1933, 7
      %v1935 = vsub.s32 0, %v1934
      %v1936 = vrot.slane %v1895, %v1935
      %v1938 = vadd.f32 %v1900, %v1936
      %v1939 = vadd.f32 %v1901, %v1936
      %v1940 = vadd.f32 %v1902, %v1936
      %v1941 = vadd.f32 %v1903, %v1936
      %v1942 = vadd.f32 %v1904, %v1936
      %v1943 = vadd.f32 %v1905, %v1936
      %v1944 = vadd.f32 %v1906, %v1936
      %v1945 = vadd.f32 %v1907, %v1936
      %v1946 = vadd.f32 %v1908, %v1936
      %v1947 = vadd.f32 %v1909, %v1936
      %v1948 = vadd.f32 %v1910, %v1936
      %v1949 = vadd.f32 %v1911, %v1936
      %v1950 = vadd.f32 %v1912, %v1936
      %v1951 = vadd.f32 %v1913, %v1936
      %v1952 = vadd.f32 %v1914, %v1936
      %v1953 = vadd.f32 %v1915, %v1936
      %v1954 = vadd.f32 %v1916, %v1936
      %v1955 = vadd.f32 %v1917, %v1936
      %v1956 = vadd.f32 %v1918, %v1936
      %v1957 = vadd.f32 %v1919, %v1936
      %v1958 = vadd.f32 %v1920, %v1936
      %v1959 = vadd.f32 %v1921, %v1936
      %v1960 = vadd.f32 %v1922, %v1936
      %v1961 = vadd.f32 %v1923, %v1936
      %v1962 = vadd.f32 %v1924, %v1936
      %v1963 = vadd.f32 %v1925, %v1936
      %v1964 = vadd.f32 %v1926, %v1936
      %v1965 = vadd.f32 %v1927, %v1936
      %v1966 = vadd.f32 %v1928, %v1936
      %v1967 = vadd.f32 %v1929, %v1936
      %v1968 = vadd.f32 %v1930, %v1936
      %v1969 = vadd.f32 %v1931, %v1936
      %v1970 = vsub.f32 0.0, %v1938
      %v1971 = vsub.f32 0.0, %v1939
      %v1972 = vsub.f32 0.0, %v1940
      %v1973 = vsub.f32 0.0, %v1941
      %v1974 = vsub.f32 0.0, %v1942
      %v1975 = vsub.f32 0.0, %v1943
      %v1976 = vsub.f32 0.0, %v1944
      %v1977 = vsub.f32 0.0, %v1945
      %v1978 = vsub.f32 0.0, %v1946
      %v1979 = vsub.f32 0.0, %v1947
      %v1980 = vsub.f32 0.0, %v1948
      %v1981 = vsub.f32 0.0, %v1949
      %v1982 = vsub.f32 0.0, %v1950
      %v1983 = vsub.f32 0.0, %v1951
      %v1984 = vsub.f32 0.0, %v1952
      %v1985 = vsub.f32 0.0, %v1953
      %v1986 = vsub.f32 0.0, %v1954
      %v1987 = vsub.f32 0.0, %v1955
      %v1988 = vsub.f32 0.0, %v1956
      %v1989 = vsub.f32 0.0, %v1957
      %v1990 = vsub.f32 0.0, %v1958
      %v1991 = vsub.f32 0.0, %v1959
      %v1992 = vsub.f32 0.0, %v1960
      %v1993 = vsub.f32 0.0, %v1961
      %v1994 = vsub.f32 0.0, %v1962
      %v1995 = vsub.f32 0.0, %v1963
      %v1996 = vsub.f32 0.0, %v1964
      %v1997 = vsub.f32 0.0, %v1965
      %v1998 = vsub.f32 0.0, %v1966
      %v1999 = vsub.f32 0.0, %v1967
      %v2000 = vsub.f32 0.0, %v1968
      %v2001 = vsub.f32 0.0, %v1969
      %v2002 = vmul.f32 %v1970, 1.442695
      %v2003 = vpow.pop %v2002
      %v2004 = vmul.f32 %v1971, 1.442695
      %v2005 = vpow.pop %v2004
      %v2006 = vmul.f32 %v1972, 1.442695
      %v2007 = vpow.pop %v2006
      %v2008 = vmul.f32 %v1973, 1.442695
      %v2009 = vpow.pop %v2008
      %v2010 = vmul.f32 %v1974, 1.442695
      %v2011 = vpow.pop %v2010
      %v2012 = vmul.f32 %v1975, 1.442695
      %v2013 = vpow.pop %v2012
      %v2014 = vmul.f32 %v1976, 1.442695
      %v2015 = vpow.pop %v2014
      %v2016 = vmul.f32 %v1977, 1.442695
      %v2017 = vpow.pop %v2016
      %v2018 = vmul.f32 %v1978, 1.442695
      %v2019 = vpow.pop %v2018
      %v2020 = vmul.f32 %v1979, 1.442695
      %v2021 = vpow.pop %v2020
      %v2022 = vmul.f32 %v1980, 1.442695
      %v2023 = vpow.pop %v2022
      %v2024 = vmul.f32 %v1981, 1.442695
      %v2025 = vpow.pop %v2024
      %v2026 = vmul.f32 %v1982, 1.442695
      %v2027 = vpow.pop %v2026
      %v2028 = vmul.f32 %v1983, 1.442695
      %v2029 = vpow.pop %v2028
      %v2030 = vmul.f32 %v1984, 1.442695
      %v2031 = vpow.pop %v2030
      %v2032 = vmul.f32 %v1985, 1.442695
      %v2033 = vpow.pop %v2032
      %v2034 = vmul.f32 %v1986, 1.442695
      %v2035 = vpow.pop %v2034
      %v2036 = vmul.f32 %v1987, 1.442695
      %v2037 = vpow.pop %v2036
      %v2038 = vmul.f32 %v1988, 1.442695
      %v2039 = vpow.pop %v2038
      %v2040 = vmul.f32 %v1989, 1.442695
      %v2041 = vpow.pop %v2040
      %v2042 = vmul.f32 %v1990, 1.442695
      %v2043 = vpow.pop %v2042
      %v2044 = vmul.f32 %v1991, 1.442695
      %v2045 = vpow.pop %v2044
      %v2046 = vmul.f32 %v1992, 1.442695
      %v2047 = vpow.pop %v2046
      %v2048 = vmul.f32 %v1993, 1.442695
      %v2049 = vpow.pop %v2048
      %v2050 = vmul.f32 %v1994, 1.442695
      %v2051 = vpow.pop %v2050
      %v2052 = vmul.f32 %v1995, 1.442695
      %v2053 = vpow.pop %v2052
      %v2054 = vmul.f32 %v1996, 1.442695
      %v2055 = vpow.pop %v2054
      %v2056 = vmul.f32 %v1997, 1.442695
      %v2057 = vpow.pop %v2056
      %v2058 = vmul.f32 %v1998, 1.442695
      %v2059 = vpow.pop %v2058
      %v2060 = vmul.f32 %v1999, 1.442695
      %v2061 = vpow.pop %v2060
      %v2062 = vmul.f32 %v2000, 1.442695
      %v2063 = vpow.pop %v2062
      %v2064 = vmul.f32 %v2001, 1.442695
      %v2065 = vpow.pop %v2064
      %v2066 = vadd.f32 %v2003, 1.0
      %v2067 = vadd.f32 %v2005, 1.0
      %v2068 = vadd.f32 %v2007, 1.0
      %v2069 = vadd.f32 %v2009, 1.0
      %v2070 = vadd.f32 %v2011, 1.0
      %v2071 = vadd.f32 %v2013, 1.0
      %v2072 = vadd.f32 %v2015, 1.0
      %v2073 = vadd.f32 %v2017, 1.0
      %v2074 = vadd.f32 %v2019, 1.0
      %v2075 = vadd.f32 %v2021, 1.0
      %v2076 = vadd.f32 %v2023, 1.0
      %v2077 = vadd.f32 %v2025, 1.0
      %v2078 = vadd.f32 %v2027, 1.0
      %v2079 = vadd.f32 %v2029, 1.0
      %v2080 = vadd.f32 %v2031, 1.0
      %v2081 = vadd.f32 %v2033, 1.0
      %v2082 = vadd.f32 %v2035, 1.0
      %v2083 = vadd.f32 %v2037, 1.0
      %v2084 = vadd.f32 %v2039, 1.0
      %v2085 = vadd.f32 %v2041, 1.0
      %v2086 = vadd.f32 %v2043, 1.0
      %v2087 = vadd.f32 %v2045, 1.0
      %v2088 = vadd.f32 %v2047, 1.0
      %v2089 = vadd.f32 %v2049, 1.0
      %v2090 = vadd.f32 %v2051, 1.0
      %v2091 = vadd.f32 %v2053, 1.0
      %v2092 = vadd.f32 %v2055, 1.0
      %v2093 = vadd.f32 %v2057, 1.0
      %v2094 = vadd.f32 %v2059, 1.0
      %v2095 = vadd.f32 %v2061, 1.0
      %v2096 = vadd.f32 %v2063, 1.0
      %v2097 = vadd.f32 %v2065, 1.0
      %v2098 = vrcp.pop %v2066
      %v2099 = vrcp.pop %v2067
      %v2100 = vrcp.pop %v2068
      %v2101 = vrcp.pop %v2069
      %v2102 = vrcp.pop %v2070
      %v2103 = vrcp.pop %v2071
      %v2104 = vrcp.pop %v2072
      %v2105 = vrcp.pop %v2073
      %v2106 = vrcp.pop %v2074
      %v2107 = vrcp.pop %v2075
      %v2108 = vrcp.pop %v2076
      %v2109 = vrcp.pop %v2077
      %v2110 = vrcp.pop %v2078
      %v2111 = vrcp.pop %v2079
      %v2112 = vrcp.pop %v2080
      %v2113 = vrcp.pop %v2081
      %v2114 = vrcp.pop %v2082
      %v2115 = vrcp.pop %v2083
      %v2116 = vrcp.pop %v2084
      %v2117 = vrcp.pop %v2085
      %v2118 = vrcp.pop %v2086
      %v2119 = vrcp.pop %v2087
      %v2120 = vrcp.pop %v2088
      %v2121 = vrcp.pop %v2089
      %v2122 = vrcp.pop %v2090
      %v2123 = vrcp.pop %v2091
      %v2124 = vrcp.pop %v2092
      %v2125 = vrcp.pop %v2093
      %v2126 = vrcp.pop %v2094
      %v2127 = vrcp.pop %v2095
      %v2128 = vrcp.pop %v2096
      %v2129 = vrcp.pop %v2097
      %v2130 = vmul.f32 %v1938, %v2098
      %v2131 = vmul.f32 %v1939, %v2099
      %v2132 = vmul.f32 %v1940, %v2100
      %v2133 = vmul.f32 %v1941, %v2101
      %v2134 = vmul.f32 %v1942, %v2102
      %v2135 = vmul.f32 %v1943, %v2103
      %v2136 = vmul.f32 %v1944, %v2104
      %v2137 = vmul.f32 %v1945, %v2105
      %v2138 = vmul.f32 %v1946, %v2106
      %v2139 = vmul.f32 %v1947, %v2107
      %v2140 = vmul.f32 %v1948, %v2108
      %v2141 = vmul.f32 %v1949, %v2109
      %v2142 = vmul.f32 %v1950, %v2110
      %v2143 = vmul.f32 %v1951, %v2111
      %v2144 = vmul.f32 %v1952, %v2112
      %v2145 = vmul.f32 %v1953, %v2113
      %v2146 = vmul.f32 %v1954, %v2114
      %v2147 = vmul.f32 %v1955, %v2115
      %v2148 = vmul.f32 %v1956, %v2116
      %v2149 = vmul.f32 %v1957, %v2117
      %v2150 = vmul.f32 %v1958, %v2118
      %v2151 = vmul.f32 %v1959, %v2119
      %v2152 = vmul.f32 %v1960, %v2120
      %v2153 = vmul.f32 %v1961, %v2121
      %v2154 = vmul.f32 %v1962, %v2122
      %v2155 = vmul.f32 %v1963, %v2123
      %v2156 = vmul.f32 %v1964, %v2124
      %v2157 = vmul.f32 %v1965, %v2125
      %v2158 = vmul.f32 %v1966, %v2126
      %v2159 = vmul.f32 %v1967, %v2127
      %v2160 = vmul.f32 %v1968, %v2128
      %v2161 = vmul.f32 %v1969, %v2129
      %v2162 = vrot.slane %v2130, 7
      %v2163 = vrot.slane %v2132, 7
      %v2164 = vrot.slane %v2134, 7
      %v2165 = vrot.slane %v2136, 7
      %v2166 = vrot.slane %v2138, 7
      %v2167 = vrot.slane %v2140, 7
      %v2168 = vrot.slane %v2142, 7
      %v2169 = vrot.slane %v2144, 7
      %v2170 = vrot.slane %v2146, 7
      %v2171 = vrot.slane %v2148, 7
      %v2172 = vrot.slane %v2150, 7
      %v2173 = vrot.slane %v2152, 7
      %v2174 = vrot.slane %v2154, 7
      %v2175 = vrot.slane %v2156, 7
      %v2176 = vrot.slane %v2158, 7
      %v2177 = vrot.slane %v2160, 7
      %v2178 = vrot.slane %v2131, 7
      %v2179 = vrot.slane %v2133, 7
      %v2180 = vrot.slane %v2135, 7
      %v2181 = vrot.slane %v2137, 7
      %v2182 = vrot.slane %v2139, 7
      %v2183 = vrot.slane %v2141, 7
      %v2184 = vrot.slane %v2143, 7
      %v2185 = vrot.slane %v2145, 7
      %v2186 = vrot.slane %v2147, 7
      %v2187 = vrot.slane %v2149, 7
      %v2188 = vrot.slane %v2151, 7
      %v2189 = vrot.slane %v2153, 7
      %v2190 = vrot.slane %v2155, 7
      %v2191 = vrot.slane %v2157, 7
      %v2192 = vrot.slane %v2159, 7
      %v2193 = vrot.slane %v2161, 7
      %vm2194 = vcmp.lt.s32.totalorder %v1020, 1
      %v2195 = vsel %vm2194, %v2162, %v2178
      %v2196 = vsel %vm2194, %v2163, %v2179
      %v2197 = vsel %vm2194, %v2164, %v2180
      %v2198 = vsel %vm2194, %v2165, %v2181
      %v2199 = vsel %vm2194, %v2166, %v2182
      %v2200 = vsel %vm2194, %v2167, %v2183
      %v2201 = vsel %vm2194, %v2168, %v2184
      %v2202 = vsel %vm2194, %v2169, %v2185
      %v2203 = vsel %vm2194, %v2170, %v2186
      %v2204 = vsel %vm2194, %v2171, %v2187
      %v2205 = vsel %vm2194, %v2172, %v2188
      %v2206 = vsel %vm2194, %v2173, %v2189
      %v2207 = vsel %vm2194, %v2174, %v2190
      %v2208 = vsel %vm2194, %v2175, %v2191
      %v2209 = vsel %vm2194, %v2176, %v2192
      %v2210 = vsel %vm2194, %v2177, %v2193
      %v2211 = vsel %vm2194, %v2178, %v2162
      %v2212 = vsel %vm2194, %v2179, %v2163
      %v2213 = vsel %vm2194, %v2180, %v2164
      %v2214 = vsel %vm2194, %v2181, %v2165
      %v2215 = vsel %vm2194, %v2182, %v2166
      %v2216 = vsel %vm2194, %v2183, %v2167
      %v2217 = vsel %vm2194, %v2184, %v2168
      %v2218 = vsel %vm2194, %v2185, %v2169
      %v2219 = vsel %vm2194, %v2186, %v2170
      %v2220 = vsel %vm2194, %v2187, %v2171
      %v2221 = vsel %vm2194, %v2188, %v2172
      %v2222 = vsel %vm2194, %v2189, %v2173
      %v2223 = vsel %vm2194, %v2190, %v2174
      %v2224 = vsel %vm2194, %v2191, %v2175
      %v2225 = vsel %vm2194, %v2192, %v2176
      %v2226 = vsel %vm2194, %v2193, %v2177
      %v2227 = vsel %vm1022, 1, 0
      %v2228 = vsel %vm1023, 1, 0
      %vm2229 = vcmp.eq.s32.totalorder %v2227, 1
      %vm2230 = vcmp.eq.s32.totalorder %v2228, 1
      %v2231 = vsel %vm2229, 0.0, %v2211
      %v2232 = vsel %vm2230, 0.0, %v2195
      %v2233 = vsel %vm2229, 0.0, %v2212
      %v2234 = vsel %vm2230, 0.0, %v2196
      %v2235 = vsel %vm2229, 0.0, %v2213
      %v2236 = vsel %vm2230, 0.0, %v2197
      %v2237 = vsel %vm2229, 0.0, %v2214
      %v2238 = vsel %vm2230, 0.0, %v2198
      %v2239 = vsel %vm2229, 0.0, %v2215
      %v2240 = vsel %vm2230, 0.0, %v2199
      %v2241 = vsel %vm2229, 0.0, %v2216
      %v2242 = vsel %vm2230, 0.0, %v2200
      %v2243 = vsel %vm2229, 0.0, %v2217
      %v2244 = vsel %vm2230, 0.0, %v2201
      %v2245 = vsel %vm2229, 0.0, %v2218
      %v2246 = vsel %vm2230, 0.0, %v2202
      %v2247 = vsel %vm2229, 0.0, %v2219
      %v2248 = vsel %vm2230, 0.0, %v2203
      %v2249 = vsel %vm2229, 0.0, %v2220
      %v2250 = vsel %vm2230, 0.0, %v2204
      %v2251 = vsel %vm2229, 0.0, %v2221
      %v2252 = vsel %vm2230, 0.0, %v2205
      %v2253 = vsel %vm2229, 0.0, %v2222
      %v2254 = vsel %vm2230, 0.0, %v2206
      %v2255 = vsel %vm2229, 0.0, %v2223
      %v2256 = vsel %vm2230, 0.0, %v2207
      %v2257 = vsel %vm2229, 0.0, %v2224
      %v2258 = vsel %vm2230, 0.0, %v2208
      %v2259 = vsel %vm2229, 0.0, %v2225
      %v2260 = vsel %vm2230, 0.0, %v2209
      %v2261 = vsel %vm2229, 0.0, %v2226
      %v2262 = vsel %vm2230, 0.0, %v2210
      %v2263 = vrot.slane %v2130, 1
      %v2264 = vrot.slane %v2132, 1
      %v2265 = vrot.slane %v2134, 1
      %v2266 = vrot.slane %v2136, 1
      %v2267 = vrot.slane %v2138, 1
      %v2268 = vrot.slane %v2140, 1
      %v2269 = vrot.slane %v2142, 1
      %v2270 = vrot.slane %v2144, 1
      %v2271 = vrot.slane %v2146, 1
      %v2272 = vrot.slane %v2148, 1
      %v2273 = vrot.slane %v2150, 1
      %v2274 = vrot.slane %v2152, 1
      %v2275 = vrot.slane %v2154, 1
      %v2276 = vrot.slane %v2156, 1
      %v2277 = vrot.slane %v2158, 1
      %v2278 = vrot.slane %v2160, 1
      %v2279 = vrot.slane %v2131, 1
      %v2280 = vrot.slane %v2133, 1
      %v2281 = vrot.slane %v2135, 1
      %v2282 = vrot.slane %v2137, 1
      %v2283 = vrot.slane %v2139, 1
      %v2284 = vrot.slane %v2141, 1
      %v2285 = vrot.slane %v2143, 1
      %v2286 = vrot.slane %v2145, 1
      %v2287 = vrot.slane %v2147, 1
      %v2288 = vrot.slane %v2149, 1
      %v2289 = vrot.slane %v2151, 1
      %v2290 = vrot.slane %v2153, 1
      %v2291 = vrot.slane %v2155, 1
      %v2292 = vrot.slane %v2157, 1
      %v2293 = vrot.slane %v2159, 1
      %v2294 = vrot.slane %v2161, 1
      %vm2295 = vcmp.lt.s32.totalorder %v1020, 7
      %v2296 = vsel %vm2295, %v2263, %v2279
      %v2297 = vsel %vm2295, %v2264, %v2280
      %v2298 = vsel %vm2295, %v2265, %v2281
      %v2299 = vsel %vm2295, %v2266, %v2282
      %v2300 = vsel %vm2295, %v2267, %v2283
      %v2301 = vsel %vm2295, %v2268, %v2284
      %v2302 = vsel %vm2295, %v2269, %v2285
      %v2303 = vsel %vm2295, %v2270, %v2286
      %v2304 = vsel %vm2295, %v2271, %v2287
      %v2305 = vsel %vm2295, %v2272, %v2288
      %v2306 = vsel %vm2295, %v2273, %v2289
      %v2307 = vsel %vm2295, %v2274, %v2290
      %v2308 = vsel %vm2295, %v2275, %v2291
      %v2309 = vsel %vm2295, %v2276, %v2292
      %v2310 = vsel %vm2295, %v2277, %v2293
      %v2311 = vsel %vm2295, %v2278, %v2294
      %v2312 = vsel %vm2295, %v2279, %v2263
      %v2313 = vsel %vm2295, %v2280, %v2264
      %v2314 = vsel %vm2295, %v2281, %v2265
      %v2315 = vsel %vm2295, %v2282, %v2266
      %v2316 = vsel %vm2295, %v2283, %v2267
      %v2317 = vsel %vm2295, %v2284, %v2268
      %v2318 = vsel %vm2295, %v2285, %v2269
      %v2319 = vsel %vm2295, %v2286, %v2270
      %v2320 = vsel %vm2295, %v2287, %v2271
      %v2321 = vsel %vm2295, %v2288, %v2272
      %v2322 = vsel %vm2295, %v2289, %v2273
      %v2323 = vsel %vm2295, %v2290, %v2274
      %v2324 = vsel %vm2295, %v2291, %v2275
      %v2325 = vsel %vm2295, %v2292, %v2276
      %v2326 = vsel %vm2295, %v2293, %v2277
      %v2327 = vsel %vm2295, %v2294, %v2278
      %v2328 = vsel %vm1024, 1, 0
      %v2329 = vsel %vm1025, 1, 0
      %vm2330 = vcmp.eq.s32.totalorder %v2328, 1
      %vm2331 = vcmp.eq.s32.totalorder %v2329, 1
      %v2332 = vsel %vm2330, 0.0, %v2296
      %v2333 = vsel %vm2331, 0.0, %v2312
      %v2334 = vsel %vm2330, 0.0, %v2297
      %v2335 = vsel %vm2331, 0.0, %v2313
      %v2336 = vsel %vm2330, 0.0, %v2298
      %v2337 = vsel %vm2331, 0.0, %v2314
      %v2338 = vsel %vm2330, 0.0, %v2299
      %v2339 = vsel %vm2331, 0.0, %v2315
      %v2340 = vsel %vm2330, 0.0, %v2300
      %v2341 = vsel %vm2331, 0.0, %v2316
      %v2342 = vsel %vm2330, 0.0, %v2301
      %v2343 = vsel %vm2331, 0.0, %v2317
      %v2344 = vsel %vm2330, 0.0, %v2302
      %v2345 = vsel %vm2331, 0.0, %v2318
      %v2346 = vsel %vm2330, 0.0, %v2303
      %v2347 = vsel %vm2331, 0.0, %v2319
      %v2348 = vsel %vm2330, 0.0, %v2304
      %v2349 = vsel %vm2331, 0.0, %v2320
      %v2350 = vsel %vm2330, 0.0, %v2305
      %v2351 = vsel %vm2331, 0.0, %v2321
      %v2352 = vsel %vm2330, 0.0, %v2306
      %v2353 = vsel %vm2331, 0.0, %v2322
      %v2354 = vsel %vm2330, 0.0, %v2307
      %v2355 = vsel %vm2331, 0.0, %v2323
      %v2356 = vsel %vm2330, 0.0, %v2308
      %v2357 = vsel %vm2331, 0.0, %v2324
      %v2358 = vsel %vm2330, 0.0, %v2309
      %v2359 = vsel %vm2331, 0.0, %v2325
      %v2360 = vsel %vm2330, 0.0, %v2310
      %v2361 = vsel %vm2331, 0.0, %v2326
      %v2362 = vsel %vm2330, 0.0, %v2311
      %v2363 = vsel %vm2331, 0.0, %v2327
      %v2364 = vpack.c.bf16 %v2232, %v2231
      %v2365 = vpack.c.bf16 %v2234, %v2233
      %v2366 = vpack.c.bf16 %v2236, %v2235
      %v2367 = vpack.c.bf16 %v2238, %v2237
      %v2368 = vpack.c.bf16 %v2240, %v2239
      %v2369 = vpack.c.bf16 %v2242, %v2241
      %v2370 = vpack.c.bf16 %v2244, %v2243
      %v2371 = vpack.c.bf16 %v2246, %v2245
      %v2372 = vpack.c.bf16 %v2248, %v2247
      %v2373 = vpack.c.bf16 %v2250, %v2249
      %v2374 = vpack.c.bf16 %v2252, %v2251
      %v2375 = vpack.c.bf16 %v2254, %v2253
      %v2376 = vpack.c.bf16 %v2256, %v2255
      %v2377 = vpack.c.bf16 %v2258, %v2257
      %v2378 = vpack.c.bf16 %v2260, %v2259
      %v2379 = vpack.c.bf16 %v2262, %v2261
      %v2380 = vpack.c.bf16 %v2131, %v2130
      %v2381 = vpack.c.bf16 %v2133, %v2132
      %v2382 = vpack.c.bf16 %v2135, %v2134
      %v2383 = vpack.c.bf16 %v2137, %v2136
      %v2384 = vpack.c.bf16 %v2139, %v2138
      %v2385 = vpack.c.bf16 %v2141, %v2140
      %v2386 = vpack.c.bf16 %v2143, %v2142
      %v2387 = vpack.c.bf16 %v2145, %v2144
      %v2388 = vpack.c.bf16 %v2147, %v2146
      %v2389 = vpack.c.bf16 %v2149, %v2148
      %v2390 = vpack.c.bf16 %v2151, %v2150
      %v2391 = vpack.c.bf16 %v2153, %v2152
      %v2392 = vpack.c.bf16 %v2155, %v2154
      %v2393 = vpack.c.bf16 %v2157, %v2156
      %v2394 = vpack.c.bf16 %v2159, %v2158
      %v2395 = vpack.c.bf16 %v2161, %v2160
      %v2396 = vpack.c.bf16 %v2333, %v2332
      %v2397 = vpack.c.bf16 %v2335, %v2334
      %v2398 = vpack.c.bf16 %v2337, %v2336
      %v2399 = vpack.c.bf16 %v2339, %v2338
      %v2400 = vpack.c.bf16 %v2341, %v2340
      %v2401 = vpack.c.bf16 %v2343, %v2342
      %v2402 = vpack.c.bf16 %v2345, %v2344
      %v2403 = vpack.c.bf16 %v2347, %v2346
      %v2404 = vpack.c.bf16 %v2349, %v2348
      %v2405 = vpack.c.bf16 %v2351, %v2350
      %v2406 = vpack.c.bf16 %v2353, %v2352
      %v2407 = vpack.c.bf16 %v2355, %v2354
      %v2408 = vpack.c.bf16 %v2357, %v2356
      %v2409 = vpack.c.bf16 %v2359, %v2358
      %v2410 = vpack.c.bf16 %v2361, %v2360
      %v2411 = vpack.c.bf16 %v2363, %v2362
      %v2412 = vld [vmem:[%s27] sm:$0xf]
      %v2413 = vld [vmem:[%s27 + $0x4] sm:$0xf]
      %v2414 = vld [vmem:[%s27 + $0x8] sm:$0xf]
      %v2415 = vld [vmem:[%s27 + $0xc] sm:$0xf]
      %v2416 = vld [vmem:[%s27 + $0x10] sm:$0xf]
      %v2417 = vld [vmem:[%s27 + $0x14] sm:$0xf]
      %v2418 = vld [vmem:[%s27 + $0x18] sm:$0xf]
      %v2419 = vld [vmem:[%s27 + $0x1c] sm:$0xf]
      %v2420 = vld [vmem:[%s27 + $0x20] sm:$0xf]
      %v2421 = vld [vmem:[%s27 + $0x24] sm:$0xf]
      %v2422 = vld [vmem:[%s27 + $0x28] sm:$0xf]
      %v2423 = vld [vmem:[%s27 + $0x2c] sm:$0xf]
      %v2424 = vld [vmem:[%s27 + $0x30] sm:$0xf]
      %v2425 = vld [vmem:[%s27 + $0x34] sm:$0xf]
      %v2426 = vld [vmem:[%s27 + $0x38] sm:$0xf]
      %v2427 = vld [vmem:[%s27 + $0x3c] sm:$0xf]
      %v2428 = vld [vmem:[%s27 + $0x40] sm:$0xf]
      %v2429 = vld [vmem:[%s27 + $0x44] sm:$0xf]
      %v2430 = vld [vmem:[%s27 + $0x48] sm:$0xf]
      %v2431 = vld [vmem:[%s27 + $0x4c] sm:$0xf]
      %v2432 = vld [vmem:[%s27 + $0x50] sm:$0xf]
      %v2433 = vld [vmem:[%s27 + $0x54] sm:$0xf]
      %v2434 = vld [vmem:[%s27 + $0x58] sm:$0xf]
      %v2435 = vld [vmem:[%s27 + $0x5c] sm:$0xf]
      %v2436 = vld [vmem:[%s27 + $0x60] sm:$0xf]
      %v2437 = vld [vmem:[%s27 + $0x64] sm:$0xf]
      %v2438 = vld [vmem:[%s27 + $0x68] sm:$0xf]
      %v2439 = vld [vmem:[%s27 + $0x6c] sm:$0xf]
      %v2440 = vld [vmem:[%s27 + $0x70] sm:$0xf]
      %v2441 = vld [vmem:[%s27 + $0x74] sm:$0xf]
      %v2442 = vld [vmem:[%s27 + $0x78] sm:$0xf]
      %v2443 = vld [vmem:[%s27 + $0x7c] sm:$0xf]
      %v2460 = vunpack.c.l.b16 %v2428
      %v2461 = vunpack.c.l.b16 %v2429
      %v2462 = vunpack.c.l.b16 %v2430
      %v2463 = vunpack.c.l.b16 %v2431
      %v2464 = vunpack.c.l.b16 %v2432
      %v2465 = vunpack.c.l.b16 %v2433
      %v2466 = vunpack.c.l.b16 %v2434
      %v2467 = vunpack.c.l.b16 %v2435
      %v2468 = vunpack.c.l.b16 %v2436
      %v2469 = vunpack.c.l.b16 %v2437
      %v2470 = vunpack.c.l.b16 %v2438
      %v2471 = vunpack.c.l.b16 %v2439
      %v2472 = vunpack.c.l.b16 %v2440
      %v2473 = vunpack.c.l.b16 %v2441
      %v2474 = vunpack.c.l.b16 %v2442
      %v2475 = vunpack.c.l.b16 %v2443
      %v2476 = vpack.c.b16 %v2461, %v2460
      %v2477 = vpack.c.b16 %v2463, %v2462
      %v2478 = vpack.c.b16 %v2465, %v2464
      %v2479 = vpack.c.b16 %v2467, %v2466
      %v2480 = vpack.c.b16 %v2469, %v2468
      %v2481 = vpack.c.b16 %v2471, %v2470
      %v2482 = vpack.c.b16 %v2473, %v2472
      %v2483 = vpack.c.b16 %v2475, %v2474
      %2492 = vmatprep.subr.bf16.mxu0 0
      %2493 = vmatpush1.bf16.msra.mxu0 %v2476
      %2494 = vmatprep.subr.bf16.mxu0 0
      %2495 = vmatpush1.bf16.msra.mxu0 %v2477
      %2496 = vmatprep.subr.bf16.mxu0 0
      %2497 = vmatpush1.bf16.msra.mxu0 %v2478
      %2498 = vmatprep.subr.bf16.mxu0 0
      %2499 = vmatpush1.bf16.msra.mxu0 %v2479
      %2500 = vmatprep.subr.bf16.mxu0 0
      %2501 = vmatpush1.bf16.msra.mxu0 %v2480
      %2502 = vmatprep.subr.bf16.mxu0 0
      %2503 = vmatpush1.bf16.msra.mxu0 %v2481
      %2504 = vmatprep.subr.bf16.mxu0 0
      %2505 = vmatpush1.bf16.msra.mxu0 %v2482
      %2506 = vmatprep.subr.bf16.mxu0 0
      %2507 = vmatpush1.bf16.msra.mxu0 %v2483
      %2508 = vmatprep.subr.bf16.mxu0 0
      %2509 = vmatpush1.bf16.msra.mxu0 0
      %2510 = vmatprep.subr.bf16.mxu0 0
      %2511 = vmatpush1.bf16.msra.mxu0 0
      %2512 = vmatprep.subr.bf16.mxu0 0
      %2513 = vmatpush1.bf16.msra.mxu0 0
      %2514 = vmatprep.subr.bf16.mxu0 0
      %2515 = vmatpush1.bf16.msra.mxu0 0
      %2516 = vmatprep.subr.bf16.mxu0 0
      %2517 = vmatpush1.bf16.msra.mxu0 0
      %2518 = vmatprep.subr.bf16.mxu0 0
      %2519 = vmatpush1.bf16.msra.mxu0 0
      %2520 = vmatprep.subr.bf16.mxu0 0
      %2521 = vmatpush1.bf16.msra.mxu0 0
      %2522 = vmatprep.subr.bf16.mxu0 0
      %2523 = vmatpush1.bf16.msra.mxu0 0
      %2524 = vmatprep.mubr.bf16.mxu0 0
      %2525 = vmatmul.mubr.bf16.gmra.mrb[0].mxu0 0
      %v2526 = vpop.f32.mrb[0].mxu0
      %v2527 = vadd.f32 0.0, %v2526
      %v2528 = vpop.f32.mrb[0].mxu0
      %v2529 = vpop.f32.mrb[0].mxu0
      %v2530 = vadd.f32 0.0, %v2529
      %v2531 = vpop.f32.mrb[0].mxu0
      %2532 = vmatprep.mubr.bf16.mxu0 0
      %2533 = vmatmul.mubr.bf16.gmra.mrb[0].mxu0 %v2380
      %v2534 = vpop.f32.mrb[0].mxu0
      %v2535 = vadd.f32 0.0, %v2534
      %v2536 = vpop.f32.mrb[0].mxu0
      %v2537 = vpop.f32.mrb[0].mxu0
      %v2538 = vadd.f32 0.0, %v2537
      %v2539 = vpop.f32.mrb[0].mxu0
      %2540 = vmatprep.mubr.bf16.mxu0 0
      %2541 = vmatmul.mubr.bf16.gmra.mrb[0].mxu0 %v2381
      %v2542 = vpop.f32.mrb[0].mxu0
      %v2543 = vadd.f32 0.0, %v2542
      %v2544 = vpop.f32.mrb[0].mxu0
      %v2545 = vpop.f32.mrb[0].mxu0
      %v2546 = vadd.f32 0.0, %v2545
      %v2547 = vpop.f32.mrb[0].mxu0
      %2548 = vmatprep.mubr.bf16.mxu0 0
      %2549 = vmatmul.mubr.bf16.gmra.mrb[0].mxu0 %v2382
      %v2550 = vpop.f32.mrb[0].mxu0
      %v2551 = vadd.f32 0.0, %v2550
      %v2552 = vpop.f32.mrb[0].mxu0
      %v2553 = vpop.f32.mrb[0].mxu0
      %v2554 = vadd.f32 0.0, %v2553
      %v2555 = vpop.f32.mrb[0].mxu0
      %2556 = vmatprep.mubr.bf16.mxu0 0
      %2557 = vmatmul.mubr.bf16.gmra.mrb[0].mxu0 %v2383
      %v2558 = vpop.f32.mrb[0].mxu0
      %v2559 = vadd.f32 0.0, %v2558
      %v2560 = vpop.f32.mrb[0].mxu0
      %v2561 = vpop.f32.mrb[0].mxu0
      %v2562 = vadd.f32 0.0, %v2561
      %v2563 = vpop.f32.mrb[0].mxu0
      %2564 = vmatprep.mubr.bf16.mxu0 0
      %2565 = vmatmul.mubr.bf16.gmra.mrb[0].mxu0 %v2384
      %v2566 = vpop.f32.mrb[0].mxu0
      %v2567 = vadd.f32 0.0, %v2566
      %v2568 = vpop.f32.mrb[0].mxu0
      %v2569 = vpop.f32.mrb[0].mxu0
      %v2570 = vadd.f32 0.0, %v2569
      %v2571 = vpop.f32.mrb[0].mxu0
      %2572 = vmatprep.mubr.bf16.mxu0 0
      %2573 = vmatmul.mubr.bf16.gmra.mrb[0].mxu0 %v2385
      %v2574 = vpop.f32.mrb[0].mxu0
      %v2575 = vadd.f32 0.0, %v2574
      %v2576 = vpop.f32.mrb[0].mxu0
      %v2577 = vpop.f32.mrb[0].mxu0
      %v2578 = vadd.f32 0.0, %v2577
      %v2579 = vpop.f32.mrb[0].mxu0
      %2580 = vmatprep.mubr.bf16.mxu0 0
      %2581 = vmatmul.mubr.bf16.gmra.mrb[0].mxu0 %v2386
      %v2582 = vpop.f32.mrb[0].mxu0
      %v2583 = vadd.f32 0.0, %v2582
      %v2584 = vpop.f32.mrb[0].mxu0
      %v2585 = vpop.f32.mrb[0].mxu0
      %v2586 = vadd.f32 0.0, %v2585
      %v2587 = vpop.f32.mrb[0].mxu0
      %2588 = vmatprep.mubr.bf16.mxu0 0
      %2589 = vmatmul.mubr.bf16.gmra.mrb[0].mxu0 %v2387
      %v2590 = vpop.f32.mrb[0].mxu0
      %v2591 = vadd.f32 0.0, %v2590
      %v2592 = vpop.f32.mrb[0].mxu0
      %v2593 = vpop.f32.mrb[0].mxu0
      %v2594 = vadd.f32 0.0, %v2593
      %v2595 = vpop.f32.mrb[0].mxu0
      %2596 = vmatprep.mubr.bf16.mxu0 0
      %2597 = vmatmul.mubr.bf16.gmra.mrb[0].mxu0 %v2388
      %v2598 = vpop.f32.mrb[0].mxu0
      %v2599 = vadd.f32 0.0, %v2598
      %v2600 = vpop.f32.mrb[0].mxu0
      %v2601 = vpop.f32.mrb[0].mxu0
      %v2602 = vadd.f32 0.0, %v2601
      %v2603 = vpop.f32.mrb[0].mxu0
      %2604 = vmatprep.mubr.bf16.mxu0 0
      %2605 = vmatmul.mubr.bf16.gmra.mrb[0].mxu0 %v2389
      %v2606 = vpop.f32.mrb[0].mxu0
      %v2607 = vadd.f32 0.0, %v2606
      %v2608 = vpop.f32.mrb[0].mxu0
      %v2609 = vpop.f32.mrb[0].mxu0
      %v2610 = vadd.f32 0.0, %v2609
      %v2611 = vpop.f32.mrb[0].mxu0
      %2612 = vmatprep.mubr.bf16.mxu0 0
      %2613 = vmatmul.mubr.bf16.gmra.mrb[0].mxu0 %v2390
      %v2614 = vpop.f32.mrb[0].mxu0
      %v2615 = vadd.f32 0.0, %v2614
      %v2616 = vpop.f32.mrb[0].mxu0
      %v2617 = vpop.f32.mrb[0].mxu0
      %v2618 = vadd.f32 0.0, %v2617
      %v2619 = vpop.f32.mrb[0].mxu0
      %2620 = vmatprep.mubr.bf16.mxu0 0
      %2621 = vmatmul.mubr.bf16.gmra.mrb[0].mxu0 %v2391
      %v2622 = vpop.f32.mrb[0].mxu0
      %v2623 = vadd.f32 0.0, %v2622
      %v2624 = vpop.f32.mrb[0].mxu0
      %v2625 = vpop.f32.mrb[0].mxu0
      %v2626 = vadd.f32 0.0, %v2625
      %v2627 = vpop.f32.mrb[0].mxu0
      %2628 = vmatprep.mubr.bf16.mxu0 0
      %2629 = vmatmul.mubr.bf16.gmra.mrb[0].mxu0 %v2392
      %v2630 = vpop.f32.mrb[0].mxu0
      %v2631 = vadd.f32 0.0, %v2630
      %v2632 = vpop.f32.mrb[0].mxu0
      %v2633 = vpop.f32.mrb[0].mxu0
      %v2634 = vadd.f32 0.0, %v2633
      %v2635 = vpop.f32.mrb[0].mxu0
      %2636 = vmatprep.mubr.bf16.mxu0 0
      %2637 = vmatmul.mubr.bf16.gmra.mrb[0].mxu0 %v2393
      %v2638 = vpop.f32.mrb[0].mxu0
      %v2639 = vadd.f32 0.0, %v2638
      %v2640 = vpop.f32.mrb[0].mxu0
      %v2641 = vpop.f32.mrb[0].mxu0
      %v2642 = vadd.f32 0.0, %v2641
      %v2643 = vpop.f32.mrb[0].mxu0
      %2644 = vmatprep.mubr.bf16.mxu0 0
      %2645 = vmatmul.mubr.bf16.gmra.mrb[0].mxu0 %v2394
      %v2646 = vpop.f32.mrb[0].mxu0
      %v2647 = vadd.f32 0.0, %v2646
      %v2648 = vpop.f32.mrb[0].mxu0
      %v2649 = vpop.f32.mrb[0].mxu0
      %v2650 = vadd.f32 0.0, %v2649
      %v2651 = vpop.f32.mrb[0].mxu0
      %2652 = vdwg.mxu0
      %v2669 = vunpack.c.l.b16 %v2412
      %v2670 = vunpack.c.l.b16 %v2413
      %v2671 = vunpack.c.l.b16 %v2414
      %v2672 = vunpack.c.l.b16 %v2415
      %v2673 = vunpack.c.l.b16 %v2416
      %v2674 = vunpack.c.l.b16 %v2417
      %v2675 = vunpack.c.l.b16 %v2418
      %v2676 = vunpack.c.l.b16 %v2419
      %v2677 = vunpack.c.l.b16 %v2420
      %v2678 = vunpack.c.l.b16 %v2421
      %v2679 = vunpack.c.l.b16 %v2422
      %v2680 = vunpack.c.l.b16 %v2423
      %v2681 = vunpack.c.l.b16 %v2424
      %v2682 = vunpack.c.l.b16 %v2425
      %v2683 = vunpack.c.l.b16 %v2426
      %v2684 = vunpack.c.l.b16 %v2427
      %v2685 = vpack.c.b16 %v2670, %v2669
      %v2686 = vpack.c.b16 %v2672, %v2671
      %v2687 = vpack.c.b16 %v2674, %v2673
      %v2688 = vpack.c.b16 %v2676, %v2675
      %v2689 = vpack.c.b16 %v2678, %v2677
      %v2690 = vpack.c.b16 %v2680, %v2679
      %v2691 = vpack.c.b16 %v2682, %v2681
      %v2692 = vpack.c.b16 %v2684, %v2683
      %2701 = vmatprep.subr.bf16.mxu0 0
      %2702 = vmatpush1.bf16.msra.mxu0 %v2685
      %2703 = vmatprep.subr.bf16.mxu0 0
      %2704 = vmatpush1.bf16.msra.mxu0 %v2686
      %2705 = vmatprep.subr.bf16.mxu0 0
      %2706 = vmatpush1.bf16.msra.mxu0 %v2687
      %2707 = vmatprep.subr.bf16.mxu0 0
      %2708 = vmatpush1.bf16.msra.mxu0 %v2688
      %2709 = vmatprep.subr.bf16.mxu0 0
      %2710 = vmatpush1.bf16.msra.mxu0 %v2689
      %2711 = vmatprep.subr.bf16.mxu0 0
      %2712 = vmatpush1.bf16.msra.mxu0 %v2690
      %2713 = vmatprep.subr.bf16.mxu0 0
      %2714 = vmatpush1.bf16.msra.mxu0 %v2691
      %2715 = vmatprep.subr.bf16.mxu0 0
      %2716 = vmatpush1.bf16.msra.mxu0 %v2692
      %2717 = vmatprep.subr.bf16.mxu0 0
      %2718 = vmatpush1.bf16.msra.mxu0 0
      %2719 = vmatprep.subr.bf16.mxu0 0
      %2720 = vmatpush1.bf16.msra.mxu0 0
      %2721 = vmatprep.subr.bf16.mxu0 0
      %2722 = vmatpush1.bf16.msra.mxu0 0
      %2723 = vmatprep.subr.bf16.mxu0 0
      %2724 = vmatpush1.bf16.msra.mxu0 0
      %2725 = vmatprep.subr.bf16.mxu0 0
      %2726 = vmatpush1.bf16.msra.mxu0 0
      %2727 = vmatprep.subr.bf16.mxu0 0
      %2728 = vmatpush1.bf16.msra.mxu0 0
      %2729 = vmatprep.subr.bf16.mxu0 0
      %2730 = vmatpush1.bf16.msra.mxu0 0
      %2731 = vmatprep.subr.bf16.mxu0 0
      %2732 = vmatpush1.bf16.msra.mxu0 0
      %2733 = vmatprep.mubr.bf16.mxu0 0
      %2734 = vmatmul.mubr.bf16.gmra.mrb[0].mxu0 0
      %v2735 = vpop.f32.mrb[0].mxu0
      %v2736 = vadd.f32 %v2527, %v2735
      %v2737 = vpop.f32.mrb[0].mxu0
      %v2738 = vpop.f32.mrb[0].mxu0
      %v2739 = vadd.f32 %v2530, %v2738
      %v2740 = vpop.f32.mrb[0].mxu0
      %2741 = vmatprep.mubr.bf16.mxu0 0
      %2742 = vmatmul.mubr.bf16.gmra.mrb[0].mxu0 %v2364
      %v2743 = vpop.f32.mrb[0].mxu0
      %v2744 = vadd.f32 %v2535, %v2743
      %v2745 = vpop.f32.mrb[0].mxu0
      %v2746 = vpop.f32.mrb[0].mxu0
      %v2747 = vadd.f32 %v2538, %v2746
      %v2748 = vpop.f32.mrb[0].mxu0
      %2749 = vmatprep.mubr.bf16.mxu0 0
      %2750 = vmatmul.mubr.bf16.gmra.mrb[0].mxu0 %v2365
      %v2751 = vpop.f32.mrb[0].mxu0
      %v2752 = vadd.f32 %v2543, %v2751
      %v2753 = vpop.f32.mrb[0].mxu0
      %v2754 = vpop.f32.mrb[0].mxu0
      %v2755 = vadd.f32 %v2546, %v2754
      %v2756 = vpop.f32.mrb[0].mxu0
      %2757 = vmatprep.mubr.bf16.mxu0 0
      %2758 = vmatmul.mubr.bf16.gmra.mrb[0].mxu0 %v2366
      %v2759 = vpop.f32.mrb[0].mxu0
      %v2760 = vadd.f32 %v2551, %v2759
      %v2761 = vpop.f32.mrb[0].mxu0
      %v2762 = vpop.f32.mrb[0].mxu0
      %v2763 = vadd.f32 %v2554, %v2762
      %v2764 = vpop.f32.mrb[0].mxu0
      %2765 = vmatprep.mubr.bf16.mxu0 0
      %2766 = vmatmul.mubr.bf16.gmra.mrb[0].mxu0 %v2367
      %v2767 = vpop.f32.mrb[0].mxu0
      %v2768 = vadd.f32 %v2559, %v2767
      %v2769 = vpop.f32.mrb[0].mxu0
      %v2770 = vpop.f32.mrb[0].mxu0
      %v2771 = vadd.f32 %v2562, %v2770
      %v2772 = vpop.f32.mrb[0].mxu0
      %2773 = vmatprep.mubr.bf16.mxu0 0
      %2774 = vmatmul.mubr.bf16.gmra.mrb[0].mxu0 %v2368
      %v2775 = vpop.f32.mrb[0].mxu0
      %v2776 = vadd.f32 %v2567, %v2775
      %v2777 = vpop.f32.mrb[0].mxu0
      %v2778 = vpop.f32.mrb[0].mxu0
      %v2779 = vadd.f32 %v2570, %v2778
      %v2780 = vpop.f32.mrb[0].mxu0
      %2781 = vmatprep.mubr.bf16.mxu0 0
      %2782 = vmatmul.mubr.bf16.gmra.mrb[0].mxu0 %v2369
      %v2783 = vpop.f32.mrb[0].mxu0
      %v2784 = vadd.f32 %v2575, %v2783
      %v2785 = vpop.f32.mrb[0].mxu0
      %v2786 = vpop.f32.mrb[0].mxu0
      %v2787 = vadd.f32 %v2578, %v2786
      %v2788 = vpop.f32.mrb[0].mxu0
      %2789 = vmatprep.mubr.bf16.mxu0 0
      %2790 = vmatmul.mubr.bf16.gmra.mrb[0].mxu0 %v2370
      %v2791 = vpop.f32.mrb[0].mxu0
      %v2792 = vadd.f32 %v2583, %v2791
      %v2793 = vpop.f32.mrb[0].mxu0
      %v2794 = vpop.f32.mrb[0].mxu0
      %v2795 = vadd.f32 %v2586, %v2794
      %v2796 = vpop.f32.mrb[0].mxu0
      %2797 = vmatprep.mubr.bf16.mxu0 0
      %2798 = vmatmul.mubr.bf16.gmra.mrb[0].mxu0 %v2371
      %v2799 = vpop.f32.mrb[0].mxu0
      %v2800 = vadd.f32 %v2591, %v2799
      %v2801 = vpop.f32.mrb[0].mxu0
      %v2802 = vpop.f32.mrb[0].mxu0
      %v2803 = vadd.f32 %v2594, %v2802
      %v2804 = vpop.f32.mrb[0].mxu0
      %2805 = vmatprep.mubr.bf16.mxu0 0
      %2806 = vmatmul.mubr.bf16.gmra.mrb[0].mxu0 %v2372
      %v2807 = vpop.f32.mrb[0].mxu0
      %v2808 = vadd.f32 %v2599, %v2807
      %v2809 = vpop.f32.mrb[0].mxu0
      %v2810 = vpop.f32.mrb[0].mxu0
      %v2811 = vadd.f32 %v2602, %v2810
      %v2812 = vpop.f32.mrb[0].mxu0
      %2813 = vmatprep.mubr.bf16.mxu0 0
      %2814 = vmatmul.mubr.bf16.gmra.mrb[0].mxu0 %v2373
      %v2815 = vpop.f32.mrb[0].mxu0
      %v2816 = vadd.f32 %v2607, %v2815
      %v2817 = vpop.f32.mrb[0].mxu0
      %v2818 = vpop.f32.mrb[0].mxu0
      %v2819 = vadd.f32 %v2610, %v2818
      %v2820 = vpop.f32.mrb[0].mxu0
      %2821 = vmatprep.mubr.bf16.mxu0 0
      %2822 = vmatmul.mubr.bf16.gmra.mrb[0].mxu0 %v2374
      %v2823 = vpop.f32.mrb[0].mxu0
      %v2824 = vadd.f32 %v2615, %v2823
      %v2825 = vpop.f32.mrb[0].mxu0
      %v2826 = vpop.f32.mrb[0].mxu0
      %v2827 = vadd.f32 %v2618, %v2826
      %v2828 = vpop.f32.mrb[0].mxu0
      %2829 = vmatprep.mubr.bf16.mxu0 0
      %2830 = vmatmul.mubr.bf16.gmra.mrb[0].mxu0 %v2375
      %v2831 = vpop.f32.mrb[0].mxu0
      %v2832 = vadd.f32 %v2623, %v2831
      %v2833 = vpop.f32.mrb[0].mxu0
      %v2834 = vpop.f32.mrb[0].mxu0
      %v2835 = vadd.f32 %v2626, %v2834
      %v2836 = vpop.f32.mrb[0].mxu0
      %2837 = vmatprep.mubr.bf16.mxu0 0
      %2838 = vmatmul.mubr.bf16.gmra.mrb[0].mxu0 %v2376
      %v2839 = vpop.f32.mrb[0].mxu0
      %v2840 = vadd.f32 %v2631, %v2839
      %v2841 = vpop.f32.mrb[0].mxu0
      %v2842 = vpop.f32.mrb[0].mxu0
      %v2843 = vadd.f32 %v2634, %v2842
      %v2844 = vpop.f32.mrb[0].mxu0
      %2845 = vmatprep.mubr.bf16.mxu0 0
      %2846 = vmatmul.mubr.bf16.gmra.mrb[0].mxu0 %v2377
      %v2847 = vpop.f32.mrb[0].mxu0
      %v2848 = vadd.f32 %v2639, %v2847
      %v2849 = vpop.f32.mrb[0].mxu0
      %v2850 = vpop.f32.mrb[0].mxu0
      %v2851 = vadd.f32 %v2642, %v2850
      %v2852 = vpop.f32.mrb[0].mxu0
      %2853 = vmatprep.mubr.bf16.mxu0 0
      %2854 = vmatmul.mubr.bf16.gmra.mrb[0].mxu0 %v2378
      %v2855 = vpop.f32.mrb[0].mxu0
      %v2856 = vadd.f32 %v2647, %v2855
      %v2857 = vpop.f32.mrb[0].mxu0
      %v2858 = vpop.f32.mrb[0].mxu0
      %v2859 = vadd.f32 %v2650, %v2858
      %v2860 = vpop.f32.mrb[0].mxu0
      %2861 = vdwg.mxu0
      %v2862 = vld [vmem:[%s27 + $0x80] sm:$0xf]
      %v2863 = vld [vmem:[%s27 + $0x84] sm:$0xf]
      %v2864 = vld [vmem:[%s27 + $0x88] sm:$0xf]
      %v2865 = vld [vmem:[%s27 + $0x8c] sm:$0xf]
      %v2866 = vld [vmem:[%s27 + $0x90] sm:$0xf]
      %v2867 = vld [vmem:[%s27 + $0x94] sm:$0xf]
      %v2868 = vld [vmem:[%s27 + $0x98] sm:$0xf]
      %v2869 = vld [vmem:[%s27 + $0x9c] sm:$0xf]
      %v2870 = vld [vmem:[%s27 + $0xa0] sm:$0xf]
      %v2871 = vld [vmem:[%s27 + $0xa4] sm:$0xf]
      %v2872 = vld [vmem:[%s27 + $0xa8] sm:$0xf]
      %v2873 = vld [vmem:[%s27 + $0xac] sm:$0xf]
      %v2874 = vld [vmem:[%s27 + $0xb0] sm:$0xf]
      %v2875 = vld [vmem:[%s27 + $0xb4] sm:$0xf]
      %v2876 = vld [vmem:[%s27 + $0xb8] sm:$0xf]
      %v2877 = vld [vmem:[%s27 + $0xbc] sm:$0xf]
      %v2894 = vunpack.c.l.b16 %v2862
      %v2895 = vunpack.c.l.b16 %v2863
      %v2896 = vunpack.c.l.b16 %v2864
      %v2897 = vunpack.c.l.b16 %v2865
      %v2898 = vunpack.c.l.b16 %v2866
      %v2899 = vunpack.c.l.b16 %v2867
      %v2900 = vunpack.c.l.b16 %v2868
      %v2901 = vunpack.c.l.b16 %v2869
      %v2902 = vunpack.c.l.b16 %v2870
      %v2903 = vunpack.c.l.b16 %v2871
      %v2904 = vunpack.c.l.b16 %v2872
      %v2905 = vunpack.c.l.b16 %v2873
      %v2906 = vunpack.c.l.b16 %v2874
      %v2907 = vunpack.c.l.b16 %v2875
      %v2908 = vunpack.c.l.b16 %v2876
      %v2909 = vunpack.c.l.b16 %v2877
      %v2910 = vpack.c.b16 %v2895, %v2894
      %v2911 = vpack.c.b16 %v2897, %v2896
      %v2912 = vpack.c.b16 %v2899, %v2898
      %v2913 = vpack.c.b16 %v2901, %v2900
      %v2914 = vpack.c.b16 %v2903, %v2902
      %v2915 = vpack.c.b16 %v2905, %v2904
      %v2916 = vpack.c.b16 %v2907, %v2906
      %v2917 = vpack.c.b16 %v2909, %v2908
      %2926 = vmatprep.subr.bf16.mxu0 0
      %2927 = vmatpush1.bf16.msra.mxu0 %v2910
      %2928 = vmatprep.subr.bf16.mxu0 0
      %2929 = vmatpush1.bf16.msra.mxu0 %v2911
      %2930 = vmatprep.subr.bf16.mxu0 0
      %2931 = vmatpush1.bf16.msra.mxu0 %v2912
      %2932 = vmatprep.subr.bf16.mxu0 0
      %2933 = vmatpush1.bf16.msra.mxu0 %v2913
      %2934 = vmatprep.subr.bf16.mxu0 0
      %2935 = vmatpush1.bf16.msra.mxu0 %v2914
      %2936 = vmatprep.subr.bf16.mxu0 0
      %2937 = vmatpush1.bf16.msra.mxu0 %v2915
      %2938 = vmatprep.subr.bf16.mxu0 0
      %2939 = vmatpush1.bf16.msra.mxu0 %v2916
      %2940 = vmatprep.subr.bf16.mxu0 0
      %2941 = vmatpush1.bf16.msra.mxu0 %v2917
      %2942 = vmatprep.subr.bf16.mxu0 0
      %2943 = vmatpush1.bf16.msra.mxu0 0
      %2944 = vmatprep.subr.bf16.mxu0 0
      %2945 = vmatpush1.bf16.msra.mxu0 0
      %2946 = vmatprep.subr.bf16.mxu0 0
      %2947 = vmatpush1.bf16.msra.mxu0 0
      %2948 = vmatprep.subr.bf16.mxu0 0
      %2949 = vmatpush1.bf16.msra.mxu0 0
      %2950 = vmatprep.subr.bf16.mxu0 0
      %2951 = vmatpush1.bf16.msra.mxu0 0
      %2952 = vmatprep.subr.bf16.mxu0 0
      %2953 = vmatpush1.bf16.msra.mxu0 0
      %2954 = vmatprep.subr.bf16.mxu0 0
      %2955 = vmatpush1.bf16.msra.mxu0 0
      %2956 = vmatprep.subr.bf16.mxu0 0
      %2957 = vmatpush1.bf16.msra.mxu0 0
      %2958 = vmatprep.mubr.bf16.mxu0 0
      %2959 = vmatmul.mubr.bf16.gmra.mrb[0].mxu0 0
      %v2960 = vpop.f32.mrb[0].mxu0
      %v2961 = vadd.f32 0.0, %v2960
      %v2962 = vpop.f32.mrb[0].mxu0
      %v2963 = vpop.f32.mrb[0].mxu0
      %v2964 = vadd.f32 0.0, %v2963
      %v2965 = vpop.f32.mrb[0].mxu0
      %2966 = vmatprep.mubr.bf16.mxu0 0
      %2967 = vmatmul.mubr.bf16.gmra.mrb[0].mxu0 %v2396
      %v2968 = vpop.f32.mrb[0].mxu0
      %v2969 = vadd.f32 0.0, %v2968
      %v2970 = vpop.f32.mrb[0].mxu0
      %v2971 = vpop.f32.mrb[0].mxu0
      %v2972 = vadd.f32 0.0, %v2971
      %v2973 = vpop.f32.mrb[0].mxu0
      %2974 = vmatprep.mubr.bf16.mxu0 0
      %2975 = vmatmul.mubr.bf16.gmra.mrb[0].mxu0 %v2397
      %v2976 = vpop.f32.mrb[0].mxu0
      %v2977 = vadd.f32 0.0, %v2976
      %v2978 = vpop.f32.mrb[0].mxu0
      %v2979 = vpop.f32.mrb[0].mxu0
      %v2980 = vadd.f32 0.0, %v2979
      %v2981 = vpop.f32.mrb[0].mxu0
      %2982 = vmatprep.mubr.bf16.mxu0 0
      %2983 = vmatmul.mubr.bf16.gmra.mrb[0].mxu0 %v2398
      %v2984 = vpop.f32.mrb[0].mxu0
      %v2985 = vadd.f32 0.0, %v2984
      %v2986 = vpop.f32.mrb[0].mxu0
      %v2987 = vpop.f32.mrb[0].mxu0
      %v2988 = vadd.f32 0.0, %v2987
      %v2989 = vpop.f32.mrb[0].mxu0
      %2990 = vmatprep.mubr.bf16.mxu0 0
      %2991 = vmatmul.mubr.bf16.gmra.mrb[0].mxu0 %v2399
      %v2992 = vpop.f32.mrb[0].mxu0
      %v2993 = vadd.f32 0.0, %v2992
      %v2994 = vpop.f32.mrb[0].mxu0
      %v2995 = vpop.f32.mrb[0].mxu0
      %v2996 = vadd.f32 0.0, %v2995
      %v2997 = vpop.f32.mrb[0].mxu0
      %2998 = vmatprep.mubr.bf16.mxu0 0
      %2999 = vmatmul.mubr.bf16.gmra.mrb[0].mxu0 %v2400
      %v3000 = vpop.f32.mrb[0].mxu0
      %v3001 = vadd.f32 0.0, %v3000
      %v3002 = vpop.f32.mrb[0].mxu0
      %v3003 = vpop.f32.mrb[0].mxu0
      %v3004 = vadd.f32 0.0, %v3003
      %v3005 = vpop.f32.mrb[0].mxu0
      %3006 = vmatprep.mubr.bf16.mxu0 0
      %3007 = vmatmul.mubr.bf16.gmra.mrb[0].mxu0 %v2401
      %v3008 = vpop.f32.mrb[0].mxu0
      %v3009 = vadd.f32 0.0, %v3008
      %v3010 = vpop.f32.mrb[0].mxu0
      %v3011 = vpop.f32.mrb[0].mxu0
      %v3012 = vadd.f32 0.0, %v3011
      %v3013 = vpop.f32.mrb[0].mxu0
      %3014 = vmatprep.mubr.bf16.mxu0 0
      %3015 = vmatmul.mubr.bf16.gmra.mrb[0].mxu0 %v2402
      %v3016 = vpop.f32.mrb[0].mxu0
      %v3017 = vadd.f32 0.0, %v3016
      %v3018 = vpop.f32.mrb[0].mxu0
      %v3019 = vpop.f32.mrb[0].mxu0
      %v3020 = vadd.f32 0.0, %v3019
      %v3021 = vpop.f32.mrb[0].mxu0
      %3022 = vmatprep.mubr.bf16.mxu0 0
      %3023 = vmatmul.mubr.bf16.gmra.mrb[0].mxu0 %v2403
      %v3024 = vpop.f32.mrb[0].mxu0
      %v3025 = vadd.f32 0.0, %v3024
      %v3026 = vpop.f32.mrb[0].mxu0
      %v3027 = vpop.f32.mrb[0].mxu0
      %v3028 = vadd.f32 0.0, %v3027
      %v3029 = vpop.f32.mrb[0].mxu0
      %3030 = vmatprep.mubr.bf16.mxu0 0
      %3031 = vmatmul.mubr.bf16.gmra.mrb[0].mxu0 %v2404
      %v3032 = vpop.f32.mrb[0].mxu0
      %v3033 = vadd.f32 0.0, %v3032
      %v3034 = vpop.f32.mrb[0].mxu0
      %v3035 = vpop.f32.mrb[0].mxu0
      %v3036 = vadd.f32 0.0, %v3035
      %v3037 = vpop.f32.mrb[0].mxu0
      %3038 = vmatprep.mubr.bf16.mxu0 0
      %3039 = vmatmul.mubr.bf16.gmra.mrb[0].mxu0 %v2405
      %v3040 = vpop.f32.mrb[0].mxu0
      %v3041 = vadd.f32 0.0, %v3040
      %v3042 = vpop.f32.mrb[0].mxu0
      %v3043 = vpop.f32.mrb[0].mxu0
      %v3044 = vadd.f32 0.0, %v3043
      %v3045 = vpop.f32.mrb[0].mxu0
      %3046 = vmatprep.mubr.bf16.mxu0 0
      %3047 = vmatmul.mubr.bf16.gmra.mrb[0].mxu0 %v2406
      %v3048 = vpop.f32.mrb[0].mxu0
      %v3049 = vadd.f32 0.0, %v3048
      %v3050 = vpop.f32.mrb[0].mxu0
      %v3051 = vpop.f32.mrb[0].mxu0
      %v3052 = vadd.f32 0.0, %v3051
      %v3053 = vpop.f32.mrb[0].mxu0
      %3054 = vmatprep.mubr.bf16.mxu0 0
      %3055 = vmatmul.mubr.bf16.gmra.mrb[0].mxu0 %v2407
      %v3056 = vpop.f32.mrb[0].mxu0
      %v3057 = vadd.f32 0.0, %v3056
      %v3058 = vpop.f32.mrb[0].mxu0
      %v3059 = vpop.f32.mrb[0].mxu0
      %v3060 = vadd.f32 0.0, %v3059
      %v3061 = vpop.f32.mrb[0].mxu0
      %3062 = vmatprep.mubr.bf16.mxu0 0
      %3063 = vmatmul.mubr.bf16.gmra.mrb[0].mxu0 %v2408
      %v3064 = vpop.f32.mrb[0].mxu0
      %v3065 = vadd.f32 0.0, %v3064
      %v3066 = vpop.f32.mrb[0].mxu0
      %v3067 = vpop.f32.mrb[0].mxu0
      %v3068 = vadd.f32 0.0, %v3067
      %v3069 = vpop.f32.mrb[0].mxu0
      %3070 = vmatprep.mubr.bf16.mxu0 0
      %3071 = vmatmul.mubr.bf16.gmra.mrb[0].mxu0 %v2409
      %v3072 = vpop.f32.mrb[0].mxu0
      %v3073 = vadd.f32 0.0, %v3072
      %v3074 = vpop.f32.mrb[0].mxu0
      %v3075 = vpop.f32.mrb[0].mxu0
      %v3076 = vadd.f32 0.0, %v3075
      %v3077 = vpop.f32.mrb[0].mxu0
      %3078 = vmatprep.mubr.bf16.mxu0 0
      %3079 = vmatmul.mubr.bf16.gmra.mrb[0].mxu0 %v2410
      %v3080 = vpop.f32.mrb[0].mxu0
      %v3081 = vadd.f32 0.0, %v3080
      %v3082 = vpop.f32.mrb[0].mxu0
      %v3083 = vpop.f32.mrb[0].mxu0
      %v3084 = vadd.f32 0.0, %v3083
      %v3085 = vpop.f32.mrb[0].mxu0
      %3086 = vdwg.mxu0
      %v3087 = vadd.f32 %v2736, %v2961
      %v3088 = vadd.f32 %v2739, %v2964
      %v3089 = vadd.f32 %v2744, %v2969
      %v3090 = vadd.f32 %v2747, %v2972
      %v3091 = vadd.f32 %v2752, %v2977
      %v3092 = vadd.f32 %v2755, %v2980
      %v3093 = vadd.f32 %v2760, %v2985
      %v3094 = vadd.f32 %v2763, %v2988
      %v3095 = vadd.f32 %v2768, %v2993
      %v3096 = vadd.f32 %v2771, %v2996
      %v3097 = vadd.f32 %v2776, %v3001
      %v3098 = vadd.f32 %v2779, %v3004
      %v3099 = vadd.f32 %v2784, %v3009
      %v3100 = vadd.f32 %v2787, %v3012
      %v3101 = vadd.f32 %v2792, %v3017
      %v3102 = vadd.f32 %v2795, %v3020
      %v3103 = vadd.f32 %v2800, %v3025
      %v3104 = vadd.f32 %v2803, %v3028
      %v3105 = vadd.f32 %v2808, %v3033
      %v3106 = vadd.f32 %v2811, %v3036
      %v3107 = vadd.f32 %v2816, %v3041
      %v3108 = vadd.f32 %v2819, %v3044
      %v3109 = vadd.f32 %v2824, %v3049
      %v3110 = vadd.f32 %v2827, %v3052
      %v3111 = vadd.f32 %v2832, %v3057
      %v3112 = vadd.f32 %v2835, %v3060
      %v3113 = vadd.f32 %v2840, %v3065
      %v3114 = vadd.f32 %v2843, %v3068
      %v3115 = vadd.f32 %v2848, %v3073
      %v3116 = vadd.f32 %v2851, %v3076
      %v3117 = vadd.f32 %v2856, %v3081
      %v3118 = vadd.f32 %v2859, %v3084
      %v3119 = vld [vmem:[%s27 + $0xc0] sm:$0xf]
      %v3120 = vld [vmem:[%s27 + $0xc4] sm:$0xf]
      %v3121 = vld [vmem:[%s27 + $0xc8] sm:$0xf]
      %v3122 = vld [vmem:[%s27 + $0xcc] sm:$0xf]
      %v3123 = vld [vmem:[%s27 + $0xd0] sm:$0xf]
      %v3124 = vld [vmem:[%s27 + $0xd4] sm:$0xf]
      %v3125 = vld [vmem:[%s27 + $0xd8] sm:$0xf]
      %v3126 = vld [vmem:[%s27 + $0xdc] sm:$0xf]
      %v3127 = vld [vmem:[%s27 + $0xe0] sm:$0xf]
      %v3128 = vld [vmem:[%s27 + $0xe4] sm:$0xf]
      %v3129 = vld [vmem:[%s27 + $0xe8] sm:$0xf]
      %v3130 = vld [vmem:[%s27 + $0xec] sm:$0xf]
      %v3131 = vld [vmem:[%s27 + $0xf0] sm:$0xf]
      %v3132 = vld [vmem:[%s27 + $0xf4] sm:$0xf]
      %v3133 = vld [vmem:[%s27 + $0xf8] sm:$0xf]
      %v3134 = vld [vmem:[%s27 + $0xfc] sm:$0xf]
      %v3151 = vunpack.c.l.b16 %v3119
      %v3152 = vunpack.c.l.b16 %v3120
      %v3153 = vunpack.c.l.b16 %v3121
      %v3154 = vunpack.c.l.b16 %v3122
      %v3155 = vunpack.c.l.b16 %v3123
      %v3156 = vunpack.c.l.b16 %v3124
      %v3157 = vunpack.c.l.b16 %v3125
      %v3158 = vunpack.c.l.b16 %v3126
      %v3159 = vunpack.c.l.b16 %v3127
      %v3160 = vunpack.c.l.b16 %v3128
      %v3161 = vunpack.c.l.b16 %v3129
      %v3162 = vunpack.c.l.b16 %v3130
      %v3163 = vunpack.c.l.b16 %v3131
      %v3164 = vunpack.c.l.b16 %v3132
      %v3165 = vunpack.c.l.b16 %v3133
      %v3166 = vunpack.c.l.b16 %v3134
      %v3167 = vpack.c.b16 %v3152, %v3151
      %v3168 = vpack.c.b16 %v3154, %v3153
      %v3169 = vpack.c.b16 %v3156, %v3155
      %v3170 = vpack.c.b16 %v3158, %v3157
      %v3171 = vpack.c.b16 %v3160, %v3159
      %v3172 = vpack.c.b16 %v3162, %v3161
      %v3173 = vpack.c.b16 %v3164, %v3163
      %v3174 = vpack.c.b16 %v3166, %v3165
      %3183 = vmatprep.subr.bf16.mxu0 0
      %3184 = vmatpush1.bf16.msra.mxu0 %v3167
      %3185 = vmatprep.subr.bf16.mxu0 0
      %3186 = vmatpush1.bf16.msra.mxu0 %v3168
      %3187 = vmatprep.subr.bf16.mxu0 0
      %3188 = vmatpush1.bf16.msra.mxu0 %v3169
      %3189 = vmatprep.subr.bf16.mxu0 0
      %3190 = vmatpush1.bf16.msra.mxu0 %v3170
      %3191 = vmatprep.subr.bf16.mxu0 0
      %3192 = vmatpush1.bf16.msra.mxu0 %v3171
      %3193 = vmatprep.subr.bf16.mxu0 0
      %3194 = vmatpush1.bf16.msra.mxu0 %v3172
      %3195 = vmatprep.subr.bf16.mxu0 0
      %3196 = vmatpush1.bf16.msra.mxu0 %v3173
      %3197 = vmatprep.subr.bf16.mxu0 0
      %3198 = vmatpush1.bf16.msra.mxu0 %v3174
      %3199 = vmatprep.subr.bf16.mxu0 0
      %3200 = vmatpush1.bf16.msra.mxu0 0
      %3201 = vmatprep.subr.bf16.mxu0 0
      %3202 = vmatpush1.bf16.msra.mxu0 0
      %3203 = vmatprep.subr.bf16.mxu0 0
      %3204 = vmatpush1.bf16.msra.mxu0 0
      %3205 = vmatprep.subr.bf16.mxu0 0
      %3206 = vmatpush1.bf16.msra.mxu0 0
      %3207 = vmatprep.subr.bf16.mxu0 0
      %3208 = vmatpush1.bf16.msra.mxu0 0
      %3209 = vmatprep.subr.bf16.mxu0 0
      %3210 = vmatpush1.bf16.msra.mxu0 0
      %3211 = vmatprep.subr.bf16.mxu0 0
      %3212 = vmatpush1.bf16.msra.mxu0 0
      %3213 = vmatprep.subr.bf16.mxu0 0
      %3214 = vmatpush1.bf16.msra.mxu0 0
      %3215 = vmatprep.mubr.bf16.mxu0 0
      %3216 = vmatmul.mubr.bf16.gmra.mrb[0].mxu0 %v2364
      %v3217 = vpop.f32.mrb[0].mxu0
      %v3218 = vadd.f32 0.0, %v3217
      %v3219 = vpop.f32.mrb[0].mxu0
      %v3220 = vpop.f32.mrb[0].mxu0
      %v3221 = vadd.f32 0.0, %v3220
      %v3222 = vpop.f32.mrb[0].mxu0
      %3223 = vmatprep.mubr.bf16.mxu0 0
      %3224 = vmatmul.mubr.bf16.gmra.mrb[0].mxu0 %v2365
      %v3225 = vpop.f32.mrb[0].mxu0
      %v3226 = vadd.f32 0.0, %v3225
      %v3227 = vpop.f32.mrb[0].mxu0
      %v3228 = vpop.f32.mrb[0].mxu0
      %v3229 = vadd.f32 0.0, %v3228
      %v3230 = vpop.f32.mrb[0].mxu0
      %3231 = vmatprep.mubr.bf16.mxu0 0
      %3232 = vmatmul.mubr.bf16.gmra.mrb[0].mxu0 %v2366
      %v3233 = vpop.f32.mrb[0].mxu0
      %v3234 = vadd.f32 0.0, %v3233
      %v3235 = vpop.f32.mrb[0].mxu0
      %v3236 = vpop.f32.mrb[0].mxu0
      %v3237 = vadd.f32 0.0, %v3236
      %v3238 = vpop.f32.mrb[0].mxu0
      %3239 = vmatprep.mubr.bf16.mxu0 0
      %3240 = vmatmul.mubr.bf16.gmra.mrb[0].mxu0 %v2367
      %v3241 = vpop.f32.mrb[0].mxu0
      %v3242 = vadd.f32 0.0, %v3241
      %v3243 = vpop.f32.mrb[0].mxu0
      %v3244 = vpop.f32.mrb[0].mxu0
      %v3245 = vadd.f32 0.0, %v3244
      %v3246 = vpop.f32.mrb[0].mxu0
      %3247 = vmatprep.mubr.bf16.mxu0 0
      %3248 = vmatmul.mubr.bf16.gmra.mrb[0].mxu0 %v2368
      %v3249 = vpop.f32.mrb[0].mxu0
      %v3250 = vadd.f32 0.0, %v3249
      %v3251 = vpop.f32.mrb[0].mxu0
      %v3252 = vpop.f32.mrb[0].mxu0
      %v3253 = vadd.f32 0.0, %v3252
      %v3254 = vpop.f32.mrb[0].mxu0
      %3255 = vmatprep.mubr.bf16.mxu0 0
      %3256 = vmatmul.mubr.bf16.gmra.mrb[0].mxu0 %v2369
      %v3257 = vpop.f32.mrb[0].mxu0
      %v3258 = vadd.f32 0.0, %v3257
      %v3259 = vpop.f32.mrb[0].mxu0
      %v3260 = vpop.f32.mrb[0].mxu0
      %v3261 = vadd.f32 0.0, %v3260
      %v3262 = vpop.f32.mrb[0].mxu0
      %3263 = vmatprep.mubr.bf16.mxu0 0
      %3264 = vmatmul.mubr.bf16.gmra.mrb[0].mxu0 %v2370
      %v3265 = vpop.f32.mrb[0].mxu0
      %v3266 = vadd.f32 0.0, %v3265
      %v3267 = vpop.f32.mrb[0].mxu0
      %v3268 = vpop.f32.mrb[0].mxu0
      %v3269 = vadd.f32 0.0, %v3268
      %v3270 = vpop.f32.mrb[0].mxu0
      %3271 = vmatprep.mubr.bf16.mxu0 0
      %3272 = vmatmul.mubr.bf16.gmra.mrb[0].mxu0 %v2371
      %v3273 = vpop.f32.mrb[0].mxu0
      %v3274 = vadd.f32 0.0, %v3273
      %v3275 = vpop.f32.mrb[0].mxu0
      %v3276 = vpop.f32.mrb[0].mxu0
      %v3277 = vadd.f32 0.0, %v3276
      %v3278 = vpop.f32.mrb[0].mxu0
      %3279 = vmatprep.mubr.bf16.mxu0 0
      %3280 = vmatmul.mubr.bf16.gmra.mrb[0].mxu0 %v2372
      %v3281 = vpop.f32.mrb[0].mxu0
      %v3282 = vadd.f32 0.0, %v3281
      %v3283 = vpop.f32.mrb[0].mxu0
      %v3284 = vpop.f32.mrb[0].mxu0
      %v3285 = vadd.f32 0.0, %v3284
      %v3286 = vpop.f32.mrb[0].mxu0
      %3287 = vmatprep.mubr.bf16.mxu0 0
      %3288 = vmatmul.mubr.bf16.gmra.mrb[0].mxu0 %v2373
      %v3289 = vpop.f32.mrb[0].mxu0
      %v3290 = vadd.f32 0.0, %v3289
      %v3291 = vpop.f32.mrb[0].mxu0
      %v3292 = vpop.f32.mrb[0].mxu0
      %v3293 = vadd.f32 0.0, %v3292
      %v3294 = vpop.f32.mrb[0].mxu0
      %3295 = vmatprep.mubr.bf16.mxu0 0
      %3296 = vmatmul.mubr.bf16.gmra.mrb[0].mxu0 %v2374
      %v3297 = vpop.f32.mrb[0].mxu0
      %v3298 = vadd.f32 0.0, %v3297
      %v3299 = vpop.f32.mrb[0].mxu0
      %v3300 = vpop.f32.mrb[0].mxu0
      %v3301 = vadd.f32 0.0, %v3300
      %v3302 = vpop.f32.mrb[0].mxu0
      %3303 = vmatprep.mubr.bf16.mxu0 0
      %3304 = vmatmul.mubr.bf16.gmra.mrb[0].mxu0 %v2375
      %v3305 = vpop.f32.mrb[0].mxu0
      %v3306 = vadd.f32 0.0, %v3305
      %v3307 = vpop.f32.mrb[0].mxu0
      %v3308 = vpop.f32.mrb[0].mxu0
      %v3309 = vadd.f32 0.0, %v3308
      %v3310 = vpop.f32.mrb[0].mxu0
      %3311 = vmatprep.mubr.bf16.mxu0 0
      %3312 = vmatmul.mubr.bf16.gmra.mrb[0].mxu0 %v2376
      %v3313 = vpop.f32.mrb[0].mxu0
      %v3314 = vadd.f32 0.0, %v3313
      %v3315 = vpop.f32.mrb[0].mxu0
      %v3316 = vpop.f32.mrb[0].mxu0
      %v3317 = vadd.f32 0.0, %v3316
      %v3318 = vpop.f32.mrb[0].mxu0
      %3319 = vmatprep.mubr.bf16.mxu0 0
      %3320 = vmatmul.mubr.bf16.gmra.mrb[0].mxu0 %v2377
      %v3321 = vpop.f32.mrb[0].mxu0
      %v3322 = vadd.f32 0.0, %v3321
      %v3323 = vpop.f32.mrb[0].mxu0
      %v3324 = vpop.f32.mrb[0].mxu0
      %v3325 = vadd.f32 0.0, %v3324
      %v3326 = vpop.f32.mrb[0].mxu0
      %3327 = vmatprep.mubr.bf16.mxu0 0
      %3328 = vmatmul.mubr.bf16.gmra.mrb[0].mxu0 %v2378
      %v3329 = vpop.f32.mrb[0].mxu0
      %v3330 = vadd.f32 0.0, %v3329
      %v3331 = vpop.f32.mrb[0].mxu0
      %v3332 = vpop.f32.mrb[0].mxu0
      %v3333 = vadd.f32 0.0, %v3332
      %v3334 = vpop.f32.mrb[0].mxu0
      %3335 = vmatprep.mubr.bf16.mxu0 0
      %3336 = vmatmul.mubr.bf16.gmra.mrb[0].mxu0 %v2379
      %v3337 = vpop.f32.mrb[0].mxu0
      %v3338 = vadd.f32 0.0, %v3337
      %v3339 = vpop.f32.mrb[0].mxu0
      %v3340 = vpop.f32.mrb[0].mxu0
      %v3341 = vadd.f32 0.0, %v3340
      %v3342 = vpop.f32.mrb[0].mxu0
      %3343 = vdwg.mxu0
      %v3344 = vadd.f32 %v3087, %v3218
      %v3345 = vadd.f32 %v3088, %v3221
      %v3346 = vadd.f32 %v3089, %v3226
      %v3347 = vadd.f32 %v3090, %v3229
      %v3348 = vadd.f32 %v3091, %v3234
      %v3349 = vadd.f32 %v3092, %v3237
      %v3350 = vadd.f32 %v3093, %v3242
      %v3351 = vadd.f32 %v3094, %v3245
      %v3352 = vadd.f32 %v3095, %v3250
      %v3353 = vadd.f32 %v3096, %v3253
      %v3354 = vadd.f32 %v3097, %v3258
      %v3355 = vadd.f32 %v3098, %v3261
      %v3356 = vadd.f32 %v3099, %v3266
      %v3357 = vadd.f32 %v3100, %v3269
      %v3358 = vadd.f32 %v3101, %v3274
      %v3359 = vadd.f32 %v3102, %v3277
      %v3360 = vadd.f32 %v3103, %v3282
      %v3361 = vadd.f32 %v3104, %v3285
      %v3362 = vadd.f32 %v3105, %v3290
      %v3363 = vadd.f32 %v3106, %v3293
      %v3364 = vadd.f32 %v3107, %v3298
      %v3365 = vadd.f32 %v3108, %v3301
      %v3366 = vadd.f32 %v3109, %v3306
      %v3367 = vadd.f32 %v3110, %v3309
      %v3368 = vadd.f32 %v3111, %v3314
      %v3369 = vadd.f32 %v3112, %v3317
      %v3370 = vadd.f32 %v3113, %v3322
      %v3371 = vadd.f32 %v3114, %v3325
      %v3372 = vadd.f32 %v3115, %v3330
      %v3373 = vadd.f32 %v3116, %v3333
      %v3374 = vadd.f32 %v3117, %v3338
      %v3375 = vadd.f32 %v3118, %v3341
      %v3376 = vld [vmem:[%s27 + $0x100] sm:$0xf]
      %v3377 = vld [vmem:[%s27 + $0x104] sm:$0xf]
      %v3378 = vld [vmem:[%s27 + $0x108] sm:$0xf]
      %v3379 = vld [vmem:[%s27 + $0x10c] sm:$0xf]
      %v3380 = vld [vmem:[%s27 + $0x110] sm:$0xf]
      %v3381 = vld [vmem:[%s27 + $0x114] sm:$0xf]
      %v3382 = vld [vmem:[%s27 + $0x118] sm:$0xf]
      %v3383 = vld [vmem:[%s27 + $0x11c] sm:$0xf]
      %v3384 = vld [vmem:[%s27 + $0x120] sm:$0xf]
      %v3385 = vld [vmem:[%s27 + $0x124] sm:$0xf]
      %v3386 = vld [vmem:[%s27 + $0x128] sm:$0xf]
      %v3387 = vld [vmem:[%s27 + $0x12c] sm:$0xf]
      %v3388 = vld [vmem:[%s27 + $0x130] sm:$0xf]
      %v3389 = vld [vmem:[%s27 + $0x134] sm:$0xf]
      %v3390 = vld [vmem:[%s27 + $0x138] sm:$0xf]
      %v3391 = vld [vmem:[%s27 + $0x13c] sm:$0xf]
      %v3408 = vunpack.c.l.b16 %v3376
      %v3409 = vunpack.c.l.b16 %v3377
      %v3410 = vunpack.c.l.b16 %v3378
      %v3411 = vunpack.c.l.b16 %v3379
      %v3412 = vunpack.c.l.b16 %v3380
      %v3413 = vunpack.c.l.b16 %v3381
      %v3414 = vunpack.c.l.b16 %v3382
      %v3415 = vunpack.c.l.b16 %v3383
      %v3416 = vunpack.c.l.b16 %v3384
      %v3417 = vunpack.c.l.b16 %v3385
      %v3418 = vunpack.c.l.b16 %v3386
      %v3419 = vunpack.c.l.b16 %v3387
      %v3420 = vunpack.c.l.b16 %v3388
      %v3421 = vunpack.c.l.b16 %v3389
      %v3422 = vunpack.c.l.b16 %v3390
      %v3423 = vunpack.c.l.b16 %v3391
      %v3424 = vpack.c.b16 %v3409, %v3408
      %v3425 = vpack.c.b16 %v3411, %v3410
      %v3426 = vpack.c.b16 %v3413, %v3412
      %v3427 = vpack.c.b16 %v3415, %v3414
      %v3428 = vpack.c.b16 %v3417, %v3416
      %v3429 = vpack.c.b16 %v3419, %v3418
      %v3430 = vpack.c.b16 %v3421, %v3420
      %v3431 = vpack.c.b16 %v3423, %v3422
      %3440 = vmatprep.subr.bf16.mxu0 0
      %3441 = vmatpush1.bf16.msra.mxu0 %v3424
      %3442 = vmatprep.subr.bf16.mxu0 0
      %3443 = vmatpush1.bf16.msra.mxu0 %v3425
      %3444 = vmatprep.subr.bf16.mxu0 0
      %3445 = vmatpush1.bf16.msra.mxu0 %v3426
      %3446 = vmatprep.subr.bf16.mxu0 0
      %3447 = vmatpush1.bf16.msra.mxu0 %v3427
      %3448 = vmatprep.subr.bf16.mxu0 0
      %3449 = vmatpush1.bf16.msra.mxu0 %v3428
      %3450 = vmatprep.subr.bf16.mxu0 0
      %3451 = vmatpush1.bf16.msra.mxu0 %v3429
      %3452 = vmatprep.subr.bf16.mxu0 0
      %3453 = vmatpush1.bf16.msra.mxu0 %v3430
      %3454 = vmatprep.subr.bf16.mxu0 0
      %3455 = vmatpush1.bf16.msra.mxu0 %v3431
      %3456 = vmatprep.subr.bf16.mxu0 0
      %3457 = vmatpush1.bf16.msra.mxu0 0
      %3458 = vmatprep.subr.bf16.mxu0 0
      %3459 = vmatpush1.bf16.msra.mxu0 0
      %3460 = vmatprep.subr.bf16.mxu0 0
      %3461 = vmatpush1.bf16.msra.mxu0 0
      %3462 = vmatprep.subr.bf16.mxu0 0
      %3463 = vmatpush1.bf16.msra.mxu0 0
      %3464 = vmatprep.subr.bf16.mxu0 0
      %3465 = vmatpush1.bf16.msra.mxu0 0
      %3466 = vmatprep.subr.bf16.mxu0 0
      %3467 = vmatpush1.bf16.msra.mxu0 0
      %3468 = vmatprep.subr.bf16.mxu0 0
      %3469 = vmatpush1.bf16.msra.mxu0 0
      %3470 = vmatprep.subr.bf16.mxu0 0
      %3471 = vmatpush1.bf16.msra.mxu0 0
      %3472 = vmatprep.mubr.bf16.mxu0 0
      %3473 = vmatmul.mubr.bf16.gmra.mrb[0].mxu0 %v2380
      %v3474 = vpop.f32.mrb[0].mxu0
      %v3475 = vadd.f32 0.0, %v3474
      %v3476 = vpop.f32.mrb[0].mxu0
      %v3477 = vpop.f32.mrb[0].mxu0
      %v3478 = vadd.f32 0.0, %v3477
      %v3479 = vpop.f32.mrb[0].mxu0
      %3480 = vmatprep.mubr.bf16.mxu0 0
      %3481 = vmatmul.mubr.bf16.gmra.mrb[0].mxu0 %v2381
      %v3482 = vpop.f32.mrb[0].mxu0
      %v3483 = vadd.f32 0.0, %v3482
      %v3484 = vpop.f32.mrb[0].mxu0
      %v3485 = vpop.f32.mrb[0].mxu0
      %v3486 = vadd.f32 0.0, %v3485
      %v3487 = vpop.f32.mrb[0].mxu0
      %3488 = vmatprep.mubr.bf16.mxu0 0
      %3489 = vmatmul.mubr.bf16.gmra.mrb[0].mxu0 %v2382
      %v3490 = vpop.f32.mrb[0].mxu0
      %v3491 = vadd.f32 0.0, %v3490
      %v3492 = vpop.f32.mrb[0].mxu0
      %v3493 = vpop.f32.mrb[0].mxu0
      %v3494 = vadd.f32 0.0, %v3493
      %v3495 = vpop.f32.mrb[0].mxu0
      %3496 = vmatprep.mubr.bf16.mxu0 0
      %3497 = vmatmul.mubr.bf16.gmra.mrb[0].mxu0 %v2383
      %v3498 = vpop.f32.mrb[0].mxu0
      %v3499 = vadd.f32 0.0, %v3498
      %v3500 = vpop.f32.mrb[0].mxu0
      %v3501 = vpop.f32.mrb[0].mxu0
      %v3502 = vadd.f32 0.0, %v3501
      %v3503 = vpop.f32.mrb[0].mxu0
      %3504 = vmatprep.mubr.bf16.mxu0 0
      %3505 = vmatmul.mubr.bf16.gmra.mrb[0].mxu0 %v2384
      %v3506 = vpop.f32.mrb[0].mxu0
      %v3507 = vadd.f32 0.0, %v3506
      %v3508 = vpop.f32.mrb[0].mxu0
      %v3509 = vpop.f32.mrb[0].mxu0
      %v3510 = vadd.f32 0.0, %v3509
      %v3511 = vpop.f32.mrb[0].mxu0
      %3512 = vmatprep.mubr.bf16.mxu0 0
      %3513 = vmatmul.mubr.bf16.gmra.mrb[0].mxu0 %v2385
      %v3514 = vpop.f32.mrb[0].mxu0
      %v3515 = vadd.f32 0.0, %v3514
      %v3516 = vpop.f32.mrb[0].mxu0
      %v3517 = vpop.f32.mrb[0].mxu0
      %v3518 = vadd.f32 0.0, %v3517
      %v3519 = vpop.f32.mrb[0].mxu0
      %3520 = vmatprep.mubr.bf16.mxu0 0
      %3521 = vmatmul.mubr.bf16.gmra.mrb[0].mxu0 %v2386
      %v3522 = vpop.f32.mrb[0].mxu0
      %v3523 = vadd.f32 0.0, %v3522
      %v3524 = vpop.f32.mrb[0].mxu0
      %v3525 = vpop.f32.mrb[0].mxu0
      %v3526 = vadd.f32 0.0, %v3525
      %v3527 = vpop.f32.mrb[0].mxu0
      %3528 = vmatprep.mubr.bf16.mxu0 0
      %3529 = vmatmul.mubr.bf16.gmra.mrb[0].mxu0 %v2387
      %v3530 = vpop.f32.mrb[0].mxu0
      %v3531 = vadd.f32 0.0, %v3530
      %v3532 = vpop.f32.mrb[0].mxu0
      %v3533 = vpop.f32.mrb[0].mxu0
      %v3534 = vadd.f32 0.0, %v3533
      %v3535 = vpop.f32.mrb[0].mxu0
      %3536 = vmatprep.mubr.bf16.mxu0 0
      %3537 = vmatmul.mubr.bf16.gmra.mrb[0].mxu0 %v2388
      %v3538 = vpop.f32.mrb[0].mxu0
      %v3539 = vadd.f32 0.0, %v3538
      %v3540 = vpop.f32.mrb[0].mxu0
      %v3541 = vpop.f32.mrb[0].mxu0
      %v3542 = vadd.f32 0.0, %v3541
      %v3543 = vpop.f32.mrb[0].mxu0
      %3544 = vmatprep.mubr.bf16.mxu0 0
      %3545 = vmatmul.mubr.bf16.gmra.mrb[0].mxu0 %v2389
      %v3546 = vpop.f32.mrb[0].mxu0
      %v3547 = vadd.f32 0.0, %v3546
      %v3548 = vpop.f32.mrb[0].mxu0
      %v3549 = vpop.f32.mrb[0].mxu0
      %v3550 = vadd.f32 0.0, %v3549
      %v3551 = vpop.f32.mrb[0].mxu0
      %3552 = vmatprep.mubr.bf16.mxu0 0
      %3553 = vmatmul.mubr.bf16.gmra.mrb[0].mxu0 %v2390
      %v3554 = vpop.f32.mrb[0].mxu0
      %v3555 = vadd.f32 0.0, %v3554
      %v3556 = vpop.f32.mrb[0].mxu0
      %v3557 = vpop.f32.mrb[0].mxu0
      %v3558 = vadd.f32 0.0, %v3557
      %v3559 = vpop.f32.mrb[0].mxu0
      %3560 = vmatprep.mubr.bf16.mxu0 0
      %3561 = vmatmul.mubr.bf16.gmra.mrb[0].mxu0 %v2391
      %v3562 = vpop.f32.mrb[0].mxu0
      %v3563 = vadd.f32 0.0, %v3562
      %v3564 = vpop.f32.mrb[0].mxu0
      %v3565 = vpop.f32.mrb[0].mxu0
      %v3566 = vadd.f32 0.0, %v3565
      %v3567 = vpop.f32.mrb[0].mxu0
      %3568 = vmatprep.mubr.bf16.mxu0 0
      %3569 = vmatmul.mubr.bf16.gmra.mrb[0].mxu0 %v2392
      %v3570 = vpop.f32.mrb[0].mxu0
      %v3571 = vadd.f32 0.0, %v3570
      %v3572 = vpop.f32.mrb[0].mxu0
      %v3573 = vpop.f32.mrb[0].mxu0
      %v3574 = vadd.f32 0.0, %v3573
      %v3575 = vpop.f32.mrb[0].mxu0
      %3576 = vmatprep.mubr.bf16.mxu0 0
      %3577 = vmatmul.mubr.bf16.gmra.mrb[0].mxu0 %v2393
      %v3578 = vpop.f32.mrb[0].mxu0
      %v3579 = vadd.f32 0.0, %v3578
      %v3580 = vpop.f32.mrb[0].mxu0
      %v3581 = vpop.f32.mrb[0].mxu0
      %v3582 = vadd.f32 0.0, %v3581
      %v3583 = vpop.f32.mrb[0].mxu0
      %3584 = vmatprep.mubr.bf16.mxu0 0
      %3585 = vmatmul.mubr.bf16.gmra.mrb[0].mxu0 %v2394
      %v3586 = vpop.f32.mrb[0].mxu0
      %v3587 = vadd.f32 0.0, %v3586
      %v3588 = vpop.f32.mrb[0].mxu0
      %v3589 = vpop.f32.mrb[0].mxu0
      %v3590 = vadd.f32 0.0, %v3589
      %v3591 = vpop.f32.mrb[0].mxu0
      %3592 = vmatprep.mubr.bf16.mxu0 0
      %3593 = vmatmul.mubr.bf16.gmra.mrb[0].mxu0 %v2395
      %v3594 = vpop.f32.mrb[0].mxu0
      %v3595 = vadd.f32 0.0, %v3594
      %v3596 = vpop.f32.mrb[0].mxu0
      %v3597 = vpop.f32.mrb[0].mxu0
      %v3598 = vadd.f32 0.0, %v3597
      %v3599 = vpop.f32.mrb[0].mxu0
      %3600 = vdwg.mxu0
      %v3601 = vadd.f32 %v3344, %v3475
      %v3602 = vadd.f32 %v3345, %v3478
      %v3603 = vadd.f32 %v3346, %v3483
      %v3604 = vadd.f32 %v3347, %v3486
      %v3605 = vadd.f32 %v3348, %v3491
      %v3606 = vadd.f32 %v3349, %v3494
      %v3607 = vadd.f32 %v3350, %v3499
      %v3608 = vadd.f32 %v3351, %v3502
      %v3609 = vadd.f32 %v3352, %v3507
      %v3610 = vadd.f32 %v3353, %v3510
      %v3611 = vadd.f32 %v3354, %v3515
      %v3612 = vadd.f32 %v3355, %v3518
      %v3613 = vadd.f32 %v3356, %v3523
      %v3614 = vadd.f32 %v3357, %v3526
      %v3615 = vadd.f32 %v3358, %v3531
      %v3616 = vadd.f32 %v3359, %v3534
      %v3617 = vadd.f32 %v3360, %v3539
      %v3618 = vadd.f32 %v3361, %v3542
      %v3619 = vadd.f32 %v3362, %v3547
      %v3620 = vadd.f32 %v3363, %v3550
      %v3621 = vadd.f32 %v3364, %v3555
      %v3622 = vadd.f32 %v3365, %v3558
      %v3623 = vadd.f32 %v3366, %v3563
      %v3624 = vadd.f32 %v3367, %v3566
      %v3625 = vadd.f32 %v3368, %v3571
      %v3626 = vadd.f32 %v3369, %v3574
      %v3627 = vadd.f32 %v3370, %v3579
      %v3628 = vadd.f32 %v3371, %v3582
      %v3629 = vadd.f32 %v3372, %v3587
      %v3630 = vadd.f32 %v3373, %v3590
      %v3631 = vadd.f32 %v3374, %v3595
      %v3632 = vadd.f32 %v3375, %v3598
      %v3633 = vld [vmem:[%s27 + $0x140] sm:$0xf]
      %v3634 = vld [vmem:[%s27 + $0x144] sm:$0xf]
      %v3635 = vld [vmem:[%s27 + $0x148] sm:$0xf]
      %v3636 = vld [vmem:[%s27 + $0x14c] sm:$0xf]
      %v3637 = vld [vmem:[%s27 + $0x150] sm:$0xf]
      %v3638 = vld [vmem:[%s27 + $0x154] sm:$0xf]
      %v3639 = vld [vmem:[%s27 + $0x158] sm:$0xf]
      %v3640 = vld [vmem:[%s27 + $0x15c] sm:$0xf]
      %v3641 = vld [vmem:[%s27 + $0x160] sm:$0xf]
      %v3642 = vld [vmem:[%s27 + $0x164] sm:$0xf]
      %v3643 = vld [vmem:[%s27 + $0x168] sm:$0xf]
      %v3644 = vld [vmem:[%s27 + $0x16c] sm:$0xf]
      %v3645 = vld [vmem:[%s27 + $0x170] sm:$0xf]
      %v3646 = vld [vmem:[%s27 + $0x174] sm:$0xf]
      %v3647 = vld [vmem:[%s27 + $0x178] sm:$0xf]
      %v3648 = vld [vmem:[%s27 + $0x17c] sm:$0xf]
      %v3665 = vunpack.c.l.b16 %v3633
      %v3666 = vunpack.c.l.b16 %v3634
      %v3667 = vunpack.c.l.b16 %v3635
      %v3668 = vunpack.c.l.b16 %v3636
      %v3669 = vunpack.c.l.b16 %v3637
      %v3670 = vunpack.c.l.b16 %v3638
      %v3671 = vunpack.c.l.b16 %v3639
      %v3672 = vunpack.c.l.b16 %v3640
      %v3673 = vunpack.c.l.b16 %v3641
      %v3674 = vunpack.c.l.b16 %v3642
      %v3675 = vunpack.c.l.b16 %v3643
      %v3676 = vunpack.c.l.b16 %v3644
      %v3677 = vunpack.c.l.b16 %v3645
      %v3678 = vunpack.c.l.b16 %v3646
      %v3679 = vunpack.c.l.b16 %v3647
      %v3680 = vunpack.c.l.b16 %v3648
      %v3681 = vpack.c.b16 %v3666, %v3665
      %v3682 = vpack.c.b16 %v3668, %v3667
      %v3683 = vpack.c.b16 %v3670, %v3669
      %v3684 = vpack.c.b16 %v3672, %v3671
      %v3685 = vpack.c.b16 %v3674, %v3673
      %v3686 = vpack.c.b16 %v3676, %v3675
      %v3687 = vpack.c.b16 %v3678, %v3677
      %v3688 = vpack.c.b16 %v3680, %v3679
      %3697 = vmatprep.subr.bf16.mxu0 0
      %3698 = vmatpush1.bf16.msra.mxu0 %v3681
      %3699 = vmatprep.subr.bf16.mxu0 0
      %3700 = vmatpush1.bf16.msra.mxu0 %v3682
      %3701 = vmatprep.subr.bf16.mxu0 0
      %3702 = vmatpush1.bf16.msra.mxu0 %v3683
      %3703 = vmatprep.subr.bf16.mxu0 0
      %3704 = vmatpush1.bf16.msra.mxu0 %v3684
      %3705 = vmatprep.subr.bf16.mxu0 0
      %3706 = vmatpush1.bf16.msra.mxu0 %v3685
      %3707 = vmatprep.subr.bf16.mxu0 0
      %3708 = vmatpush1.bf16.msra.mxu0 %v3686
      %3709 = vmatprep.subr.bf16.mxu0 0
      %3710 = vmatpush1.bf16.msra.mxu0 %v3687
      %3711 = vmatprep.subr.bf16.mxu0 0
      %3712 = vmatpush1.bf16.msra.mxu0 %v3688
      %3713 = vmatprep.subr.bf16.mxu0 0
      %3714 = vmatpush1.bf16.msra.mxu0 0
      %3715 = vmatprep.subr.bf16.mxu0 0
      %3716 = vmatpush1.bf16.msra.mxu0 0
      %3717 = vmatprep.subr.bf16.mxu0 0
      %3718 = vmatpush1.bf16.msra.mxu0 0
      %3719 = vmatprep.subr.bf16.mxu0 0
      %3720 = vmatpush1.bf16.msra.mxu0 0
      %3721 = vmatprep.subr.bf16.mxu0 0
      %3722 = vmatpush1.bf16.msra.mxu0 0
      %3723 = vmatprep.subr.bf16.mxu0 0
      %3724 = vmatpush1.bf16.msra.mxu0 0
      %3725 = vmatprep.subr.bf16.mxu0 0
      %3726 = vmatpush1.bf16.msra.mxu0 0
      %3727 = vmatprep.subr.bf16.mxu0 0
      %3728 = vmatpush1.bf16.msra.mxu0 0
      %3729 = vmatprep.mubr.bf16.mxu0 0
      %3730 = vmatmul.mubr.bf16.gmra.mrb[0].mxu0 %v2396
      %v3731 = vpop.f32.mrb[0].mxu0
      %v3732 = vadd.f32 0.0, %v3731
      %v3733 = vpop.f32.mrb[0].mxu0
      %v3734 = vpop.f32.mrb[0].mxu0
      %v3735 = vadd.f32 0.0, %v3734
      %v3736 = vpop.f32.mrb[0].mxu0
      %3737 = vmatprep.mubr.bf16.mxu0 0
      %3738 = vmatmul.mubr.bf16.gmra.mrb[0].mxu0 %v2397
      %v3739 = vpop.f32.mrb[0].mxu0
      %v3740 = vadd.f32 0.0, %v3739
      %v3741 = vpop.f32.mrb[0].mxu0
      %v3742 = vpop.f32.mrb[0].mxu0
      %v3743 = vadd.f32 0.0, %v3742
      %v3744 = vpop.f32.mrb[0].mxu0
      %3745 = vmatprep.mubr.bf16.mxu0 0
      %3746 = vmatmul.mubr.bf16.gmra.mrb[0].mxu0 %v2398
      %v3747 = vpop.f32.mrb[0].mxu0
      %v3748 = vadd.f32 0.0, %v3747
      %v3749 = vpop.f32.mrb[0].mxu0
      %v3750 = vpop.f32.mrb[0].mxu0
      %v3751 = vadd.f32 0.0, %v3750
      %v3752 = vpop.f32.mrb[0].mxu0
      %3753 = vmatprep.mubr.bf16.mxu0 0
      %3754 = vmatmul.mubr.bf16.gmra.mrb[0].mxu0 %v2399
      %v3755 = vpop.f32.mrb[0].mxu0
      %v3756 = vadd.f32 0.0, %v3755
      %v3757 = vpop.f32.mrb[0].mxu0
      %v3758 = vpop.f32.mrb[0].mxu0
      %v3759 = vadd.f32 0.0, %v3758
      %v3760 = vpop.f32.mrb[0].mxu0
      %3761 = vmatprep.mubr.bf16.mxu0 0
      %3762 = vmatmul.mubr.bf16.gmra.mrb[0].mxu0 %v2400
      %v3763 = vpop.f32.mrb[0].mxu0
      %v3764 = vadd.f32 0.0, %v3763
      %v3765 = vpop.f32.mrb[0].mxu0
      %v3766 = vpop.f32.mrb[0].mxu0
      %v3767 = vadd.f32 0.0, %v3766
      %v3768 = vpop.f32.mrb[0].mxu0
      %3769 = vmatprep.mubr.bf16.mxu0 0
      %3770 = vmatmul.mubr.bf16.gmra.mrb[0].mxu0 %v2401
      %v3771 = vpop.f32.mrb[0].mxu0
      %v3772 = vadd.f32 0.0, %v3771
      %v3773 = vpop.f32.mrb[0].mxu0
      %v3774 = vpop.f32.mrb[0].mxu0
      %v3775 = vadd.f32 0.0, %v3774
      %v3776 = vpop.f32.mrb[0].mxu0
      %3777 = vmatprep.mubr.bf16.mxu0 0
      %3778 = vmatmul.mubr.bf16.gmra.mrb[0].mxu0 %v2402
      %v3779 = vpop.f32.mrb[0].mxu0
      %v3780 = vadd.f32 0.0, %v3779
      %v3781 = vpop.f32.mrb[0].mxu0
      %v3782 = vpop.f32.mrb[0].mxu0
      %v3783 = vadd.f32 0.0, %v3782
      %v3784 = vpop.f32.mrb[0].mxu0
      %3785 = vmatprep.mubr.bf16.mxu0 0
      %3786 = vmatmul.mubr.bf16.gmra.mrb[0].mxu0 %v2403
      %v3787 = vpop.f32.mrb[0].mxu0
      %v3788 = vadd.f32 0.0, %v3787
      %v3789 = vpop.f32.mrb[0].mxu0
      %v3790 = vpop.f32.mrb[0].mxu0
      %v3791 = vadd.f32 0.0, %v3790
      %v3792 = vpop.f32.mrb[0].mxu0
      %3793 = vmatprep.mubr.bf16.mxu0 0
      %3794 = vmatmul.mubr.bf16.gmra.mrb[0].mxu0 %v2404
      %v3795 = vpop.f32.mrb[0].mxu0
      %v3796 = vadd.f32 0.0, %v3795
      %v3797 = vpop.f32.mrb[0].mxu0
      %v3798 = vpop.f32.mrb[0].mxu0
      %v3799 = vadd.f32 0.0, %v3798
      %v3800 = vpop.f32.mrb[0].mxu0
      %3801 = vmatprep.mubr.bf16.mxu0 0
      %3802 = vmatmul.mubr.bf16.gmra.mrb[0].mxu0 %v2405
      %v3803 = vpop.f32.mrb[0].mxu0
      %v3804 = vadd.f32 0.0, %v3803
      %v3805 = vpop.f32.mrb[0].mxu0
      %v3806 = vpop.f32.mrb[0].mxu0
      %v3807 = vadd.f32 0.0, %v3806
      %v3808 = vpop.f32.mrb[0].mxu0
      %3809 = vmatprep.mubr.bf16.mxu0 0
      %3810 = vmatmul.mubr.bf16.gmra.mrb[0].mxu0 %v2406
      %v3811 = vpop.f32.mrb[0].mxu0
      %v3812 = vadd.f32 0.0, %v3811
      %v3813 = vpop.f32.mrb[0].mxu0
      %v3814 = vpop.f32.mrb[0].mxu0
      %v3815 = vadd.f32 0.0, %v3814
      %v3816 = vpop.f32.mrb[0].mxu0
      %3817 = vmatprep.mubr.bf16.mxu0 0
      %3818 = vmatmul.mubr.bf16.gmra.mrb[0].mxu0 %v2407
      %v3819 = vpop.f32.mrb[0].mxu0
      %v3820 = vadd.f32 0.0, %v3819
      %v3821 = vpop.f32.mrb[0].mxu0
      %v3822 = vpop.f32.mrb[0].mxu0
      %v3823 = vadd.f32 0.0, %v3822
      %v3824 = vpop.f32.mrb[0].mxu0
      %3825 = vmatprep.mubr.bf16.mxu0 0
      %3826 = vmatmul.mubr.bf16.gmra.mrb[0].mxu0 %v2408
      %v3827 = vpop.f32.mrb[0].mxu0
      %v3828 = vadd.f32 0.0, %v3827
      %v3829 = vpop.f32.mrb[0].mxu0
      %v3830 = vpop.f32.mrb[0].mxu0
      %v3831 = vadd.f32 0.0, %v3830
      %v3832 = vpop.f32.mrb[0].mxu0
      %3833 = vmatprep.mubr.bf16.mxu0 0
      %3834 = vmatmul.mubr.bf16.gmra.mrb[0].mxu0 %v2409
      %v3835 = vpop.f32.mrb[0].mxu0
      %v3836 = vadd.f32 0.0, %v3835
      %v3837 = vpop.f32.mrb[0].mxu0
      %v3838 = vpop.f32.mrb[0].mxu0
      %v3839 = vadd.f32 0.0, %v3838
      %v3840 = vpop.f32.mrb[0].mxu0
      %3841 = vmatprep.mubr.bf16.mxu0 0
      %3842 = vmatmul.mubr.bf16.gmra.mrb[0].mxu0 %v2410
      %v3843 = vpop.f32.mrb[0].mxu0
      %v3844 = vadd.f32 0.0, %v3843
      %v3845 = vpop.f32.mrb[0].mxu0
      %v3846 = vpop.f32.mrb[0].mxu0
      %v3847 = vadd.f32 0.0, %v3846
      %v3848 = vpop.f32.mrb[0].mxu0
      %3849 = vmatprep.mubr.bf16.mxu0 0
      %3850 = vmatmul.mubr.bf16.gmra.mrb[0].mxu0 %v2411
      %v3851 = vpop.f32.mrb[0].mxu0
      %v3852 = vadd.f32 0.0, %v3851
      %v3853 = vpop.f32.mrb[0].mxu0
      %v3854 = vpop.f32.mrb[0].mxu0
      %v3855 = vadd.f32 0.0, %v3854
      %v3856 = vpop.f32.mrb[0].mxu0
      %3857 = vdwg.mxu0
      %v3858 = vadd.f32 %v3601, %v3732
      %v3859 = vadd.f32 %v3602, %v3735
      %v3860 = vadd.f32 %v3603, %v3740
      %v3861 = vadd.f32 %v3604, %v3743
      %v3862 = vadd.f32 %v3605, %v3748
      %v3863 = vadd.f32 %v3606, %v3751
      %v3864 = vadd.f32 %v3607, %v3756
      %v3865 = vadd.f32 %v3608, %v3759
      %v3866 = vadd.f32 %v3609, %v3764
      %v3867 = vadd.f32 %v3610, %v3767
      %v3868 = vadd.f32 %v3611, %v3772
      %v3869 = vadd.f32 %v3612, %v3775
      %v3870 = vadd.f32 %v3613, %v3780
      %v3871 = vadd.f32 %v3614, %v3783
      %v3872 = vadd.f32 %v3615, %v3788
      %v3873 = vadd.f32 %v3616, %v3791
      %v3874 = vadd.f32 %v3617, %v3796
      %v3875 = vadd.f32 %v3618, %v3799
      %v3876 = vadd.f32 %v3619, %v3804
      %v3877 = vadd.f32 %v3620, %v3807
      %v3878 = vadd.f32 %v3621, %v3812
      %v3879 = vadd.f32 %v3622, %v3815
      %v3880 = vadd.f32 %v3623, %v3820
      %v3881 = vadd.f32 %v3624, %v3823
      %v3882 = vadd.f32 %v3625, %v3828
      %v3883 = vadd.f32 %v3626, %v3831
      %v3884 = vadd.f32 %v3627, %v3836
      %v3885 = vadd.f32 %v3628, %v3839
      %v3886 = vadd.f32 %v3629, %v3844
      %v3887 = vadd.f32 %v3630, %v3847
      %v3888 = vadd.f32 %v3631, %v3852
      %v3889 = vadd.f32 %v3632, %v3855
      %v3890 = vld [vmem:[%s27 + $0x180] sm:$0xf]
      %v3891 = vld [vmem:[%s27 + $0x184] sm:$0xf]
      %v3892 = vld [vmem:[%s27 + $0x188] sm:$0xf]
      %v3893 = vld [vmem:[%s27 + $0x18c] sm:$0xf]
      %v3894 = vld [vmem:[%s27 + $0x190] sm:$0xf]
      %v3895 = vld [vmem:[%s27 + $0x194] sm:$0xf]
      %v3896 = vld [vmem:[%s27 + $0x198] sm:$0xf]
      %v3897 = vld [vmem:[%s27 + $0x19c] sm:$0xf]
      %v3898 = vld [vmem:[%s27 + $0x1a0] sm:$0xf]
      %v3899 = vld [vmem:[%s27 + $0x1a4] sm:$0xf]
      %v3900 = vld [vmem:[%s27 + $0x1a8] sm:$0xf]
      %v3901 = vld [vmem:[%s27 + $0x1ac] sm:$0xf]
      %v3902 = vld [vmem:[%s27 + $0x1b0] sm:$0xf]
      %v3903 = vld [vmem:[%s27 + $0x1b4] sm:$0xf]
      %v3904 = vld [vmem:[%s27 + $0x1b8] sm:$0xf]
      %v3905 = vld [vmem:[%s27 + $0x1bc] sm:$0xf]
      %v3922 = vunpack.c.l.b16 %v3890
      %v3923 = vunpack.c.l.b16 %v3891
      %v3924 = vunpack.c.l.b16 %v3892
      %v3925 = vunpack.c.l.b16 %v3893
      %v3926 = vunpack.c.l.b16 %v3894
      %v3927 = vunpack.c.l.b16 %v3895
      %v3928 = vunpack.c.l.b16 %v3896
      %v3929 = vunpack.c.l.b16 %v3897
      %v3930 = vunpack.c.l.b16 %v3898
      %v3931 = vunpack.c.l.b16 %v3899
      %v3932 = vunpack.c.l.b16 %v3900
      %v3933 = vunpack.c.l.b16 %v3901
      %v3934 = vunpack.c.l.b16 %v3902
      %v3935 = vunpack.c.l.b16 %v3903
      %v3936 = vunpack.c.l.b16 %v3904
      %v3937 = vunpack.c.l.b16 %v3905
      %v3938 = vpack.c.b16 %v3923, %v3922
      %v3939 = vpack.c.b16 %v3925, %v3924
      %v3940 = vpack.c.b16 %v3927, %v3926
      %v3941 = vpack.c.b16 %v3929, %v3928
      %v3942 = vpack.c.b16 %v3931, %v3930
      %v3943 = vpack.c.b16 %v3933, %v3932
      %v3944 = vpack.c.b16 %v3935, %v3934
      %v3945 = vpack.c.b16 %v3937, %v3936
      %3954 = vmatprep.subr.bf16.mxu0 0
      %3955 = vmatpush1.bf16.msra.mxu0 %v3938
      %3956 = vmatprep.subr.bf16.mxu0 0
      %3957 = vmatpush1.bf16.msra.mxu0 %v3939
      %3958 = vmatprep.subr.bf16.mxu0 0
      %3959 = vmatpush1.bf16.msra.mxu0 %v3940
      %3960 = vmatprep.subr.bf16.mxu0 0
      %3961 = vmatpush1.bf16.msra.mxu0 %v3941
      %3962 = vmatprep.subr.bf16.mxu0 0
      %3963 = vmatpush1.bf16.msra.mxu0 %v3942
      %3964 = vmatprep.subr.bf16.mxu0 0
      %3965 = vmatpush1.bf16.msra.mxu0 %v3943
      %3966 = vmatprep.subr.bf16.mxu0 0
      %3967 = vmatpush1.bf16.msra.mxu0 %v3944
      %3968 = vmatprep.subr.bf16.mxu0 0
      %3969 = vmatpush1.bf16.msra.mxu0 %v3945
      %3970 = vmatprep.subr.bf16.mxu0 0
      %3971 = vmatpush1.bf16.msra.mxu0 0
      %3972 = vmatprep.subr.bf16.mxu0 0
      %3973 = vmatpush1.bf16.msra.mxu0 0
      %3974 = vmatprep.subr.bf16.mxu0 0
      %3975 = vmatpush1.bf16.msra.mxu0 0
      %3976 = vmatprep.subr.bf16.mxu0 0
      %3977 = vmatpush1.bf16.msra.mxu0 0
      %3978 = vmatprep.subr.bf16.mxu0 0
      %3979 = vmatpush1.bf16.msra.mxu0 0
      %3980 = vmatprep.subr.bf16.mxu0 0
      %3981 = vmatpush1.bf16.msra.mxu0 0
      %3982 = vmatprep.subr.bf16.mxu0 0
      %3983 = vmatpush1.bf16.msra.mxu0 0
      %3984 = vmatprep.subr.bf16.mxu0 0
      %3985 = vmatpush1.bf16.msra.mxu0 0
      %3986 = vmatprep.mubr.bf16.mxu0 0
      %3987 = vmatmul.mubr.bf16.gmra.mrb[0].mxu0 %v2365
      %v3988 = vpop.f32.mrb[0].mxu0
      %v3989 = vadd.f32 0.0, %v3988
      %v3990 = vpop.f32.mrb[0].mxu0
      %v3991 = vpop.f32.mrb[0].mxu0
      %v3992 = vadd.f32 0.0, %v3991
      %v3993 = vpop.f32.mrb[0].mxu0
      %3994 = vmatprep.mubr.bf16.mxu0 0
      %3995 = vmatmul.mubr.bf16.gmra.mrb[0].mxu0 %v2366
      %v3996 = vpop.f32.mrb[0].mxu0
      %v3997 = vadd.f32 0.0, %v3996
      %v3998 = vpop.f32.mrb[0].mxu0
      %v3999 = vpop.f32.mrb[0].mxu0
      %v4000 = vadd.f32 0.0, %v3999
      %v4001 = vpop.f32.mrb[0].mxu0
      %4002 = vmatprep.mubr.bf16.mxu0 0
      %4003 = vmatmul.mubr.bf16.gmra.mrb[0].mxu0 %v2367
      %v4004 = vpop.f32.mrb[0].mxu0
      %v4005 = vadd.f32 0.0, %v4004
      %v4006 = vpop.f32.mrb[0].mxu0
      %v4007 = vpop.f32.mrb[0].mxu0
      %v4008 = vadd.f32 0.0, %v4007
      %v4009 = vpop.f32.mrb[0].mxu0
      %4010 = vmatprep.mubr.bf16.mxu0 0
      %4011 = vmatmul.mubr.bf16.gmra.mrb[0].mxu0 %v2368
      %v4012 = vpop.f32.mrb[0].mxu0
      %v4013 = vadd.f32 0.0, %v4012
      %v4014 = vpop.f32.mrb[0].mxu0
      %v4015 = vpop.f32.mrb[0].mxu0
      %v4016 = vadd.f32 0.0, %v4015
      %v4017 = vpop.f32.mrb[0].mxu0
      %4018 = vmatprep.mubr.bf16.mxu0 0
      %4019 = vmatmul.mubr.bf16.gmra.mrb[0].mxu0 %v2369
      %v4020 = vpop.f32.mrb[0].mxu0
      %v4021 = vadd.f32 0.0, %v4020
      %v4022 = vpop.f32.mrb[0].mxu0
      %v4023 = vpop.f32.mrb[0].mxu0
      %v4024 = vadd.f32 0.0, %v4023
      %v4025 = vpop.f32.mrb[0].mxu0
      %4026 = vmatprep.mubr.bf16.mxu0 0
      %4027 = vmatmul.mubr.bf16.gmra.mrb[0].mxu0 %v2370
      %v4028 = vpop.f32.mrb[0].mxu0
      %v4029 = vadd.f32 0.0, %v4028
      %v4030 = vpop.f32.mrb[0].mxu0
      %v4031 = vpop.f32.mrb[0].mxu0
      %v4032 = vadd.f32 0.0, %v4031
      %v4033 = vpop.f32.mrb[0].mxu0
      %4034 = vmatprep.mubr.bf16.mxu0 0
      %4035 = vmatmul.mubr.bf16.gmra.mrb[0].mxu0 %v2371
      %v4036 = vpop.f32.mrb[0].mxu0
      %v4037 = vadd.f32 0.0, %v4036
      %v4038 = vpop.f32.mrb[0].mxu0
      %v4039 = vpop.f32.mrb[0].mxu0
      %v4040 = vadd.f32 0.0, %v4039
      %v4041 = vpop.f32.mrb[0].mxu0
      %4042 = vmatprep.mubr.bf16.mxu0 0
      %4043 = vmatmul.mubr.bf16.gmra.mrb[0].mxu0 %v2372
      %v4044 = vpop.f32.mrb[0].mxu0
      %v4045 = vadd.f32 0.0, %v4044
      %v4046 = vpop.f32.mrb[0].mxu0
      %v4047 = vpop.f32.mrb[0].mxu0
      %v4048 = vadd.f32 0.0, %v4047
      %v4049 = vpop.f32.mrb[0].mxu0
      %4050 = vmatprep.mubr.bf16.mxu0 0
      %4051 = vmatmul.mubr.bf16.gmra.mrb[0].mxu0 %v2373
      %v4052 = vpop.f32.mrb[0].mxu0
      %v4053 = vadd.f32 0.0, %v4052
      %v4054 = vpop.f32.mrb[0].mxu0
      %v4055 = vpop.f32.mrb[0].mxu0
      %v4056 = vadd.f32 0.0, %v4055
      %v4057 = vpop.f32.mrb[0].mxu0
      %4058 = vmatprep.mubr.bf16.mxu0 0
      %4059 = vmatmul.mubr.bf16.gmra.mrb[0].mxu0 %v2374
      %v4060 = vpop.f32.mrb[0].mxu0
      %v4061 = vadd.f32 0.0, %v4060
      %v4062 = vpop.f32.mrb[0].mxu0
      %v4063 = vpop.f32.mrb[0].mxu0
      %v4064 = vadd.f32 0.0, %v4063
      %v4065 = vpop.f32.mrb[0].mxu0
      %4066 = vmatprep.mubr.bf16.mxu0 0
      %4067 = vmatmul.mubr.bf16.gmra.mrb[0].mxu0 %v2375
      %v4068 = vpop.f32.mrb[0].mxu0
      %v4069 = vadd.f32 0.0, %v4068
      %v4070 = vpop.f32.mrb[0].mxu0
      %v4071 = vpop.f32.mrb[0].mxu0
      %v4072 = vadd.f32 0.0, %v4071
      %v4073 = vpop.f32.mrb[0].mxu0
      %4074 = vmatprep.mubr.bf16.mxu0 0
      %4075 = vmatmul.mubr.bf16.gmra.mrb[0].mxu0 %v2376
      %v4076 = vpop.f32.mrb[0].mxu0
      %v4077 = vadd.f32 0.0, %v4076
      %v4078 = vpop.f32.mrb[0].mxu0
      %v4079 = vpop.f32.mrb[0].mxu0
      %v4080 = vadd.f32 0.0, %v4079
      %v4081 = vpop.f32.mrb[0].mxu0
      %4082 = vmatprep.mubr.bf16.mxu0 0
      %4083 = vmatmul.mubr.bf16.gmra.mrb[0].mxu0 %v2377
      %v4084 = vpop.f32.mrb[0].mxu0
      %v4085 = vadd.f32 0.0, %v4084
      %v4086 = vpop.f32.mrb[0].mxu0
      %v4087 = vpop.f32.mrb[0].mxu0
      %v4088 = vadd.f32 0.0, %v4087
      %v4089 = vpop.f32.mrb[0].mxu0
      %4090 = vmatprep.mubr.bf16.mxu0 0
      %4091 = vmatmul.mubr.bf16.gmra.mrb[0].mxu0 %v2378
      %v4092 = vpop.f32.mrb[0].mxu0
      %v4093 = vadd.f32 0.0, %v4092
      %v4094 = vpop.f32.mrb[0].mxu0
      %v4095 = vpop.f32.mrb[0].mxu0
      %v4096 = vadd.f32 0.0, %v4095
      %v4097 = vpop.f32.mrb[0].mxu0
      %4098 = vmatprep.mubr.bf16.mxu0 0
      %4099 = vmatmul.mubr.bf16.gmra.mrb[0].mxu0 %v2379
      %v4100 = vpop.f32.mrb[0].mxu0
      %v4101 = vadd.f32 0.0, %v4100
      %v4102 = vpop.f32.mrb[0].mxu0
      %v4103 = vpop.f32.mrb[0].mxu0
      %v4104 = vadd.f32 0.0, %v4103
      %v4105 = vpop.f32.mrb[0].mxu0
      %4106 = vmatprep.mubr.bf16.mxu0 0
      %4107 = vmatmul.mubr.bf16.gmra.mrb[0].mxu0 0
      %v4108 = vpop.f32.mrb[0].mxu0
      %v4109 = vadd.f32 0.0, %v4108
      %v4110 = vpop.f32.mrb[0].mxu0
      %v4111 = vpop.f32.mrb[0].mxu0
      %v4112 = vadd.f32 0.0, %v4111
      %v4113 = vpop.f32.mrb[0].mxu0
      %4114 = vdwg.mxu0
      %v4115 = vadd.f32 %v3858, %v3989
      %v4116 = vadd.f32 %v3859, %v3992
      %v4117 = vadd.f32 %v3860, %v3997
      %v4118 = vadd.f32 %v3861, %v4000
      %v4119 = vadd.f32 %v3862, %v4005
      %v4120 = vadd.f32 %v3863, %v4008
      %v4121 = vadd.f32 %v3864, %v4013
      %v4122 = vadd.f32 %v3865, %v4016
      %v4123 = vadd.f32 %v3866, %v4021
      %v4124 = vadd.f32 %v3867, %v4024
      %v4125 = vadd.f32 %v3868, %v4029
      %v4126 = vadd.f32 %v3869, %v4032
      %v4127 = vadd.f32 %v3870, %v4037
      %v4128 = vadd.f32 %v3871, %v4040
      %v4129 = vadd.f32 %v3872, %v4045
      %v4130 = vadd.f32 %v3873, %v4048
      %v4131 = vadd.f32 %v3874, %v4053
      %v4132 = vadd.f32 %v3875, %v4056
      %v4133 = vadd.f32 %v3876, %v4061
      %v4134 = vadd.f32 %v3877, %v4064
      %v4135 = vadd.f32 %v3878, %v4069
      %v4136 = vadd.f32 %v3879, %v4072
      %v4137 = vadd.f32 %v3880, %v4077
      %v4138 = vadd.f32 %v3881, %v4080
      %v4139 = vadd.f32 %v3882, %v4085
      %v4140 = vadd.f32 %v3883, %v4088
      %v4141 = vadd.f32 %v3884, %v4093
      %v4142 = vadd.f32 %v3885, %v4096
      %v4143 = vadd.f32 %v3886, %v4101
      %v4144 = vadd.f32 %v3887, %v4104
      %v4145 = vadd.f32 %v3888, %v4109
      %v4146 = vadd.f32 %v3889, %v4112
      %v4147 = vld [vmem:[%s27 + $0x1c0] sm:$0xf]
      %v4148 = vld [vmem:[%s27 + $0x1c4] sm:$0xf]
      %v4149 = vld [vmem:[%s27 + $0x1c8] sm:$0xf]
      %v4150 = vld [vmem:[%s27 + $0x1cc] sm:$0xf]
      %v4151 = vld [vmem:[%s27 + $0x1d0] sm:$0xf]
      %v4152 = vld [vmem:[%s27 + $0x1d4] sm:$0xf]
      %v4153 = vld [vmem:[%s27 + $0x1d8] sm:$0xf]
      %v4154 = vld [vmem:[%s27 + $0x1dc] sm:$0xf]
      %v4155 = vld [vmem:[%s27 + $0x1e0] sm:$0xf]
      %v4156 = vld [vmem:[%s27 + $0x1e4] sm:$0xf]
      %v4157 = vld [vmem:[%s27 + $0x1e8] sm:$0xf]
      %v4158 = vld [vmem:[%s27 + $0x1ec] sm:$0xf]
      %v4159 = vld [vmem:[%s27 + $0x1f0] sm:$0xf]
      %v4160 = vld [vmem:[%s27 + $0x1f4] sm:$0xf]
      %v4161 = vld [vmem:[%s27 + $0x1f8] sm:$0xf]
      %v4162 = vld [vmem:[%s27 + $0x1fc] sm:$0xf]
      %v4179 = vunpack.c.l.b16 %v4147
      %v4180 = vunpack.c.l.b16 %v4148
      %v4181 = vunpack.c.l.b16 %v4149
      %v4182 = vunpack.c.l.b16 %v4150
      %v4183 = vunpack.c.l.b16 %v4151
      %v4184 = vunpack.c.l.b16 %v4152
      %v4185 = vunpack.c.l.b16 %v4153
      %v4186 = vunpack.c.l.b16 %v4154
      %v4187 = vunpack.c.l.b16 %v4155
      %v4188 = vunpack.c.l.b16 %v4156
      %v4189 = vunpack.c.l.b16 %v4157
      %v4190 = vunpack.c.l.b16 %v4158
      %v4191 = vunpack.c.l.b16 %v4159
      %v4192 = vunpack.c.l.b16 %v4160
      %v4193 = vunpack.c.l.b16 %v4161
      %v4194 = vunpack.c.l.b16 %v4162
      %v4195 = vpack.c.b16 %v4180, %v4179
      %v4196 = vpack.c.b16 %v4182, %v4181
      %v4197 = vpack.c.b16 %v4184, %v4183
      %v4198 = vpack.c.b16 %v4186, %v4185
      %v4199 = vpack.c.b16 %v4188, %v4187
      %v4200 = vpack.c.b16 %v4190, %v4189
      %v4201 = vpack.c.b16 %v4192, %v4191
      %v4202 = vpack.c.b16 %v4194, %v4193
      %4211 = vmatprep.subr.bf16.mxu0 0
      %4212 = vmatpush1.bf16.msra.mxu0 %v4195
      %4213 = vmatprep.subr.bf16.mxu0 0
      %4214 = vmatpush1.bf16.msra.mxu0 %v4196
      %4215 = vmatprep.subr.bf16.mxu0 0
      %4216 = vmatpush1.bf16.msra.mxu0 %v4197
      %4217 = vmatprep.subr.bf16.mxu0 0
      %4218 = vmatpush1.bf16.msra.mxu0 %v4198
      %4219 = vmatprep.subr.bf16.mxu0 0
      %4220 = vmatpush1.bf16.msra.mxu0 %v4199
      %4221 = vmatprep.subr.bf16.mxu0 0
      %4222 = vmatpush1.bf16.msra.mxu0 %v4200
      %4223 = vmatprep.subr.bf16.mxu0 0
      %4224 = vmatpush1.bf16.msra.mxu0 %v4201
      %4225 = vmatprep.subr.bf16.mxu0 0
      %4226 = vmatpush1.bf16.msra.mxu0 %v4202
      %4227 = vmatprep.subr.bf16.mxu0 0
      %4228 = vmatpush1.bf16.msra.mxu0 0
      %4229 = vmatprep.subr.bf16.mxu0 0
      %4230 = vmatpush1.bf16.msra.mxu0 0
      %4231 = vmatprep.subr.bf16.mxu0 0
      %4232 = vmatpush1.bf16.msra.mxu0 0
      %4233 = vmatprep.subr.bf16.mxu0 0
      %4234 = vmatpush1.bf16.msra.mxu0 0
      %4235 = vmatprep.subr.bf16.mxu0 0
      %4236 = vmatpush1.bf16.msra.mxu0 0
      %4237 = vmatprep.subr.bf16.mxu0 0
      %4238 = vmatpush1.bf16.msra.mxu0 0
      %4239 = vmatprep.subr.bf16.mxu0 0
      %4240 = vmatpush1.bf16.msra.mxu0 0
      %4241 = vmatprep.subr.bf16.mxu0 0
      %4242 = vmatpush1.bf16.msra.mxu0 0
      %4243 = vmatprep.mubr.bf16.mxu0 0
      %4244 = vmatmul.mubr.bf16.gmra.mrb[0].mxu0 %v2381
      %v4245 = vpop.f32.mrb[0].mxu0
      %v4246 = vadd.f32 0.0, %v4245
      %v4247 = vpop.f32.mrb[0].mxu0
      %v4248 = vpop.f32.mrb[0].mxu0
      %v4249 = vadd.f32 0.0, %v4248
      %v4250 = vpop.f32.mrb[0].mxu0
      %4251 = vmatprep.mubr.bf16.mxu0 0
      %4252 = vmatmul.mubr.bf16.gmra.mrb[0].mxu0 %v2382
      %v4253 = vpop.f32.mrb[0].mxu0
      %v4254 = vadd.f32 0.0, %v4253
      %v4255 = vpop.f32.mrb[0].mxu0
      %v4256 = vpop.f32.mrb[0].mxu0
      %v4257 = vadd.f32 0.0, %v4256
      %v4258 = vpop.f32.mrb[0].mxu0
      %4259 = vmatprep.mubr.bf16.mxu0 0
      %4260 = vmatmul.mubr.bf16.gmra.mrb[0].mxu0 %v2383
      %v4261 = vpop.f32.mrb[0].mxu0
      %v4262 = vadd.f32 0.0, %v4261
      %v4263 = vpop.f32.mrb[0].mxu0
      %v4264 = vpop.f32.mrb[0].mxu0
      %v4265 = vadd.f32 0.0, %v4264
      %v4266 = vpop.f32.mrb[0].mxu0
      %4267 = vmatprep.mubr.bf16.mxu0 0
      %4268 = vmatmul.mubr.bf16.gmra.mrb[0].mxu0 %v2384
      %v4269 = vpop.f32.mrb[0].mxu0
      %v4270 = vadd.f32 0.0, %v4269
      %v4271 = vpop.f32.mrb[0].mxu0
      %v4272 = vpop.f32.mrb[0].mxu0
      %v4273 = vadd.f32 0.0, %v4272
      %v4274 = vpop.f32.mrb[0].mxu0
      %4275 = vmatprep.mubr.bf16.mxu0 0
      %4276 = vmatmul.mubr.bf16.gmra.mrb[0].mxu0 %v2385
      %v4277 = vpop.f32.mrb[0].mxu0
      %v4278 = vadd.f32 0.0, %v4277
      %v4279 = vpop.f32.mrb[0].mxu0
      %v4280 = vpop.f32.mrb[0].mxu0
      %v4281 = vadd.f32 0.0, %v4280
      %v4282 = vpop.f32.mrb[0].mxu0
      %4283 = vmatprep.mubr.bf16.mxu0 0
      %4284 = vmatmul.mubr.bf16.gmra.mrb[0].mxu0 %v2386
      %v4285 = vpop.f32.mrb[0].mxu0
      %v4286 = vadd.f32 0.0, %v4285
      %v4287 = vpop.f32.mrb[0].mxu0
      %v4288 = vpop.f32.mrb[0].mxu0
      %v4289 = vadd.f32 0.0, %v4288
      %v4290 = vpop.f32.mrb[0].mxu0
      %4291 = vmatprep.mubr.bf16.mxu0 0
      %4292 = vmatmul.mubr.bf16.gmra.mrb[0].mxu0 %v2387
      %v4293 = vpop.f32.mrb[0].mxu0
      %v4294 = vadd.f32 0.0, %v4293
      %v4295 = vpop.f32.mrb[0].mxu0
      %v4296 = vpop.f32.mrb[0].mxu0
      %v4297 = vadd.f32 0.0, %v4296
      %v4298 = vpop.f32.mrb[0].mxu0
      %4299 = vmatprep.mubr.bf16.mxu0 0
      %4300 = vmatmul.mubr.bf16.gmra.mrb[0].mxu0 %v2388
      %v4301 = vpop.f32.mrb[0].mxu0
      %v4302 = vadd.f32 0.0, %v4301
      %v4303 = vpop.f32.mrb[0].mxu0
      %v4304 = vpop.f32.mrb[0].mxu0
      %v4305 = vadd.f32 0.0, %v4304
      %v4306 = vpop.f32.mrb[0].mxu0
      %4307 = vmatprep.mubr.bf16.mxu0 0
      %4308 = vmatmul.mubr.bf16.gmra.mrb[0].mxu0 %v2389
      %v4309 = vpop.f32.mrb[0].mxu0
      %v4310 = vadd.f32 0.0, %v4309
      %v4311 = vpop.f32.mrb[0].mxu0
      %v4312 = vpop.f32.mrb[0].mxu0
      %v4313 = vadd.f32 0.0, %v4312
      %v4314 = vpop.f32.mrb[0].mxu0
      %4315 = vmatprep.mubr.bf16.mxu0 0
      %4316 = vmatmul.mubr.bf16.gmra.mrb[0].mxu0 %v2390
      %v4317 = vpop.f32.mrb[0].mxu0
      %v4318 = vadd.f32 0.0, %v4317
      %v4319 = vpop.f32.mrb[0].mxu0
      %v4320 = vpop.f32.mrb[0].mxu0
      %v4321 = vadd.f32 0.0, %v4320
      %v4322 = vpop.f32.mrb[0].mxu0
      %4323 = vmatprep.mubr.bf16.mxu0 0
      %4324 = vmatmul.mubr.bf16.gmra.mrb[0].mxu0 %v2391
      %v4325 = vpop.f32.mrb[0].mxu0
      %v4326 = vadd.f32 0.0, %v4325
      %v4327 = vpop.f32.mrb[0].mxu0
      %v4328 = vpop.f32.mrb[0].mxu0
      %v4329 = vadd.f32 0.0, %v4328
      %v4330 = vpop.f32.mrb[0].mxu0
      %4331 = vmatprep.mubr.bf16.mxu0 0
      %4332 = vmatmul.mubr.bf16.gmra.mrb[0].mxu0 %v2392
      %v4333 = vpop.f32.mrb[0].mxu0
      %v4334 = vadd.f32 0.0, %v4333
      %v4335 = vpop.f32.mrb[0].mxu0
      %v4336 = vpop.f32.mrb[0].mxu0
      %v4337 = vadd.f32 0.0, %v4336
      %v4338 = vpop.f32.mrb[0].mxu0
      %4339 = vmatprep.mubr.bf16.mxu0 0
      %4340 = vmatmul.mubr.bf16.gmra.mrb[0].mxu0 %v2393
      %v4341 = vpop.f32.mrb[0].mxu0
      %v4342 = vadd.f32 0.0, %v4341
      %v4343 = vpop.f32.mrb[0].mxu0
      %v4344 = vpop.f32.mrb[0].mxu0
      %v4345 = vadd.f32 0.0, %v4344
      %v4346 = vpop.f32.mrb[0].mxu0
      %4347 = vmatprep.mubr.bf16.mxu0 0
      %4348 = vmatmul.mubr.bf16.gmra.mrb[0].mxu0 %v2394
      %v4349 = vpop.f32.mrb[0].mxu0
      %v4350 = vadd.f32 0.0, %v4349
      %v4351 = vpop.f32.mrb[0].mxu0
      %v4352 = vpop.f32.mrb[0].mxu0
      %v4353 = vadd.f32 0.0, %v4352
      %v4354 = vpop.f32.mrb[0].mxu0
      %4355 = vmatprep.mubr.bf16.mxu0 0
      %4356 = vmatmul.mubr.bf16.gmra.mrb[0].mxu0 %v2395
      %v4357 = vpop.f32.mrb[0].mxu0
      %v4358 = vadd.f32 0.0, %v4357
      %v4359 = vpop.f32.mrb[0].mxu0
      %v4360 = vpop.f32.mrb[0].mxu0
      %v4361 = vadd.f32 0.0, %v4360
      %v4362 = vpop.f32.mrb[0].mxu0
      %4363 = vmatprep.mubr.bf16.mxu0 0
      %4364 = vmatmul.mubr.bf16.gmra.mrb[0].mxu0 0
      %v4365 = vpop.f32.mrb[0].mxu0
      %v4366 = vadd.f32 0.0, %v4365
      %v4367 = vpop.f32.mrb[0].mxu0
      %v4368 = vpop.f32.mrb[0].mxu0
      %v4369 = vadd.f32 0.0, %v4368
      %v4370 = vpop.f32.mrb[0].mxu0
      %4371 = vdwg.mxu0
      %v4372 = vadd.f32 %v4115, %v4246
      %v4373 = vadd.f32 %v4116, %v4249
      %v4374 = vadd.f32 %v4117, %v4254
      %v4375 = vadd.f32 %v4118, %v4257
      %v4376 = vadd.f32 %v4119, %v4262
      %v4377 = vadd.f32 %v4120, %v4265
      %v4378 = vadd.f32 %v4121, %v4270
      %v4379 = vadd.f32 %v4122, %v4273
      %v4380 = vadd.f32 %v4123, %v4278
      %v4381 = vadd.f32 %v4124, %v4281
      %v4382 = vadd.f32 %v4125, %v4286
      %v4383 = vadd.f32 %v4126, %v4289
      %v4384 = vadd.f32 %v4127, %v4294
      %v4385 = vadd.f32 %v4128, %v4297
      %v4386 = vadd.f32 %v4129, %v4302
      %v4387 = vadd.f32 %v4130, %v4305
      %v4388 = vadd.f32 %v4131, %v4310
      %v4389 = vadd.f32 %v4132, %v4313
      %v4390 = vadd.f32 %v4133, %v4318
      %v4391 = vadd.f32 %v4134, %v4321
      %v4392 = vadd.f32 %v4135, %v4326
      %v4393 = vadd.f32 %v4136, %v4329
      %v4394 = vadd.f32 %v4137, %v4334
      %v4395 = vadd.f32 %v4138, %v4337
      %v4396 = vadd.f32 %v4139, %v4342
      %v4397 = vadd.f32 %v4140, %v4345
      %v4398 = vadd.f32 %v4141, %v4350
      %v4399 = vadd.f32 %v4142, %v4353
      %v4400 = vadd.f32 %v4143, %v4358
      %v4401 = vadd.f32 %v4144, %v4361
      %v4402 = vadd.f32 %v4145, %v4366
      %v4403 = vadd.f32 %v4146, %v4369
      %v4404 = vld [vmem:[%s27 + $0x200] sm:$0xf]
      %v4405 = vld [vmem:[%s27 + $0x204] sm:$0xf]
      %v4406 = vld [vmem:[%s27 + $0x208] sm:$0xf]
      %v4407 = vld [vmem:[%s27 + $0x20c] sm:$0xf]
      %v4408 = vld [vmem:[%s27 + $0x210] sm:$0xf]
      %v4409 = vld [vmem:[%s27 + $0x214] sm:$0xf]
      %v4410 = vld [vmem:[%s27 + $0x218] sm:$0xf]
      %v4411 = vld [vmem:[%s27 + $0x21c] sm:$0xf]
      %v4412 = vld [vmem:[%s27 + $0x220] sm:$0xf]
      %v4413 = vld [vmem:[%s27 + $0x224] sm:$0xf]
      %v4414 = vld [vmem:[%s27 + $0x228] sm:$0xf]
      %v4415 = vld [vmem:[%s27 + $0x22c] sm:$0xf]
      %v4416 = vld [vmem:[%s27 + $0x230] sm:$0xf]
      %v4417 = vld [vmem:[%s27 + $0x234] sm:$0xf]
      %v4418 = vld [vmem:[%s27 + $0x238] sm:$0xf]
      %v4419 = vld [vmem:[%s27 + $0x23c] sm:$0xf]
      %v4436 = vunpack.c.l.b16 %v4404
      %v4437 = vunpack.c.l.b16 %v4405
      %v4438 = vunpack.c.l.b16 %v4406
      %v4439 = vunpack.c.l.b16 %v4407
      %v4440 = vunpack.c.l.b16 %v4408
      %v4441 = vunpack.c.l.b16 %v4409
      %v4442 = vunpack.c.l.b16 %v4410
      %v4443 = vunpack.c.l.b16 %v4411
      %v4444 = vunpack.c.l.b16 %v4412
      %v4445 = vunpack.c.l.b16 %v4413
      %v4446 = vunpack.c.l.b16 %v4414
      %v4447 = vunpack.c.l.b16 %v4415
      %v4448 = vunpack.c.l.b16 %v4416
      %v4449 = vunpack.c.l.b16 %v4417
      %v4450 = vunpack.c.l.b16 %v4418
      %v4451 = vunpack.c.l.b16 %v4419
      %v4452 = vpack.c.b16 %v4437, %v4436
      %v4453 = vpack.c.b16 %v4439, %v4438
      %v4454 = vpack.c.b16 %v4441, %v4440
      %v4455 = vpack.c.b16 %v4443, %v4442
      %v4456 = vpack.c.b16 %v4445, %v4444
      %v4457 = vpack.c.b16 %v4447, %v4446
      %v4458 = vpack.c.b16 %v4449, %v4448
      %v4459 = vpack.c.b16 %v4451, %v4450
      %4468 = vmatprep.subr.bf16.mxu0 0
      %4469 = vmatpush1.bf16.msra.mxu0 %v4452
      %4470 = vmatprep.subr.bf16.mxu0 0
      %4471 = vmatpush1.bf16.msra.mxu0 %v4453
      %4472 = vmatprep.subr.bf16.mxu0 0
      %4473 = vmatpush1.bf16.msra.mxu0 %v4454
      %4474 = vmatprep.subr.bf16.mxu0 0
      %4475 = vmatpush1.bf16.msra.mxu0 %v4455
      %4476 = vmatprep.subr.bf16.mxu0 0
      %4477 = vmatpush1.bf16.msra.mxu0 %v4456
      %4478 = vmatprep.subr.bf16.mxu0 0
      %4479 = vmatpush1.bf16.msra.mxu0 %v4457
      %4480 = vmatprep.subr.bf16.mxu0 0
      %4481 = vmatpush1.bf16.msra.mxu0 %v4458
      %4482 = vmatprep.subr.bf16.mxu0 0
      %4483 = vmatpush1.bf16.msra.mxu0 %v4459
      %4484 = vmatprep.subr.bf16.mxu0 0
      %4485 = vmatpush1.bf16.msra.mxu0 0
      %4486 = vmatprep.subr.bf16.mxu0 0
      %4487 = vmatpush1.bf16.msra.mxu0 0
      %4488 = vmatprep.subr.bf16.mxu0 0
      %4489 = vmatpush1.bf16.msra.mxu0 0
      %4490 = vmatprep.subr.bf16.mxu0 0
      %4491 = vmatpush1.bf16.msra.mxu0 0
      %4492 = vmatprep.subr.bf16.mxu0 0
      %4493 = vmatpush1.bf16.msra.mxu0 0
      %4494 = vmatprep.subr.bf16.mxu0 0
      %4495 = vmatpush1.bf16.msra.mxu0 0
      %4496 = vmatprep.subr.bf16.mxu0 0
      %4497 = vmatpush1.bf16.msra.mxu0 0
      %4498 = vmatprep.subr.bf16.mxu0 0
      %4499 = vmatpush1.bf16.msra.mxu0 0
      %4500 = vmatprep.mubr.bf16.mxu0 0
      %4501 = vmatmul.mubr.bf16.gmra.mrb[0].mxu0 %v2397
      %v4502 = vpop.f32.mrb[0].mxu0
      %v4503 = vadd.f32 0.0, %v4502
      %v4504 = vpop.f32.mrb[0].mxu0
      %v4505 = vpop.f32.mrb[0].mxu0
      %v4506 = vadd.f32 0.0, %v4505
      %v4507 = vpop.f32.mrb[0].mxu0
      %4508 = vmatprep.mubr.bf16.mxu0 0
      %4509 = vmatmul.mubr.bf16.gmra.mrb[0].mxu0 %v2398
      %v4510 = vpop.f32.mrb[0].mxu0
      %v4511 = vadd.f32 0.0, %v4510
      %v4512 = vpop.f32.mrb[0].mxu0
      %v4513 = vpop.f32.mrb[0].mxu0
      %v4514 = vadd.f32 0.0, %v4513
      %v4515 = vpop.f32.mrb[0].mxu0
      %4516 = vmatprep.mubr.bf16.mxu0 0
      %4517 = vmatmul.mubr.bf16.gmra.mrb[0].mxu0 %v2399
      %v4518 = vpop.f32.mrb[0].mxu0
      %v4519 = vadd.f32 0.0, %v4518
      %v4520 = vpop.f32.mrb[0].mxu0
      %v4521 = vpop.f32.mrb[0].mxu0
      %v4522 = vadd.f32 0.0, %v4521
      %v4523 = vpop.f32.mrb[0].mxu0
      %4524 = vmatprep.mubr.bf16.mxu0 0
      %4525 = vmatmul.mubr.bf16.gmra.mrb[0].mxu0 %v2400
      %v4526 = vpop.f32.mrb[0].mxu0
      %v4527 = vadd.f32 0.0, %v4526
      %v4528 = vpop.f32.mrb[0].mxu0
      %v4529 = vpop.f32.mrb[0].mxu0
      %v4530 = vadd.f32 0.0, %v4529
      %v4531 = vpop.f32.mrb[0].mxu0
      %4532 = vmatprep.mubr.bf16.mxu0 0
      %4533 = vmatmul.mubr.bf16.gmra.mrb[0].mxu0 %v2401
      %v4534 = vpop.f32.mrb[0].mxu0
      %v4535 = vadd.f32 0.0, %v4534
      %v4536 = vpop.f32.mrb[0].mxu0
      %v4537 = vpop.f32.mrb[0].mxu0
      %v4538 = vadd.f32 0.0, %v4537
      %v4539 = vpop.f32.mrb[0].mxu0
      %4540 = vmatprep.mubr.bf16.mxu0 0
      %4541 = vmatmul.mubr.bf16.gmra.mrb[0].mxu0 %v2402
      %v4542 = vpop.f32.mrb[0].mxu0
      %v4543 = vadd.f32 0.0, %v4542
      %v4544 = vpop.f32.mrb[0].mxu0
      %v4545 = vpop.f32.mrb[0].mxu0
      %v4546 = vadd.f32 0.0, %v4545
      %v4547 = vpop.f32.mrb[0].mxu0
      %4548 = vmatprep.mubr.bf16.mxu0 0
      %4549 = vmatmul.mubr.bf16.gmra.mrb[0].mxu0 %v2403
      %v4550 = vpop.f32.mrb[0].mxu0
      %v4551 = vadd.f32 0.0, %v4550
      %v4552 = vpop.f32.mrb[0].mxu0
      %v4553 = vpop.f32.mrb[0].mxu0
      %v4554 = vadd.f32 0.0, %v4553
      %v4555 = vpop.f32.mrb[0].mxu0
      %4556 = vmatprep.mubr.bf16.mxu0 0
      %4557 = vmatmul.mubr.bf16.gmra.mrb[0].mxu0 %v2404
      %v4558 = vpop.f32.mrb[0].mxu0
      %v4559 = vadd.f32 0.0, %v4558
      %v4560 = vpop.f32.mrb[0].mxu0
      %v4561 = vpop.f32.mrb[0].mxu0
      %v4562 = vadd.f32 0.0, %v4561
      %v4563 = vpop.f32.mrb[0].mxu0
      %4564 = vmatprep.mubr.bf16.mxu0 0
      %4565 = vmatmul.mubr.bf16.gmra.mrb[0].mxu0 %v2405
      %v4566 = vpop.f32.mrb[0].mxu0
      %v4567 = vadd.f32 0.0, %v4566
      %v4568 = vpop.f32.mrb[0].mxu0
      %v4569 = vpop.f32.mrb[0].mxu0
      %v4570 = vadd.f32 0.0, %v4569
      %v4571 = vpop.f32.mrb[0].mxu0
      %4572 = vmatprep.mubr.bf16.mxu0 0
      %4573 = vmatmul.mubr.bf16.gmra.mrb[0].mxu0 %v2406
      %v4574 = vpop.f32.mrb[0].mxu0
      %v4575 = vadd.f32 0.0, %v4574
      %v4576 = vpop.f32.mrb[0].mxu0
      %v4577 = vpop.f32.mrb[0].mxu0
      %v4578 = vadd.f32 0.0, %v4577
      %v4579 = vpop.f32.mrb[0].mxu0
      %4580 = vmatprep.mubr.bf16.mxu0 0
      %4581 = vmatmul.mubr.bf16.gmra.mrb[0].mxu0 %v2407
      %v4582 = vpop.f32.mrb[0].mxu0
      %v4583 = vadd.f32 0.0, %v4582
      %v4584 = vpop.f32.mrb[0].mxu0
      %v4585 = vpop.f32.mrb[0].mxu0
      %v4586 = vadd.f32 0.0, %v4585
      %v4587 = vpop.f32.mrb[0].mxu0
      %4588 = vmatprep.mubr.bf16.mxu0 0
      %4589 = vmatmul.mubr.bf16.gmra.mrb[0].mxu0 %v2408
      %v4590 = vpop.f32.mrb[0].mxu0
      %v4591 = vadd.f32 0.0, %v4590
      %v4592 = vpop.f32.mrb[0].mxu0
      %v4593 = vpop.f32.mrb[0].mxu0
      %v4594 = vadd.f32 0.0, %v4593
      %v4595 = vpop.f32.mrb[0].mxu0
      %4596 = vmatprep.mubr.bf16.mxu0 0
      %4597 = vmatmul.mubr.bf16.gmra.mrb[0].mxu0 %v2409
      %v4598 = vpop.f32.mrb[0].mxu0
      %v4599 = vadd.f32 0.0, %v4598
      %v4600 = vpop.f32.mrb[0].mxu0
      %v4601 = vpop.f32.mrb[0].mxu0
      %v4602 = vadd.f32 0.0, %v4601
      %v4603 = vpop.f32.mrb[0].mxu0
      %4604 = vmatprep.mubr.bf16.mxu0 0
      %4605 = vmatmul.mubr.bf16.gmra.mrb[0].mxu0 %v2410
      %v4606 = vpop.f32.mrb[0].mxu0
      %v4607 = vadd.f32 0.0, %v4606
      %v4608 = vpop.f32.mrb[0].mxu0
      %v4609 = vpop.f32.mrb[0].mxu0
      %v4610 = vadd.f32 0.0, %v4609
      %v4611 = vpop.f32.mrb[0].mxu0
      %4612 = vmatprep.mubr.bf16.mxu0 0
      %4613 = vmatmul.mubr.bf16.gmra.mrb[0].mxu0 %v2411
      %v4614 = vpop.f32.mrb[0].mxu0
      %v4615 = vadd.f32 0.0, %v4614
      %v4616 = vpop.f32.mrb[0].mxu0
      %v4617 = vpop.f32.mrb[0].mxu0
      %v4618 = vadd.f32 0.0, %v4617
      %v4619 = vpop.f32.mrb[0].mxu0
      %4620 = vmatprep.mubr.bf16.mxu0 0
      %4621 = vmatmul.mubr.bf16.gmra.mrb[0].mxu0 0
      %v4622 = vpop.f32.mrb[0].mxu0
      %v4623 = vadd.f32 0.0, %v4622
      %v4624 = vpop.f32.mrb[0].mxu0
      %v4625 = vpop.f32.mrb[0].mxu0
      %v4626 = vadd.f32 0.0, %v4625
      %v4627 = vpop.f32.mrb[0].mxu0
      %4628 = vdwg.mxu0
      %v4629 = vadd.f32 %v4372, %v4503
      %v4630 = vadd.f32 %v4373, %v4506
      %v4631 = vadd.f32 %v4374, %v4511
      %v4632 = vadd.f32 %v4375, %v4514
      %v4633 = vadd.f32 %v4376, %v4519
      %v4634 = vadd.f32 %v4377, %v4522
      %v4635 = vadd.f32 %v4378, %v4527
      %v4636 = vadd.f32 %v4379, %v4530
      %v4637 = vadd.f32 %v4380, %v4535
      %v4638 = vadd.f32 %v4381, %v4538
      %v4639 = vadd.f32 %v4382, %v4543
      %v4640 = vadd.f32 %v4383, %v4546
      %v4641 = vadd.f32 %v4384, %v4551
      %v4642 = vadd.f32 %v4385, %v4554
      %v4643 = vadd.f32 %v4386, %v4559
      %v4644 = vadd.f32 %v4387, %v4562
      %v4645 = vadd.f32 %v4388, %v4567
      %v4646 = vadd.f32 %v4389, %v4570
      %v4647 = vadd.f32 %v4390, %v4575
      %v4648 = vadd.f32 %v4391, %v4578
      %v4649 = vadd.f32 %v4392, %v4583
      %v4650 = vadd.f32 %v4393, %v4586
      %v4651 = vadd.f32 %v4394, %v4591
      %v4652 = vadd.f32 %v4395, %v4594
      %v4653 = vadd.f32 %v4396, %v4599
      %v4654 = vadd.f32 %v4397, %v4602
      %v4655 = vadd.f32 %v4398, %v4607
      %v4656 = vadd.f32 %v4399, %v4610
      %v4657 = vadd.f32 %v4400, %v4615
      %v4658 = vadd.f32 %v4401, %v4618
      %v4659 = vadd.f32 %v4402, %v4623
      %v4660 = vadd.f32 %v4403, %v4626
      %v4661 = vld [vmem:[%s29] sm:$0x1]
      %v4663 = vlaneseq
      %v4664 = vshrl.u32 %v4663, 7
      %v4665 = vsub.s32 0, %v4664
      %v4666 = vrot.slane %v4661, %v4665
      %v4668 = vadd.f32 %v4629, %v4666
      %v4669 = vadd.f32 %v4630, %v4666
      %v4670 = vadd.f32 %v4631, %v4666
      %v4671 = vadd.f32 %v4632, %v4666
      %v4672 = vadd.f32 %v4633, %v4666
      %v4673 = vadd.f32 %v4634, %v4666
      %v4674 = vadd.f32 %v4635, %v4666
      %v4675 = vadd.f32 %v4636, %v4666
      %v4676 = vadd.f32 %v4637, %v4666
      %v4677 = vadd.f32 %v4638, %v4666
      %v4678 = vadd.f32 %v4639, %v4666
      %v4679 = vadd.f32 %v4640, %v4666
      %v4680 = vadd.f32 %v4641, %v4666
      %v4681 = vadd.f32 %v4642, %v4666
      %v4682 = vadd.f32 %v4643, %v4666
      %v4683 = vadd.f32 %v4644, %v4666
      %v4684 = vadd.f32 %v4645, %v4666
      %v4685 = vadd.f32 %v4646, %v4666
      %v4686 = vadd.f32 %v4647, %v4666
      %v4687 = vadd.f32 %v4648, %v4666
      %v4688 = vadd.f32 %v4649, %v4666
      %v4689 = vadd.f32 %v4650, %v4666
      %v4690 = vadd.f32 %v4651, %v4666
      %v4691 = vadd.f32 %v4652, %v4666
      %v4692 = vadd.f32 %v4653, %v4666
      %v4693 = vadd.f32 %v4654, %v4666
      %v4694 = vadd.f32 %v4655, %v4666
      %v4695 = vadd.f32 %v4656, %v4666
      %v4696 = vadd.f32 %v4657, %v4666
      %v4697 = vadd.f32 %v4658, %v4666
      %v4698 = vadd.f32 %v4659, %v4666
      %v4699 = vadd.f32 %v4660, %v4666
      %v4700 = vsub.f32 0.0, %v1240
      %v4701 = vmul.f32 %v4700, 1.442695
      %v4702 = vpow.pop %v4701
      %v4703 = vadd.f32 %v4702, 1.0
      %v4704 = vrcp.pop %v4703
      %v4705 = vmul.f32 %v1240, %v4704
      %v4706 = vpack.c.bf16 %v4705, %v4705
      %v4707 = vld [vmem:[%s31] sm:$0xf]
      %v4708 = vld [vmem:[%s31 + $0x4] sm:$0xf]
      %v4709 = vld [vmem:[%s31 + $0x8] sm:$0xf]
      %v4710 = vld [vmem:[%s31 + $0xc] sm:$0xf]
      %v4711 = vld [vmem:[%s31 + $0x10] sm:$0xf]
      %v4712 = vld [vmem:[%s31 + $0x14] sm:$0xf]
      %v4713 = vld [vmem:[%s31 + $0x18] sm:$0xf]
      %v4714 = vld [vmem:[%s31 + $0x1c] sm:$0xf]
      %v4715 = vld [vmem:[%s31 + $0x20] sm:$0xf]
      %v4716 = vld [vmem:[%s31 + $0x24] sm:$0xf]
      %v4717 = vld [vmem:[%s31 + $0x28] sm:$0xf]
      %v4718 = vld [vmem:[%s31 + $0x2c] sm:$0xf]
      %v4719 = vld [vmem:[%s31 + $0x30] sm:$0xf]
      %v4720 = vld [vmem:[%s31 + $0x34] sm:$0xf]
      %v4721 = vld [vmem:[%s31 + $0x38] sm:$0xf]
      %v4722 = vld [vmem:[%s31 + $0x3c] sm:$0xf]
      %v4723 = vld [vmem:[%s33] sm:$0x1]
      %v4740 = vunpack.c.l.b16 %v4707
      %v4741 = vunpack.c.l.b16 %v4708
      %v4742 = vunpack.c.l.b16 %v4709
      %v4743 = vunpack.c.l.b16 %v4710
      %v4744 = vunpack.c.l.b16 %v4711
      %v4745 = vunpack.c.l.b16 %v4712
      %v4746 = vunpack.c.l.b16 %v4713
      %v4747 = vunpack.c.l.b16 %v4714
      %v4748 = vunpack.c.l.b16 %v4715
      %v4749 = vunpack.c.l.b16 %v4716
      %v4750 = vunpack.c.l.b16 %v4717
      %v4751 = vunpack.c.l.b16 %v4718
      %v4752 = vunpack.c.l.b16 %v4719
      %v4753 = vunpack.c.l.b16 %v4720
      %v4754 = vunpack.c.l.b16 %v4721
      %v4755 = vunpack.c.l.b16 %v4722
      %v4756 = vpack.c.b16 %v4741, %v4740
      %v4757 = vpack.c.b16 %v4743, %v4742
      %v4758 = vpack.c.b16 %v4745, %v4744
      %v4759 = vpack.c.b16 %v4747, %v4746
      %v4760 = vpack.c.b16 %v4749, %v4748
      %v4761 = vpack.c.b16 %v4751, %v4750
      %v4762 = vpack.c.b16 %v4753, %v4752
      %v4763 = vpack.c.b16 %v4755, %v4754
      %4772 = vmatprep.subr.bf16.mxu0 0
      %4773 = vmatpush1.bf16.msra.mxu0 %v4756
      %4774 = vmatprep.subr.bf16.mxu0 0
      %4775 = vmatpush1.bf16.msra.mxu0 %v4757
      %4776 = vmatprep.subr.bf16.mxu0 0
      %4777 = vmatpush1.bf16.msra.mxu0 %v4758
      %4778 = vmatprep.subr.bf16.mxu0 0
      %4779 = vmatpush1.bf16.msra.mxu0 %v4759
      %4780 = vmatprep.subr.bf16.mxu0 0
      %4781 = vmatpush1.bf16.msra.mxu0 %v4760
      %4782 = vmatprep.subr.bf16.mxu0 0
      %4783 = vmatpush1.bf16.msra.mxu0 %v4761
      %4784 = vmatprep.subr.bf16.mxu0 0
      %4785 = vmatpush1.bf16.msra.mxu0 %v4762
      %4786 = vmatprep.subr.bf16.mxu0 0
      %4787 = vmatpush1.bf16.msra.mxu0 %v4763
      %4788 = vmatprep.subr.bf16.mxu0 0
      %4789 = vmatpush1.bf16.msra.mxu0 0
      %4790 = vmatprep.subr.bf16.mxu0 0
      %4791 = vmatpush1.bf16.msra.mxu0 0
      %4792 = vmatprep.subr.bf16.mxu0 0
      %4793 = vmatpush1.bf16.msra.mxu0 0
      %4794 = vmatprep.subr.bf16.mxu0 0
      %4795 = vmatpush1.bf16.msra.mxu0 0
      %4796 = vmatprep.subr.bf16.mxu0 0
      %4797 = vmatpush1.bf16.msra.mxu0 0
      %4798 = vmatprep.subr.bf16.mxu0 0
      %4799 = vmatpush1.bf16.msra.mxu0 0
      %4800 = vmatprep.subr.bf16.mxu0 0
      %4801 = vmatpush1.bf16.msra.mxu0 0
      %4802 = vmatprep.subr.bf16.mxu0 0
      %4803 = vmatpush1.bf16.msra.mxu0 0
      %4804 = vmatprep.mubr.bf16.mxu0 0
      %4805 = vmatmul.mubr.bf16.gmra.mrb[0].mxu0 %v4706
      %v4806 = vpop.f32.mrb[0].mxu0
      %v4807 = vadd.f32 %v4723, %v4806
      %v4808 = vpop.f32.mrb[0].mxu0
      %v4809 = vpop.f32.mrb[0].mxu0
      %v4810 = vpop.f32.mrb[0].mxu0
      %4811 = vdwg.mxu0
      %v4812 = vlaneseq
      %v4813 = vshrl.u32 %v4812, 7
      %v4814 = vsub.s32 0, %v4813
      %v4815 = vrot.slane %v4807, %v4814
      %v4816 = vadd.f32 %v4668, %v4815
      %v4817 = vadd.f32 %v4669, %v4815
      %v4818 = vadd.f32 %v4670, %v4815
      %v4819 = vadd.f32 %v4671, %v4815
      %v4820 = vadd.f32 %v4672, %v4815
      %v4821 = vadd.f32 %v4673, %v4815
      %v4822 = vadd.f32 %v4674, %v4815
      %v4823 = vadd.f32 %v4675, %v4815
      %v4824 = vadd.f32 %v4676, %v4815
      %v4825 = vadd.f32 %v4677, %v4815
      %v4826 = vadd.f32 %v4678, %v4815
      %v4827 = vadd.f32 %v4679, %v4815
      %v4828 = vadd.f32 %v4680, %v4815
      %v4829 = vadd.f32 %v4681, %v4815
      %v4830 = vadd.f32 %v4682, %v4815
      %v4831 = vadd.f32 %v4683, %v4815
      %v4832 = vadd.f32 %v4684, %v4815
      %v4833 = vadd.f32 %v4685, %v4815
      %v4834 = vadd.f32 %v4686, %v4815
      %v4835 = vadd.f32 %v4687, %v4815
      %v4836 = vadd.f32 %v4688, %v4815
      %v4837 = vadd.f32 %v4689, %v4815
      %v4838 = vadd.f32 %v4690, %v4815
      %v4839 = vadd.f32 %v4691, %v4815
      %v4840 = vadd.f32 %v4692, %v4815
      %v4841 = vadd.f32 %v4693, %v4815
      %v4842 = vadd.f32 %v4694, %v4815
      %v4843 = vadd.f32 %v4695, %v4815
      %v4844 = vadd.f32 %v4696, %v4815
      %v4845 = vadd.f32 %v4697, %v4815
      %v4846 = vadd.f32 %v4698, %v4815
      %v4847 = vadd.f32 %v4699, %v4815
      %v4848 = vadd.f32 %v4816, %v4817
      %v4849 = vadd.f32 %v4848, %v4818
      %v4850 = vadd.f32 %v4849, %v4819
      %v4851 = vadd.f32 %v4850, %v4820
      %v4852 = vadd.f32 %v4851, %v4821
      %v4853 = vadd.f32 %v4852, %v4822
      %v4854 = vadd.f32 %v4853, %v4823
      %v4855 = vadd.f32 %v4854, %v4824
      %v4856 = vadd.f32 %v4855, %v4825
      %v4857 = vadd.f32 %v4856, %v4826
      %v4858 = vadd.f32 %v4857, %v4827
      %v4859 = vadd.f32 %v4858, %v4828
      %v4860 = vadd.f32 %v4859, %v4829
      %v4861 = vadd.f32 %v4860, %v4830
      %v4862 = vadd.f32 %v4861, %v4831
      %v4863 = vadd.f32 %v4862, %v4832
      %v4864 = vadd.f32 %v4863, %v4833
      %v4865 = vadd.f32 %v4864, %v4834
      %v4866 = vadd.f32 %v4865, %v4835
      %v4867 = vadd.f32 %v4866, %v4836
      %v4868 = vadd.f32 %v4867, %v4837
      %v4869 = vadd.f32 %v4868, %v4838
      %v4870 = vadd.f32 %v4869, %v4839
      %v4871 = vadd.f32 %v4870, %v4840
      %v4872 = vadd.f32 %v4871, %v4841
      %v4873 = vadd.f32 %v4872, %v4842
      %v4874 = vadd.f32 %v4873, %v4843
      %v4875 = vadd.f32 %v4874, %v4844
      %v4876 = vadd.f32 %v4875, %v4845
      %v4877 = vadd.f32 %v4876, %v4846
      %v4878 = vadd.f32 %v4877, %v4847
      %v4879 = vrot.slane %v4878, 4
      %v4880 = vadd.f32 %v4878, %v4879
      %v4881 = vrot.slane %v4880, 2
      %v4882 = vadd.f32 %v4880, %v4881
      %v4883 = vrot.slane %v4882, 1
      %v4884 = vadd.f32 %v4882, %v4883
      %v4885 = vmul.f32 %v4816, %v4816
      %v4886 = vmul.f32 %v4817, %v4817
      %v4887 = vmul.f32 %v4818, %v4818
      %v4888 = vmul.f32 %v4819, %v4819
      %v4889 = vmul.f32 %v4820, %v4820
      %v4890 = vmul.f32 %v4821, %v4821
      %v4891 = vmul.f32 %v4822, %v4822
      %v4892 = vmul.f32 %v4823, %v4823
      %v4893 = vmul.f32 %v4824, %v4824
      %v4894 = vmul.f32 %v4825, %v4825
      %v4895 = vmul.f32 %v4826, %v4826
      %v4896 = vmul.f32 %v4827, %v4827
      %v4897 = vmul.f32 %v4828, %v4828
      %v4898 = vmul.f32 %v4829, %v4829
      %v4899 = vmul.f32 %v4830, %v4830
      %v4900 = vmul.f32 %v4831, %v4831
      %v4901 = vmul.f32 %v4832, %v4832
      %v4902 = vmul.f32 %v4833, %v4833
      %v4903 = vmul.f32 %v4834, %v4834
      %v4904 = vmul.f32 %v4835, %v4835
      %v4905 = vmul.f32 %v4836, %v4836
      %v4906 = vmul.f32 %v4837, %v4837
      %v4907 = vmul.f32 %v4838, %v4838
      %v4908 = vmul.f32 %v4839, %v4839
      %v4909 = vmul.f32 %v4840, %v4840
      %v4910 = vmul.f32 %v4841, %v4841
      %v4911 = vmul.f32 %v4842, %v4842
      %v4912 = vmul.f32 %v4843, %v4843
      %v4913 = vmul.f32 %v4844, %v4844
      %v4914 = vmul.f32 %v4845, %v4845
      %v4915 = vmul.f32 %v4846, %v4846
      %v4916 = vmul.f32 %v4847, %v4847
      %v4917 = vadd.f32 %v4885, %v4886
      %v4918 = vadd.f32 %v4917, %v4887
      %v4919 = vadd.f32 %v4918, %v4888
      %v4920 = vadd.f32 %v4919, %v4889
      %v4921 = vadd.f32 %v4920, %v4890
      %v4922 = vadd.f32 %v4921, %v4891
      %v4923 = vadd.f32 %v4922, %v4892
      %v4924 = vadd.f32 %v4923, %v4893
      %v4925 = vadd.f32 %v4924, %v4894
      %v4926 = vadd.f32 %v4925, %v4895
      %v4927 = vadd.f32 %v4926, %v4896
      %v4928 = vadd.f32 %v4927, %v4897
      %v4929 = vadd.f32 %v4928, %v4898
      %v4930 = vadd.f32 %v4929, %v4899
      %v4931 = vadd.f32 %v4930, %v4900
      %v4932 = vadd.f32 %v4931, %v4901
      %v4933 = vadd.f32 %v4932, %v4902
      %v4934 = vadd.f32 %v4933, %v4903
      %v4935 = vadd.f32 %v4934, %v4904
      %v4936 = vadd.f32 %v4935, %v4905
      %v4937 = vadd.f32 %v4936, %v4906
      %v4938 = vadd.f32 %v4937, %v4907
      %v4939 = vadd.f32 %v4938, %v4908
      %v4940 = vadd.f32 %v4939, %v4909
      %v4941 = vadd.f32 %v4940, %v4910
      %v4942 = vadd.f32 %v4941, %v4911
      %v4943 = vadd.f32 %v4942, %v4912
      %v4944 = vadd.f32 %v4943, %v4913
      %v4945 = vadd.f32 %v4944, %v4914
      %v4946 = vadd.f32 %v4945, %v4915
      %v4947 = vadd.f32 %v4946, %v4916
      %v4948 = vrot.slane %v4947, 4
      %v4949 = vadd.f32 %v4947, %v4948
      %v4950 = vrot.slane %v4949, 2
      %v4951 = vadd.f32 %v4949, %v4950
      %v4952 = vrot.slane %v4951, 1
      %v4953 = vadd.f32 %v4951, %v4952
      %v4954 = vsel %vm1704, %v4884, %v4953
      %4955 = vmatprep.subr.mxu0 0.0
      %4956 = vmatpush1.msra.mxu0 %v1706
      %4957 = vmatprep.subr.mxu0 0.0
      %4958 = vmatpush1.msra.mxu0 %v1707
      %4959 = vmatprep.subr.mxu0 0.0
      %4960 = vmatpush1.msra.mxu0 %v1708
      %4961 = vmatprep.subr.mxu0 0.0
      %4962 = vmatpush1.msra.mxu0 %v1709
      %4963 = vmatprep.subr.mxu0 0.0
      %4964 = vmatpush1.msra.mxu0 %v1710
      %4965 = vmatprep.subr.mxu0 0.0
      %4966 = vmatpush1.msra.mxu0 %v1711
      %4967 = vmatprep.subr.mxu0 0.0
      %4968 = vmatpush1.msra.mxu0 %v1712
      %4969 = vmatprep.subr.mxu0 0.0
      %4970 = vmatpush1.msra.mxu0 %v1713
      %4971 = vmatprep.subr.mxu0 0.0
      %4972 = vmatpush1.msra.mxu0 %v1714
      %4973 = vmatprep.subr.mxu0 0.0
      %4974 = vmatpush1.msra.mxu0 %v1715
      %4975 = vmatprep.subr.mxu0 0.0
      %4976 = vmatpush1.msra.mxu0 %v1716
      %4977 = vmatprep.subr.mxu0 0.0
      %4978 = vmatpush1.msra.mxu0 %v1717
      %4979 = vmatprep.subr.mxu0 0.0
      %4980 = vmatpush1.msra.mxu0 %v1718
      %4981 = vmatprep.subr.mxu0 0.0
      %4982 = vmatpush1.msra.mxu0 %v1719
      %4983 = vmatprep.subr.mxu0 0.0
      %4984 = vmatpush1.msra.mxu0 %v1720
      %4985 = vmatprep.subr.mxu0 0.0
      %4986 = vmatpush1.msra.mxu0 %v1721
      %4987 = vmatprep.subr.mxu0 0.0
      %4988 = vmatpush1.msra.mxu0 0.0
      %4989 = vmatprep.subr.mxu0 0.0
      %4990 = vmatpush1.msra.mxu0 0.0
      %4991 = vmatprep.subr.mxu0 0.0
      %4992 = vmatpush1.msra.mxu0 0.0
      %4993 = vmatprep.subr.mxu0 0.0
      %4994 = vmatpush1.msra.mxu0 0.0
      %4995 = vmatprep.subr.mxu0 0.0
      %4996 = vmatpush1.msra.mxu0 0.0
      %4997 = vmatprep.subr.mxu0 0.0
      %4998 = vmatpush1.msra.mxu0 0.0
      %4999 = vmatprep.subr.mxu0 0.0
      %5000 = vmatpush1.msra.mxu0 0.0
      %5001 = vmatprep.subr.mxu0 0.0
      %5002 = vmatpush1.msra.mxu0 0.0
      %5003 = vmatprep.subr.mxu0 0.0
      %5004 = vmatpush1.msra.mxu0 0.0
      %5005 = vmatprep.subr.mxu0 0.0
      %5006 = vmatpush1.msra.mxu0 0.0
      %5007 = vmatprep.subr.mxu0 0.0
      %5008 = vmatpush1.msra.mxu0 0.0
      %5009 = vmatprep.subr.mxu0 0.0
      %5010 = vmatpush1.msra.mxu0 0.0
      %5011 = vmatprep.subr.mxu0 0.0
      %5012 = vmatpush1.msra.mxu0 0.0
      %5013 = vmatprep.subr.mxu0 0.0
      %5014 = vmatpush1.msra.mxu0 0.0
      %5015 = vmatprep.subr.mxu0 0.0
      %5016 = vmatpush1.msra.mxu0 0.0
      %5017 = vmatprep.subr.mxu0 0.0
      %5018 = vmatpush1.msra.mxu0 0.0
      %5019 = vmatprep.mubr.f32.mxu0 0.0
      %5020 = vmatmul.mubr.f32.gmra.mrb[0].mxu0 %v4954
      %v5021 = vpop.f32.mrb[0].mxu0
      %v5022 = vadd.f32 0.0, %v5021
      %v5023 = vpop.f32.mrb[0].mxu0
      %5024 = vdwg.mxu0
      %v5025 = vmul.f32 %v5022, %v1792
      %v5026 = vmul.f32 %v5025, %v5025
      %v5028 = vrot.slane %v5026, 7
      %v5030 = vsub.f32 %v5025, %v5028
      %v5031 = vmax.f32 %v5030, 0.0
      %v5032 = vadd.f32 %v5031, 1e-05
      %v5033 = vrsqrt.pop %v5032
      %v5034 = vsel %vm1704, %v5025, %v5033
      %v5036 = vsel %vm1804, %v5034, 0
      %5038 = vmatprep.subr.mxu0 0.0
      %5039 = vmatpush1.msra.mxu0 %v1810
      %5040 = vmatprep.subr.mxu0 0.0
      %5041 = vmatpush1.msra.mxu0 0.0
      %5042 = vmatprep.subr.mxu0 0.0
      %5043 = vmatpush1.msra.mxu0 0.0
      %5044 = vmatprep.subr.mxu0 0.0
      %5045 = vmatpush1.msra.mxu0 0.0
      %5046 = vmatprep.subr.mxu0 0.0
      %5047 = vmatpush1.msra.mxu0 0.0
      %5048 = vmatprep.subr.mxu0 0.0
      %5049 = vmatpush1.msra.mxu0 0.0
      %5050 = vmatprep.subr.mxu0 0.0
      %5051 = vmatpush1.msra.mxu0 0.0
      %5052 = vmatprep.subr.mxu0 0.0
      %5053 = vmatpush1.msra.mxu0 0.0
      %5054 = vmatprep.subr.mxu0 0.0
      %5055 = vmatpush1.msra.mxu0 0.0
      %5056 = vmatprep.subr.mxu0 0.0
      %5057 = vmatpush1.msra.mxu0 0.0
      %5058 = vmatprep.subr.mxu0 0.0
      %5059 = vmatpush1.msra.mxu0 0.0
      %5060 = vmatprep.subr.mxu0 0.0
      %5061 = vmatpush1.msra.mxu0 0.0
      %5062 = vmatprep.subr.mxu0 0.0
      %5063 = vmatpush1.msra.mxu0 0.0
      %5064 = vmatprep.subr.mxu0 0.0
      %5065 = vmatpush1.msra.mxu0 0.0
      %5066 = vmatprep.subr.mxu0 0.0
      %5067 = vmatpush1.msra.mxu0 0.0
      %5068 = vmatprep.subr.mxu0 0.0
      %5069 = vmatpush1.msra.mxu0 0.0
      %5070 = vmatprep.subr.mxu0 0.0
      %5071 = vmatpush1.msra.mxu0 0.0
      %5072 = vmatprep.subr.mxu0 0.0
      %5073 = vmatpush1.msra.mxu0 0.0
      %5074 = vmatprep.subr.mxu0 0.0
      %5075 = vmatpush1.msra.mxu0 0.0
      %5076 = vmatprep.subr.mxu0 0.0
      %5077 = vmatpush1.msra.mxu0 0.0
      %5078 = vmatprep.subr.mxu0 0.0
      %5079 = vmatpush1.msra.mxu0 0.0
      %5080 = vmatprep.subr.mxu0 0.0
      %5081 = vmatpush1.msra.mxu0 0.0
      %5082 = vmatprep.subr.mxu0 0.0
      %5083 = vmatpush1.msra.mxu0 0.0
      %5084 = vmatprep.subr.mxu0 0.0
      %5085 = vmatpush1.msra.mxu0 0.0
      %5086 = vmatprep.subr.mxu0 0.0
      %5087 = vmatpush1.msra.mxu0 0.0
      %5088 = vmatprep.subr.mxu0 0.0
      %5089 = vmatpush1.msra.mxu0 0.0
      %5090 = vmatprep.subr.mxu0 0.0
      %5091 = vmatpush1.msra.mxu0 0.0
      %5092 = vmatprep.subr.mxu0 0.0
      %5093 = vmatpush1.msra.mxu0 0.0
      %5094 = vmatprep.subr.mxu0 0.0
      %5095 = vmatpush1.msra.mxu0 0.0
      %5096 = vmatprep.subr.mxu0 0.0
      %5097 = vmatpush1.msra.mxu0 0.0
      %5098 = vmatprep.subr.mxu0 0.0
      %5099 = vmatpush1.msra.mxu0 0.0
      %5100 = vmatprep.subr.mxu0 0.0
      %5101 = vmatpush1.msra.mxu0 0.0
      %5102 = vmatprep.mubr.f32.mxu0 0.0
      %5103 = vmatmul.mubr.f32.gmra.mrb[0].mxu0 %v5036
      %v5104 = vpop.f32.mrb[0].mxu0
      %v5105 = vadd.f32 0.0, %v5104
      %v5106 = vpop.f32.mrb[0].mxu0
      %5107 = vdwg.mxu0
      %v5108 = vld [vmem:[%s35] sm:$0x1]
      %v5110 = vlaneseq
      %v5111 = vshrl.u32 %v5110, 7
      %v5112 = vsub.s32 0, %v5111
      %v5113 = vrot.slane %v5108, %v5112
      %v5115 = vmul.f32 %v5105, %v5113
      %v5116 = vld [vmem:[%s37] sm:$0x1]
      %v5118 = vrot.slane %v5115, 1
      %v5120 = vmul.f32 %v5105, %v5118
      %v5121 = vsub.f32 %v5116, %v5120
      %v5122 = vlaneseq
      %v5123 = vshrl.u32 %v5122, 7
      %v5124 = vsub.s32 1, %v5123
      %v5125 = vrot.slane %v5115, %v5124
      %v5126 = vmul.f32 %v4816, %v5125
      %v5127 = vmul.f32 %v4817, %v5125
      %v5128 = vmul.f32 %v4818, %v5125
      %v5129 = vmul.f32 %v4819, %v5125
      %v5130 = vmul.f32 %v4820, %v5125
      %v5131 = vmul.f32 %v4821, %v5125
      %v5132 = vmul.f32 %v4822, %v5125
      %v5133 = vmul.f32 %v4823, %v5125
      %v5134 = vmul.f32 %v4824, %v5125
      %v5135 = vmul.f32 %v4825, %v5125
      %v5136 = vmul.f32 %v4826, %v5125
      %v5137 = vmul.f32 %v4827, %v5125
      %v5138 = vmul.f32 %v4828, %v5125
      %v5139 = vmul.f32 %v4829, %v5125
      %v5140 = vmul.f32 %v4830, %v5125
      %v5141 = vmul.f32 %v4831, %v5125
      %v5142 = vmul.f32 %v4832, %v5125
      %v5143 = vmul.f32 %v4833, %v5125
      %v5144 = vmul.f32 %v4834, %v5125
      %v5145 = vmul.f32 %v4835, %v5125
      %v5146 = vmul.f32 %v4836, %v5125
      %v5147 = vmul.f32 %v4837, %v5125
      %v5148 = vmul.f32 %v4838, %v5125
      %v5149 = vmul.f32 %v4839, %v5125
      %v5150 = vmul.f32 %v4840, %v5125
      %v5151 = vmul.f32 %v4841, %v5125
      %v5152 = vmul.f32 %v4842, %v5125
      %v5153 = vmul.f32 %v4843, %v5125
      %v5154 = vmul.f32 %v4844, %v5125
      %v5155 = vmul.f32 %v4845, %v5125
      %v5156 = vmul.f32 %v4846, %v5125
      %v5157 = vmul.f32 %v4847, %v5125
      %v5159 = vlaneseq
      %v5160 = vshrl.u32 %v5159, 7
      %v5161 = vsub.s32 0, %v5160
      %v5162 = vrot.slane %v5121, %v5161
      %v5164 = vadd.f32 %v5126, %v5162
      %v5165 = vadd.f32 %v5127, %v5162
      %v5166 = vadd.f32 %v5128, %v5162
      %v5167 = vadd.f32 %v5129, %v5162
      %v5168 = vadd.f32 %v5130, %v5162
      %v5169 = vadd.f32 %v5131, %v5162
      %v5170 = vadd.f32 %v5132, %v5162
      %v5171 = vadd.f32 %v5133, %v5162
      %v5172 = vadd.f32 %v5134, %v5162
      %v5173 = vadd.f32 %v5135, %v5162
      %v5174 = vadd.f32 %v5136, %v5162
      %v5175 = vadd.f32 %v5137, %v5162
      %v5176 = vadd.f32 %v5138, %v5162
      %v5177 = vadd.f32 %v5139, %v5162
      %v5178 = vadd.f32 %v5140, %v5162
      %v5179 = vadd.f32 %v5141, %v5162
      %v5180 = vadd.f32 %v5142, %v5162
      %v5181 = vadd.f32 %v5143, %v5162
      %v5182 = vadd.f32 %v5144, %v5162
      %v5183 = vadd.f32 %v5145, %v5162
      %v5184 = vadd.f32 %v5146, %v5162
      %v5185 = vadd.f32 %v5147, %v5162
      %v5186 = vadd.f32 %v5148, %v5162
      %v5187 = vadd.f32 %v5149, %v5162
      %v5188 = vadd.f32 %v5150, %v5162
      %v5189 = vadd.f32 %v5151, %v5162
      %v5190 = vadd.f32 %v5152, %v5162
      %v5191 = vadd.f32 %v5153, %v5162
      %v5192 = vadd.f32 %v5154, %v5162
      %v5193 = vadd.f32 %v5155, %v5162
      %v5194 = vadd.f32 %v5156, %v5162
      %v5195 = vadd.f32 %v5157, %v5162
      %v5196 = vsub.f32 0.0, %v5164
      %v5197 = vsub.f32 0.0, %v5165
      %v5198 = vsub.f32 0.0, %v5166
      %v5199 = vsub.f32 0.0, %v5167
      %v5200 = vsub.f32 0.0, %v5168
      %v5201 = vsub.f32 0.0, %v5169
      %v5202 = vsub.f32 0.0, %v5170
      %v5203 = vsub.f32 0.0, %v5171
      %v5204 = vsub.f32 0.0, %v5172
      %v5205 = vsub.f32 0.0, %v5173
      %v5206 = vsub.f32 0.0, %v5174
      %v5207 = vsub.f32 0.0, %v5175
      %v5208 = vsub.f32 0.0, %v5176
      %v5209 = vsub.f32 0.0, %v5177
      %v5210 = vsub.f32 0.0, %v5178
      %v5211 = vsub.f32 0.0, %v5179
      %v5212 = vsub.f32 0.0, %v5180
      %v5213 = vsub.f32 0.0, %v5181
      %v5214 = vsub.f32 0.0, %v5182
      %v5215 = vsub.f32 0.0, %v5183
      %v5216 = vsub.f32 0.0, %v5184
      %v5217 = vsub.f32 0.0, %v5185
      %v5218 = vsub.f32 0.0, %v5186
      %v5219 = vsub.f32 0.0, %v5187
      %v5220 = vsub.f32 0.0, %v5188
      %v5221 = vsub.f32 0.0, %v5189
      %v5222 = vsub.f32 0.0, %v5190
      %v5223 = vsub.f32 0.0, %v5191
      %v5224 = vsub.f32 0.0, %v5192
      %v5225 = vsub.f32 0.0, %v5193
      %v5226 = vsub.f32 0.0, %v5194
      %v5227 = vsub.f32 0.0, %v5195
      %v5228 = vmul.f32 %v5196, 1.442695
      %v5229 = vpow.pop %v5228
      %v5230 = vmul.f32 %v5197, 1.442695
      %v5231 = vpow.pop %v5230
      %v5232 = vmul.f32 %v5198, 1.442695
      %v5233 = vpow.pop %v5232
      %v5234 = vmul.f32 %v5199, 1.442695
      %v5235 = vpow.pop %v5234
      %v5236 = vmul.f32 %v5200, 1.442695
      %v5237 = vpow.pop %v5236
      %v5238 = vmul.f32 %v5201, 1.442695
      %v5239 = vpow.pop %v5238
      %v5240 = vmul.f32 %v5202, 1.442695
      %v5241 = vpow.pop %v5240
      %v5242 = vmul.f32 %v5203, 1.442695
      %v5243 = vpow.pop %v5242
      %v5244 = vmul.f32 %v5204, 1.442695
      %v5245 = vpow.pop %v5244
      %v5246 = vmul.f32 %v5205, 1.442695
      %v5247 = vpow.pop %v5246
      %v5248 = vmul.f32 %v5206, 1.442695
      %v5249 = vpow.pop %v5248
      %v5250 = vmul.f32 %v5207, 1.442695
      %v5251 = vpow.pop %v5250
      %v5252 = vmul.f32 %v5208, 1.442695
      %v5253 = vpow.pop %v5252
      %v5254 = vmul.f32 %v5209, 1.442695
      %v5255 = vpow.pop %v5254
      %v5256 = vmul.f32 %v5210, 1.442695
      %v5257 = vpow.pop %v5256
      %v5258 = vmul.f32 %v5211, 1.442695
      %v5259 = vpow.pop %v5258
      %v5260 = vmul.f32 %v5212, 1.442695
      %v5261 = vpow.pop %v5260
      %v5262 = vmul.f32 %v5213, 1.442695
      %v5263 = vpow.pop %v5262
      %v5264 = vmul.f32 %v5214, 1.442695
      %v5265 = vpow.pop %v5264
      %v5266 = vmul.f32 %v5215, 1.442695
      %v5267 = vpow.pop %v5266
      %v5268 = vmul.f32 %v5216, 1.442695
      %v5269 = vpow.pop %v5268
      %v5270 = vmul.f32 %v5217, 1.442695
      %v5271 = vpow.pop %v5270
      %v5272 = vmul.f32 %v5218, 1.442695
      %v5273 = vpow.pop %v5272
      %v5274 = vmul.f32 %v5219, 1.442695
      %v5275 = vpow.pop %v5274
      %v5276 = vmul.f32 %v5220, 1.442695
      %v5277 = vpow.pop %v5276
      %v5278 = vmul.f32 %v5221, 1.442695
      %v5279 = vpow.pop %v5278
      %v5280 = vmul.f32 %v5222, 1.442695
      %v5281 = vpow.pop %v5280
      %v5282 = vmul.f32 %v5223, 1.442695
      %v5283 = vpow.pop %v5282
      %v5284 = vmul.f32 %v5224, 1.442695
      %v5285 = vpow.pop %v5284
      %v5286 = vmul.f32 %v5225, 1.442695
      %v5287 = vpow.pop %v5286
      %v5288 = vmul.f32 %v5226, 1.442695
      %v5289 = vpow.pop %v5288
      %v5290 = vmul.f32 %v5227, 1.442695
      %v5291 = vpow.pop %v5290
      %v5292 = vadd.f32 %v5229, 1.0
      %v5293 = vadd.f32 %v5231, 1.0
      %v5294 = vadd.f32 %v5233, 1.0
      %v5295 = vadd.f32 %v5235, 1.0
      %v5296 = vadd.f32 %v5237, 1.0
      %v5297 = vadd.f32 %v5239, 1.0
      %v5298 = vadd.f32 %v5241, 1.0
      %v5299 = vadd.f32 %v5243, 1.0
      %v5300 = vadd.f32 %v5245, 1.0
      %v5301 = vadd.f32 %v5247, 1.0
      %v5302 = vadd.f32 %v5249, 1.0
      %v5303 = vadd.f32 %v5251, 1.0
      %v5304 = vadd.f32 %v5253, 1.0
      %v5305 = vadd.f32 %v5255, 1.0
      %v5306 = vadd.f32 %v5257, 1.0
      %v5307 = vadd.f32 %v5259, 1.0
      %v5308 = vadd.f32 %v5261, 1.0
      %v5309 = vadd.f32 %v5263, 1.0
      %v5310 = vadd.f32 %v5265, 1.0
      %v5311 = vadd.f32 %v5267, 1.0
      %v5312 = vadd.f32 %v5269, 1.0
      %v5313 = vadd.f32 %v5271, 1.0
      %v5314 = vadd.f32 %v5273, 1.0
      %v5315 = vadd.f32 %v5275, 1.0
      %v5316 = vadd.f32 %v5277, 1.0
      %v5317 = vadd.f32 %v5279, 1.0
      %v5318 = vadd.f32 %v5281, 1.0
      %v5319 = vadd.f32 %v5283, 1.0
      %v5320 = vadd.f32 %v5285, 1.0
      %v5321 = vadd.f32 %v5287, 1.0
      %v5322 = vadd.f32 %v5289, 1.0
      %v5323 = vadd.f32 %v5291, 1.0
      %v5324 = vrcp.pop %v5292
      %v5325 = vrcp.pop %v5293
      %v5326 = vrcp.pop %v5294
      %v5327 = vrcp.pop %v5295
      %v5328 = vrcp.pop %v5296
      %v5329 = vrcp.pop %v5297
      %v5330 = vrcp.pop %v5298
      %v5331 = vrcp.pop %v5299
      %v5332 = vrcp.pop %v5300
      %v5333 = vrcp.pop %v5301
      %v5334 = vrcp.pop %v5302
      %v5335 = vrcp.pop %v5303
      %v5336 = vrcp.pop %v5304
      %v5337 = vrcp.pop %v5305
      %v5338 = vrcp.pop %v5306
      %v5339 = vrcp.pop %v5307
      %v5340 = vrcp.pop %v5308
      %v5341 = vrcp.pop %v5309
      %v5342 = vrcp.pop %v5310
      %v5343 = vrcp.pop %v5311
      %v5344 = vrcp.pop %v5312
      %v5345 = vrcp.pop %v5313
      %v5346 = vrcp.pop %v5314
      %v5347 = vrcp.pop %v5315
      %v5348 = vrcp.pop %v5316
      %v5349 = vrcp.pop %v5317
      %v5350 = vrcp.pop %v5318
      %v5351 = vrcp.pop %v5319
      %v5352 = vrcp.pop %v5320
      %v5353 = vrcp.pop %v5321
      %v5354 = vrcp.pop %v5322
      %v5355 = vrcp.pop %v5323
      %v5356 = vmul.f32 %v5164, %v5324
      %v5357 = vmul.f32 %v5165, %v5325
      %v5358 = vmul.f32 %v5166, %v5326
      %v5359 = vmul.f32 %v5167, %v5327
      %v5360 = vmul.f32 %v5168, %v5328
      %v5361 = vmul.f32 %v5169, %v5329
      %v5362 = vmul.f32 %v5170, %v5330
      %v5363 = vmul.f32 %v5171, %v5331
      %v5364 = vmul.f32 %v5172, %v5332
      %v5365 = vmul.f32 %v5173, %v5333
      %v5366 = vmul.f32 %v5174, %v5334
      %v5367 = vmul.f32 %v5175, %v5335
      %v5368 = vmul.f32 %v5176, %v5336
      %v5369 = vmul.f32 %v5177, %v5337
      %v5370 = vmul.f32 %v5178, %v5338
      %v5371 = vmul.f32 %v5179, %v5339
      %v5372 = vmul.f32 %v5180, %v5340
      %v5373 = vmul.f32 %v5181, %v5341
      %v5374 = vmul.f32 %v5182, %v5342
      %v5375 = vmul.f32 %v5183, %v5343
      %v5376 = vmul.f32 %v5184, %v5344
      %v5377 = vmul.f32 %v5185, %v5345
      %v5378 = vmul.f32 %v5186, %v5346
      %v5379 = vmul.f32 %v5187, %v5347
      %v5380 = vmul.f32 %v5188, %v5348
      %v5381 = vmul.f32 %v5189, %v5349
      %v5382 = vmul.f32 %v5190, %v5350
      %v5383 = vmul.f32 %v5191, %v5351
      %v5384 = vmul.f32 %v5192, %v5352
      %v5385 = vmul.f32 %v5193, %v5353
      %v5386 = vmul.f32 %v5194, %v5354
      %v5387 = vmul.f32 %v5195, %v5355
      %v5388 = vrot.slane %v5356, 7
      %v5389 = vrot.slane %v5358, 7
      %v5390 = vrot.slane %v5360, 7
      %v5391 = vrot.slane %v5362, 7
      %v5392 = vrot.slane %v5364, 7
      %v5393 = vrot.slane %v5366, 7
      %v5394 = vrot.slane %v5368, 7
      %v5395 = vrot.slane %v5370, 7
      %v5396 = vrot.slane %v5372, 7
      %v5397 = vrot.slane %v5374, 7
      %v5398 = vrot.slane %v5376, 7
      %v5399 = vrot.slane %v5378, 7
      %v5400 = vrot.slane %v5380, 7
      %v5401 = vrot.slane %v5382, 7
      %v5402 = vrot.slane %v5384, 7
      %v5403 = vrot.slane %v5386, 7
      %v5404 = vrot.slane %v5357, 7
      %v5405 = vrot.slane %v5359, 7
      %v5406 = vrot.slane %v5361, 7
      %v5407 = vrot.slane %v5363, 7
      %v5408 = vrot.slane %v5365, 7
      %v5409 = vrot.slane %v5367, 7
      %v5410 = vrot.slane %v5369, 7
      %v5411 = vrot.slane %v5371, 7
      %v5412 = vrot.slane %v5373, 7
      %v5413 = vrot.slane %v5375, 7
      %v5414 = vrot.slane %v5377, 7
      %v5415 = vrot.slane %v5379, 7
      %v5416 = vrot.slane %v5381, 7
      %v5417 = vrot.slane %v5383, 7
      %v5418 = vrot.slane %v5385, 7
      %v5419 = vrot.slane %v5387, 7
      %v5420 = vsel %vm2194, %v5388, %v5404
      %v5421 = vsel %vm2194, %v5389, %v5405
      %v5422 = vsel %vm2194, %v5390, %v5406
      %v5423 = vsel %vm2194, %v5391, %v5407
      %v5424 = vsel %vm2194, %v5392, %v5408
      %v5425 = vsel %vm2194, %v5393, %v5409
      %v5426 = vsel %vm2194, %v5394, %v5410
      %v5427 = vsel %vm2194, %v5395, %v5411
      %v5428 = vsel %vm2194, %v5396, %v5412
      %v5429 = vsel %vm2194, %v5397, %v5413
      %v5430 = vsel %vm2194, %v5398, %v5414
      %v5431 = vsel %vm2194, %v5399, %v5415
      %v5432 = vsel %vm2194, %v5400, %v5416
      %v5433 = vsel %vm2194, %v5401, %v5417
      %v5434 = vsel %vm2194, %v5402, %v5418
      %v5435 = vsel %vm2194, %v5403, %v5419
      %v5436 = vsel %vm2194, %v5404, %v5388
      %v5437 = vsel %vm2194, %v5405, %v5389
      %v5438 = vsel %vm2194, %v5406, %v5390
      %v5439 = vsel %vm2194, %v5407, %v5391
      %v5440 = vsel %vm2194, %v5408, %v5392
      %v5441 = vsel %vm2194, %v5409, %v5393
      %v5442 = vsel %vm2194, %v5410, %v5394
      %v5443 = vsel %vm2194, %v5411, %v5395
      %v5444 = vsel %vm2194, %v5412, %v5396
      %v5445 = vsel %vm2194, %v5413, %v5397
      %v5446 = vsel %vm2194, %v5414, %v5398
      %v5447 = vsel %vm2194, %v5415, %v5399
      %v5448 = vsel %vm2194, %v5416, %v5400
      %v5449 = vsel %vm2194, %v5417, %v5401
      %v5450 = vsel %vm2194, %v5418, %v5402
      %v5451 = vsel %vm2194, %v5419, %v5403
      %v5452 = vsel %vm2229, 0.0, %v5436
      %v5453 = vsel %vm2230, 0.0, %v5420
      %v5454 = vsel %vm2229, 0.0, %v5437
      %v5455 = vsel %vm2230, 0.0, %v5421
      %v5456 = vsel %vm2229, 0.0, %v5438
      %v5457 = vsel %vm2230, 0.0, %v5422
      %v5458 = vsel %vm2229, 0.0, %v5439
      %v5459 = vsel %vm2230, 0.0, %v5423
      %v5460 = vsel %vm2229, 0.0, %v5440
      %v5461 = vsel %vm2230, 0.0, %v5424
      %v5462 = vsel %vm2229, 0.0, %v5441
      %v5463 = vsel %vm2230, 0.0, %v5425
      %v5464 = vsel %vm2229, 0.0, %v5442
      %v5465 = vsel %vm2230, 0.0, %v5426
      %v5466 = vsel %vm2229, 0.0, %v5443
      %v5467 = vsel %vm2230, 0.0, %v5427
      %v5468 = vsel %vm2229, 0.0, %v5444
      %v5469 = vsel %vm2230, 0.0, %v5428
      %v5470 = vsel %vm2229, 0.0, %v5445
      %v5471 = vsel %vm2230, 0.0, %v5429
      %v5472 = vsel %vm2229, 0.0, %v5446
      %v5473 = vsel %vm2230, 0.0, %v5430
      %v5474 = vsel %vm2229, 0.0, %v5447
      %v5475 = vsel %vm2230, 0.0, %v5431
      %v5476 = vsel %vm2229, 0.0, %v5448
      %v5477 = vsel %vm2230, 0.0, %v5432
      %v5478 = vsel %vm2229, 0.0, %v5449
      %v5479 = vsel %vm2230, 0.0, %v5433
      %v5480 = vsel %vm2229, 0.0, %v5450
      %v5481 = vsel %vm2230, 0.0, %v5434
      %v5482 = vsel %vm2229, 0.0, %v5451
      %v5483 = vsel %vm2230, 0.0, %v5435
      %v5484 = vrot.slane %v5356, 1
      %v5485 = vrot.slane %v5358, 1
      %v5486 = vrot.slane %v5360, 1
      %v5487 = vrot.slane %v5362, 1
      %v5488 = vrot.slane %v5364, 1
      %v5489 = vrot.slane %v5366, 1
      %v5490 = vrot.slane %v5368, 1
      %v5491 = vrot.slane %v5370, 1
      %v5492 = vrot.slane %v5372, 1
      %v5493 = vrot.slane %v5374, 1
      %v5494 = vrot.slane %v5376, 1
      %v5495 = vrot.slane %v5378, 1
      %v5496 = vrot.slane %v5380, 1
      %v5497 = vrot.slane %v5382, 1
      %v5498 = vrot.slane %v5384, 1
      %v5499 = vrot.slane %v5386, 1
      %v5500 = vrot.slane %v5357, 1
      %v5501 = vrot.slane %v5359, 1
      %v5502 = vrot.slane %v5361, 1
      %v5503 = vrot.slane %v5363, 1
      %v5504 = vrot.slane %v5365, 1
      %v5505 = vrot.slane %v5367, 1
      %v5506 = vrot.slane %v5369, 1
      %v5507 = vrot.slane %v5371, 1
      %v5508 = vrot.slane %v5373, 1
      %v5509 = vrot.slane %v5375, 1
      %v5510 = vrot.slane %v5377, 1
      %v5511 = vrot.slane %v5379, 1
      %v5512 = vrot.slane %v5381, 1
      %v5513 = vrot.slane %v5383, 1
      %v5514 = vrot.slane %v5385, 1
      %v5515 = vrot.slane %v5387, 1
      %v5516 = vsel %vm2295, %v5484, %v5500
      %v5517 = vsel %vm2295, %v5485, %v5501
      %v5518 = vsel %vm2295, %v5486, %v5502
      %v5519 = vsel %vm2295, %v5487, %v5503
      %v5520 = vsel %vm2295, %v5488, %v5504
      %v5521 = vsel %vm2295, %v5489, %v5505
      %v5522 = vsel %vm2295, %v5490, %v5506
      %v5523 = vsel %vm2295, %v5491, %v5507
      %v5524 = vsel %vm2295, %v5492, %v5508
      %v5525 = vsel %vm2295, %v5493, %v5509
      %v5526 = vsel %vm2295, %v5494, %v5510
      %v5527 = vsel %vm2295, %v5495, %v5511
      %v5528 = vsel %vm2295, %v5496, %v5512
      %v5529 = vsel %vm2295, %v5497, %v5513
      %v5530 = vsel %vm2295, %v5498, %v5514
      %v5531 = vsel %vm2295, %v5499, %v5515
      %v5532 = vsel %vm2295, %v5500, %v5484
      %v5533 = vsel %vm2295, %v5501, %v5485
      %v5534 = vsel %vm2295, %v5502, %v5486
      %v5535 = vsel %vm2295, %v5503, %v5487
      %v5536 = vsel %vm2295, %v5504, %v5488
      %v5537 = vsel %vm2295, %v5505, %v5489
      %v5538 = vsel %vm2295, %v5506, %v5490
      %v5539 = vsel %vm2295, %v5507, %v5491
      %v5540 = vsel %vm2295, %v5508, %v5492
      %v5541 = vsel %vm2295, %v5509, %v5493
      %v5542 = vsel %vm2295, %v5510, %v5494
      %v5543 = vsel %vm2295, %v5511, %v5495
      %v5544 = vsel %vm2295, %v5512, %v5496
      %v5545 = vsel %vm2295, %v5513, %v5497
      %v5546 = vsel %vm2295, %v5514, %v5498
      %v5547 = vsel %vm2295, %v5515, %v5499
      %v5548 = vsel %vm2330, 0.0, %v5516
      %v5549 = vsel %vm2331, 0.0, %v5532
      %v5550 = vsel %vm2330, 0.0, %v5517
      %v5551 = vsel %vm2331, 0.0, %v5533
      %v5552 = vsel %vm2330, 0.0, %v5518
      %v5553 = vsel %vm2331, 0.0, %v5534
      %v5554 = vsel %vm2330, 0.0, %v5519
      %v5555 = vsel %vm2331, 0.0, %v5535
      %v5556 = vsel %vm2330, 0.0, %v5520
      %v5557 = vsel %vm2331, 0.0, %v5536
      %v5558 = vsel %vm2330, 0.0, %v5521
      %v5559 = vsel %vm2331, 0.0, %v5537
      %v5560 = vsel %vm2330, 0.0, %v5522
      %v5561 = vsel %vm2331, 0.0, %v5538
      %v5562 = vsel %vm2330, 0.0, %v5523
      %v5563 = vsel %vm2331, 0.0, %v5539
      %v5564 = vsel %vm2330, 0.0, %v5524
      %v5565 = vsel %vm2331, 0.0, %v5540
      %v5566 = vsel %vm2330, 0.0, %v5525
      %v5567 = vsel %vm2331, 0.0, %v5541
      %v5568 = vsel %vm2330, 0.0, %v5526
      %v5569 = vsel %vm2331, 0.0, %v5542
      %v5570 = vsel %vm2330, 0.0, %v5527
      %v5571 = vsel %vm2331, 0.0, %v5543
      %v5572 = vsel %vm2330, 0.0, %v5528
      %v5573 = vsel %vm2331, 0.0, %v5544
      %v5574 = vsel %vm2330, 0.0, %v5529
      %v5575 = vsel %vm2331, 0.0, %v5545
      %v5576 = vsel %vm2330, 0.0, %v5530
      %v5577 = vsel %vm2331, 0.0, %v5546
      %v5578 = vsel %vm2330, 0.0, %v5531
      %v5579 = vsel %vm2331, 0.0, %v5547
      %v5580 = vpack.c.bf16 %v5453, %v5452
      %v5581 = vpack.c.bf16 %v5455, %v5454
      %v5582 = vpack.c.bf16 %v5457, %v5456
      %v5583 = vpack.c.bf16 %v5459, %v5458
      %v5584 = vpack.c.bf16 %v5461, %v5460
      %v5585 = vpack.c.bf16 %v5463, %v5462
      %v5586 = vpack.c.bf16 %v5465, %v5464
      %v5587 = vpack.c.bf16 %v5467, %v5466
      %v5588 = vpack.c.bf16 %v5469, %v5468
      %v5589 = vpack.c.bf16 %v5471, %v5470
      %v5590 = vpack.c.bf16 %v5473, %v5472
      %v5591 = vpack.c.bf16 %v5475, %v5474
      %v5592 = vpack.c.bf16 %v5477, %v5476
      %v5593 = vpack.c.bf16 %v5479, %v5478
      %v5594 = vpack.c.bf16 %v5481, %v5480
      %v5595 = vpack.c.bf16 %v5483, %v5482
      %v5596 = vpack.c.bf16 %v5357, %v5356
      %v5597 = vpack.c.bf16 %v5359, %v5358
      %v5598 = vpack.c.bf16 %v5361, %v5360
      %v5599 = vpack.c.bf16 %v5363, %v5362
      %v5600 = vpack.c.bf16 %v5365, %v5364
      %v5601 = vpack.c.bf16 %v5367, %v5366
      %v5602 = vpack.c.bf16 %v5369, %v5368
      %v5603 = vpack.c.bf16 %v5371, %v5370
      %v5604 = vpack.c.bf16 %v5373, %v5372
      %v5605 = vpack.c.bf16 %v5375, %v5374
      %v5606 = vpack.c.bf16 %v5377, %v5376
      %v5607 = vpack.c.bf16 %v5379, %v5378
      %v5608 = vpack.c.bf16 %v5381, %v5380
      %v5609 = vpack.c.bf16 %v5383, %v5382
      %v5610 = vpack.c.bf16 %v5385, %v5384
      %v5611 = vpack.c.bf16 %v5387, %v5386
      %v5612 = vpack.c.bf16 %v5549, %v5548
      %v5613 = vpack.c.bf16 %v5551, %v5550
      %v5614 = vpack.c.bf16 %v5553, %v5552
      %v5615 = vpack.c.bf16 %v5555, %v5554
      %v5616 = vpack.c.bf16 %v5557, %v5556
      %v5617 = vpack.c.bf16 %v5559, %v5558
      %v5618 = vpack.c.bf16 %v5561, %v5560
      %v5619 = vpack.c.bf16 %v5563, %v5562
      %v5620 = vpack.c.bf16 %v5565, %v5564
      %v5621 = vpack.c.bf16 %v5567, %v5566
      %v5622 = vpack.c.bf16 %v5569, %v5568
      %v5623 = vpack.c.bf16 %v5571, %v5570
      %v5624 = vpack.c.bf16 %v5573, %v5572
      %v5625 = vpack.c.bf16 %v5575, %v5574
      %v5626 = vpack.c.bf16 %v5577, %v5576
      %v5627 = vpack.c.bf16 %v5579, %v5578
      %v5628 = vld [vmem:[%s39] sm:$0xf]
      %v5629 = vld [vmem:[%s39 + $0x4] sm:$0xf]
      %v5630 = vld [vmem:[%s39 + $0x8] sm:$0xf]
      %v5631 = vld [vmem:[%s39 + $0xc] sm:$0xf]
      %v5632 = vld [vmem:[%s39 + $0x10] sm:$0xf]
      %v5633 = vld [vmem:[%s39 + $0x14] sm:$0xf]
      %v5634 = vld [vmem:[%s39 + $0x18] sm:$0xf]
      %v5635 = vld [vmem:[%s39 + $0x1c] sm:$0xf]
      %v5636 = vld [vmem:[%s39 + $0x20] sm:$0xf]
      %v5637 = vld [vmem:[%s39 + $0x24] sm:$0xf]
      %v5638 = vld [vmem:[%s39 + $0x28] sm:$0xf]
      %v5639 = vld [vmem:[%s39 + $0x2c] sm:$0xf]
      %v5640 = vld [vmem:[%s39 + $0x30] sm:$0xf]
      %v5641 = vld [vmem:[%s39 + $0x34] sm:$0xf]
      %v5642 = vld [vmem:[%s39 + $0x38] sm:$0xf]
      %v5643 = vld [vmem:[%s39 + $0x3c] sm:$0xf]
      %v5644 = vld [vmem:[%s39 + $0x40] sm:$0xf]
      %v5645 = vld [vmem:[%s39 + $0x44] sm:$0xf]
      %v5646 = vld [vmem:[%s39 + $0x48] sm:$0xf]
      %v5647 = vld [vmem:[%s39 + $0x4c] sm:$0xf]
      %v5648 = vld [vmem:[%s39 + $0x50] sm:$0xf]
      %v5649 = vld [vmem:[%s39 + $0x54] sm:$0xf]
      %v5650 = vld [vmem:[%s39 + $0x58] sm:$0xf]
      %v5651 = vld [vmem:[%s39 + $0x5c] sm:$0xf]
      %v5652 = vld [vmem:[%s39 + $0x60] sm:$0xf]
      %v5653 = vld [vmem:[%s39 + $0x64] sm:$0xf]
      %v5654 = vld [vmem:[%s39 + $0x68] sm:$0xf]
      %v5655 = vld [vmem:[%s39 + $0x6c] sm:$0xf]
      %v5656 = vld [vmem:[%s39 + $0x70] sm:$0xf]
      %v5657 = vld [vmem:[%s39 + $0x74] sm:$0xf]
      %v5658 = vld [vmem:[%s39 + $0x78] sm:$0xf]
      %v5659 = vld [vmem:[%s39 + $0x7c] sm:$0xf]
      %v5676 = vunpack.c.l.b16 %v5644
      %v5677 = vunpack.c.l.b16 %v5645
      %v5678 = vunpack.c.l.b16 %v5646
      %v5679 = vunpack.c.l.b16 %v5647
      %v5680 = vunpack.c.l.b16 %v5648
      %v5681 = vunpack.c.l.b16 %v5649
      %v5682 = vunpack.c.l.b16 %v5650
      %v5683 = vunpack.c.l.b16 %v5651
      %v5684 = vunpack.c.l.b16 %v5652
      %v5685 = vunpack.c.l.b16 %v5653
      %v5686 = vunpack.c.l.b16 %v5654
      %v5687 = vunpack.c.l.b16 %v5655
      %v5688 = vunpack.c.l.b16 %v5656
      %v5689 = vunpack.c.l.b16 %v5657
      %v5690 = vunpack.c.l.b16 %v5658
      %v5691 = vunpack.c.l.b16 %v5659
      %v5692 = vpack.c.b16 %v5677, %v5676
      %v5693 = vpack.c.b16 %v5679, %v5678
      %v5694 = vpack.c.b16 %v5681, %v5680
      %v5695 = vpack.c.b16 %v5683, %v5682
      %v5696 = vpack.c.b16 %v5685, %v5684
      %v5697 = vpack.c.b16 %v5687, %v5686
      %v5698 = vpack.c.b16 %v5689, %v5688
      %v5699 = vpack.c.b16 %v5691, %v5690
      %5708 = vmatprep.subr.bf16.mxu0 0
      %5709 = vmatpush1.bf16.msra.mxu0 %v5692
      %5710 = vmatprep.subr.bf16.mxu0 0
      %5711 = vmatpush1.bf16.msra.mxu0 %v5693
      %5712 = vmatprep.subr.bf16.mxu0 0
      %5713 = vmatpush1.bf16.msra.mxu0 %v5694
      %5714 = vmatprep.subr.bf16.mxu0 0
      %5715 = vmatpush1.bf16.msra.mxu0 %v5695
      %5716 = vmatprep.subr.bf16.mxu0 0
      %5717 = vmatpush1.bf16.msra.mxu0 %v5696
      %5718 = vmatprep.subr.bf16.mxu0 0
      %5719 = vmatpush1.bf16.msra.mxu0 %v5697
      %5720 = vmatprep.subr.bf16.mxu0 0
      %5721 = vmatpush1.bf16.msra.mxu0 %v5698
      %5722 = vmatprep.subr.bf16.mxu0 0
      %5723 = vmatpush1.bf16.msra.mxu0 %v5699
      %5724 = vmatprep.subr.bf16.mxu0 0
      %5725 = vmatpush1.bf16.msra.mxu0 0
      %5726 = vmatprep.subr.bf16.mxu0 0
      %5727 = vmatpush1.bf16.msra.mxu0 0
      %5728 = vmatprep.subr.bf16.mxu0 0
      %5729 = vmatpush1.bf16.msra.mxu0 0
      %5730 = vmatprep.subr.bf16.mxu0 0
      %5731 = vmatpush1.bf16.msra.mxu0 0
      %5732 = vmatprep.subr.bf16.mxu0 0
      %5733 = vmatpush1.bf16.msra.mxu0 0
      %5734 = vmatprep.subr.bf16.mxu0 0
      %5735 = vmatpush1.bf16.msra.mxu0 0
      %5736 = vmatprep.subr.bf16.mxu0 0
      %5737 = vmatpush1.bf16.msra.mxu0 0
      %5738 = vmatprep.subr.bf16.mxu0 0
      %5739 = vmatpush1.bf16.msra.mxu0 0
      %5740 = vmatprep.mubr.bf16.mxu0 0
      %5741 = vmatmul.mubr.bf16.gmra.mrb[0].mxu0 0
      %v5742 = vpop.f32.mrb[0].mxu0
      %v5743 = vadd.f32 0.0, %v5742
      %v5744 = vpop.f32.mrb[0].mxu0
      %v5745 = vpop.f32.mrb[0].mxu0
      %v5746 = vadd.f32 0.0, %v5745
      %v5747 = vpop.f32.mrb[0].mxu0
      %5748 = vmatprep.mubr.bf16.mxu0 0
      %5749 = vmatmul.mubr.bf16.gmra.mrb[0].mxu0 %v5596
      %v5750 = vpop.f32.mrb[0].mxu0
      %v5751 = vadd.f32 0.0, %v5750
      %v5752 = vpop.f32.mrb[0].mxu0
      %v5753 = vpop.f32.mrb[0].mxu0
      %v5754 = vadd.f32 0.0, %v5753
      %v5755 = vpop.f32.mrb[0].mxu0
      %5756 = vmatprep.mubr.bf16.mxu0 0
      %5757 = vmatmul.mubr.bf16.gmra.mrb[0].mxu0 %v5597
      %v5758 = vpop.f32.mrb[0].mxu0
      %v5759 = vadd.f32 0.0, %v5758
      %v5760 = vpop.f32.mrb[0].mxu0
      %v5761 = vpop.f32.mrb[0].mxu0
      %v5762 = vadd.f32 0.0, %v5761
      %v5763 = vpop.f32.mrb[0].mxu0
      %5764 = vmatprep.mubr.bf16.mxu0 0
      %5765 = vmatmul.mubr.bf16.gmra.mrb[0].mxu0 %v5598
      %v5766 = vpop.f32.mrb[0].mxu0
      %v5767 = vadd.f32 0.0, %v5766
      %v5768 = vpop.f32.mrb[0].mxu0
      %v5769 = vpop.f32.mrb[0].mxu0
      %v5770 = vadd.f32 0.0, %v5769
      %v5771 = vpop.f32.mrb[0].mxu0
      %5772 = vmatprep.mubr.bf16.mxu0 0
      %5773 = vmatmul.mubr.bf16.gmra.mrb[0].mxu0 %v5599
      %v5774 = vpop.f32.mrb[0].mxu0
      %v5775 = vadd.f32 0.0, %v5774
      %v5776 = vpop.f32.mrb[0].mxu0
      %v5777 = vpop.f32.mrb[0].mxu0
      %v5778 = vadd.f32 0.0, %v5777
      %v5779 = vpop.f32.mrb[0].mxu0
      %5780 = vmatprep.mubr.bf16.mxu0 0
      %5781 = vmatmul.mubr.bf16.gmra.mrb[0].mxu0 %v5600
      %v5782 = vpop.f32.mrb[0].mxu0
      %v5783 = vadd.f32 0.0, %v5782
      %v5784 = vpop.f32.mrb[0].mxu0
      %v5785 = vpop.f32.mrb[0].mxu0
      %v5786 = vadd.f32 0.0, %v5785
      %v5787 = vpop.f32.mrb[0].mxu0
      %5788 = vmatprep.mubr.bf16.mxu0 0
      %5789 = vmatmul.mubr.bf16.gmra.mrb[0].mxu0 %v5601
      %v5790 = vpop.f32.mrb[0].mxu0
      %v5791 = vadd.f32 0.0, %v5790
      %v5792 = vpop.f32.mrb[0].mxu0
      %v5793 = vpop.f32.mrb[0].mxu0
      %v5794 = vadd.f32 0.0, %v5793
      %v5795 = vpop.f32.mrb[0].mxu0
      %5796 = vmatprep.mubr.bf16.mxu0 0
      %5797 = vmatmul.mubr.bf16.gmra.mrb[0].mxu0 %v5602
      %v5798 = vpop.f32.mrb[0].mxu0
      %v5799 = vadd.f32 0.0, %v5798
      %v5800 = vpop.f32.mrb[0].mxu0
      %v5801 = vpop.f32.mrb[0].mxu0
      %v5802 = vadd.f32 0.0, %v5801
      %v5803 = vpop.f32.mrb[0].mxu0
      %5804 = vmatprep.mubr.bf16.mxu0 0
      %5805 = vmatmul.mubr.bf16.gmra.mrb[0].mxu0 %v5603
      %v5806 = vpop.f32.mrb[0].mxu0
      %v5807 = vadd.f32 0.0, %v5806
      %v5808 = vpop.f32.mrb[0].mxu0
      %v5809 = vpop.f32.mrb[0].mxu0
      %v5810 = vadd.f32 0.0, %v5809
      %v5811 = vpop.f32.mrb[0].mxu0
      %5812 = vmatprep.mubr.bf16.mxu0 0
      %5813 = vmatmul.mubr.bf16.gmra.mrb[0].mxu0 %v5604
      %v5814 = vpop.f32.mrb[0].mxu0
      %v5815 = vadd.f32 0.0, %v5814
      %v5816 = vpop.f32.mrb[0].mxu0
      %v5817 = vpop.f32.mrb[0].mxu0
      %v5818 = vadd.f32 0.0, %v5817
      %v5819 = vpop.f32.mrb[0].mxu0
      %5820 = vmatprep.mubr.bf16.mxu0 0
      %5821 = vmatmul.mubr.bf16.gmra.mrb[0].mxu0 %v5605
      %v5822 = vpop.f32.mrb[0].mxu0
      %v5823 = vadd.f32 0.0, %v5822
      %v5824 = vpop.f32.mrb[0].mxu0
      %v5825 = vpop.f32.mrb[0].mxu0
      %v5826 = vadd.f32 0.0, %v5825
      %v5827 = vpop.f32.mrb[0].mxu0
      %5828 = vmatprep.mubr.bf16.mxu0 0
      %5829 = vmatmul.mubr.bf16.gmra.mrb[0].mxu0 %v5606
      %v5830 = vpop.f32.mrb[0].mxu0
      %v5831 = vadd.f32 0.0, %v5830
      %v5832 = vpop.f32.mrb[0].mxu0
      %v5833 = vpop.f32.mrb[0].mxu0
      %v5834 = vadd.f32 0.0, %v5833
      %v5835 = vpop.f32.mrb[0].mxu0
      %5836 = vmatprep.mubr.bf16.mxu0 0
      %5837 = vmatmul.mubr.bf16.gmra.mrb[0].mxu0 %v5607
      %v5838 = vpop.f32.mrb[0].mxu0
      %v5839 = vadd.f32 0.0, %v5838
      %v5840 = vpop.f32.mrb[0].mxu0
      %v5841 = vpop.f32.mrb[0].mxu0
      %v5842 = vadd.f32 0.0, %v5841
      %v5843 = vpop.f32.mrb[0].mxu0
      %5844 = vmatprep.mubr.bf16.mxu0 0
      %5845 = vmatmul.mubr.bf16.gmra.mrb[0].mxu0 %v5608
      %v5846 = vpop.f32.mrb[0].mxu0
      %v5847 = vadd.f32 0.0, %v5846
      %v5848 = vpop.f32.mrb[0].mxu0
      %v5849 = vpop.f32.mrb[0].mxu0
      %v5850 = vadd.f32 0.0, %v5849
      %v5851 = vpop.f32.mrb[0].mxu0
      %5852 = vmatprep.mubr.bf16.mxu0 0
      %5853 = vmatmul.mubr.bf16.gmra.mrb[0].mxu0 %v5609
      %v5854 = vpop.f32.mrb[0].mxu0
      %v5855 = vadd.f32 0.0, %v5854
      %v5856 = vpop.f32.mrb[0].mxu0
      %v5857 = vpop.f32.mrb[0].mxu0
      %v5858 = vadd.f32 0.0, %v5857
      %v5859 = vpop.f32.mrb[0].mxu0
      %5860 = vmatprep.mubr.bf16.mxu0 0
      %5861 = vmatmul.mubr.bf16.gmra.mrb[0].mxu0 %v5610
      %v5862 = vpop.f32.mrb[0].mxu0
      %v5863 = vadd.f32 0.0, %v5862
      %v5864 = vpop.f32.mrb[0].mxu0
      %v5865 = vpop.f32.mrb[0].mxu0
      %v5866 = vadd.f32 0.0, %v5865
      %v5867 = vpop.f32.mrb[0].mxu0
      %5868 = vdwg.mxu0
      %v5885 = vunpack.c.l.b16 %v5628
      %v5886 = vunpack.c.l.b16 %v5629
      %v5887 = vunpack.c.l.b16 %v5630
      %v5888 = vunpack.c.l.b16 %v5631
      %v5889 = vunpack.c.l.b16 %v5632
      %v5890 = vunpack.c.l.b16 %v5633
      %v5891 = vunpack.c.l.b16 %v5634
      %v5892 = vunpack.c.l.b16 %v5635
      %v5893 = vunpack.c.l.b16 %v5636
      %v5894 = vunpack.c.l.b16 %v5637
      %v5895 = vunpack.c.l.b16 %v5638
      %v5896 = vunpack.c.l.b16 %v5639
      %v5897 = vunpack.c.l.b16 %v5640
      %v5898 = vunpack.c.l.b16 %v5641
      %v5899 = vunpack.c.l.b16 %v5642
      %v5900 = vunpack.c.l.b16 %v5643
      %v5901 = vpack.c.b16 %v5886, %v5885
      %v5902 = vpack.c.b16 %v5888, %v5887
      %v5903 = vpack.c.b16 %v5890, %v5889
      %v5904 = vpack.c.b16 %v5892, %v5891
      %v5905 = vpack.c.b16 %v5894, %v5893
      %v5906 = vpack.c.b16 %v5896, %v5895
      %v5907 = vpack.c.b16 %v5898, %v5897
      %v5908 = vpack.c.b16 %v5900, %v5899
      %5917 = vmatprep.subr.bf16.mxu0 0
      %5918 = vmatpush1.bf16.msra.mxu0 %v5901
      %5919 = vmatprep.subr.bf16.mxu0 0
      %5920 = vmatpush1.bf16.msra.mxu0 %v5902
      %5921 = vmatprep.subr.bf16.mxu0 0
      %5922 = vmatpush1.bf16.msra.mxu0 %v5903
      %5923 = vmatprep.subr.bf16.mxu0 0
      %5924 = vmatpush1.bf16.msra.mxu0 %v5904
      %5925 = vmatprep.subr.bf16.mxu0 0
      %5926 = vmatpush1.bf16.msra.mxu0 %v5905
      %5927 = vmatprep.subr.bf16.mxu0 0
      %5928 = vmatpush1.bf16.msra.mxu0 %v5906
      %5929 = vmatprep.subr.bf16.mxu0 0
      %5930 = vmatpush1.bf16.msra.mxu0 %v5907
      %5931 = vmatprep.subr.bf16.mxu0 0
      %5932 = vmatpush1.bf16.msra.mxu0 %v5908
      %5933 = vmatprep.subr.bf16.mxu0 0
      %5934 = vmatpush1.bf16.msra.mxu0 0
      %5935 = vmatprep.subr.bf16.mxu0 0
      %5936 = vmatpush1.bf16.msra.mxu0 0
      %5937 = vmatprep.subr.bf16.mxu0 0
      %5938 = vmatpush1.bf16.msra.mxu0 0
      %5939 = vmatprep.subr.bf16.mxu0 0
      %5940 = vmatpush1.bf16.msra.mxu0 0
      %5941 = vmatprep.subr.bf16.mxu0 0
      %5942 = vmatpush1.bf16.msra.mxu0 0
      %5943 = vmatprep.subr.bf16.mxu0 0
      %5944 = vmatpush1.bf16.msra.mxu0 0
      %5945 = vmatprep.subr.bf16.mxu0 0
      %5946 = vmatpush1.bf16.msra.mxu0 0
      %5947 = vmatprep.subr.bf16.mxu0 0
      %5948 = vmatpush1.bf16.msra.mxu0 0
      %5949 = vmatprep.mubr.bf16.mxu0 0
      %5950 = vmatmul.mubr.bf16.gmra.mrb[0].mxu0 0
      %v5951 = vpop.f32.mrb[0].mxu0
      %v5952 = vadd.f32 %v5743, %v5951
      %v5953 = vpop.f32.mrb[0].mxu0
      %v5954 = vpop.f32.mrb[0].mxu0
      %v5955 = vadd.f32 %v5746, %v5954
      %v5956 = vpop.f32.mrb[0].mxu0
      %5957 = vmatprep.mubr.bf16.mxu0 0
      %5958 = vmatmul.mubr.bf16.gmra.mrb[0].mxu0 %v5580
      %v5959 = vpop.f32.mrb[0].mxu0
      %v5960 = vadd.f32 %v5751, %v5959
      %v5961 = vpop.f32.mrb[0].mxu0
      %v5962 = vpop.f32.mrb[0].mxu0
      %v5963 = vadd.f32 %v5754, %v5962
      %v5964 = vpop.f32.mrb[0].mxu0
      %5965 = vmatprep.mubr.bf16.mxu0 0
      %5966 = vmatmul.mubr.bf16.gmra.mrb[0].mxu0 %v5581
      %v5967 = vpop.f32.mrb[0].mxu0
      %v5968 = vadd.f32 %v5759, %v5967
      %v5969 = vpop.f32.mrb[0].mxu0
      %v5970 = vpop.f32.mrb[0].mxu0
      %v5971 = vadd.f32 %v5762, %v5970
      %v5972 = vpop.f32.mrb[0].mxu0
      %5973 = vmatprep.mubr.bf16.mxu0 0
      %5974 = vmatmul.mubr.bf16.gmra.mrb[0].mxu0 %v5582
      %v5975 = vpop.f32.mrb[0].mxu0
      %v5976 = vadd.f32 %v5767, %v5975
      %v5977 = vpop.f32.mrb[0].mxu0
      %v5978 = vpop.f32.mrb[0].mxu0
      %v5979 = vadd.f32 %v5770, %v5978
      %v5980 = vpop.f32.mrb[0].mxu0
      %5981 = vmatprep.mubr.bf16.mxu0 0
      %5982 = vmatmul.mubr.bf16.gmra.mrb[0].mxu0 %v5583
      %v5983 = vpop.f32.mrb[0].mxu0
      %v5984 = vadd.f32 %v5775, %v5983
      %v5985 = vpop.f32.mrb[0].mxu0
      %v5986 = vpop.f32.mrb[0].mxu0
      %v5987 = vadd.f32 %v5778, %v5986
      %v5988 = vpop.f32.mrb[0].mxu0
      %5989 = vmatprep.mubr.bf16.mxu0 0
      %5990 = vmatmul.mubr.bf16.gmra.mrb[0].mxu0 %v5584
      %v5991 = vpop.f32.mrb[0].mxu0
      %v5992 = vadd.f32 %v5783, %v5991
      %v5993 = vpop.f32.mrb[0].mxu0
      %v5994 = vpop.f32.mrb[0].mxu0
      %v5995 = vadd.f32 %v5786, %v5994
      %v5996 = vpop.f32.mrb[0].mxu0
      %5997 = vmatprep.mubr.bf16.mxu0 0
      %5998 = vmatmul.mubr.bf16.gmra.mrb[0].mxu0 %v5585
      %v5999 = vpop.f32.mrb[0].mxu0
      %v6000 = vadd.f32 %v5791, %v5999
      %v6001 = vpop.f32.mrb[0].mxu0
      %v6002 = vpop.f32.mrb[0].mxu0
      %v6003 = vadd.f32 %v5794, %v6002
      %v6004 = vpop.f32.mrb[0].mxu0
      %6005 = vmatprep.mubr.bf16.mxu0 0
      %6006 = vmatmul.mubr.bf16.gmra.mrb[0].mxu0 %v5586
      %v6007 = vpop.f32.mrb[0].mxu0
      %v6008 = vadd.f32 %v5799, %v6007
      %v6009 = vpop.f32.mrb[0].mxu0
      %v6010 = vpop.f32.mrb[0].mxu0
      %v6011 = vadd.f32 %v5802, %v6010
      %v6012 = vpop.f32.mrb[0].mxu0
      %6013 = vmatprep.mubr.bf16.mxu0 0
      %6014 = vmatmul.mubr.bf16.gmra.mrb[0].mxu0 %v5587
      %v6015 = vpop.f32.mrb[0].mxu0
      %v6016 = vadd.f32 %v5807, %v6015
      %v6017 = vpop.f32.mrb[0].mxu0
      %v6018 = vpop.f32.mrb[0].mxu0
      %v6019 = vadd.f32 %v5810, %v6018
      %v6020 = vpop.f32.mrb[0].mxu0
      %6021 = vmatprep.mubr.bf16.mxu0 0
      %6022 = vmatmul.mubr.bf16.gmra.mrb[0].mxu0 %v5588
      %v6023 = vpop.f32.mrb[0].mxu0
      %v6024 = vadd.f32 %v5815, %v6023
      %v6025 = vpop.f32.mrb[0].mxu0
      %v6026 = vpop.f32.mrb[0].mxu0
      %v6027 = vadd.f32 %v5818, %v6026
      %v6028 = vpop.f32.mrb[0].mxu0
      %6029 = vmatprep.mubr.bf16.mxu0 0
      %6030 = vmatmul.mubr.bf16.gmra.mrb[0].mxu0 %v5589
      %v6031 = vpop.f32.mrb[0].mxu0
      %v6032 = vadd.f32 %v5823, %v6031
      %v6033 = vpop.f32.mrb[0].mxu0
      %v6034 = vpop.f32.mrb[0].mxu0
      %v6035 = vadd.f32 %v5826, %v6034
      %v6036 = vpop.f32.mrb[0].mxu0
      %6037 = vmatprep.mubr.bf16.mxu0 0
      %6038 = vmatmul.mubr.bf16.gmra.mrb[0].mxu0 %v5590
      %v6039 = vpop.f32.mrb[0].mxu0
      %v6040 = vadd.f32 %v5831, %v6039
      %v6041 = vpop.f32.mrb[0].mxu0
      %v6042 = vpop.f32.mrb[0].mxu0
      %v6043 = vadd.f32 %v5834, %v6042
      %v6044 = vpop.f32.mrb[0].mxu0
      %6045 = vmatprep.mubr.bf16.mxu0 0
      %6046 = vmatmul.mubr.bf16.gmra.mrb[0].mxu0 %v5591
      %v6047 = vpop.f32.mrb[0].mxu0
      %v6048 = vadd.f32 %v5839, %v6047
      %v6049 = vpop.f32.mrb[0].mxu0
      %v6050 = vpop.f32.mrb[0].mxu0
      %v6051 = vadd.f32 %v5842, %v6050
      %v6052 = vpop.f32.mrb[0].mxu0
      %6053 = vmatprep.mubr.bf16.mxu0 0
      %6054 = vmatmul.mubr.bf16.gmra.mrb[0].mxu0 %v5592
      %v6055 = vpop.f32.mrb[0].mxu0
      %v6056 = vadd.f32 %v5847, %v6055
      %v6057 = vpop.f32.mrb[0].mxu0
      %v6058 = vpop.f32.mrb[0].mxu0
      %v6059 = vadd.f32 %v5850, %v6058
      %v6060 = vpop.f32.mrb[0].mxu0
      %6061 = vmatprep.mubr.bf16.mxu0 0
      %6062 = vmatmul.mubr.bf16.gmra.mrb[0].mxu0 %v5593
      %v6063 = vpop.f32.mrb[0].mxu0
      %v6064 = vadd.f32 %v5855, %v6063
      %v6065 = vpop.f32.mrb[0].mxu0
      %v6066 = vpop.f32.mrb[0].mxu0
      %v6067 = vadd.f32 %v5858, %v6066
      %v6068 = vpop.f32.mrb[0].mxu0
      %6069 = vmatprep.mubr.bf16.mxu0 0
      %6070 = vmatmul.mubr.bf16.gmra.mrb[0].mxu0 %v5594
      %v6071 = vpop.f32.mrb[0].mxu0
      %v6072 = vadd.f32 %v5863, %v6071
      %v6073 = vpop.f32.mrb[0].mxu0
      %v6074 = vpop.f32.mrb[0].mxu0
      %v6075 = vadd.f32 %v5866, %v6074
      %v6076 = vpop.f32.mrb[0].mxu0
      %6077 = vdwg.mxu0
      %v6078 = vld [vmem:[%s39 + $0x80] sm:$0xf]
      %v6079 = vld [vmem:[%s39 + $0x84] sm:$0xf]
      %v6080 = vld [vmem:[%s39 + $0x88] sm:$0xf]
      %v6081 = vld [vmem:[%s39 + $0x8c] sm:$0xf]
      %v6082 = vld [vmem:[%s39 + $0x90] sm:$0xf]
      %v6083 = vld [vmem:[%s39 + $0x94] sm:$0xf]
      %v6084 = vld [vmem:[%s39 + $0x98] sm:$0xf]
      %v6085 = vld [vmem:[%s39 + $0x9c] sm:$0xf]
      %v6086 = vld [vmem:[%s39 + $0xa0] sm:$0xf]
      %v6087 = vld [vmem:[%s39 + $0xa4] sm:$0xf]
      %v6088 = vld [vmem:[%s39 + $0xa8] sm:$0xf]
      %v6089 = vld [vmem:[%s39 + $0xac] sm:$0xf]
      %v6090 = vld [vmem:[%s39 + $0xb0] sm:$0xf]
      %v6091 = vld [vmem:[%s39 + $0xb4] sm:$0xf]
      %v6092 = vld [vmem:[%s39 + $0xb8] sm:$0xf]
      %v6093 = vld [vmem:[%s39 + $0xbc] sm:$0xf]
      %v6110 = vunpack.c.l.b16 %v6078
      %v6111 = vunpack.c.l.b16 %v6079
      %v6112 = vunpack.c.l.b16 %v6080
      %v6113 = vunpack.c.l.b16 %v6081
      %v6114 = vunpack.c.l.b16 %v6082
      %v6115 = vunpack.c.l.b16 %v6083
      %v6116 = vunpack.c.l.b16 %v6084
      %v6117 = vunpack.c.l.b16 %v6085
      %v6118 = vunpack.c.l.b16 %v6086
      %v6119 = vunpack.c.l.b16 %v6087
      %v6120 = vunpack.c.l.b16 %v6088
      %v6121 = vunpack.c.l.b16 %v6089
      %v6122 = vunpack.c.l.b16 %v6090
      %v6123 = vunpack.c.l.b16 %v6091
      %v6124 = vunpack.c.l.b16 %v6092
      %v6125 = vunpack.c.l.b16 %v6093
      %v6126 = vpack.c.b16 %v6111, %v6110
      %v6127 = vpack.c.b16 %v6113, %v6112
      %v6128 = vpack.c.b16 %v6115, %v6114
      %v6129 = vpack.c.b16 %v6117, %v6116
      %v6130 = vpack.c.b16 %v6119, %v6118
      %v6131 = vpack.c.b16 %v6121, %v6120
      %v6132 = vpack.c.b16 %v6123, %v6122
      %v6133 = vpack.c.b16 %v6125, %v6124
      %6142 = vmatprep.subr.bf16.mxu0 0
      %6143 = vmatpush1.bf16.msra.mxu0 %v6126
      %6144 = vmatprep.subr.bf16.mxu0 0
      %6145 = vmatpush1.bf16.msra.mxu0 %v6127
      %6146 = vmatprep.subr.bf16.mxu0 0
      %6147 = vmatpush1.bf16.msra.mxu0 %v6128
      %6148 = vmatprep.subr.bf16.mxu0 0
      %6149 = vmatpush1.bf16.msra.mxu0 %v6129
      %6150 = vmatprep.subr.bf16.mxu0 0
      %6151 = vmatpush1.bf16.msra.mxu0 %v6130
      %6152 = vmatprep.subr.bf16.mxu0 0
      %6153 = vmatpush1.bf16.msra.mxu0 %v6131
      %6154 = vmatprep.subr.bf16.mxu0 0
      %6155 = vmatpush1.bf16.msra.mxu0 %v6132
      %6156 = vmatprep.subr.bf16.mxu0 0
      %6157 = vmatpush1.bf16.msra.mxu0 %v6133
      %6158 = vmatprep.subr.bf16.mxu0 0
      %6159 = vmatpush1.bf16.msra.mxu0 0
      %6160 = vmatprep.subr.bf16.mxu0 0
      %6161 = vmatpush1.bf16.msra.mxu0 0
      %6162 = vmatprep.subr.bf16.mxu0 0
      %6163 = vmatpush1.bf16.msra.mxu0 0
      %6164 = vmatprep.subr.bf16.mxu0 0
      %6165 = vmatpush1.bf16.msra.mxu0 0
      %6166 = vmatprep.subr.bf16.mxu0 0
      %6167 = vmatpush1.bf16.msra.mxu0 0
      %6168 = vmatprep.subr.bf16.mxu0 0
      %6169 = vmatpush1.bf16.msra.mxu0 0
      %6170 = vmatprep.subr.bf16.mxu0 0
      %6171 = vmatpush1.bf16.msra.mxu0 0
      %6172 = vmatprep.subr.bf16.mxu0 0
      %6173 = vmatpush1.bf16.msra.mxu0 0
      %6174 = vmatprep.mubr.bf16.mxu0 0
      %6175 = vmatmul.mubr.bf16.gmra.mrb[0].mxu0 0
      %v6176 = vpop.f32.mrb[0].mxu0
      %v6177 = vadd.f32 0.0, %v6176
      %v6178 = vpop.f32.mrb[0].mxu0
      %v6179 = vpop.f32.mrb[0].mxu0
      %v6180 = vadd.f32 0.0, %v6179
      %v6181 = vpop.f32.mrb[0].mxu0
      %6182 = vmatprep.mubr.bf16.mxu0 0
      %6183 = vmatmul.mubr.bf16.gmra.mrb[0].mxu0 %v5612
      %v6184 = vpop.f32.mrb[0].mxu0
      %v6185 = vadd.f32 0.0, %v6184
      %v6186 = vpop.f32.mrb[0].mxu0
      %v6187 = vpop.f32.mrb[0].mxu0
      %v6188 = vadd.f32 0.0, %v6187
      %v6189 = vpop.f32.mrb[0].mxu0
      %6190 = vmatprep.mubr.bf16.mxu0 0
      %6191 = vmatmul.mubr.bf16.gmra.mrb[0].mxu0 %v5613
      %v6192 = vpop.f32.mrb[0].mxu0
      %v6193 = vadd.f32 0.0, %v6192
      %v6194 = vpop.f32.mrb[0].mxu0
      %v6195 = vpop.f32.mrb[0].mxu0
      %v6196 = vadd.f32 0.0, %v6195
      %v6197 = vpop.f32.mrb[0].mxu0
      %6198 = vmatprep.mubr.bf16.mxu0 0
      %6199 = vmatmul.mubr.bf16.gmra.mrb[0].mxu0 %v5614
      %v6200 = vpop.f32.mrb[0].mxu0
      %v6201 = vadd.f32 0.0, %v6200
      %v6202 = vpop.f32.mrb[0].mxu0
      %v6203 = vpop.f32.mrb[0].mxu0
      %v6204 = vadd.f32 0.0, %v6203
      %v6205 = vpop.f32.mrb[0].mxu0
      %6206 = vmatprep.mubr.bf16.mxu0 0
      %6207 = vmatmul.mubr.bf16.gmra.mrb[0].mxu0 %v5615
      %v6208 = vpop.f32.mrb[0].mxu0
      %v6209 = vadd.f32 0.0, %v6208
      %v6210 = vpop.f32.mrb[0].mxu0
      %v6211 = vpop.f32.mrb[0].mxu0
      %v6212 = vadd.f32 0.0, %v6211
      %v6213 = vpop.f32.mrb[0].mxu0
      %6214 = vmatprep.mubr.bf16.mxu0 0
      %6215 = vmatmul.mubr.bf16.gmra.mrb[0].mxu0 %v5616
      %v6216 = vpop.f32.mrb[0].mxu0
      %v6217 = vadd.f32 0.0, %v6216
      %v6218 = vpop.f32.mrb[0].mxu0
      %v6219 = vpop.f32.mrb[0].mxu0
      %v6220 = vadd.f32 0.0, %v6219
      %v6221 = vpop.f32.mrb[0].mxu0
      %6222 = vmatprep.mubr.bf16.mxu0 0
      %6223 = vmatmul.mubr.bf16.gmra.mrb[0].mxu0 %v5617
      %v6224 = vpop.f32.mrb[0].mxu0
      %v6225 = vadd.f32 0.0, %v6224
      %v6226 = vpop.f32.mrb[0].mxu0
      %v6227 = vpop.f32.mrb[0].mxu0
      %v6228 = vadd.f32 0.0, %v6227
      %v6229 = vpop.f32.mrb[0].mxu0
      %6230 = vmatprep.mubr.bf16.mxu0 0
      %6231 = vmatmul.mubr.bf16.gmra.mrb[0].mxu0 %v5618
      %v6232 = vpop.f32.mrb[0].mxu0
      %v6233 = vadd.f32 0.0, %v6232
      %v6234 = vpop.f32.mrb[0].mxu0
      %v6235 = vpop.f32.mrb[0].mxu0
      %v6236 = vadd.f32 0.0, %v6235
      %v6237 = vpop.f32.mrb[0].mxu0
      %6238 = vmatprep.mubr.bf16.mxu0 0
      %6239 = vmatmul.mubr.bf16.gmra.mrb[0].mxu0 %v5619
      %v6240 = vpop.f32.mrb[0].mxu0
      %v6241 = vadd.f32 0.0, %v6240
      %v6242 = vpop.f32.mrb[0].mxu0
      %v6243 = vpop.f32.mrb[0].mxu0
      %v6244 = vadd.f32 0.0, %v6243
      %v6245 = vpop.f32.mrb[0].mxu0
      %6246 = vmatprep.mubr.bf16.mxu0 0
      %6247 = vmatmul.mubr.bf16.gmra.mrb[0].mxu0 %v5620
      %v6248 = vpop.f32.mrb[0].mxu0
      %v6249 = vadd.f32 0.0, %v6248
      %v6250 = vpop.f32.mrb[0].mxu0
      %v6251 = vpop.f32.mrb[0].mxu0
      %v6252 = vadd.f32 0.0, %v6251
      %v6253 = vpop.f32.mrb[0].mxu0
      %6254 = vmatprep.mubr.bf16.mxu0 0
      %6255 = vmatmul.mubr.bf16.gmra.mrb[0].mxu0 %v5621
      %v6256 = vpop.f32.mrb[0].mxu0
      %v6257 = vadd.f32 0.0, %v6256
      %v6258 = vpop.f32.mrb[0].mxu0
      %v6259 = vpop.f32.mrb[0].mxu0
      %v6260 = vadd.f32 0.0, %v6259
      %v6261 = vpop.f32.mrb[0].mxu0
      %6262 = vmatprep.mubr.bf16.mxu0 0
      %6263 = vmatmul.mubr.bf16.gmra.mrb[0].mxu0 %v5622
      %v6264 = vpop.f32.mrb[0].mxu0
      %v6265 = vadd.f32 0.0, %v6264
      %v6266 = vpop.f32.mrb[0].mxu0
      %v6267 = vpop.f32.mrb[0].mxu0
      %v6268 = vadd.f32 0.0, %v6267
      %v6269 = vpop.f32.mrb[0].mxu0
      %6270 = vmatprep.mubr.bf16.mxu0 0
      %6271 = vmatmul.mubr.bf16.gmra.mrb[0].mxu0 %v5623
      %v6272 = vpop.f32.mrb[0].mxu0
      %v6273 = vadd.f32 0.0, %v6272
      %v6274 = vpop.f32.mrb[0].mxu0
      %v6275 = vpop.f32.mrb[0].mxu0
      %v6276 = vadd.f32 0.0, %v6275
      %v6277 = vpop.f32.mrb[0].mxu0
      %6278 = vmatprep.mubr.bf16.mxu0 0
      %6279 = vmatmul.mubr.bf16.gmra.mrb[0].mxu0 %v5624
      %v6280 = vpop.f32.mrb[0].mxu0
      %v6281 = vadd.f32 0.0, %v6280
      %v6282 = vpop.f32.mrb[0].mxu0
      %v6283 = vpop.f32.mrb[0].mxu0
      %v6284 = vadd.f32 0.0, %v6283
      %v6285 = vpop.f32.mrb[0].mxu0
      %6286 = vmatprep.mubr.bf16.mxu0 0
      %6287 = vmatmul.mubr.bf16.gmra.mrb[0].mxu0 %v5625
      %v6288 = vpop.f32.mrb[0].mxu0
      %v6289 = vadd.f32 0.0, %v6288
      %v6290 = vpop.f32.mrb[0].mxu0
      %v6291 = vpop.f32.mrb[0].mxu0
      %v6292 = vadd.f32 0.0, %v6291
      %v6293 = vpop.f32.mrb[0].mxu0
      %6294 = vmatprep.mubr.bf16.mxu0 0
      %6295 = vmatmul.mubr.bf16.gmra.mrb[0].mxu0 %v5626
      %v6296 = vpop.f32.mrb[0].mxu0
      %v6297 = vadd.f32 0.0, %v6296
      %v6298 = vpop.f32.mrb[0].mxu0
      %v6299 = vpop.f32.mrb[0].mxu0
      %v6300 = vadd.f32 0.0, %v6299
      %v6301 = vpop.f32.mrb[0].mxu0
      %6302 = vdwg.mxu0
      %v6303 = vadd.f32 %v5952, %v6177
      %v6304 = vadd.f32 %v5955, %v6180
      %v6305 = vadd.f32 %v5960, %v6185
      %v6306 = vadd.f32 %v5963, %v6188
      %v6307 = vadd.f32 %v5968, %v6193
      %v6308 = vadd.f32 %v5971, %v6196
      %v6309 = vadd.f32 %v5976, %v6201
      %v6310 = vadd.f32 %v5979, %v6204
      %v6311 = vadd.f32 %v5984, %v6209
      %v6312 = vadd.f32 %v5987, %v6212
      %v6313 = vadd.f32 %v5992, %v6217
      %v6314 = vadd.f32 %v5995, %v6220
      %v6315 = vadd.f32 %v6000, %v6225
      %v6316 = vadd.f32 %v6003, %v6228
      %v6317 = vadd.f32 %v6008, %v6233
      %v6318 = vadd.f32 %v6011, %v6236
      %v6319 = vadd.f32 %v6016, %v6241
      %v6320 = vadd.f32 %v6019, %v6244
      %v6321 = vadd.f32 %v6024, %v6249
      %v6322 = vadd.f32 %v6027, %v6252
      %v6323 = vadd.f32 %v6032, %v6257
      %v6324 = vadd.f32 %v6035, %v6260
      %v6325 = vadd.f32 %v6040, %v6265
      %v6326 = vadd.f32 %v6043, %v6268
      %v6327 = vadd.f32 %v6048, %v6273
      %v6328 = vadd.f32 %v6051, %v6276
      %v6329 = vadd.f32 %v6056, %v6281
      %v6330 = vadd.f32 %v6059, %v6284
      %v6331 = vadd.f32 %v6064, %v6289
      %v6332 = vadd.f32 %v6067, %v6292
      %v6333 = vadd.f32 %v6072, %v6297
      %v6334 = vadd.f32 %v6075, %v6300
      %v6335 = vld [vmem:[%s39 + $0xc0] sm:$0xf]
      %v6336 = vld [vmem:[%s39 + $0xc4] sm:$0xf]
      %v6337 = vld [vmem:[%s39 + $0xc8] sm:$0xf]
      %v6338 = vld [vmem:[%s39 + $0xcc] sm:$0xf]
      %v6339 = vld [vmem:[%s39 + $0xd0] sm:$0xf]
      %v6340 = vld [vmem:[%s39 + $0xd4] sm:$0xf]
      %v6341 = vld [vmem:[%s39 + $0xd8] sm:$0xf]
      %v6342 = vld [vmem:[%s39 + $0xdc] sm:$0xf]
      %v6343 = vld [vmem:[%s39 + $0xe0] sm:$0xf]
      %v6344 = vld [vmem:[%s39 + $0xe4] sm:$0xf]
      %v6345 = vld [vmem:[%s39 + $0xe8] sm:$0xf]
      %v6346 = vld [vmem:[%s39 + $0xec] sm:$0xf]
      %v6347 = vld [vmem:[%s39 + $0xf0] sm:$0xf]
      %v6348 = vld [vmem:[%s39 + $0xf4] sm:$0xf]
      %v6349 = vld [vmem:[%s39 + $0xf8] sm:$0xf]
      %v6350 = vld [vmem:[%s39 + $0xfc] sm:$0xf]
      %v6367 = vunpack.c.l.b16 %v6335
      %v6368 = vunpack.c.l.b16 %v6336
      %v6369 = vunpack.c.l.b16 %v6337
      %v6370 = vunpack.c.l.b16 %v6338
      %v6371 = vunpack.c.l.b16 %v6339
      %v6372 = vunpack.c.l.b16 %v6340
      %v6373 = vunpack.c.l.b16 %v6341
      %v6374 = vunpack.c.l.b16 %v6342
      %v6375 = vunpack.c.l.b16 %v6343
      %v6376 = vunpack.c.l.b16 %v6344
      %v6377 = vunpack.c.l.b16 %v6345
      %v6378 = vunpack.c.l.b16 %v6346
      %v6379 = vunpack.c.l.b16 %v6347
      %v6380 = vunpack.c.l.b16 %v6348
      %v6381 = vunpack.c.l.b16 %v6349
      %v6382 = vunpack.c.l.b16 %v6350
      %v6383 = vpack.c.b16 %v6368, %v6367
      %v6384 = vpack.c.b16 %v6370, %v6369
      %v6385 = vpack.c.b16 %v6372, %v6371
      %v6386 = vpack.c.b16 %v6374, %v6373
      %v6387 = vpack.c.b16 %v6376, %v6375
      %v6388 = vpack.c.b16 %v6378, %v6377
      %v6389 = vpack.c.b16 %v6380, %v6379
      %v6390 = vpack.c.b16 %v6382, %v6381
      %6399 = vmatprep.subr.bf16.mxu0 0
      %6400 = vmatpush1.bf16.msra.mxu0 %v6383
      %6401 = vmatprep.subr.bf16.mxu0 0
      %6402 = vmatpush1.bf16.msra.mxu0 %v6384
      %6403 = vmatprep.subr.bf16.mxu0 0
      %6404 = vmatpush1.bf16.msra.mxu0 %v6385
      %6405 = vmatprep.subr.bf16.mxu0 0
      %6406 = vmatpush1.bf16.msra.mxu0 %v6386
      %6407 = vmatprep.subr.bf16.mxu0 0
      %6408 = vmatpush1.bf16.msra.mxu0 %v6387
      %6409 = vmatprep.subr.bf16.mxu0 0
      %6410 = vmatpush1.bf16.msra.mxu0 %v6388
      %6411 = vmatprep.subr.bf16.mxu0 0
      %6412 = vmatpush1.bf16.msra.mxu0 %v6389
      %6413 = vmatprep.subr.bf16.mxu0 0
      %6414 = vmatpush1.bf16.msra.mxu0 %v6390
      %6415 = vmatprep.subr.bf16.mxu0 0
      %6416 = vmatpush1.bf16.msra.mxu0 0
      %6417 = vmatprep.subr.bf16.mxu0 0
      %6418 = vmatpush1.bf16.msra.mxu0 0
      %6419 = vmatprep.subr.bf16.mxu0 0
      %6420 = vmatpush1.bf16.msra.mxu0 0
      %6421 = vmatprep.subr.bf16.mxu0 0
      %6422 = vmatpush1.bf16.msra.mxu0 0
      %6423 = vmatprep.subr.bf16.mxu0 0
      %6424 = vmatpush1.bf16.msra.mxu0 0
      %6425 = vmatprep.subr.bf16.mxu0 0
      %6426 = vmatpush1.bf16.msra.mxu0 0
      %6427 = vmatprep.subr.bf16.mxu0 0
      %6428 = vmatpush1.bf16.msra.mxu0 0
      %6429 = vmatprep.subr.bf16.mxu0 0
      %6430 = vmatpush1.bf16.msra.mxu0 0
      %6431 = vmatprep.mubr.bf16.mxu0 0
      %6432 = vmatmul.mubr.bf16.gmra.mrb[0].mxu0 %v5580
      %v6433 = vpop.f32.mrb[0].mxu0
      %v6434 = vadd.f32 0.0, %v6433
      %v6435 = vpop.f32.mrb[0].mxu0
      %v6436 = vpop.f32.mrb[0].mxu0
      %v6437 = vadd.f32 0.0, %v6436
      %v6438 = vpop.f32.mrb[0].mxu0
      %6439 = vmatprep.mubr.bf16.mxu0 0
      %6440 = vmatmul.mubr.bf16.gmra.mrb[0].mxu0 %v5581
      %v6441 = vpop.f32.mrb[0].mxu0
      %v6442 = vadd.f32 0.0, %v6441
      %v6443 = vpop.f32.mrb[0].mxu0
      %v6444 = vpop.f32.mrb[0].mxu0
      %v6445 = vadd.f32 0.0, %v6444
      %v6446 = vpop.f32.mrb[0].mxu0
      %6447 = vmatprep.mubr.bf16.mxu0 0
      %6448 = vmatmul.mubr.bf16.gmra.mrb[0].mxu0 %v5582
      %v6449 = vpop.f32.mrb[0].mxu0
      %v6450 = vadd.f32 0.0, %v6449
      %v6451 = vpop.f32.mrb[0].mxu0
      %v6452 = vpop.f32.mrb[0].mxu0
      %v6453 = vadd.f32 0.0, %v6452
      %v6454 = vpop.f32.mrb[0].mxu0
      %6455 = vmatprep.mubr.bf16.mxu0 0
      %6456 = vmatmul.mubr.bf16.gmra.mrb[0].mxu0 %v5583
      %v6457 = vpop.f32.mrb[0].mxu0
      %v6458 = vadd.f32 0.0, %v6457
      %v6459 = vpop.f32.mrb[0].mxu0
      %v6460 = vpop.f32.mrb[0].mxu0
      %v6461 = vadd.f32 0.0, %v6460
      %v6462 = vpop.f32.mrb[0].mxu0
      %6463 = vmatprep.mubr.bf16.mxu0 0
      %6464 = vmatmul.mubr.bf16.gmra.mrb[0].mxu0 %v5584
      %v6465 = vpop.f32.mrb[0].mxu0
      %v6466 = vadd.f32 0.0, %v6465
      %v6467 = vpop.f32.mrb[0].mxu0
      %v6468 = vpop.f32.mrb[0].mxu0
      %v6469 = vadd.f32 0.0, %v6468
      %v6470 = vpop.f32.mrb[0].mxu0
      %6471 = vmatprep.mubr.bf16.mxu0 0
      %6472 = vmatmul.mubr.bf16.gmra.mrb[0].mxu0 %v5585
      %v6473 = vpop.f32.mrb[0].mxu0
      %v6474 = vadd.f32 0.0, %v6473
      %v6475 = vpop.f32.mrb[0].mxu0
      %v6476 = vpop.f32.mrb[0].mxu0
      %v6477 = vadd.f32 0.0, %v6476
      %v6478 = vpop.f32.mrb[0].mxu0
      %6479 = vmatprep.mubr.bf16.mxu0 0
      %6480 = vmatmul.mubr.bf16.gmra.mrb[0].mxu0 %v5586
      %v6481 = vpop.f32.mrb[0].mxu0
      %v6482 = vadd.f32 0.0, %v6481
      %v6483 = vpop.f32.mrb[0].mxu0
      %v6484 = vpop.f32.mrb[0].mxu0
      %v6485 = vadd.f32 0.0, %v6484
      %v6486 = vpop.f32.mrb[0].mxu0
      %6487 = vmatprep.mubr.bf16.mxu0 0
      %6488 = vmatmul.mubr.bf16.gmra.mrb[0].mxu0 %v5587
      %v6489 = vpop.f32.mrb[0].mxu0
      %v6490 = vadd.f32 0.0, %v6489
      %v6491 = vpop.f32.mrb[0].mxu0
      %v6492 = vpop.f32.mrb[0].mxu0
      %v6493 = vadd.f32 0.0, %v6492
      %v6494 = vpop.f32.mrb[0].mxu0
      %6495 = vmatprep.mubr.bf16.mxu0 0
      %6496 = vmatmul.mubr.bf16.gmra.mrb[0].mxu0 %v5588
      %v6497 = vpop.f32.mrb[0].mxu0
      %v6498 = vadd.f32 0.0, %v6497
      %v6499 = vpop.f32.mrb[0].mxu0
      %v6500 = vpop.f32.mrb[0].mxu0
      %v6501 = vadd.f32 0.0, %v6500
      %v6502 = vpop.f32.mrb[0].mxu0
      %6503 = vmatprep.mubr.bf16.mxu0 0
      %6504 = vmatmul.mubr.bf16.gmra.mrb[0].mxu0 %v5589
      %v6505 = vpop.f32.mrb[0].mxu0
      %v6506 = vadd.f32 0.0, %v6505
      %v6507 = vpop.f32.mrb[0].mxu0
      %v6508 = vpop.f32.mrb[0].mxu0
      %v6509 = vadd.f32 0.0, %v6508
      %v6510 = vpop.f32.mrb[0].mxu0
      %6511 = vmatprep.mubr.bf16.mxu0 0
      %6512 = vmatmul.mubr.bf16.gmra.mrb[0].mxu0 %v5590
      %v6513 = vpop.f32.mrb[0].mxu0
      %v6514 = vadd.f32 0.0, %v6513
      %v6515 = vpop.f32.mrb[0].mxu0
      %v6516 = vpop.f32.mrb[0].mxu0
      %v6517 = vadd.f32 0.0, %v6516
      %v6518 = vpop.f32.mrb[0].mxu0
      %6519 = vmatprep.mubr.bf16.mxu0 0
      %6520 = vmatmul.mubr.bf16.gmra.mrb[0].mxu0 %v5591
      %v6521 = vpop.f32.mrb[0].mxu0
      %v6522 = vadd.f32 0.0, %v6521
      %v6523 = vpop.f32.mrb[0].mxu0
      %v6524 = vpop.f32.mrb[0].mxu0
      %v6525 = vadd.f32 0.0, %v6524
      %v6526 = vpop.f32.mrb[0].mxu0
      %6527 = vmatprep.mubr.bf16.mxu0 0
      %6528 = vmatmul.mubr.bf16.gmra.mrb[0].mxu0 %v5592
      %v6529 = vpop.f32.mrb[0].mxu0
      %v6530 = vadd.f32 0.0, %v6529
      %v6531 = vpop.f32.mrb[0].mxu0
      %v6532 = vpop.f32.mrb[0].mxu0
      %v6533 = vadd.f32 0.0, %v6532
      %v6534 = vpop.f32.mrb[0].mxu0
      %6535 = vmatprep.mubr.bf16.mxu0 0
      %6536 = vmatmul.mubr.bf16.gmra.mrb[0].mxu0 %v5593
      %v6537 = vpop.f32.mrb[0].mxu0
      %v6538 = vadd.f32 0.0, %v6537
      %v6539 = vpop.f32.mrb[0].mxu0
      %v6540 = vpop.f32.mrb[0].mxu0
      %v6541 = vadd.f32 0.0, %v6540
      %v6542 = vpop.f32.mrb[0].mxu0
      %6543 = vmatprep.mubr.bf16.mxu0 0
      %6544 = vmatmul.mubr.bf16.gmra.mrb[0].mxu0 %v5594
      %v6545 = vpop.f32.mrb[0].mxu0
      %v6546 = vadd.f32 0.0, %v6545
      %v6547 = vpop.f32.mrb[0].mxu0
      %v6548 = vpop.f32.mrb[0].mxu0
      %v6549 = vadd.f32 0.0, %v6548
      %v6550 = vpop.f32.mrb[0].mxu0
      %6551 = vmatprep.mubr.bf16.mxu0 0
      %6552 = vmatmul.mubr.bf16.gmra.mrb[0].mxu0 %v5595
      %v6553 = vpop.f32.mrb[0].mxu0
      %v6554 = vadd.f32 0.0, %v6553
      %v6555 = vpop.f32.mrb[0].mxu0
      %v6556 = vpop.f32.mrb[0].mxu0
      %v6557 = vadd.f32 0.0, %v6556
      %v6558 = vpop.f32.mrb[0].mxu0
      %6559 = vdwg.mxu0
      %v6560 = vadd.f32 %v6303, %v6434
      %v6561 = vadd.f32 %v6304, %v6437
      %v6562 = vadd.f32 %v6305, %v6442
      %v6563 = vadd.f32 %v6306, %v6445
      %v6564 = vadd.f32 %v6307, %v6450
      %v6565 = vadd.f32 %v6308, %v6453
      %v6566 = vadd.f32 %v6309, %v6458
      %v6567 = vadd.f32 %v6310, %v6461
      %v6568 = vadd.f32 %v6311, %v6466
      %v6569 = vadd.f32 %v6312, %v6469
      %v6570 = vadd.f32 %v6313, %v6474
      %v6571 = vadd.f32 %v6314, %v6477
      %v6572 = vadd.f32 %v6315, %v6482
      %v6573 = vadd.f32 %v6316, %v6485
      %v6574 = vadd.f32 %v6317, %v6490
      %v6575 = vadd.f32 %v6318, %v6493
      %v6576 = vadd.f32 %v6319, %v6498
      %v6577 = vadd.f32 %v6320, %v6501
      %v6578 = vadd.f32 %v6321, %v6506
      %v6579 = vadd.f32 %v6322, %v6509
      %v6580 = vadd.f32 %v6323, %v6514
      %v6581 = vadd.f32 %v6324, %v6517
      %v6582 = vadd.f32 %v6325, %v6522
      %v6583 = vadd.f32 %v6326, %v6525
      %v6584 = vadd.f32 %v6327, %v6530
      %v6585 = vadd.f32 %v6328, %v6533
      %v6586 = vadd.f32 %v6329, %v6538
      %v6587 = vadd.f32 %v6330, %v6541
      %v6588 = vadd.f32 %v6331, %v6546
      %v6589 = vadd.f32 %v6332, %v6549
      %v6590 = vadd.f32 %v6333, %v6554
      %v6591 = vadd.f32 %v6334, %v6557
      %v6592 = vld [vmem:[%s39 + $0x100] sm:$0xf]
      %v6593 = vld [vmem:[%s39 + $0x104] sm:$0xf]
      %v6594 = vld [vmem:[%s39 + $0x108] sm:$0xf]
      %v6595 = vld [vmem:[%s39 + $0x10c] sm:$0xf]
      %v6596 = vld [vmem:[%s39 + $0x110] sm:$0xf]
      %v6597 = vld [vmem:[%s39 + $0x114] sm:$0xf]
      %v6598 = vld [vmem:[%s39 + $0x118] sm:$0xf]
      %v6599 = vld [vmem:[%s39 + $0x11c] sm:$0xf]
      %v6600 = vld [vmem:[%s39 + $0x120] sm:$0xf]
      %v6601 = vld [vmem:[%s39 + $0x124] sm:$0xf]
      %v6602 = vld [vmem:[%s39 + $0x128] sm:$0xf]
      %v6603 = vld [vmem:[%s39 + $0x12c] sm:$0xf]
      %v6604 = vld [vmem:[%s39 + $0x130] sm:$0xf]
      %v6605 = vld [vmem:[%s39 + $0x134] sm:$0xf]
      %v6606 = vld [vmem:[%s39 + $0x138] sm:$0xf]
      %v6607 = vld [vmem:[%s39 + $0x13c] sm:$0xf]
      %v6624 = vunpack.c.l.b16 %v6592
      %v6625 = vunpack.c.l.b16 %v6593
      %v6626 = vunpack.c.l.b16 %v6594
      %v6627 = vunpack.c.l.b16 %v6595
      %v6628 = vunpack.c.l.b16 %v6596
      %v6629 = vunpack.c.l.b16 %v6597
      %v6630 = vunpack.c.l.b16 %v6598
      %v6631 = vunpack.c.l.b16 %v6599
      %v6632 = vunpack.c.l.b16 %v6600
      %v6633 = vunpack.c.l.b16 %v6601
      %v6634 = vunpack.c.l.b16 %v6602
      %v6635 = vunpack.c.l.b16 %v6603
      %v6636 = vunpack.c.l.b16 %v6604
      %v6637 = vunpack.c.l.b16 %v6605
      %v6638 = vunpack.c.l.b16 %v6606
      %v6639 = vunpack.c.l.b16 %v6607
      %v6640 = vpack.c.b16 %v6625, %v6624
      %v6641 = vpack.c.b16 %v6627, %v6626
      %v6642 = vpack.c.b16 %v6629, %v6628
      %v6643 = vpack.c.b16 %v6631, %v6630
      %v6644 = vpack.c.b16 %v6633, %v6632
      %v6645 = vpack.c.b16 %v6635, %v6634
      %v6646 = vpack.c.b16 %v6637, %v6636
      %v6647 = vpack.c.b16 %v6639, %v6638
      %6656 = vmatprep.subr.bf16.mxu0 0
      %6657 = vmatpush1.bf16.msra.mxu0 %v6640
      %6658 = vmatprep.subr.bf16.mxu0 0
      %6659 = vmatpush1.bf16.msra.mxu0 %v6641
      %6660 = vmatprep.subr.bf16.mxu0 0
      %6661 = vmatpush1.bf16.msra.mxu0 %v6642
      %6662 = vmatprep.subr.bf16.mxu0 0
      %6663 = vmatpush1.bf16.msra.mxu0 %v6643
      %6664 = vmatprep.subr.bf16.mxu0 0
      %6665 = vmatpush1.bf16.msra.mxu0 %v6644
      %6666 = vmatprep.subr.bf16.mxu0 0
      %6667 = vmatpush1.bf16.msra.mxu0 %v6645
      %6668 = vmatprep.subr.bf16.mxu0 0
      %6669 = vmatpush1.bf16.msra.mxu0 %v6646
      %6670 = vmatprep.subr.bf16.mxu0 0
      %6671 = vmatpush1.bf16.msra.mxu0 %v6647
      %6672 = vmatprep.subr.bf16.mxu0 0
      %6673 = vmatpush1.bf16.msra.mxu0 0
      %6674 = vmatprep.subr.bf16.mxu0 0
      %6675 = vmatpush1.bf16.msra.mxu0 0
      %6676 = vmatprep.subr.bf16.mxu0 0
      %6677 = vmatpush1.bf16.msra.mxu0 0
      %6678 = vmatprep.subr.bf16.mxu0 0
      %6679 = vmatpush1.bf16.msra.mxu0 0
      %6680 = vmatprep.subr.bf16.mxu0 0
      %6681 = vmatpush1.bf16.msra.mxu0 0
      %6682 = vmatprep.subr.bf16.mxu0 0
      %6683 = vmatpush1.bf16.msra.mxu0 0
      %6684 = vmatprep.subr.bf16.mxu0 0
      %6685 = vmatpush1.bf16.msra.mxu0 0
      %6686 = vmatprep.subr.bf16.mxu0 0
      %6687 = vmatpush1.bf16.msra.mxu0 0
      %6688 = vmatprep.mubr.bf16.mxu0 0
      %6689 = vmatmul.mubr.bf16.gmra.mrb[0].mxu0 %v5596
      %v6690 = vpop.f32.mrb[0].mxu0
      %v6691 = vadd.f32 0.0, %v6690
      %v6692 = vpop.f32.mrb[0].mxu0
      %v6693 = vpop.f32.mrb[0].mxu0
      %v6694 = vadd.f32 0.0, %v6693
      %v6695 = vpop.f32.mrb[0].mxu0
      %6696 = vmatprep.mubr.bf16.mxu0 0
      %6697 = vmatmul.mubr.bf16.gmra.mrb[0].mxu0 %v5597
      %v6698 = vpop.f32.mrb[0].mxu0
      %v6699 = vadd.f32 0.0, %v6698
      %v6700 = vpop.f32.mrb[0].mxu0
      %v6701 = vpop.f32.mrb[0].mxu0
      %v6702 = vadd.f32 0.0, %v6701
      %v6703 = vpop.f32.mrb[0].mxu0
      %6704 = vmatprep.mubr.bf16.mxu0 0
      %6705 = vmatmul.mubr.bf16.gmra.mrb[0].mxu0 %v5598
      %v6706 = vpop.f32.mrb[0].mxu0
      %v6707 = vadd.f32 0.0, %v6706
      %v6708 = vpop.f32.mrb[0].mxu0
      %v6709 = vpop.f32.mrb[0].mxu0
      %v6710 = vadd.f32 0.0, %v6709
      %v6711 = vpop.f32.mrb[0].mxu0
      %6712 = vmatprep.mubr.bf16.mxu0 0
      %6713 = vmatmul.mubr.bf16.gmra.mrb[0].mxu0 %v5599
      %v6714 = vpop.f32.mrb[0].mxu0
      %v6715 = vadd.f32 0.0, %v6714
      %v6716 = vpop.f32.mrb[0].mxu0
      %v6717 = vpop.f32.mrb[0].mxu0
      %v6718 = vadd.f32 0.0, %v6717
      %v6719 = vpop.f32.mrb[0].mxu0
      %6720 = vmatprep.mubr.bf16.mxu0 0
      %6721 = vmatmul.mubr.bf16.gmra.mrb[0].mxu0 %v5600
      %v6722 = vpop.f32.mrb[0].mxu0
      %v6723 = vadd.f32 0.0, %v6722
      %v6724 = vpop.f32.mrb[0].mxu0
      %v6725 = vpop.f32.mrb[0].mxu0
      %v6726 = vadd.f32 0.0, %v6725
      %v6727 = vpop.f32.mrb[0].mxu0
      %6728 = vmatprep.mubr.bf16.mxu0 0
      %6729 = vmatmul.mubr.bf16.gmra.mrb[0].mxu0 %v5601
      %v6730 = vpop.f32.mrb[0].mxu0
      %v6731 = vadd.f32 0.0, %v6730
      %v6732 = vpop.f32.mrb[0].mxu0
      %v6733 = vpop.f32.mrb[0].mxu0
      %v6734 = vadd.f32 0.0, %v6733
      %v6735 = vpop.f32.mrb[0].mxu0
      %6736 = vmatprep.mubr.bf16.mxu0 0
      %6737 = vmatmul.mubr.bf16.gmra.mrb[0].mxu0 %v5602
      %v6738 = vpop.f32.mrb[0].mxu0
      %v6739 = vadd.f32 0.0, %v6738
      %v6740 = vpop.f32.mrb[0].mxu0
      %v6741 = vpop.f32.mrb[0].mxu0
      %v6742 = vadd.f32 0.0, %v6741
      %v6743 = vpop.f32.mrb[0].mxu0
      %6744 = vmatprep.mubr.bf16.mxu0 0
      %6745 = vmatmul.mubr.bf16.gmra.mrb[0].mxu0 %v5603
      %v6746 = vpop.f32.mrb[0].mxu0
      %v6747 = vadd.f32 0.0, %v6746
      %v6748 = vpop.f32.mrb[0].mxu0
      %v6749 = vpop.f32.mrb[0].mxu0
      %v6750 = vadd.f32 0.0, %v6749
      %v6751 = vpop.f32.mrb[0].mxu0
      %6752 = vmatprep.mubr.bf16.mxu0 0
      %6753 = vmatmul.mubr.bf16.gmra.mrb[0].mxu0 %v5604
      %v6754 = vpop.f32.mrb[0].mxu0
      %v6755 = vadd.f32 0.0, %v6754
      %v6756 = vpop.f32.mrb[0].mxu0
      %v6757 = vpop.f32.mrb[0].mxu0
      %v6758 = vadd.f32 0.0, %v6757
      %v6759 = vpop.f32.mrb[0].mxu0
      %6760 = vmatprep.mubr.bf16.mxu0 0
      %6761 = vmatmul.mubr.bf16.gmra.mrb[0].mxu0 %v5605
      %v6762 = vpop.f32.mrb[0].mxu0
      %v6763 = vadd.f32 0.0, %v6762
      %v6764 = vpop.f32.mrb[0].mxu0
      %v6765 = vpop.f32.mrb[0].mxu0
      %v6766 = vadd.f32 0.0, %v6765
      %v6767 = vpop.f32.mrb[0].mxu0
      %6768 = vmatprep.mubr.bf16.mxu0 0
      %6769 = vmatmul.mubr.bf16.gmra.mrb[0].mxu0 %v5606
      %v6770 = vpop.f32.mrb[0].mxu0
      %v6771 = vadd.f32 0.0, %v6770
      %v6772 = vpop.f32.mrb[0].mxu0
      %v6773 = vpop.f32.mrb[0].mxu0
      %v6774 = vadd.f32 0.0, %v6773
      %v6775 = vpop.f32.mrb[0].mxu0
      %6776 = vmatprep.mubr.bf16.mxu0 0
      %6777 = vmatmul.mubr.bf16.gmra.mrb[0].mxu0 %v5607
      %v6778 = vpop.f32.mrb[0].mxu0
      %v6779 = vadd.f32 0.0, %v6778
      %v6780 = vpop.f32.mrb[0].mxu0
      %v6781 = vpop.f32.mrb[0].mxu0
      %v6782 = vadd.f32 0.0, %v6781
      %v6783 = vpop.f32.mrb[0].mxu0
      %6784 = vmatprep.mubr.bf16.mxu0 0
      %6785 = vmatmul.mubr.bf16.gmra.mrb[0].mxu0 %v5608
      %v6786 = vpop.f32.mrb[0].mxu0
      %v6787 = vadd.f32 0.0, %v6786
      %v6788 = vpop.f32.mrb[0].mxu0
      %v6789 = vpop.f32.mrb[0].mxu0
      %v6790 = vadd.f32 0.0, %v6789
      %v6791 = vpop.f32.mrb[0].mxu0
      %6792 = vmatprep.mubr.bf16.mxu0 0
      %6793 = vmatmul.mubr.bf16.gmra.mrb[0].mxu0 %v5609
      %v6794 = vpop.f32.mrb[0].mxu0
      %v6795 = vadd.f32 0.0, %v6794
      %v6796 = vpop.f32.mrb[0].mxu0
      %v6797 = vpop.f32.mrb[0].mxu0
      %v6798 = vadd.f32 0.0, %v6797
      %v6799 = vpop.f32.mrb[0].mxu0
      %6800 = vmatprep.mubr.bf16.mxu0 0
      %6801 = vmatmul.mubr.bf16.gmra.mrb[0].mxu0 %v5610
      %v6802 = vpop.f32.mrb[0].mxu0
      %v6803 = vadd.f32 0.0, %v6802
      %v6804 = vpop.f32.mrb[0].mxu0
      %v6805 = vpop.f32.mrb[0].mxu0
      %v6806 = vadd.f32 0.0, %v6805
      %v6807 = vpop.f32.mrb[0].mxu0
      %6808 = vmatprep.mubr.bf16.mxu0 0
      %6809 = vmatmul.mubr.bf16.gmra.mrb[0].mxu0 %v5611
      %v6810 = vpop.f32.mrb[0].mxu0
      %v6811 = vadd.f32 0.0, %v6810
      %v6812 = vpop.f32.mrb[0].mxu0
      %v6813 = vpop.f32.mrb[0].mxu0
      %v6814 = vadd.f32 0.0, %v6813
      %v6815 = vpop.f32.mrb[0].mxu0
      %6816 = vdwg.mxu0
      %v6817 = vadd.f32 %v6560, %v6691
      %v6818 = vadd.f32 %v6561, %v6694
      %v6819 = vadd.f32 %v6562, %v6699
      %v6820 = vadd.f32 %v6563, %v6702
      %v6821 = vadd.f32 %v6564, %v6707
      %v6822 = vadd.f32 %v6565, %v6710
      %v6823 = vadd.f32 %v6566, %v6715
      %v6824 = vadd.f32 %v6567, %v6718
      %v6825 = vadd.f32 %v6568, %v6723
      %v6826 = vadd.f32 %v6569, %v6726
      %v6827 = vadd.f32 %v6570, %v6731
      %v6828 = vadd.f32 %v6571, %v6734
      %v6829 = vadd.f32 %v6572, %v6739
      %v6830 = vadd.f32 %v6573, %v6742
      %v6831 = vadd.f32 %v6574, %v6747
      %v6832 = vadd.f32 %v6575, %v6750
      %v6833 = vadd.f32 %v6576, %v6755
      %v6834 = vadd.f32 %v6577, %v6758
      %v6835 = vadd.f32 %v6578, %v6763
      %v6836 = vadd.f32 %v6579, %v6766
      %v6837 = vadd.f32 %v6580, %v6771
      %v6838 = vadd.f32 %v6581, %v6774
      %v6839 = vadd.f32 %v6582, %v6779
      %v6840 = vadd.f32 %v6583, %v6782
      %v6841 = vadd.f32 %v6584, %v6787
      %v6842 = vadd.f32 %v6585, %v6790
      %v6843 = vadd.f32 %v6586, %v6795
      %v6844 = vadd.f32 %v6587, %v6798
      %v6845 = vadd.f32 %v6588, %v6803
      %v6846 = vadd.f32 %v6589, %v6806
      %v6847 = vadd.f32 %v6590, %v6811
      %v6848 = vadd.f32 %v6591, %v6814
      %v6849 = vld [vmem:[%s39 + $0x140] sm:$0xf]
      %v6850 = vld [vmem:[%s39 + $0x144] sm:$0xf]
      %v6851 = vld [vmem:[%s39 + $0x148] sm:$0xf]
      %v6852 = vld [vmem:[%s39 + $0x14c] sm:$0xf]
      %v6853 = vld [vmem:[%s39 + $0x150] sm:$0xf]
      %v6854 = vld [vmem:[%s39 + $0x154] sm:$0xf]
      %v6855 = vld [vmem:[%s39 + $0x158] sm:$0xf]
      %v6856 = vld [vmem:[%s39 + $0x15c] sm:$0xf]
      %v6857 = vld [vmem:[%s39 + $0x160] sm:$0xf]
      %v6858 = vld [vmem:[%s39 + $0x164] sm:$0xf]
      %v6859 = vld [vmem:[%s39 + $0x168] sm:$0xf]
      %v6860 = vld [vmem:[%s39 + $0x16c] sm:$0xf]
      %v6861 = vld [vmem:[%s39 + $0x170] sm:$0xf]
      %v6862 = vld [vmem:[%s39 + $0x174] sm:$0xf]
      %v6863 = vld [vmem:[%s39 + $0x178] sm:$0xf]
      %v6864 = vld [vmem:[%s39 + $0x17c] sm:$0xf]
      %v6881 = vunpack.c.l.b16 %v6849
      %v6882 = vunpack.c.l.b16 %v6850
      %v6883 = vunpack.c.l.b16 %v6851
      %v6884 = vunpack.c.l.b16 %v6852
      %v6885 = vunpack.c.l.b16 %v6853
      %v6886 = vunpack.c.l.b16 %v6854
      %v6887 = vunpack.c.l.b16 %v6855
      %v6888 = vunpack.c.l.b16 %v6856
      %v6889 = vunpack.c.l.b16 %v6857
      %v6890 = vunpack.c.l.b16 %v6858
      %v6891 = vunpack.c.l.b16 %v6859
      %v6892 = vunpack.c.l.b16 %v6860
      %v6893 = vunpack.c.l.b16 %v6861
      %v6894 = vunpack.c.l.b16 %v6862
      %v6895 = vunpack.c.l.b16 %v6863
      %v6896 = vunpack.c.l.b16 %v6864
      %v6897 = vpack.c.b16 %v6882, %v6881
      %v6898 = vpack.c.b16 %v6884, %v6883
      %v6899 = vpack.c.b16 %v6886, %v6885
      %v6900 = vpack.c.b16 %v6888, %v6887
      %v6901 = vpack.c.b16 %v6890, %v6889
      %v6902 = vpack.c.b16 %v6892, %v6891
      %v6903 = vpack.c.b16 %v6894, %v6893
      %v6904 = vpack.c.b16 %v6896, %v6895
      %6913 = vmatprep.subr.bf16.mxu0 0
      %6914 = vmatpush1.bf16.msra.mxu0 %v6897
      %6915 = vmatprep.subr.bf16.mxu0 0
      %6916 = vmatpush1.bf16.msra.mxu0 %v6898
      %6917 = vmatprep.subr.bf16.mxu0 0
      %6918 = vmatpush1.bf16.msra.mxu0 %v6899
      %6919 = vmatprep.subr.bf16.mxu0 0
      %6920 = vmatpush1.bf16.msra.mxu0 %v6900
      %6921 = vmatprep.subr.bf16.mxu0 0
      %6922 = vmatpush1.bf16.msra.mxu0 %v6901
      %6923 = vmatprep.subr.bf16.mxu0 0
      %6924 = vmatpush1.bf16.msra.mxu0 %v6902
      %6925 = vmatprep.subr.bf16.mxu0 0
      %6926 = vmatpush1.bf16.msra.mxu0 %v6903
      %6927 = vmatprep.subr.bf16.mxu0 0
      %6928 = vmatpush1.bf16.msra.mxu0 %v6904
      %6929 = vmatprep.subr.bf16.mxu0 0
      %6930 = vmatpush1.bf16.msra.mxu0 0
      %6931 = vmatprep.subr.bf16.mxu0 0
      %6932 = vmatpush1.bf16.msra.mxu0 0
      %6933 = vmatprep.subr.bf16.mxu0 0
      %6934 = vmatpush1.bf16.msra.mxu0 0
      %6935 = vmatprep.subr.bf16.mxu0 0
      %6936 = vmatpush1.bf16.msra.mxu0 0
      %6937 = vmatprep.subr.bf16.mxu0 0
      %6938 = vmatpush1.bf16.msra.mxu0 0
      %6939 = vmatprep.subr.bf16.mxu0 0
      %6940 = vmatpush1.bf16.msra.mxu0 0
      %6941 = vmatprep.subr.bf16.mxu0 0
      %6942 = vmatpush1.bf16.msra.mxu0 0
      %6943 = vmatprep.subr.bf16.mxu0 0
      %6944 = vmatpush1.bf16.msra.mxu0 0
      %6945 = vmatprep.mubr.bf16.mxu0 0
      %6946 = vmatmul.mubr.bf16.gmra.mrb[0].mxu0 %v5612
      %v6947 = vpop.f32.mrb[0].mxu0
      %v6948 = vadd.f32 0.0, %v6947
      %v6949 = vpop.f32.mrb[0].mxu0
      %v6950 = vpop.f32.mrb[0].mxu0
      %v6951 = vadd.f32 0.0, %v6950
      %v6952 = vpop.f32.mrb[0].mxu0
      %6953 = vmatprep.mubr.bf16.mxu0 0
      %6954 = vmatmul.mubr.bf16.gmra.mrb[0].mxu0 %v5613
      %v6955 = vpop.f32.mrb[0].mxu0
      %v6956 = vadd.f32 0.0, %v6955
      %v6957 = vpop.f32.mrb[0].mxu0
      %v6958 = vpop.f32.mrb[0].mxu0
      %v6959 = vadd.f32 0.0, %v6958
      %v6960 = vpop.f32.mrb[0].mxu0
      %6961 = vmatprep.mubr.bf16.mxu0 0
      %6962 = vmatmul.mubr.bf16.gmra.mrb[0].mxu0 %v5614
      %v6963 = vpop.f32.mrb[0].mxu0
      %v6964 = vadd.f32 0.0, %v6963
      %v6965 = vpop.f32.mrb[0].mxu0
      %v6966 = vpop.f32.mrb[0].mxu0
      %v6967 = vadd.f32 0.0, %v6966
      %v6968 = vpop.f32.mrb[0].mxu0
      %6969 = vmatprep.mubr.bf16.mxu0 0
      %6970 = vmatmul.mubr.bf16.gmra.mrb[0].mxu0 %v5615
      %v6971 = vpop.f32.mrb[0].mxu0
      %v6972 = vadd.f32 0.0, %v6971
      %v6973 = vpop.f32.mrb[0].mxu0
      %v6974 = vpop.f32.mrb[0].mxu0
      %v6975 = vadd.f32 0.0, %v6974
      %v6976 = vpop.f32.mrb[0].mxu0
      %6977 = vmatprep.mubr.bf16.mxu0 0
      %6978 = vmatmul.mubr.bf16.gmra.mrb[0].mxu0 %v5616
      %v6979 = vpop.f32.mrb[0].mxu0
      %v6980 = vadd.f32 0.0, %v6979
      %v6981 = vpop.f32.mrb[0].mxu0
      %v6982 = vpop.f32.mrb[0].mxu0
      %v6983 = vadd.f32 0.0, %v6982
      %v6984 = vpop.f32.mrb[0].mxu0
      %6985 = vmatprep.mubr.bf16.mxu0 0
      %6986 = vmatmul.mubr.bf16.gmra.mrb[0].mxu0 %v5617
      %v6987 = vpop.f32.mrb[0].mxu0
      %v6988 = vadd.f32 0.0, %v6987
      %v6989 = vpop.f32.mrb[0].mxu0
      %v6990 = vpop.f32.mrb[0].mxu0
      %v6991 = vadd.f32 0.0, %v6990
      %v6992 = vpop.f32.mrb[0].mxu0
      %6993 = vmatprep.mubr.bf16.mxu0 0
      %6994 = vmatmul.mubr.bf16.gmra.mrb[0].mxu0 %v5618
      %v6995 = vpop.f32.mrb[0].mxu0
      %v6996 = vadd.f32 0.0, %v6995
      %v6997 = vpop.f32.mrb[0].mxu0
      %v6998 = vpop.f32.mrb[0].mxu0
      %v6999 = vadd.f32 0.0, %v6998
      %v7000 = vpop.f32.mrb[0].mxu0
      %7001 = vmatprep.mubr.bf16.mxu0 0
      %7002 = vmatmul.mubr.bf16.gmra.mrb[0].mxu0 %v5619
      %v7003 = vpop.f32.mrb[0].mxu0
      %v7004 = vadd.f32 0.0, %v7003
      %v7005 = vpop.f32.mrb[0].mxu0
      %v7006 = vpop.f32.mrb[0].mxu0
      %v7007 = vadd.f32 0.0, %v7006
      %v7008 = vpop.f32.mrb[0].mxu0
      %7009 = vmatprep.mubr.bf16.mxu0 0
      %7010 = vmatmul.mubr.bf16.gmra.mrb[0].mxu0 %v5620
      %v7011 = vpop.f32.mrb[0].mxu0
      %v7012 = vadd.f32 0.0, %v7011
      %v7013 = vpop.f32.mrb[0].mxu0
      %v7014 = vpop.f32.mrb[0].mxu0
      %v7015 = vadd.f32 0.0, %v7014
      %v7016 = vpop.f32.mrb[0].mxu0
      %7017 = vmatprep.mubr.bf16.mxu0 0
      %7018 = vmatmul.mubr.bf16.gmra.mrb[0].mxu0 %v5621
      %v7019 = vpop.f32.mrb[0].mxu0
      %v7020 = vadd.f32 0.0, %v7019
      %v7021 = vpop.f32.mrb[0].mxu0
      %v7022 = vpop.f32.mrb[0].mxu0
      %v7023 = vadd.f32 0.0, %v7022
      %v7024 = vpop.f32.mrb[0].mxu0
      %7025 = vmatprep.mubr.bf16.mxu0 0
      %7026 = vmatmul.mubr.bf16.gmra.mrb[0].mxu0 %v5622
      %v7027 = vpop.f32.mrb[0].mxu0
      %v7028 = vadd.f32 0.0, %v7027
      %v7029 = vpop.f32.mrb[0].mxu0
      %v7030 = vpop.f32.mrb[0].mxu0
      %v7031 = vadd.f32 0.0, %v7030
      %v7032 = vpop.f32.mrb[0].mxu0
      %7033 = vmatprep.mubr.bf16.mxu0 0
      %7034 = vmatmul.mubr.bf16.gmra.mrb[0].mxu0 %v5623
      %v7035 = vpop.f32.mrb[0].mxu0
      %v7036 = vadd.f32 0.0, %v7035
      %v7037 = vpop.f32.mrb[0].mxu0
      %v7038 = vpop.f32.mrb[0].mxu0
      %v7039 = vadd.f32 0.0, %v7038
      %v7040 = vpop.f32.mrb[0].mxu0
      %7041 = vmatprep.mubr.bf16.mxu0 0
      %7042 = vmatmul.mubr.bf16.gmra.mrb[0].mxu0 %v5624
      %v7043 = vpop.f32.mrb[0].mxu0
      %v7044 = vadd.f32 0.0, %v7043
      %v7045 = vpop.f32.mrb[0].mxu0
      %v7046 = vpop.f32.mrb[0].mxu0
      %v7047 = vadd.f32 0.0, %v7046
      %v7048 = vpop.f32.mrb[0].mxu0
      %7049 = vmatprep.mubr.bf16.mxu0 0
      %7050 = vmatmul.mubr.bf16.gmra.mrb[0].mxu0 %v5625
      %v7051 = vpop.f32.mrb[0].mxu0
      %v7052 = vadd.f32 0.0, %v7051
      %v7053 = vpop.f32.mrb[0].mxu0
      %v7054 = vpop.f32.mrb[0].mxu0
      %v7055 = vadd.f32 0.0, %v7054
      %v7056 = vpop.f32.mrb[0].mxu0
      %7057 = vmatprep.mubr.bf16.mxu0 0
      %7058 = vmatmul.mubr.bf16.gmra.mrb[0].mxu0 %v5626
      %v7059 = vpop.f32.mrb[0].mxu0
      %v7060 = vadd.f32 0.0, %v7059
      %v7061 = vpop.f32.mrb[0].mxu0
      %v7062 = vpop.f32.mrb[0].mxu0
      %v7063 = vadd.f32 0.0, %v7062
      %v7064 = vpop.f32.mrb[0].mxu0
      %7065 = vmatprep.mubr.bf16.mxu0 0
      %7066 = vmatmul.mubr.bf16.gmra.mrb[0].mxu0 %v5627
      %v7067 = vpop.f32.mrb[0].mxu0
      %v7068 = vadd.f32 0.0, %v7067
      %v7069 = vpop.f32.mrb[0].mxu0
      %v7070 = vpop.f32.mrb[0].mxu0
      %v7071 = vadd.f32 0.0, %v7070
      %v7072 = vpop.f32.mrb[0].mxu0
      %7073 = vdwg.mxu0
      %v7074 = vadd.f32 %v6817, %v6948
      %v7075 = vadd.f32 %v6818, %v6951
      %v7076 = vadd.f32 %v6819, %v6956
      %v7077 = vadd.f32 %v6820, %v6959
      %v7078 = vadd.f32 %v6821, %v6964
      %v7079 = vadd.f32 %v6822, %v6967
      %v7080 = vadd.f32 %v6823, %v6972
      %v7081 = vadd.f32 %v6824, %v6975
      %v7082 = vadd.f32 %v6825, %v6980
      %v7083 = vadd.f32 %v6826, %v6983
      %v7084 = vadd.f32 %v6827, %v6988
      %v7085 = vadd.f32 %v6828, %v6991
      %v7086 = vadd.f32 %v6829, %v6996
      %v7087 = vadd.f32 %v6830, %v6999
      %v7088 = vadd.f32 %v6831, %v7004
      %v7089 = vadd.f32 %v6832, %v7007
      %v7090 = vadd.f32 %v6833, %v7012
      %v7091 = vadd.f32 %v6834, %v7015
      %v7092 = vadd.f32 %v6835, %v7020
      %v7093 = vadd.f32 %v6836, %v7023
      %v7094 = vadd.f32 %v6837, %v7028
      %v7095 = vadd.f32 %v6838, %v7031
      %v7096 = vadd.f32 %v6839, %v7036
      %v7097 = vadd.f32 %v6840, %v7039
      %v7098 = vadd.f32 %v6841, %v7044
      %v7099 = vadd.f32 %v6842, %v7047
      %v7100 = vadd.f32 %v6843, %v7052
      %v7101 = vadd.f32 %v6844, %v7055
      %v7102 = vadd.f32 %v6845, %v7060
      %v7103 = vadd.f32 %v6846, %v7063
      %v7104 = vadd.f32 %v6847, %v7068
      %v7105 = vadd.f32 %v6848, %v7071
      %v7106 = vld [vmem:[%s39 + $0x180] sm:$0xf]
      %v7107 = vld [vmem:[%s39 + $0x184] sm:$0xf]
      %v7108 = vld [vmem:[%s39 + $0x188] sm:$0xf]
      %v7109 = vld [vmem:[%s39 + $0x18c] sm:$0xf]
      %v7110 = vld [vmem:[%s39 + $0x190] sm:$0xf]
      %v7111 = vld [vmem:[%s39 + $0x194] sm:$0xf]
      %v7112 = vld [vmem:[%s39 + $0x198] sm:$0xf]
      %v7113 = vld [vmem:[%s39 + $0x19c] sm:$0xf]
      %v7114 = vld [vmem:[%s39 + $0x1a0] sm:$0xf]
      %v7115 = vld [vmem:[%s39 + $0x1a4] sm:$0xf]
      %v7116 = vld [vmem:[%s39 + $0x1a8] sm:$0xf]
      %v7117 = vld [vmem:[%s39 + $0x1ac] sm:$0xf]
      %v7118 = vld [vmem:[%s39 + $0x1b0] sm:$0xf]
      %v7119 = vld [vmem:[%s39 + $0x1b4] sm:$0xf]
      %v7120 = vld [vmem:[%s39 + $0x1b8] sm:$0xf]
      %v7121 = vld [vmem:[%s39 + $0x1bc] sm:$0xf]
      %v7138 = vunpack.c.l.b16 %v7106
      %v7139 = vunpack.c.l.b16 %v7107
      %v7140 = vunpack.c.l.b16 %v7108
      %v7141 = vunpack.c.l.b16 %v7109
      %v7142 = vunpack.c.l.b16 %v7110
      %v7143 = vunpack.c.l.b16 %v7111
      %v7144 = vunpack.c.l.b16 %v7112
      %v7145 = vunpack.c.l.b16 %v7113
      %v7146 = vunpack.c.l.b16 %v7114
      %v7147 = vunpack.c.l.b16 %v7115
      %v7148 = vunpack.c.l.b16 %v7116
      %v7149 = vunpack.c.l.b16 %v7117
      %v7150 = vunpack.c.l.b16 %v7118
      %v7151 = vunpack.c.l.b16 %v7119
      %v7152 = vunpack.c.l.b16 %v7120
      %v7153 = vunpack.c.l.b16 %v7121
      %v7154 = vpack.c.b16 %v7139, %v7138
      %v7155 = vpack.c.b16 %v7141, %v7140
      %v7156 = vpack.c.b16 %v7143, %v7142
      %v7157 = vpack.c.b16 %v7145, %v7144
      %v7158 = vpack.c.b16 %v7147, %v7146
      %v7159 = vpack.c.b16 %v7149, %v7148
      %v7160 = vpack.c.b16 %v7151, %v7150
      %v7161 = vpack.c.b16 %v7153, %v7152
      %7170 = vmatprep.subr.bf16.mxu0 0
      %7171 = vmatpush1.bf16.msra.mxu0 %v7154
      %7172 = vmatprep.subr.bf16.mxu0 0
      %7173 = vmatpush1.bf16.msra.mxu0 %v7155
      %7174 = vmatprep.subr.bf16.mxu0 0
      %7175 = vmatpush1.bf16.msra.mxu0 %v7156
      %7176 = vmatprep.subr.bf16.mxu0 0
      %7177 = vmatpush1.bf16.msra.mxu0 %v7157
      %7178 = vmatprep.subr.bf16.mxu0 0
      %7179 = vmatpush1.bf16.msra.mxu0 %v7158
      %7180 = vmatprep.subr.bf16.mxu0 0
      %7181 = vmatpush1.bf16.msra.mxu0 %v7159
      %7182 = vmatprep.subr.bf16.mxu0 0
      %7183 = vmatpush1.bf16.msra.mxu0 %v7160
      %7184 = vmatprep.subr.bf16.mxu0 0
      %7185 = vmatpush1.bf16.msra.mxu0 %v7161
      %7186 = vmatprep.subr.bf16.mxu0 0
      %7187 = vmatpush1.bf16.msra.mxu0 0
      %7188 = vmatprep.subr.bf16.mxu0 0
      %7189 = vmatpush1.bf16.msra.mxu0 0
      %7190 = vmatprep.subr.bf16.mxu0 0
      %7191 = vmatpush1.bf16.msra.mxu0 0
      %7192 = vmatprep.subr.bf16.mxu0 0
      %7193 = vmatpush1.bf16.msra.mxu0 0
      %7194 = vmatprep.subr.bf16.mxu0 0
      %7195 = vmatpush1.bf16.msra.mxu0 0
      %7196 = vmatprep.subr.bf16.mxu0 0
      %7197 = vmatpush1.bf16.msra.mxu0 0
      %7198 = vmatprep.subr.bf16.mxu0 0
      %7199 = vmatpush1.bf16.msra.mxu0 0
      %7200 = vmatprep.subr.bf16.mxu0 0
      %7201 = vmatpush1.bf16.msra.mxu0 0
      %7202 = vmatprep.mubr.bf16.mxu0 0
      %7203 = vmatmul.mubr.bf16.gmra.mrb[0].mxu0 %v5581
      %v7204 = vpop.f32.mrb[0].mxu0
      %v7205 = vadd.f32 0.0, %v7204
      %v7206 = vpop.f32.mrb[0].mxu0
      %v7207 = vpop.f32.mrb[0].mxu0
      %v7208 = vadd.f32 0.0, %v7207
      %v7209 = vpop.f32.mrb[0].mxu0
      %7210 = vmatprep.mubr.bf16.mxu0 0
      %7211 = vmatmul.mubr.bf16.gmra.mrb[0].mxu0 %v5582
      %v7212 = vpop.f32.mrb[0].mxu0
      %v7213 = vadd.f32 0.0, %v7212
      %v7214 = vpop.f32.mrb[0].mxu0
      %v7215 = vpop.f32.mrb[0].mxu0
      %v7216 = vadd.f32 0.0, %v7215
      %v7217 = vpop.f32.mrb[0].mxu0
      %7218 = vmatprep.mubr.bf16.mxu0 0
      %7219 = vmatmul.mubr.bf16.gmra.mrb[0].mxu0 %v5583
      %v7220 = vpop.f32.mrb[0].mxu0
      %v7221 = vadd.f32 0.0, %v7220
      %v7222 = vpop.f32.mrb[0].mxu0
      %v7223 = vpop.f32.mrb[0].mxu0
      %v7224 = vadd.f32 0.0, %v7223
      %v7225 = vpop.f32.mrb[0].mxu0
      %7226 = vmatprep.mubr.bf16.mxu0 0
      %7227 = vmatmul.mubr.bf16.gmra.mrb[0].mxu0 %v5584
      %v7228 = vpop.f32.mrb[0].mxu0
      %v7229 = vadd.f32 0.0, %v7228
      %v7230 = vpop.f32.mrb[0].mxu0
      %v7231 = vpop.f32.mrb[0].mxu0
      %v7232 = vadd.f32 0.0, %v7231
      %v7233 = vpop.f32.mrb[0].mxu0
      %7234 = vmatprep.mubr.bf16.mxu0 0
      %7235 = vmatmul.mubr.bf16.gmra.mrb[0].mxu0 %v5585
      %v7236 = vpop.f32.mrb[0].mxu0
      %v7237 = vadd.f32 0.0, %v7236
      %v7238 = vpop.f32.mrb[0].mxu0
      %v7239 = vpop.f32.mrb[0].mxu0
      %v7240 = vadd.f32 0.0, %v7239
      %v7241 = vpop.f32.mrb[0].mxu0
      %7242 = vmatprep.mubr.bf16.mxu0 0
      %7243 = vmatmul.mubr.bf16.gmra.mrb[0].mxu0 %v5586
      %v7244 = vpop.f32.mrb[0].mxu0
      %v7245 = vadd.f32 0.0, %v7244
      %v7246 = vpop.f32.mrb[0].mxu0
      %v7247 = vpop.f32.mrb[0].mxu0
      %v7248 = vadd.f32 0.0, %v7247
      %v7249 = vpop.f32.mrb[0].mxu0
      %7250 = vmatprep.mubr.bf16.mxu0 0
      %7251 = vmatmul.mubr.bf16.gmra.mrb[0].mxu0 %v5587
      %v7252 = vpop.f32.mrb[0].mxu0
      %v7253 = vadd.f32 0.0, %v7252
      %v7254 = vpop.f32.mrb[0].mxu0
      %v7255 = vpop.f32.mrb[0].mxu0
      %v7256 = vadd.f32 0.0, %v7255
      %v7257 = vpop.f32.mrb[0].mxu0
      %7258 = vmatprep.mubr.bf16.mxu0 0
      %7259 = vmatmul.mubr.bf16.gmra.mrb[0].mxu0 %v5588
      %v7260 = vpop.f32.mrb[0].mxu0
      %v7261 = vadd.f32 0.0, %v7260
      %v7262 = vpop.f32.mrb[0].mxu0
      %v7263 = vpop.f32.mrb[0].mxu0
      %v7264 = vadd.f32 0.0, %v7263
      %v7265 = vpop.f32.mrb[0].mxu0
      %7266 = vmatprep.mubr.bf16.mxu0 0
      %7267 = vmatmul.mubr.bf16.gmra.mrb[0].mxu0 %v5589
      %v7268 = vpop.f32.mrb[0].mxu0
      %v7269 = vadd.f32 0.0, %v7268
      %v7270 = vpop.f32.mrb[0].mxu0
      %v7271 = vpop.f32.mrb[0].mxu0
      %v7272 = vadd.f32 0.0, %v7271
      %v7273 = vpop.f32.mrb[0].mxu0
      %7274 = vmatprep.mubr.bf16.mxu0 0
      %7275 = vmatmul.mubr.bf16.gmra.mrb[0].mxu0 %v5590
      %v7276 = vpop.f32.mrb[0].mxu0
      %v7277 = vadd.f32 0.0, %v7276
      %v7278 = vpop.f32.mrb[0].mxu0
      %v7279 = vpop.f32.mrb[0].mxu0
      %v7280 = vadd.f32 0.0, %v7279
      %v7281 = vpop.f32.mrb[0].mxu0
      %7282 = vmatprep.mubr.bf16.mxu0 0
      %7283 = vmatmul.mubr.bf16.gmra.mrb[0].mxu0 %v5591
      %v7284 = vpop.f32.mrb[0].mxu0
      %v7285 = vadd.f32 0.0, %v7284
      %v7286 = vpop.f32.mrb[0].mxu0
      %v7287 = vpop.f32.mrb[0].mxu0
      %v7288 = vadd.f32 0.0, %v7287
      %v7289 = vpop.f32.mrb[0].mxu0
      %7290 = vmatprep.mubr.bf16.mxu0 0
      %7291 = vmatmul.mubr.bf16.gmra.mrb[0].mxu0 %v5592
      %v7292 = vpop.f32.mrb[0].mxu0
      %v7293 = vadd.f32 0.0, %v7292
      %v7294 = vpop.f32.mrb[0].mxu0
      %v7295 = vpop.f32.mrb[0].mxu0
      %v7296 = vadd.f32 0.0, %v7295
      %v7297 = vpop.f32.mrb[0].mxu0
      %7298 = vmatprep.mubr.bf16.mxu0 0
      %7299 = vmatmul.mubr.bf16.gmra.mrb[0].mxu0 %v5593
      %v7300 = vpop.f32.mrb[0].mxu0
      %v7301 = vadd.f32 0.0, %v7300
      %v7302 = vpop.f32.mrb[0].mxu0
      %v7303 = vpop.f32.mrb[0].mxu0
      %v7304 = vadd.f32 0.0, %v7303
      %v7305 = vpop.f32.mrb[0].mxu0
      %7306 = vmatprep.mubr.bf16.mxu0 0
      %7307 = vmatmul.mubr.bf16.gmra.mrb[0].mxu0 %v5594
      %v7308 = vpop.f32.mrb[0].mxu0
      %v7309 = vadd.f32 0.0, %v7308
      %v7310 = vpop.f32.mrb[0].mxu0
      %v7311 = vpop.f32.mrb[0].mxu0
      %v7312 = vadd.f32 0.0, %v7311
      %v7313 = vpop.f32.mrb[0].mxu0
      %7314 = vmatprep.mubr.bf16.mxu0 0
      %7315 = vmatmul.mubr.bf16.gmra.mrb[0].mxu0 %v5595
      %v7316 = vpop.f32.mrb[0].mxu0
      %v7317 = vadd.f32 0.0, %v7316
      %v7318 = vpop.f32.mrb[0].mxu0
      %v7319 = vpop.f32.mrb[0].mxu0
      %v7320 = vadd.f32 0.0, %v7319
      %v7321 = vpop.f32.mrb[0].mxu0
      %7322 = vmatprep.mubr.bf16.mxu0 0
      %7323 = vmatmul.mubr.bf16.gmra.mrb[0].mxu0 0
      %v7324 = vpop.f32.mrb[0].mxu0
      %v7325 = vadd.f32 0.0, %v7324
      %v7326 = vpop.f32.mrb[0].mxu0
      %v7327 = vpop.f32.mrb[0].mxu0
      %v7328 = vadd.f32 0.0, %v7327
      %v7329 = vpop.f32.mrb[0].mxu0
      %7330 = vdwg.mxu0
      %v7331 = vadd.f32 %v7074, %v7205
      %v7332 = vadd.f32 %v7075, %v7208
      %v7333 = vadd.f32 %v7076, %v7213
      %v7334 = vadd.f32 %v7077, %v7216
      %v7335 = vadd.f32 %v7078, %v7221
      %v7336 = vadd.f32 %v7079, %v7224
      %v7337 = vadd.f32 %v7080, %v7229
      %v7338 = vadd.f32 %v7081, %v7232
      %v7339 = vadd.f32 %v7082, %v7237
      %v7340 = vadd.f32 %v7083, %v7240
      %v7341 = vadd.f32 %v7084, %v7245
      %v7342 = vadd.f32 %v7085, %v7248
      %v7343 = vadd.f32 %v7086, %v7253
      %v7344 = vadd.f32 %v7087, %v7256
      %v7345 = vadd.f32 %v7088, %v7261
      %v7346 = vadd.f32 %v7089, %v7264
      %v7347 = vadd.f32 %v7090, %v7269
      %v7348 = vadd.f32 %v7091, %v7272
      %v7349 = vadd.f32 %v7092, %v7277
      %v7350 = vadd.f32 %v7093, %v7280
      %v7351 = vadd.f32 %v7094, %v7285
      %v7352 = vadd.f32 %v7095, %v7288
      %v7353 = vadd.f32 %v7096, %v7293
      %v7354 = vadd.f32 %v7097, %v7296
      %v7355 = vadd.f32 %v7098, %v7301
      %v7356 = vadd.f32 %v7099, %v7304
      %v7357 = vadd.f32 %v7100, %v7309
      %v7358 = vadd.f32 %v7101, %v7312
      %v7359 = vadd.f32 %v7102, %v7317
      %v7360 = vadd.f32 %v7103, %v7320
      %v7361 = vadd.f32 %v7104, %v7325
      %v7362 = vadd.f32 %v7105, %v7328
      %v7363 = vld [vmem:[%s39 + $0x1c0] sm:$0xf]
      %v7364 = vld [vmem:[%s39 + $0x1c4] sm:$0xf]
      %v7365 = vld [vmem:[%s39 + $0x1c8] sm:$0xf]
      %v7366 = vld [vmem:[%s39 + $0x1cc] sm:$0xf]
      %v7367 = vld [vmem:[%s39 + $0x1d0] sm:$0xf]
      %v7368 = vld [vmem:[%s39 + $0x1d4] sm:$0xf]
      %v7369 = vld [vmem:[%s39 + $0x1d8] sm:$0xf]
      %v7370 = vld [vmem:[%s39 + $0x1dc] sm:$0xf]
      %v7371 = vld [vmem:[%s39 + $0x1e0] sm:$0xf]
      %v7372 = vld [vmem:[%s39 + $0x1e4] sm:$0xf]
      %v7373 = vld [vmem:[%s39 + $0x1e8] sm:$0xf]
      %v7374 = vld [vmem:[%s39 + $0x1ec] sm:$0xf]
      %v7375 = vld [vmem:[%s39 + $0x1f0] sm:$0xf]
      %v7376 = vld [vmem:[%s39 + $0x1f4] sm:$0xf]
      %v7377 = vld [vmem:[%s39 + $0x1f8] sm:$0xf]
      %v7378 = vld [vmem:[%s39 + $0x1fc] sm:$0xf]
      %v7395 = vunpack.c.l.b16 %v7363
      %v7396 = vunpack.c.l.b16 %v7364
      %v7397 = vunpack.c.l.b16 %v7365
      %v7398 = vunpack.c.l.b16 %v7366
      %v7399 = vunpack.c.l.b16 %v7367
      %v7400 = vunpack.c.l.b16 %v7368
      %v7401 = vunpack.c.l.b16 %v7369
      %v7402 = vunpack.c.l.b16 %v7370
      %v7403 = vunpack.c.l.b16 %v7371
      %v7404 = vunpack.c.l.b16 %v7372
      %v7405 = vunpack.c.l.b16 %v7373
      %v7406 = vunpack.c.l.b16 %v7374
      %v7407 = vunpack.c.l.b16 %v7375
      %v7408 = vunpack.c.l.b16 %v7376
      %v7409 = vunpack.c.l.b16 %v7377
      %v7410 = vunpack.c.l.b16 %v7378
      %v7411 = vpack.c.b16 %v7396, %v7395
      %v7412 = vpack.c.b16 %v7398, %v7397
      %v7413 = vpack.c.b16 %v7400, %v7399
      %v7414 = vpack.c.b16 %v7402, %v7401
      %v7415 = vpack.c.b16 %v7404, %v7403
      %v7416 = vpack.c.b16 %v7406, %v7405
      %v7417 = vpack.c.b16 %v7408, %v7407
      %v7418 = vpack.c.b16 %v7410, %v7409
      %7427 = vmatprep.subr.bf16.mxu0 0
      %7428 = vmatpush1.bf16.msra.mxu0 %v7411
      %7429 = vmatprep.subr.bf16.mxu0 0
      %7430 = vmatpush1.bf16.msra.mxu0 %v7412
      %7431 = vmatprep.subr.bf16.mxu0 0
      %7432 = vmatpush1.bf16.msra.mxu0 %v7413
      %7433 = vmatprep.subr.bf16.mxu0 0
      %7434 = vmatpush1.bf16.msra.mxu0 %v7414
      %7435 = vmatprep.subr.bf16.mxu0 0
      %7436 = vmatpush1.bf16.msra.mxu0 %v7415
      %7437 = vmatprep.subr.bf16.mxu0 0
      %7438 = vmatpush1.bf16.msra.mxu0 %v7416
      %7439 = vmatprep.subr.bf16.mxu0 0
      %7440 = vmatpush1.bf16.msra.mxu0 %v7417
      %7441 = vmatprep.subr.bf16.mxu0 0
      %7442 = vmatpush1.bf16.msra.mxu0 %v7418
      %7443 = vmatprep.subr.bf16.mxu0 0
      %7444 = vmatpush1.bf16.msra.mxu0 0
      %7445 = vmatprep.subr.bf16.mxu0 0
      %7446 = vmatpush1.bf16.msra.mxu0 0
      %7447 = vmatprep.subr.bf16.mxu0 0
      %7448 = vmatpush1.bf16.msra.mxu0 0
      %7449 = vmatprep.subr.bf16.mxu0 0
      %7450 = vmatpush1.bf16.msra.mxu0 0
      %7451 = vmatprep.subr.bf16.mxu0 0
      %7452 = vmatpush1.bf16.msra.mxu0 0
      %7453 = vmatprep.subr.bf16.mxu0 0
      %7454 = vmatpush1.bf16.msra.mxu0 0
      %7455 = vmatprep.subr.bf16.mxu0 0
      %7456 = vmatpush1.bf16.msra.mxu0 0
      %7457 = vmatprep.subr.bf16.mxu0 0
      %7458 = vmatpush1.bf16.msra.mxu0 0
      %7459 = vmatprep.mubr.bf16.mxu0 0
      %7460 = vmatmul.mubr.bf16.gmra.mrb[0].mxu0 %v5597
      %v7461 = vpop.f32.mrb[0].mxu0
      %v7462 = vadd.f32 0.0, %v7461
      %v7463 = vpop.f32.mrb[0].mxu0
      %v7464 = vpop.f32.mrb[0].mxu0
      %v7465 = vadd.f32 0.0, %v7464
      %v7466 = vpop.f32.mrb[0].mxu0
      %7467 = vmatprep.mubr.bf16.mxu0 0
      %7468 = vmatmul.mubr.bf16.gmra.mrb[0].mxu0 %v5598
      %v7469 = vpop.f32.mrb[0].mxu0
      %v7470 = vadd.f32 0.0, %v7469
      %v7471 = vpop.f32.mrb[0].mxu0
      %v7472 = vpop.f32.mrb[0].mxu0
      %v7473 = vadd.f32 0.0, %v7472
      %v7474 = vpop.f32.mrb[0].mxu0
      %7475 = vmatprep.mubr.bf16.mxu0 0
      %7476 = vmatmul.mubr.bf16.gmra.mrb[0].mxu0 %v5599
      %v7477 = vpop.f32.mrb[0].mxu0
      %v7478 = vadd.f32 0.0, %v7477
      %v7479 = vpop.f32.mrb[0].mxu0
      %v7480 = vpop.f32.mrb[0].mxu0
      %v7481 = vadd.f32 0.0, %v7480
      %v7482 = vpop.f32.mrb[0].mxu0
      %7483 = vmatprep.mubr.bf16.mxu0 0
      %7484 = vmatmul.mubr.bf16.gmra.mrb[0].mxu0 %v5600
      %v7485 = vpop.f32.mrb[0].mxu0
      %v7486 = vadd.f32 0.0, %v7485
      %v7487 = vpop.f32.mrb[0].mxu0
      %v7488 = vpop.f32.mrb[0].mxu0
      %v7489 = vadd.f32 0.0, %v7488
      %v7490 = vpop.f32.mrb[0].mxu0
      %7491 = vmatprep.mubr.bf16.mxu0 0
      %7492 = vmatmul.mubr.bf16.gmra.mrb[0].mxu0 %v5601
      %v7493 = vpop.f32.mrb[0].mxu0
      %v7494 = vadd.f32 0.0, %v7493
      %v7495 = vpop.f32.mrb[0].mxu0
      %v7496 = vpop.f32.mrb[0].mxu0
      %v7497 = vadd.f32 0.0, %v7496
      %v7498 = vpop.f32.mrb[0].mxu0
      %7499 = vmatprep.mubr.bf16.mxu0 0
      %7500 = vmatmul.mubr.bf16.gmra.mrb[0].mxu0 %v5602
      %v7501 = vpop.f32.mrb[0].mxu0
      %v7502 = vadd.f32 0.0, %v7501
      %v7503 = vpop.f32.mrb[0].mxu0
      %v7504 = vpop.f32.mrb[0].mxu0
      %v7505 = vadd.f32 0.0, %v7504
      %v7506 = vpop.f32.mrb[0].mxu0
      %7507 = vmatprep.mubr.bf16.mxu0 0
      %7508 = vmatmul.mubr.bf16.gmra.mrb[0].mxu0 %v5603
      %v7509 = vpop.f32.mrb[0].mxu0
      %v7510 = vadd.f32 0.0, %v7509
      %v7511 = vpop.f32.mrb[0].mxu0
      %v7512 = vpop.f32.mrb[0].mxu0
      %v7513 = vadd.f32 0.0, %v7512
      %v7514 = vpop.f32.mrb[0].mxu0
      %7515 = vmatprep.mubr.bf16.mxu0 0
      %7516 = vmatmul.mubr.bf16.gmra.mrb[0].mxu0 %v5604
      %v7517 = vpop.f32.mrb[0].mxu0
      %v7518 = vadd.f32 0.0, %v7517
      %v7519 = vpop.f32.mrb[0].mxu0
      %v7520 = vpop.f32.mrb[0].mxu0
      %v7521 = vadd.f32 0.0, %v7520
      %v7522 = vpop.f32.mrb[0].mxu0
      %7523 = vmatprep.mubr.bf16.mxu0 0
      %7524 = vmatmul.mubr.bf16.gmra.mrb[0].mxu0 %v5605
      %v7525 = vpop.f32.mrb[0].mxu0
      %v7526 = vadd.f32 0.0, %v7525
      %v7527 = vpop.f32.mrb[0].mxu0
      %v7528 = vpop.f32.mrb[0].mxu0
      %v7529 = vadd.f32 0.0, %v7528
      %v7530 = vpop.f32.mrb[0].mxu0
      %7531 = vmatprep.mubr.bf16.mxu0 0
      %7532 = vmatmul.mubr.bf16.gmra.mrb[0].mxu0 %v5606
      %v7533 = vpop.f32.mrb[0].mxu0
      %v7534 = vadd.f32 0.0, %v7533
      %v7535 = vpop.f32.mrb[0].mxu0
      %v7536 = vpop.f32.mrb[0].mxu0
      %v7537 = vadd.f32 0.0, %v7536
      %v7538 = vpop.f32.mrb[0].mxu0
      %7539 = vmatprep.mubr.bf16.mxu0 0
      %7540 = vmatmul.mubr.bf16.gmra.mrb[0].mxu0 %v5607
      %v7541 = vpop.f32.mrb[0].mxu0
      %v7542 = vadd.f32 0.0, %v7541
      %v7543 = vpop.f32.mrb[0].mxu0
      %v7544 = vpop.f32.mrb[0].mxu0
      %v7545 = vadd.f32 0.0, %v7544
      %v7546 = vpop.f32.mrb[0].mxu0
      %7547 = vmatprep.mubr.bf16.mxu0 0
      %7548 = vmatmul.mubr.bf16.gmra.mrb[0].mxu0 %v5608
      %v7549 = vpop.f32.mrb[0].mxu0
      %v7550 = vadd.f32 0.0, %v7549
      %v7551 = vpop.f32.mrb[0].mxu0
      %v7552 = vpop.f32.mrb[0].mxu0
      %v7553 = vadd.f32 0.0, %v7552
      %v7554 = vpop.f32.mrb[0].mxu0
      %7555 = vmatprep.mubr.bf16.mxu0 0
      %7556 = vmatmul.mubr.bf16.gmra.mrb[0].mxu0 %v5609
      %v7557 = vpop.f32.mrb[0].mxu0
      %v7558 = vadd.f32 0.0, %v7557
      %v7559 = vpop.f32.mrb[0].mxu0
      %v7560 = vpop.f32.mrb[0].mxu0
      %v7561 = vadd.f32 0.0, %v7560
      %v7562 = vpop.f32.mrb[0].mxu0
      %7563 = vmatprep.mubr.bf16.mxu0 0
      %7564 = vmatmul.mubr.bf16.gmra.mrb[0].mxu0 %v5610
      %v7565 = vpop.f32.mrb[0].mxu0
      %v7566 = vadd.f32 0.0, %v7565
      %v7567 = vpop.f32.mrb[0].mxu0
      %v7568 = vpop.f32.mrb[0].mxu0
      %v7569 = vadd.f32 0.0, %v7568
      %v7570 = vpop.f32.mrb[0].mxu0
      %7571 = vmatprep.mubr.bf16.mxu0 0
      %7572 = vmatmul.mubr.bf16.gmra.mrb[0].mxu0 %v5611
      %v7573 = vpop.f32.mrb[0].mxu0
      %v7574 = vadd.f32 0.0, %v7573
      %v7575 = vpop.f32.mrb[0].mxu0
      %v7576 = vpop.f32.mrb[0].mxu0
      %v7577 = vadd.f32 0.0, %v7576
      %v7578 = vpop.f32.mrb[0].mxu0
      %7579 = vmatprep.mubr.bf16.mxu0 0
      %7580 = vmatmul.mubr.bf16.gmra.mrb[0].mxu0 0
      %v7581 = vpop.f32.mrb[0].mxu0
      %v7582 = vadd.f32 0.0, %v7581
      %v7583 = vpop.f32.mrb[0].mxu0
      %v7584 = vpop.f32.mrb[0].mxu0
      %v7585 = vadd.f32 0.0, %v7584
      %v7586 = vpop.f32.mrb[0].mxu0
      %7587 = vdwg.mxu0
      %v7588 = vadd.f32 %v7331, %v7462
      %v7589 = vadd.f32 %v7332, %v7465
      %v7590 = vadd.f32 %v7333, %v7470
      %v7591 = vadd.f32 %v7334, %v7473
      %v7592 = vadd.f32 %v7335, %v7478
      %v7593 = vadd.f32 %v7336, %v7481
      %v7594 = vadd.f32 %v7337, %v7486
      %v7595 = vadd.f32 %v7338, %v7489
      %v7596 = vadd.f32 %v7339, %v7494
      %v7597 = vadd.f32 %v7340, %v7497
      %v7598 = vadd.f32 %v7341, %v7502
      %v7599 = vadd.f32 %v7342, %v7505
      %v7600 = vadd.f32 %v7343, %v7510
      %v7601 = vadd.f32 %v7344, %v7513
      %v7602 = vadd.f32 %v7345, %v7518
      %v7603 = vadd.f32 %v7346, %v7521
      %v7604 = vadd.f32 %v7347, %v7526
      %v7605 = vadd.f32 %v7348, %v7529
      %v7606 = vadd.f32 %v7349, %v7534
      %v7607 = vadd.f32 %v7350, %v7537
      %v7608 = vadd.f32 %v7351, %v7542
      %v7609 = vadd.f32 %v7352, %v7545
      %v7610 = vadd.f32 %v7353, %v7550
      %v7611 = vadd.f32 %v7354, %v7553
      %v7612 = vadd.f32 %v7355, %v7558
      %v7613 = vadd.f32 %v7356, %v7561
      %v7614 = vadd.f32 %v7357, %v7566
      %v7615 = vadd.f32 %v7358, %v7569
      %v7616 = vadd.f32 %v7359, %v7574
      %v7617 = vadd.f32 %v7360, %v7577
      %v7618 = vadd.f32 %v7361, %v7582
      %v7619 = vadd.f32 %v7362, %v7585
      %v7620 = vld [vmem:[%s39 + $0x200] sm:$0xf]
      %v7621 = vld [vmem:[%s39 + $0x204] sm:$0xf]
      %v7622 = vld [vmem:[%s39 + $0x208] sm:$0xf]
      %v7623 = vld [vmem:[%s39 + $0x20c] sm:$0xf]
      %v7624 = vld [vmem:[%s39 + $0x210] sm:$0xf]
      %v7625 = vld [vmem:[%s39 + $0x214] sm:$0xf]
      %v7626 = vld [vmem:[%s39 + $0x218] sm:$0xf]
      %v7627 = vld [vmem:[%s39 + $0x21c] sm:$0xf]
      %v7628 = vld [vmem:[%s39 + $0x220] sm:$0xf]
      %v7629 = vld [vmem:[%s39 + $0x224] sm:$0xf]
      %v7630 = vld [vmem:[%s39 + $0x228] sm:$0xf]
      %v7631 = vld [vmem:[%s39 + $0x22c] sm:$0xf]
      %v7632 = vld [vmem:[%s39 + $0x230] sm:$0xf]
      %v7633 = vld [vmem:[%s39 + $0x234] sm:$0xf]
      %v7634 = vld [vmem:[%s39 + $0x238] sm:$0xf]
      %v7635 = vld [vmem:[%s39 + $0x23c] sm:$0xf]
      %v7652 = vunpack.c.l.b16 %v7620
      %v7653 = vunpack.c.l.b16 %v7621
      %v7654 = vunpack.c.l.b16 %v7622
      %v7655 = vunpack.c.l.b16 %v7623
      %v7656 = vunpack.c.l.b16 %v7624
      %v7657 = vunpack.c.l.b16 %v7625
      %v7658 = vunpack.c.l.b16 %v7626
      %v7659 = vunpack.c.l.b16 %v7627
      %v7660 = vunpack.c.l.b16 %v7628
      %v7661 = vunpack.c.l.b16 %v7629
      %v7662 = vunpack.c.l.b16 %v7630
      %v7663 = vunpack.c.l.b16 %v7631
      %v7664 = vunpack.c.l.b16 %v7632
      %v7665 = vunpack.c.l.b16 %v7633
      %v7666 = vunpack.c.l.b16 %v7634
      %v7667 = vunpack.c.l.b16 %v7635
      %v7668 = vpack.c.b16 %v7653, %v7652
      %v7669 = vpack.c.b16 %v7655, %v7654
      %v7670 = vpack.c.b16 %v7657, %v7656
      %v7671 = vpack.c.b16 %v7659, %v7658
      %v7672 = vpack.c.b16 %v7661, %v7660
      %v7673 = vpack.c.b16 %v7663, %v7662
      %v7674 = vpack.c.b16 %v7665, %v7664
      %v7675 = vpack.c.b16 %v7667, %v7666
      %7684 = vmatprep.subr.bf16.mxu0 0
      %7685 = vmatpush1.bf16.msra.mxu0 %v7668
      %7686 = vmatprep.subr.bf16.mxu0 0
      %7687 = vmatpush1.bf16.msra.mxu0 %v7669
      %7688 = vmatprep.subr.bf16.mxu0 0
      %7689 = vmatpush1.bf16.msra.mxu0 %v7670
      %7690 = vmatprep.subr.bf16.mxu0 0
      %7691 = vmatpush1.bf16.msra.mxu0 %v7671
      %7692 = vmatprep.subr.bf16.mxu0 0
      %7693 = vmatpush1.bf16.msra.mxu0 %v7672
      %7694 = vmatprep.subr.bf16.mxu0 0
      %7695 = vmatpush1.bf16.msra.mxu0 %v7673
      %7696 = vmatprep.subr.bf16.mxu0 0
      %7697 = vmatpush1.bf16.msra.mxu0 %v7674
      %7698 = vmatprep.subr.bf16.mxu0 0
      %7699 = vmatpush1.bf16.msra.mxu0 %v7675
      %7700 = vmatprep.subr.bf16.mxu0 0
      %7701 = vmatpush1.bf16.msra.mxu0 0
      %7702 = vmatprep.subr.bf16.mxu0 0
      %7703 = vmatpush1.bf16.msra.mxu0 0
      %7704 = vmatprep.subr.bf16.mxu0 0
      %7705 = vmatpush1.bf16.msra.mxu0 0
      %7706 = vmatprep.subr.bf16.mxu0 0
      %7707 = vmatpush1.bf16.msra.mxu0 0
      %7708 = vmatprep.subr.bf16.mxu0 0
      %7709 = vmatpush1.bf16.msra.mxu0 0
      %7710 = vmatprep.subr.bf16.mxu0 0
      %7711 = vmatpush1.bf16.msra.mxu0 0
      %7712 = vmatprep.subr.bf16.mxu0 0
      %7713 = vmatpush1.bf16.msra.mxu0 0
      %7714 = vmatprep.subr.bf16.mxu0 0
      %7715 = vmatpush1.bf16.msra.mxu0 0
      %7716 = vmatprep.mubr.bf16.mxu0 0
      %7717 = vmatmul.mubr.bf16.gmra.mrb[0].mxu0 %v5613
      %v7718 = vpop.f32.mrb[0].mxu0
      %v7719 = vadd.f32 0.0, %v7718
      %v7720 = vpop.f32.mrb[0].mxu0
      %v7721 = vpop.f32.mrb[0].mxu0
      %v7722 = vadd.f32 0.0, %v7721
      %v7723 = vpop.f32.mrb[0].mxu0
      %7724 = vmatprep.mubr.bf16.mxu0 0
      %7725 = vmatmul.mubr.bf16.gmra.mrb[0].mxu0 %v5614
      %v7726 = vpop.f32.mrb[0].mxu0
      %v7727 = vadd.f32 0.0, %v7726
      %v7728 = vpop.f32.mrb[0].mxu0
      %v7729 = vpop.f32.mrb[0].mxu0
      %v7730 = vadd.f32 0.0, %v7729
      %v7731 = vpop.f32.mrb[0].mxu0
      %7732 = vmatprep.mubr.bf16.mxu0 0
      %7733 = vmatmul.mubr.bf16.gmra.mrb[0].mxu0 %v5615
      %v7734 = vpop.f32.mrb[0].mxu0
      %v7735 = vadd.f32 0.0, %v7734
      %v7736 = vpop.f32.mrb[0].mxu0
      %v7737 = vpop.f32.mrb[0].mxu0
      %v7738 = vadd.f32 0.0, %v7737
      %v7739 = vpop.f32.mrb[0].mxu0
      %7740 = vmatprep.mubr.bf16.mxu0 0
      %7741 = vmatmul.mubr.bf16.gmra.mrb[0].mxu0 %v5616
      %v7742 = vpop.f32.mrb[0].mxu0
      %v7743 = vadd.f32 0.0, %v7742
      %v7744 = vpop.f32.mrb[0].mxu0
      %v7745 = vpop.f32.mrb[0].mxu0
      %v7746 = vadd.f32 0.0, %v7745
      %v7747 = vpop.f32.mrb[0].mxu0
      %7748 = vmatprep.mubr.bf16.mxu0 0
      %7749 = vmatmul.mubr.bf16.gmra.mrb[0].mxu0 %v5617
      %v7750 = vpop.f32.mrb[0].mxu0
      %v7751 = vadd.f32 0.0, %v7750
      %v7752 = vpop.f32.mrb[0].mxu0
      %v7753 = vpop.f32.mrb[0].mxu0
      %v7754 = vadd.f32 0.0, %v7753
      %v7755 = vpop.f32.mrb[0].mxu0
      %7756 = vmatprep.mubr.bf16.mxu0 0
      %7757 = vmatmul.mubr.bf16.gmra.mrb[0].mxu0 %v5618
      %v7758 = vpop.f32.mrb[0].mxu0
      %v7759 = vadd.f32 0.0, %v7758
      %v7760 = vpop.f32.mrb[0].mxu0
      %v7761 = vpop.f32.mrb[0].mxu0
      %v7762 = vadd.f32 0.0, %v7761
      %v7763 = vpop.f32.mrb[0].mxu0
      %7764 = vmatprep.mubr.bf16.mxu0 0
      %7765 = vmatmul.mubr.bf16.gmra.mrb[0].mxu0 %v5619
      %v7766 = vpop.f32.mrb[0].mxu0
      %v7767 = vadd.f32 0.0, %v7766
      %v7768 = vpop.f32.mrb[0].mxu0
      %v7769 = vpop.f32.mrb[0].mxu0
      %v7770 = vadd.f32 0.0, %v7769
      %v7771 = vpop.f32.mrb[0].mxu0
      %7772 = vmatprep.mubr.bf16.mxu0 0
      %7773 = vmatmul.mubr.bf16.gmra.mrb[0].mxu0 %v5620
      %v7774 = vpop.f32.mrb[0].mxu0
      %v7775 = vadd.f32 0.0, %v7774
      %v7776 = vpop.f32.mrb[0].mxu0
      %v7777 = vpop.f32.mrb[0].mxu0
      %v7778 = vadd.f32 0.0, %v7777
      %v7779 = vpop.f32.mrb[0].mxu0
      %7780 = vmatprep.mubr.bf16.mxu0 0
      %7781 = vmatmul.mubr.bf16.gmra.mrb[0].mxu0 %v5621
      %v7782 = vpop.f32.mrb[0].mxu0
      %v7783 = vadd.f32 0.0, %v7782
      %v7784 = vpop.f32.mrb[0].mxu0
      %v7785 = vpop.f32.mrb[0].mxu0
      %v7786 = vadd.f32 0.0, %v7785
      %v7787 = vpop.f32.mrb[0].mxu0
      %7788 = vmatprep.mubr.bf16.mxu0 0
      %7789 = vmatmul.mubr.bf16.gmra.mrb[0].mxu0 %v5622
      %v7790 = vpop.f32.mrb[0].mxu0
      %v7791 = vadd.f32 0.0, %v7790
      %v7792 = vpop.f32.mrb[0].mxu0
      %v7793 = vpop.f32.mrb[0].mxu0
      %v7794 = vadd.f32 0.0, %v7793
      %v7795 = vpop.f32.mrb[0].mxu0
      %7796 = vmatprep.mubr.bf16.mxu0 0
      %7797 = vmatmul.mubr.bf16.gmra.mrb[0].mxu0 %v5623
      %v7798 = vpop.f32.mrb[0].mxu0
      %v7799 = vadd.f32 0.0, %v7798
      %v7800 = vpop.f32.mrb[0].mxu0
      %v7801 = vpop.f32.mrb[0].mxu0
      %v7802 = vadd.f32 0.0, %v7801
      %v7803 = vpop.f32.mrb[0].mxu0
      %7804 = vmatprep.mubr.bf16.mxu0 0
      %7805 = vmatmul.mubr.bf16.gmra.mrb[0].mxu0 %v5624
      %v7806 = vpop.f32.mrb[0].mxu0
      %v7807 = vadd.f32 0.0, %v7806
      %v7808 = vpop.f32.mrb[0].mxu0
      %v7809 = vpop.f32.mrb[0].mxu0
      %v7810 = vadd.f32 0.0, %v7809
      %v7811 = vpop.f32.mrb[0].mxu0
      %7812 = vmatprep.mubr.bf16.mxu0 0
      %7813 = vmatmul.mubr.bf16.gmra.mrb[0].mxu0 %v5625
      %v7814 = vpop.f32.mrb[0].mxu0
      %v7815 = vadd.f32 0.0, %v7814
      %v7816 = vpop.f32.mrb[0].mxu0
      %v7817 = vpop.f32.mrb[0].mxu0
      %v7818 = vadd.f32 0.0, %v7817
      %v7819 = vpop.f32.mrb[0].mxu0
      %7820 = vmatprep.mubr.bf16.mxu0 0
      %7821 = vmatmul.mubr.bf16.gmra.mrb[0].mxu0 %v5626
      %v7822 = vpop.f32.mrb[0].mxu0
      %v7823 = vadd.f32 0.0, %v7822
      %v7824 = vpop.f32.mrb[0].mxu0
      %v7825 = vpop.f32.mrb[0].mxu0
      %v7826 = vadd.f32 0.0, %v7825
      %v7827 = vpop.f32.mrb[0].mxu0
      %7828 = vmatprep.mubr.bf16.mxu0 0
      %7829 = vmatmul.mubr.bf16.gmra.mrb[0].mxu0 %v5627
      %v7830 = vpop.f32.mrb[0].mxu0
      %v7831 = vadd.f32 0.0, %v7830
      %v7832 = vpop.f32.mrb[0].mxu0
      %v7833 = vpop.f32.mrb[0].mxu0
      %v7834 = vadd.f32 0.0, %v7833
      %v7835 = vpop.f32.mrb[0].mxu0
      %7836 = vmatprep.mubr.bf16.mxu0 0
      %7837 = vmatmul.mubr.bf16.gmra.mrb[0].mxu0 0
      %v7838 = vpop.f32.mrb[0].mxu0
      %v7839 = vadd.f32 0.0, %v7838
      %v7840 = vpop.f32.mrb[0].mxu0
      %v7841 = vpop.f32.mrb[0].mxu0
      %v7842 = vadd.f32 0.0, %v7841
      %v7843 = vpop.f32.mrb[0].mxu0
      %7844 = vdwg.mxu0
      %v7845 = vadd.f32 %v7588, %v7719
      %v7846 = vadd.f32 %v7589, %v7722
      %v7847 = vadd.f32 %v7590, %v7727
      %v7848 = vadd.f32 %v7591, %v7730
      %v7849 = vadd.f32 %v7592, %v7735
      %v7850 = vadd.f32 %v7593, %v7738
      %v7851 = vadd.f32 %v7594, %v7743
      %v7852 = vadd.f32 %v7595, %v7746
      %v7853 = vadd.f32 %v7596, %v7751
      %v7854 = vadd.f32 %v7597, %v7754
      %v7855 = vadd.f32 %v7598, %v7759
      %v7856 = vadd.f32 %v7599, %v7762
      %v7857 = vadd.f32 %v7600, %v7767
      %v7858 = vadd.f32 %v7601, %v7770
      %v7859 = vadd.f32 %v7602, %v7775
      %v7860 = vadd.f32 %v7603, %v7778
      %v7861 = vadd.f32 %v7604, %v7783
      %v7862 = vadd.f32 %v7605, %v7786
      %v7863 = vadd.f32 %v7606, %v7791
      %v7864 = vadd.f32 %v7607, %v7794
      %v7865 = vadd.f32 %v7608, %v7799
      %v7866 = vadd.f32 %v7609, %v7802
      %v7867 = vadd.f32 %v7610, %v7807
      %v7868 = vadd.f32 %v7611, %v7810
      %v7869 = vadd.f32 %v7612, %v7815
      %v7870 = vadd.f32 %v7613, %v7818
      %v7871 = vadd.f32 %v7614, %v7823
      %v7872 = vadd.f32 %v7615, %v7826
      %v7873 = vadd.f32 %v7616, %v7831
      %v7874 = vadd.f32 %v7617, %v7834
      %v7875 = vadd.f32 %v7618, %v7839
      %v7876 = vadd.f32 %v7619, %v7842
      %v7877 = vld [vmem:[%s41] sm:$0x1]
      %v7879 = vlaneseq
      %v7880 = vshrl.u32 %v7879, 7
      %v7881 = vsub.s32 0, %v7880
      %v7882 = vrot.slane %v7877, %v7881
      %v7884 = vadd.f32 %v7845, %v7882
      %v7885 = vadd.f32 %v7846, %v7882
      %v7886 = vadd.f32 %v7847, %v7882
      %v7887 = vadd.f32 %v7848, %v7882
      %v7888 = vadd.f32 %v7849, %v7882
      %v7889 = vadd.f32 %v7850, %v7882
      %v7890 = vadd.f32 %v7851, %v7882
      %v7891 = vadd.f32 %v7852, %v7882
      %v7892 = vadd.f32 %v7853, %v7882
      %v7893 = vadd.f32 %v7854, %v7882
      %v7894 = vadd.f32 %v7855, %v7882
      %v7895 = vadd.f32 %v7856, %v7882
      %v7896 = vadd.f32 %v7857, %v7882
      %v7897 = vadd.f32 %v7858, %v7882
      %v7898 = vadd.f32 %v7859, %v7882
      %v7899 = vadd.f32 %v7860, %v7882
      %v7900 = vadd.f32 %v7861, %v7882
      %v7901 = vadd.f32 %v7862, %v7882
      %v7902 = vadd.f32 %v7863, %v7882
      %v7903 = vadd.f32 %v7864, %v7882
      %v7904 = vadd.f32 %v7865, %v7882
      %v7905 = vadd.f32 %v7866, %v7882
      %v7906 = vadd.f32 %v7867, %v7882
      %v7907 = vadd.f32 %v7868, %v7882
      %v7908 = vadd.f32 %v7869, %v7882
      %v7909 = vadd.f32 %v7870, %v7882
      %v7910 = vadd.f32 %v7871, %v7882
      %v7911 = vadd.f32 %v7872, %v7882
      %v7912 = vadd.f32 %v7873, %v7882
      %v7913 = vadd.f32 %v7874, %v7882
      %v7914 = vadd.f32 %v7875, %v7882
      %v7915 = vadd.f32 %v7876, %v7882
      %v7916 = vadd.f32 %v1472, %v7884
      %v7917 = vadd.f32 %v1475, %v7885
      %v7918 = vadd.f32 %v1480, %v7886
      %v7919 = vadd.f32 %v1483, %v7887
      %v7920 = vadd.f32 %v1488, %v7888
      %v7921 = vadd.f32 %v1491, %v7889
      %v7922 = vadd.f32 %v1496, %v7890
      %v7923 = vadd.f32 %v1499, %v7891
      %v7924 = vadd.f32 %v1504, %v7892
      %v7925 = vadd.f32 %v1507, %v7893
      %v7926 = vadd.f32 %v1512, %v7894
      %v7927 = vadd.f32 %v1515, %v7895
      %v7928 = vadd.f32 %v1520, %v7896
      %v7929 = vadd.f32 %v1523, %v7897
      %v7930 = vadd.f32 %v1528, %v7898
      %v7931 = vadd.f32 %v1531, %v7899
      %v7932 = vadd.f32 %v1536, %v7900
      %v7933 = vadd.f32 %v1539, %v7901
      %v7934 = vadd.f32 %v1544, %v7902
      %v7935 = vadd.f32 %v1547, %v7903
      %v7936 = vadd.f32 %v1552, %v7904
      %v7937 = vadd.f32 %v1555, %v7905
      %v7938 = vadd.f32 %v1560, %v7906
      %v7939 = vadd.f32 %v1563, %v7907
      %v7940 = vadd.f32 %v1568, %v7908
      %v7941 = vadd.f32 %v1571, %v7909
      %v7942 = vadd.f32 %v1576, %v7910
      %v7943 = vadd.f32 %v1579, %v7911
      %v7944 = vadd.f32 %v1584, %v7912
      %v7945 = vadd.f32 %v1587, %v7913
      %v7946 = vadd.f32 %v1592, %v7914
      %v7947 = vadd.f32 %v1595, %v7915
      %v7948 = vadd.f32 %v7916, %v7917
      %v7949 = vadd.f32 %v7948, %v7918
      %v7950 = vadd.f32 %v7949, %v7919
      %v7951 = vadd.f32 %v7950, %v7920
      %v7952 = vadd.f32 %v7951, %v7921
      %v7953 = vadd.f32 %v7952, %v7922
      %v7954 = vadd.f32 %v7953, %v7923
      %v7955 = vadd.f32 %v7954, %v7924
      %v7956 = vadd.f32 %v7955, %v7925
      %v7957 = vadd.f32 %v7956, %v7926
      %v7958 = vadd.f32 %v7957, %v7927
      %v7959 = vadd.f32 %v7958, %v7928
      %v7960 = vadd.f32 %v7959, %v7929
      %v7961 = vadd.f32 %v7960, %v7930
      %v7962 = vadd.f32 %v7961, %v7931
      %v7963 = vadd.f32 %v7962, %v7932
      %v7964 = vadd.f32 %v7963, %v7933
      %v7965 = vadd.f32 %v7964, %v7934
      %v7966 = vadd.f32 %v7965, %v7935
      %v7967 = vadd.f32 %v7966, %v7936
      %v7968 = vadd.f32 %v7967, %v7937
      %v7969 = vadd.f32 %v7968, %v7938
      %v7970 = vadd.f32 %v7969, %v7939
      %v7971 = vadd.f32 %v7970, %v7940
      %v7972 = vadd.f32 %v7971, %v7941
      %v7973 = vadd.f32 %v7972, %v7942
      %v7974 = vadd.f32 %v7973, %v7943
      %v7975 = vadd.f32 %v7974, %v7944
      %v7976 = vadd.f32 %v7975, %v7945
      %v7977 = vadd.f32 %v7976, %v7946
      %v7978 = vadd.f32 %v7977, %v7947
      %v7979 = vrot.slane %v7978, 4
      %v7980 = vadd.f32 %v7978, %v7979
      %v7981 = vrot.slane %v7980, 2
      %v7982 = vadd.f32 %v7980, %v7981
      %v7983 = vrot.slane %v7982, 1
      %v7984 = vadd.f32 %v7982, %v7983
      %v7985 = vmul.f32 %v7916, %v7916
      %v7986 = vmul.f32 %v7917, %v7917
      %v7987 = vmul.f32 %v7918, %v7918
      %v7988 = vmul.f32 %v7919, %v7919
      %v7989 = vmul.f32 %v7920, %v7920
      %v7990 = vmul.f32 %v7921, %v7921
      %v7991 = vmul.f32 %v7922, %v7922
      %v7992 = vmul.f32 %v7923, %v7923
      %v7993 = vmul.f32 %v7924, %v7924
      %v7994 = vmul.f32 %v7925, %v7925
      %v7995 = vmul.f32 %v7926, %v7926
      %v7996 = vmul.f32 %v7927, %v7927
      %v7997 = vmul.f32 %v7928, %v7928
      %v7998 = vmul.f32 %v7929, %v7929
      %v7999 = vmul.f32 %v7930, %v7930
      %v8000 = vmul.f32 %v7931, %v7931
      %v8001 = vmul.f32 %v7932, %v7932
      %v8002 = vmul.f32 %v7933, %v7933
      %v8003 = vmul.f32 %v7934, %v7934
      %v8004 = vmul.f32 %v7935, %v7935
      %v8005 = vmul.f32 %v7936, %v7936
      %v8006 = vmul.f32 %v7937, %v7937
      %v8007 = vmul.f32 %v7938, %v7938
      %v8008 = vmul.f32 %v7939, %v7939
      %v8009 = vmul.f32 %v7940, %v7940
      %v8010 = vmul.f32 %v7941, %v7941
      %v8011 = vmul.f32 %v7942, %v7942
      %v8012 = vmul.f32 %v7943, %v7943
      %v8013 = vmul.f32 %v7944, %v7944
      %v8014 = vmul.f32 %v7945, %v7945
      %v8015 = vmul.f32 %v7946, %v7946
      %v8016 = vmul.f32 %v7947, %v7947
      %v8017 = vadd.f32 %v7985, %v7986
      %v8018 = vadd.f32 %v8017, %v7987
      %v8019 = vadd.f32 %v8018, %v7988
      %v8020 = vadd.f32 %v8019, %v7989
      %v8021 = vadd.f32 %v8020, %v7990
      %v8022 = vadd.f32 %v8021, %v7991
      %v8023 = vadd.f32 %v8022, %v7992
      %v8024 = vadd.f32 %v8023, %v7993
      %v8025 = vadd.f32 %v8024, %v7994
      %v8026 = vadd.f32 %v8025, %v7995
      %v8027 = vadd.f32 %v8026, %v7996
      %v8028 = vadd.f32 %v8027, %v7997
      %v8029 = vadd.f32 %v8028, %v7998
      %v8030 = vadd.f32 %v8029, %v7999
      %v8031 = vadd.f32 %v8030, %v8000
      %v8032 = vadd.f32 %v8031, %v8001
      %v8033 = vadd.f32 %v8032, %v8002
      %v8034 = vadd.f32 %v8033, %v8003
      %v8035 = vadd.f32 %v8034, %v8004
      %v8036 = vadd.f32 %v8035, %v8005
      %v8037 = vadd.f32 %v8036, %v8006
      %v8038 = vadd.f32 %v8037, %v8007
      %v8039 = vadd.f32 %v8038, %v8008
      %v8040 = vadd.f32 %v8039, %v8009
      %v8041 = vadd.f32 %v8040, %v8010
      %v8042 = vadd.f32 %v8041, %v8011
      %v8043 = vadd.f32 %v8042, %v8012
      %v8044 = vadd.f32 %v8043, %v8013
      %v8045 = vadd.f32 %v8044, %v8014
      %v8046 = vadd.f32 %v8045, %v8015
      %v8047 = vadd.f32 %v8046, %v8016
      %v8048 = vrot.slane %v8047, 4
      %v8049 = vadd.f32 %v8047, %v8048
      %v8050 = vrot.slane %v8049, 2
      %v8051 = vadd.f32 %v8049, %v8050
      %v8052 = vrot.slane %v8051, 1
      %v8053 = vadd.f32 %v8051, %v8052
      %v8054 = vsel %vm1704, %v7984, %v8053
      %8055 = vmatprep.subr.mxu0 0.0
      %8056 = vmatpush1.msra.mxu0 %v1706
      %8057 = vmatprep.subr.mxu0 0.0
      %8058 = vmatpush1.msra.mxu0 %v1707
      %8059 = vmatprep.subr.mxu0 0.0
      %8060 = vmatpush1.msra.mxu0 %v1708
      %8061 = vmatprep.subr.mxu0 0.0
      %8062 = vmatpush1.msra.mxu0 %v1709
      %8063 = vmatprep.subr.mxu0 0.0
      %8064 = vmatpush1.msra.mxu0 %v1710
      %8065 = vmatprep.subr.mxu0 0.0
      %8066 = vmatpush1.msra.mxu0 %v1711
      %8067 = vmatprep.subr.mxu0 0.0
      %8068 = vmatpush1.msra.mxu0 %v1712
      %8069 = vmatprep.subr.mxu0 0.0
      %8070 = vmatpush1.msra.mxu0 %v1713
      %8071 = vmatprep.subr.mxu0 0.0
      %8072 = vmatpush1.msra.mxu0 %v1714
      %8073 = vmatprep.subr.mxu0 0.0
      %8074 = vmatpush1.msra.mxu0 %v1715
      %8075 = vmatprep.subr.mxu0 0.0
      %8076 = vmatpush1.msra.mxu0 %v1716
      %8077 = vmatprep.subr.mxu0 0.0
      %8078 = vmatpush1.msra.mxu0 %v1717
      %8079 = vmatprep.subr.mxu0 0.0
      %8080 = vmatpush1.msra.mxu0 %v1718
      %8081 = vmatprep.subr.mxu0 0.0
      %8082 = vmatpush1.msra.mxu0 %v1719
      %8083 = vmatprep.subr.mxu0 0.0
      %8084 = vmatpush1.msra.mxu0 %v1720
      %8085 = vmatprep.subr.mxu0 0.0
      %8086 = vmatpush1.msra.mxu0 %v1721
      %8087 = vmatprep.subr.mxu0 0.0
      %8088 = vmatpush1.msra.mxu0 0.0
      %8089 = vmatprep.subr.mxu0 0.0
      %8090 = vmatpush1.msra.mxu0 0.0
      %8091 = vmatprep.subr.mxu0 0.0
      %8092 = vmatpush1.msra.mxu0 0.0
      %8093 = vmatprep.subr.mxu0 0.0
      %8094 = vmatpush1.msra.mxu0 0.0
      %8095 = vmatprep.subr.mxu0 0.0
      %8096 = vmatpush1.msra.mxu0 0.0
      %8097 = vmatprep.subr.mxu0 0.0
      %8098 = vmatpush1.msra.mxu0 0.0
      %8099 = vmatprep.subr.mxu0 0.0
      %8100 = vmatpush1.msra.mxu0 0.0
      %8101 = vmatprep.subr.mxu0 0.0
      %8102 = vmatpush1.msra.mxu0 0.0
      %8103 = vmatprep.subr.mxu0 0.0
      %8104 = vmatpush1.msra.mxu0 0.0
      %8105 = vmatprep.subr.mxu0 0.0
      %8106 = vmatpush1.msra.mxu0 0.0
      %8107 = vmatprep.subr.mxu0 0.0
      %8108 = vmatpush1.msra.mxu0 0.0
      %8109 = vmatprep.subr.mxu0 0.0
      %8110 = vmatpush1.msra.mxu0 0.0
      %8111 = vmatprep.subr.mxu0 0.0
      %8112 = vmatpush1.msra.mxu0 0.0
      %8113 = vmatprep.subr.mxu0 0.0
      %8114 = vmatpush1.msra.mxu0 0.0
      %8115 = vmatprep.subr.mxu0 0.0
      %8116 = vmatpush1.msra.mxu0 0.0
      %8117 = vmatprep.subr.mxu0 0.0
      %8118 = vmatpush1.msra.mxu0 0.0
      %8119 = vmatprep.mubr.f32.mxu0 0.0
      %8120 = vmatmul.mubr.f32.gmra.mrb[0].mxu0 %v8054
      %v8121 = vpop.f32.mrb[0].mxu0
      %v8122 = vadd.f32 0.0, %v8121
      %v8123 = vpop.f32.mrb[0].mxu0
      %8124 = vdwg.mxu0
      %v8125 = vmul.f32 %v8122, %v1792
      %v8126 = vmul.f32 %v8125, %v8125
      %v8128 = vrot.slane %v8126, 7
      %v8130 = vsub.f32 %v8125, %v8128
      %v8131 = vmax.f32 %v8130, 0.0
      %v8132 = vadd.f32 %v8131, 1e-05
      %v8133 = vrsqrt.pop %v8132
      %v8134 = vsel %vm1704, %v8125, %v8133
      %v8136 = vsel %vm1804, %v8134, 0
      %8138 = vmatprep.subr.mxu0 0.0
      %8139 = vmatpush1.msra.mxu0 %v1810
      %8140 = vmatprep.subr.mxu0 0.0
      %8141 = vmatpush1.msra.mxu0 0.0
      %8142 = vmatprep.subr.mxu0 0.0
      %8143 = vmatpush1.msra.mxu0 0.0
      %8144 = vmatprep.subr.mxu0 0.0
      %8145 = vmatpush1.msra.mxu0 0.0
      %8146 = vmatprep.subr.mxu0 0.0
      %8147 = vmatpush1.msra.mxu0 0.0
      %8148 = vmatprep.subr.mxu0 0.0
      %8149 = vmatpush1.msra.mxu0 0.0
      %8150 = vmatprep.subr.mxu0 0.0
      %8151 = vmatpush1.msra.mxu0 0.0
      %8152 = vmatprep.subr.mxu0 0.0
      %8153 = vmatpush1.msra.mxu0 0.0
      %8154 = vmatprep.subr.mxu0 0.0
      %8155 = vmatpush1.msra.mxu0 0.0
      %8156 = vmatprep.subr.mxu0 0.0
      %8157 = vmatpush1.msra.mxu0 0.0
      %8158 = vmatprep.subr.mxu0 0.0
      %8159 = vmatpush1.msra.mxu0 0.0
      %8160 = vmatprep.subr.mxu0 0.0
      %8161 = vmatpush1.msra.mxu0 0.0
      %8162 = vmatprep.subr.mxu0 0.0
      %8163 = vmatpush1.msra.mxu0 0.0
      %8164 = vmatprep.subr.mxu0 0.0
      %8165 = vmatpush1.msra.mxu0 0.0
      %8166 = vmatprep.subr.mxu0 0.0
      %8167 = vmatpush1.msra.mxu0 0.0
      %8168 = vmatprep.subr.mxu0 0.0
      %8169 = vmatpush1.msra.mxu0 0.0
      %8170 = vmatprep.subr.mxu0 0.0
      %8171 = vmatpush1.msra.mxu0 0.0
      %8172 = vmatprep.subr.mxu0 0.0
      %8173 = vmatpush1.msra.mxu0 0.0
      %8174 = vmatprep.subr.mxu0 0.0
      %8175 = vmatpush1.msra.mxu0 0.0
      %8176 = vmatprep.subr.mxu0 0.0
      %8177 = vmatpush1.msra.mxu0 0.0
      %8178 = vmatprep.subr.mxu0 0.0
      %8179 = vmatpush1.msra.mxu0 0.0
      %8180 = vmatprep.subr.mxu0 0.0
      %8181 = vmatpush1.msra.mxu0 0.0
      %8182 = vmatprep.subr.mxu0 0.0
      %8183 = vmatpush1.msra.mxu0 0.0
      %8184 = vmatprep.subr.mxu0 0.0
      %8185 = vmatpush1.msra.mxu0 0.0
      %8186 = vmatprep.subr.mxu0 0.0
      %8187 = vmatpush1.msra.mxu0 0.0
      %8188 = vmatprep.subr.mxu0 0.0
      %8189 = vmatpush1.msra.mxu0 0.0
      %8190 = vmatprep.subr.mxu0 0.0
      %8191 = vmatpush1.msra.mxu0 0.0
      %8192 = vmatprep.subr.mxu0 0.0
      %8193 = vmatpush1.msra.mxu0 0.0
      %8194 = vmatprep.subr.mxu0 0.0
      %8195 = vmatpush1.msra.mxu0 0.0
      %8196 = vmatprep.subr.mxu0 0.0
      %8197 = vmatpush1.msra.mxu0 0.0
      %8198 = vmatprep.subr.mxu0 0.0
      %8199 = vmatpush1.msra.mxu0 0.0
      %8200 = vmatprep.subr.mxu0 0.0
      %8201 = vmatpush1.msra.mxu0 0.0
      %8202 = vmatprep.mubr.f32.mxu0 0.0
      %8203 = vmatmul.mubr.f32.gmra.mrb[0].mxu0 %v8136
      %v8204 = vpop.f32.mrb[0].mxu0
      %v8205 = vadd.f32 0.0, %v8204
      %v8206 = vpop.f32.mrb[0].mxu0
      %8207 = vdwg.mxu0
      %v8208 = vld [vmem:[%s43] sm:$0x1]
      %v8210 = vlaneseq
      %v8211 = vshrl.u32 %v8210, 7
      %v8212 = vsub.s32 0, %v8211
      %v8213 = vrot.slane %v8208, %v8212
      %v8215 = vmul.f32 %v8205, %v8213
      %v8216 = vld [vmem:[%s45] sm:$0x1]
      %v8218 = vrot.slane %v8215, 1
      %v8220 = vmul.f32 %v8205, %v8218
      %v8221 = vsub.f32 %v8216, %v8220
      %v8222 = vlaneseq
      %v8223 = vshrl.u32 %v8222, 7
      %v8224 = vsub.s32 1, %v8223
      %v8225 = vrot.slane %v8215, %v8224
      %v8226 = vmul.f32 %v7916, %v8225
      %v8227 = vmul.f32 %v7917, %v8225
      %v8228 = vmul.f32 %v7918, %v8225
      %v8229 = vmul.f32 %v7919, %v8225
      %v8230 = vmul.f32 %v7920, %v8225
      %v8231 = vmul.f32 %v7921, %v8225
      %v8232 = vmul.f32 %v7922, %v8225
      %v8233 = vmul.f32 %v7923, %v8225
      %v8234 = vmul.f32 %v7924, %v8225
      %v8235 = vmul.f32 %v7925, %v8225
      %v8236 = vmul.f32 %v7926, %v8225
      %v8237 = vmul.f32 %v7927, %v8225
      %v8238 = vmul.f32 %v7928, %v8225
      %v8239 = vmul.f32 %v7929, %v8225
      %v8240 = vmul.f32 %v7930, %v8225
      %v8241 = vmul.f32 %v7931, %v8225
      %v8242 = vmul.f32 %v7932, %v8225
      %v8243 = vmul.f32 %v7933, %v8225
      %v8244 = vmul.f32 %v7934, %v8225
      %v8245 = vmul.f32 %v7935, %v8225
      %v8246 = vmul.f32 %v7936, %v8225
      %v8247 = vmul.f32 %v7937, %v8225
      %v8248 = vmul.f32 %v7938, %v8225
      %v8249 = vmul.f32 %v7939, %v8225
      %v8250 = vmul.f32 %v7940, %v8225
      %v8251 = vmul.f32 %v7941, %v8225
      %v8252 = vmul.f32 %v7942, %v8225
      %v8253 = vmul.f32 %v7943, %v8225
      %v8254 = vmul.f32 %v7944, %v8225
      %v8255 = vmul.f32 %v7945, %v8225
      %v8256 = vmul.f32 %v7946, %v8225
      %v8257 = vmul.f32 %v7947, %v8225
      %v8259 = vlaneseq
      %v8260 = vshrl.u32 %v8259, 7
      %v8261 = vsub.s32 0, %v8260
      %v8262 = vrot.slane %v8221, %v8261
      %v8264 = vadd.f32 %v8226, %v8262
      %v8265 = vadd.f32 %v8227, %v8262
      %v8266 = vadd.f32 %v8228, %v8262
      %v8267 = vadd.f32 %v8229, %v8262
      %v8268 = vadd.f32 %v8230, %v8262
      %v8269 = vadd.f32 %v8231, %v8262
      %v8270 = vadd.f32 %v8232, %v8262
      %v8271 = vadd.f32 %v8233, %v8262
      %v8272 = vadd.f32 %v8234, %v8262
      %v8273 = vadd.f32 %v8235, %v8262
      %v8274 = vadd.f32 %v8236, %v8262
      %v8275 = vadd.f32 %v8237, %v8262
      %v8276 = vadd.f32 %v8238, %v8262
      %v8277 = vadd.f32 %v8239, %v8262
      %v8278 = vadd.f32 %v8240, %v8262
      %v8279 = vadd.f32 %v8241, %v8262
      %v8280 = vadd.f32 %v8242, %v8262
      %v8281 = vadd.f32 %v8243, %v8262
      %v8282 = vadd.f32 %v8244, %v8262
      %v8283 = vadd.f32 %v8245, %v8262
      %v8284 = vadd.f32 %v8246, %v8262
      %v8285 = vadd.f32 %v8247, %v8262
      %v8286 = vadd.f32 %v8248, %v8262
      %v8287 = vadd.f32 %v8249, %v8262
      %v8288 = vadd.f32 %v8250, %v8262
      %v8289 = vadd.f32 %v8251, %v8262
      %v8290 = vadd.f32 %v8252, %v8262
      %v8291 = vadd.f32 %v8253, %v8262
      %v8292 = vadd.f32 %v8254, %v8262
      %v8293 = vadd.f32 %v8255, %v8262
      %v8294 = vadd.f32 %v8256, %v8262
      %v8295 = vadd.f32 %v8257, %v8262
      %v8296 = vpack.c.bf16 %v8265, %v8264
      %v8297 = vpack.c.bf16 %v8267, %v8266
      %v8298 = vpack.c.bf16 %v8269, %v8268
      %v8299 = vpack.c.bf16 %v8271, %v8270
      %v8300 = vpack.c.bf16 %v8273, %v8272
      %v8301 = vpack.c.bf16 %v8275, %v8274
      %v8302 = vpack.c.bf16 %v8277, %v8276
      %v8303 = vpack.c.bf16 %v8279, %v8278
      %v8304 = vpack.c.bf16 %v8281, %v8280
      %v8305 = vpack.c.bf16 %v8283, %v8282
      %v8306 = vpack.c.bf16 %v8285, %v8284
      %v8307 = vpack.c.bf16 %v8287, %v8286
      %v8308 = vpack.c.bf16 %v8289, %v8288
      %v8309 = vpack.c.bf16 %v8291, %v8290
      %v8310 = vpack.c.bf16 %v8293, %v8292
      %v8311 = vpack.c.bf16 %v8295, %v8294
      %v8312 = vld [vmem:[%s47] sm:$0xf]
      %v8313 = vld [vmem:[%s47 + $0x4] sm:$0xf]
      %v8314 = vld [vmem:[%s47 + $0x8] sm:$0xf]
      %v8315 = vld [vmem:[%s47 + $0xc] sm:$0xf]
      %v8316 = vld [vmem:[%s47 + $0x10] sm:$0xf]
      %v8317 = vld [vmem:[%s47 + $0x14] sm:$0xf]
      %v8318 = vld [vmem:[%s47 + $0x18] sm:$0xf]
      %v8319 = vld [vmem:[%s47 + $0x1c] sm:$0xf]
      %v8320 = vld [vmem:[%s47 + $0x20] sm:$0xf]
      %v8321 = vld [vmem:[%s47 + $0x24] sm:$0xf]
      %v8322 = vld [vmem:[%s47 + $0x28] sm:$0xf]
      %v8323 = vld [vmem:[%s47 + $0x2c] sm:$0xf]
      %v8324 = vld [vmem:[%s47 + $0x30] sm:$0xf]
      %v8325 = vld [vmem:[%s47 + $0x34] sm:$0xf]
      %v8326 = vld [vmem:[%s47 + $0x38] sm:$0xf]
      %v8327 = vld [vmem:[%s47 + $0x3c] sm:$0xf]
      %v8344 = vunpack.c.l.b16 %v8312
      %v8345 = vunpack.c.l.b16 %v8313
      %v8346 = vunpack.c.l.b16 %v8314
      %v8347 = vunpack.c.l.b16 %v8315
      %v8348 = vunpack.c.l.b16 %v8316
      %v8349 = vunpack.c.l.b16 %v8317
      %v8350 = vunpack.c.l.b16 %v8318
      %v8351 = vunpack.c.l.b16 %v8319
      %v8352 = vunpack.c.l.b16 %v8320
      %v8353 = vunpack.c.l.b16 %v8321
      %v8354 = vunpack.c.l.b16 %v8322
      %v8355 = vunpack.c.l.b16 %v8323
      %v8356 = vunpack.c.l.b16 %v8324
      %v8357 = vunpack.c.l.b16 %v8325
      %v8358 = vunpack.c.l.b16 %v8326
      %v8359 = vunpack.c.l.b16 %v8327
      %v8360 = vpack.c.b16 %v8345, %v8344
      %v8361 = vpack.c.b16 %v8347, %v8346
      %v8362 = vpack.c.b16 %v8349, %v8348
      %v8363 = vpack.c.b16 %v8351, %v8350
      %v8364 = vpack.c.b16 %v8353, %v8352
      %v8365 = vpack.c.b16 %v8355, %v8354
      %v8366 = vpack.c.b16 %v8357, %v8356
      %v8367 = vpack.c.b16 %v8359, %v8358
      %8376 = vmatprep.subr.bf16.mxu0 0
      %8377 = vmatpush1.bf16.msra.mxu0 %v8360
      %8378 = vmatprep.subr.bf16.mxu0 0
      %8379 = vmatpush1.bf16.msra.mxu0 %v8361
      %8380 = vmatprep.subr.bf16.mxu0 0
      %8381 = vmatpush1.bf16.msra.mxu0 %v8362
      %8382 = vmatprep.subr.bf16.mxu0 0
      %8383 = vmatpush1.bf16.msra.mxu0 %v8363
      %8384 = vmatprep.subr.bf16.mxu0 0
      %8385 = vmatpush1.bf16.msra.mxu0 %v8364
      %8386 = vmatprep.subr.bf16.mxu0 0
      %8387 = vmatpush1.bf16.msra.mxu0 %v8365
      %8388 = vmatprep.subr.bf16.mxu0 0
      %8389 = vmatpush1.bf16.msra.mxu0 %v8366
      %8390 = vmatprep.subr.bf16.mxu0 0
      %8391 = vmatpush1.bf16.msra.mxu0 %v8367
      %8392 = vmatprep.subr.bf16.mxu0 0
      %8393 = vmatpush1.bf16.msra.mxu0 0
      %8394 = vmatprep.subr.bf16.mxu0 0
      %8395 = vmatpush1.bf16.msra.mxu0 0
      %8396 = vmatprep.subr.bf16.mxu0 0
      %8397 = vmatpush1.bf16.msra.mxu0 0
      %8398 = vmatprep.subr.bf16.mxu0 0
      %8399 = vmatpush1.bf16.msra.mxu0 0
      %8400 = vmatprep.subr.bf16.mxu0 0
      %8401 = vmatpush1.bf16.msra.mxu0 0
      %8402 = vmatprep.subr.bf16.mxu0 0
      %8403 = vmatpush1.bf16.msra.mxu0 0
      %8404 = vmatprep.subr.bf16.mxu0 0
      %8405 = vmatpush1.bf16.msra.mxu0 0
      %8406 = vmatprep.subr.bf16.mxu0 0
      %8407 = vmatpush1.bf16.msra.mxu0 0
      %8408 = vmatprep.mubr.bf16.mxu0 0
      %8409 = vmatmul.mubr.bf16.gmra.mrb[0].mxu0 %v8296
      %v8410 = vpop.f32.mrb[0].mxu0
      %v8411 = vadd.f32 0.0, %v8410
      %v8412 = vpop.f32.mrb[0].mxu0
      %v8413 = vpop.f32.mrb[0].mxu0
      %v8414 = vadd.f32 0.0, %v8413
      %v8415 = vpop.f32.mrb[0].mxu0
      %8416 = vmatprep.mubr.bf16.mxu0 0
      %8417 = vmatmul.mubr.bf16.gmra.mrb[0].mxu0 %v8297
      %v8418 = vpop.f32.mrb[0].mxu0
      %v8419 = vadd.f32 0.0, %v8418
      %v8420 = vpop.f32.mrb[0].mxu0
      %v8421 = vpop.f32.mrb[0].mxu0
      %v8422 = vadd.f32 0.0, %v8421
      %v8423 = vpop.f32.mrb[0].mxu0
      %8424 = vmatprep.mubr.bf16.mxu0 0
      %8425 = vmatmul.mubr.bf16.gmra.mrb[0].mxu0 %v8298
      %v8426 = vpop.f32.mrb[0].mxu0
      %v8427 = vadd.f32 0.0, %v8426
      %v8428 = vpop.f32.mrb[0].mxu0
      %v8429 = vpop.f32.mrb[0].mxu0
      %v8430 = vadd.f32 0.0, %v8429
      %v8431 = vpop.f32.mrb[0].mxu0
      %8432 = vmatprep.mubr.bf16.mxu0 0
      %8433 = vmatmul.mubr.bf16.gmra.mrb[0].mxu0 %v8299
      %v8434 = vpop.f32.mrb[0].mxu0
      %v8435 = vadd.f32 0.0, %v8434
      %v8436 = vpop.f32.mrb[0].mxu0
      %v8437 = vpop.f32.mrb[0].mxu0
      %v8438 = vadd.f32 0.0, %v8437
      %v8439 = vpop.f32.mrb[0].mxu0
      %8440 = vmatprep.mubr.bf16.mxu0 0
      %8441 = vmatmul.mubr.bf16.gmra.mrb[0].mxu0 %v8300
      %v8442 = vpop.f32.mrb[0].mxu0
      %v8443 = vadd.f32 0.0, %v8442
      %v8444 = vpop.f32.mrb[0].mxu0
      %v8445 = vpop.f32.mrb[0].mxu0
      %v8446 = vadd.f32 0.0, %v8445
      %v8447 = vpop.f32.mrb[0].mxu0
      %8448 = vmatprep.mubr.bf16.mxu0 0
      %8449 = vmatmul.mubr.bf16.gmra.mrb[0].mxu0 %v8301
      %v8450 = vpop.f32.mrb[0].mxu0
      %v8451 = vadd.f32 0.0, %v8450
      %v8452 = vpop.f32.mrb[0].mxu0
      %v8453 = vpop.f32.mrb[0].mxu0
      %v8454 = vadd.f32 0.0, %v8453
      %v8455 = vpop.f32.mrb[0].mxu0
      %8456 = vmatprep.mubr.bf16.mxu0 0
      %8457 = vmatmul.mubr.bf16.gmra.mrb[0].mxu0 %v8302
      %v8458 = vpop.f32.mrb[0].mxu0
      %v8459 = vadd.f32 0.0, %v8458
      %v8460 = vpop.f32.mrb[0].mxu0
      %v8461 = vpop.f32.mrb[0].mxu0
      %v8462 = vadd.f32 0.0, %v8461
      %v8463 = vpop.f32.mrb[0].mxu0
      %8464 = vmatprep.mubr.bf16.mxu0 0
      %8465 = vmatmul.mubr.bf16.gmra.mrb[0].mxu0 %v8303
      %v8466 = vpop.f32.mrb[0].mxu0
      %v8467 = vadd.f32 0.0, %v8466
      %v8468 = vpop.f32.mrb[0].mxu0
      %v8469 = vpop.f32.mrb[0].mxu0
      %v8470 = vadd.f32 0.0, %v8469
      %v8471 = vpop.f32.mrb[0].mxu0
      %8472 = vmatprep.mubr.bf16.mxu0 0
      %8473 = vmatmul.mubr.bf16.gmra.mrb[0].mxu0 %v8304
      %v8474 = vpop.f32.mrb[0].mxu0
      %v8475 = vadd.f32 0.0, %v8474
      %v8476 = vpop.f32.mrb[0].mxu0
      %v8477 = vpop.f32.mrb[0].mxu0
      %v8478 = vadd.f32 0.0, %v8477
      %v8479 = vpop.f32.mrb[0].mxu0
      %8480 = vmatprep.mubr.bf16.mxu0 0
      %8481 = vmatmul.mubr.bf16.gmra.mrb[0].mxu0 %v8305
      %v8482 = vpop.f32.mrb[0].mxu0
      %v8483 = vadd.f32 0.0, %v8482
      %v8484 = vpop.f32.mrb[0].mxu0
      %v8485 = vpop.f32.mrb[0].mxu0
      %v8486 = vadd.f32 0.0, %v8485
      %v8487 = vpop.f32.mrb[0].mxu0
      %8488 = vmatprep.mubr.bf16.mxu0 0
      %8489 = vmatmul.mubr.bf16.gmra.mrb[0].mxu0 %v8306
      %v8490 = vpop.f32.mrb[0].mxu0
      %v8491 = vadd.f32 0.0, %v8490
      %v8492 = vpop.f32.mrb[0].mxu0
      %v8493 = vpop.f32.mrb[0].mxu0
      %v8494 = vadd.f32 0.0, %v8493
      %v8495 = vpop.f32.mrb[0].mxu0
      %8496 = vmatprep.mubr.bf16.mxu0 0
      %8497 = vmatmul.mubr.bf16.gmra.mrb[0].mxu0 %v8307
      %v8498 = vpop.f32.mrb[0].mxu0
      %v8499 = vadd.f32 0.0, %v8498
      %v8500 = vpop.f32.mrb[0].mxu0
      %v8501 = vpop.f32.mrb[0].mxu0
      %v8502 = vadd.f32 0.0, %v8501
      %v8503 = vpop.f32.mrb[0].mxu0
      %8504 = vmatprep.mubr.bf16.mxu0 0
      %8505 = vmatmul.mubr.bf16.gmra.mrb[0].mxu0 %v8308
      %v8506 = vpop.f32.mrb[0].mxu0
      %v8507 = vadd.f32 0.0, %v8506
      %v8508 = vpop.f32.mrb[0].mxu0
      %v8509 = vpop.f32.mrb[0].mxu0
      %v8510 = vadd.f32 0.0, %v8509
      %v8511 = vpop.f32.mrb[0].mxu0
      %8512 = vmatprep.mubr.bf16.mxu0 0
      %8513 = vmatmul.mubr.bf16.gmra.mrb[0].mxu0 %v8309
      %v8514 = vpop.f32.mrb[0].mxu0
      %v8515 = vadd.f32 0.0, %v8514
      %v8516 = vpop.f32.mrb[0].mxu0
      %v8517 = vpop.f32.mrb[0].mxu0
      %v8518 = vadd.f32 0.0, %v8517
      %v8519 = vpop.f32.mrb[0].mxu0
      %8520 = vmatprep.mubr.bf16.mxu0 0
      %8521 = vmatmul.mubr.bf16.gmra.mrb[0].mxu0 %v8310
      %v8522 = vpop.f32.mrb[0].mxu0
      %v8523 = vadd.f32 0.0, %v8522
      %v8524 = vpop.f32.mrb[0].mxu0
      %v8525 = vpop.f32.mrb[0].mxu0
      %v8526 = vadd.f32 0.0, %v8525
      %v8527 = vpop.f32.mrb[0].mxu0
      %8528 = vmatprep.mubr.bf16.mxu0 0
      %8529 = vmatmul.mubr.bf16.gmra.mrb[0].mxu0 %v8311
      %v8530 = vpop.f32.mrb[0].mxu0
      %v8531 = vadd.f32 0.0, %v8530
      %v8532 = vpop.f32.mrb[0].mxu0
      %v8533 = vpop.f32.mrb[0].mxu0
      %v8534 = vadd.f32 0.0, %v8533
      %v8535 = vpop.f32.mrb[0].mxu0
      %8536 = vdwg.mxu0
      %v8537 = vld [vmem:[%s1012] sm:$0xf]
      %v8538 = vld [vmem:[%s49] sm:$0xf]
      %v8539 = vld [vmem:[%s49 + $0x4] sm:$0xf]
      %v8540 = vld [vmem:[%s49 + $0x8] sm:$0xf]
      %v8541 = vld [vmem:[%s49 + $0xc] sm:$0xf]
      %v8542 = vld [vmem:[%s49 + $0x10] sm:$0xf]
      %v8543 = vld [vmem:[%s49 + $0x14] sm:$0xf]
      %v8544 = vld [vmem:[%s49 + $0x18] sm:$0xf]
      %v8545 = vld [vmem:[%s49 + $0x1c] sm:$0xf]
      %v8546 = vld [vmem:[%s49 + $0x20] sm:$0xf]
      %v8547 = vld [vmem:[%s49 + $0x24] sm:$0xf]
      %v8548 = vld [vmem:[%s49 + $0x28] sm:$0xf]
      %v8549 = vld [vmem:[%s49 + $0x2c] sm:$0xf]
      %v8550 = vld [vmem:[%s49 + $0x30] sm:$0xf]
      %v8551 = vld [vmem:[%s49 + $0x34] sm:$0xf]
      %v8552 = vld [vmem:[%s49 + $0x38] sm:$0xf]
      %v8553 = vld [vmem:[%s49 + $0x3c] sm:$0xf]
      %v8570 = vunpack.c.l.b16 %v8538
      %v8571 = vunpack.c.l.b16 %v8539
      %v8572 = vunpack.c.l.b16 %v8540
      %v8573 = vunpack.c.l.b16 %v8541
      %v8574 = vunpack.c.l.b16 %v8542
      %v8575 = vunpack.c.l.b16 %v8543
      %v8576 = vunpack.c.l.b16 %v8544
      %v8577 = vunpack.c.l.b16 %v8545
      %v8578 = vunpack.c.l.b16 %v8546
      %v8579 = vunpack.c.l.b16 %v8547
      %v8580 = vunpack.c.l.b16 %v8548
      %v8581 = vunpack.c.l.b16 %v8549
      %v8582 = vunpack.c.l.b16 %v8550
      %v8583 = vunpack.c.l.b16 %v8551
      %v8584 = vunpack.c.l.b16 %v8552
      %v8585 = vunpack.c.l.b16 %v8553
      %v8586 = vpack.c.b16 %v8571, %v8570
      %v8587 = vpack.c.b16 %v8573, %v8572
      %v8588 = vpack.c.b16 %v8575, %v8574
      %v8589 = vpack.c.b16 %v8577, %v8576
      %v8590 = vpack.c.b16 %v8579, %v8578
      %v8591 = vpack.c.b16 %v8581, %v8580
      %v8592 = vpack.c.b16 %v8583, %v8582
      %v8593 = vpack.c.b16 %v8585, %v8584
      %8602 = vmatprep.subr.bf16.mxu0 0
      %8603 = vmatpush1.bf16.msra.mxu0 %v8586
      %8604 = vmatprep.subr.bf16.mxu0 0
      %8605 = vmatpush1.bf16.msra.mxu0 %v8587
      %8606 = vmatprep.subr.bf16.mxu0 0
      %8607 = vmatpush1.bf16.msra.mxu0 %v8588
      %8608 = vmatprep.subr.bf16.mxu0 0
      %8609 = vmatpush1.bf16.msra.mxu0 %v8589
      %8610 = vmatprep.subr.bf16.mxu0 0
      %8611 = vmatpush1.bf16.msra.mxu0 %v8590
      %8612 = vmatprep.subr.bf16.mxu0 0
      %8613 = vmatpush1.bf16.msra.mxu0 %v8591
      %8614 = vmatprep.subr.bf16.mxu0 0
      %8615 = vmatpush1.bf16.msra.mxu0 %v8592
      %8616 = vmatprep.subr.bf16.mxu0 0
      %8617 = vmatpush1.bf16.msra.mxu0 %v8593
      %8618 = vmatprep.subr.bf16.mxu0 0
      %8619 = vmatpush1.bf16.msra.mxu0 0
      %8620 = vmatprep.subr.bf16.mxu0 0
      %8621 = vmatpush1.bf16.msra.mxu0 0
      %8622 = vmatprep.subr.bf16.mxu0 0
      %8623 = vmatpush1.bf16.msra.mxu0 0
      %8624 = vmatprep.subr.bf16.mxu0 0
      %8625 = vmatpush1.bf16.msra.mxu0 0
      %8626 = vmatprep.subr.bf16.mxu0 0
      %8627 = vmatpush1.bf16.msra.mxu0 0
      %8628 = vmatprep.subr.bf16.mxu0 0
      %8629 = vmatpush1.bf16.msra.mxu0 0
      %8630 = vmatprep.subr.bf16.mxu0 0
      %8631 = vmatpush1.bf16.msra.mxu0 0
      %8632 = vmatprep.subr.bf16.mxu0 0
      %8633 = vmatpush1.bf16.msra.mxu0 0
      %8634 = vmatprep.mubr.bf16.mxu0 0
      %8635 = vmatmul.mubr.bf16.gmra.mrb[0].mxu0 %v8537
      %v8636 = vpop.f32.mrb[0].mxu0
      %v8637 = vadd.f32 0.0, %v8636
      %v8638 = vpop.f32.mrb[0].mxu0
      %v8639 = vpop.f32.mrb[0].mxu0
      %v8640 = vpop.f32.mrb[0].mxu0
      %8641 = vdwg.mxu0
      %v8642 = vld [vmem:[%s51] sm:$0xf]
      %v8643 = vld [vmem:[%s51 + $0x4] sm:$0xf]
      %v8644 = vld [vmem:[%s51 + $0x8] sm:$0xf]
      %v8645 = vld [vmem:[%s51 + $0xc] sm:$0xf]
      %v8646 = vld [vmem:[%s51 + $0x10] sm:$0xf]
      %v8647 = vld [vmem:[%s51 + $0x14] sm:$0xf]
      %v8648 = vld [vmem:[%s51 + $0x18] sm:$0xf]
      %v8649 = vld [vmem:[%s51 + $0x1c] sm:$0xf]
      %v8650 = vld [vmem:[%s51 + $0x20] sm:$0xf]
      %v8651 = vld [vmem:[%s51 + $0x24] sm:$0xf]
      %v8652 = vld [vmem:[%s51 + $0x28] sm:$0xf]
      %v8653 = vld [vmem:[%s51 + $0x2c] sm:$0xf]
      %v8654 = vld [vmem:[%s51 + $0x30] sm:$0xf]
      %v8655 = vld [vmem:[%s51 + $0x34] sm:$0xf]
      %v8656 = vld [vmem:[%s51 + $0x38] sm:$0xf]
      %v8657 = vld [vmem:[%s51 + $0x3c] sm:$0xf]
      %v8674 = vunpack.c.l.b16 %v8642
      %v8675 = vunpack.c.l.b16 %v8643
      %v8676 = vunpack.c.l.b16 %v8644
      %v8677 = vunpack.c.l.b16 %v8645
      %v8678 = vunpack.c.l.b16 %v8646
      %v8679 = vunpack.c.l.b16 %v8647
      %v8680 = vunpack.c.l.b16 %v8648
      %v8681 = vunpack.c.l.b16 %v8649
      %v8682 = vunpack.c.l.b16 %v8650
      %v8683 = vunpack.c.l.b16 %v8651
      %v8684 = vunpack.c.l.b16 %v8652
      %v8685 = vunpack.c.l.b16 %v8653
      %v8686 = vunpack.c.l.b16 %v8654
      %v8687 = vunpack.c.l.b16 %v8655
      %v8688 = vunpack.c.l.b16 %v8656
      %v8689 = vunpack.c.l.b16 %v8657
      %v8690 = vpack.c.b16 %v8675, %v8674
      %v8691 = vpack.c.b16 %v8677, %v8676
      %v8692 = vpack.c.b16 %v8679, %v8678
      %v8693 = vpack.c.b16 %v8681, %v8680
      %v8694 = vpack.c.b16 %v8683, %v8682
      %v8695 = vpack.c.b16 %v8685, %v8684
      %v8696 = vpack.c.b16 %v8687, %v8686
      %v8697 = vpack.c.b16 %v8689, %v8688
      %8706 = vmatprep.subr.bf16.mxu0 0
      %8707 = vmatpush1.bf16.msra.mxu0 %v8690
      %8708 = vmatprep.subr.bf16.mxu0 0
      %8709 = vmatpush1.bf16.msra.mxu0 %v8691
      %8710 = vmatprep.subr.bf16.mxu0 0
      %8711 = vmatpush1.bf16.msra.mxu0 %v8692
      %8712 = vmatprep.subr.bf16.mxu0 0
      %8713 = vmatpush1.bf16.msra.mxu0 %v8693
      %8714 = vmatprep.subr.bf16.mxu0 0
      %8715 = vmatpush1.bf16.msra.mxu0 %v8694
      %8716 = vmatprep.subr.bf16.mxu0 0
      %8717 = vmatpush1.bf16.msra.mxu0 %v8695
      %8718 = vmatprep.subr.bf16.mxu0 0
      %8719 = vmatpush1.bf16.msra.mxu0 %v8696
      %8720 = vmatprep.subr.bf16.mxu0 0
      %8721 = vmatpush1.bf16.msra.mxu0 %v8697
      %8722 = vmatprep.subr.bf16.mxu0 0
      %8723 = vmatpush1.bf16.msra.mxu0 0
      %8724 = vmatprep.subr.bf16.mxu0 0
      %8725 = vmatpush1.bf16.msra.mxu0 0
      %8726 = vmatprep.subr.bf16.mxu0 0
      %8727 = vmatpush1.bf16.msra.mxu0 0
      %8728 = vmatprep.subr.bf16.mxu0 0
      %8729 = vmatpush1.bf16.msra.mxu0 0
      %8730 = vmatprep.subr.bf16.mxu0 0
      %8731 = vmatpush1.bf16.msra.mxu0 0
      %8732 = vmatprep.subr.bf16.mxu0 0
      %8733 = vmatpush1.bf16.msra.mxu0 0
      %8734 = vmatprep.subr.bf16.mxu0 0
      %8735 = vmatpush1.bf16.msra.mxu0 0
      %8736 = vmatprep.subr.bf16.mxu0 0
      %8737 = vmatpush1.bf16.msra.mxu0 0
      %8738 = vmatprep.mubr.bf16.mxu0 0
      %8739 = vmatmul.mubr.bf16.gmra.mrb[0].mxu0 %v8537
      %v8740 = vpop.f32.mrb[0].mxu0
      %v8741 = vadd.f32 0.0, %v8740
      %v8742 = vpop.f32.mrb[0].mxu0
      %v8743 = vpop.f32.mrb[0].mxu0
      %v8744 = vpop.f32.mrb[0].mxu0
      %8745 = vdwg.mxu0
      %v8746 = vpack.c.bf16 %v8637, %v8637
      %v8747 = vpack.c.bf16 %v8414, %v8411
      %v8748 = vpack.c.bf16 %v8422, %v8419
      %v8749 = vpack.c.bf16 %v8430, %v8427
      %v8750 = vpack.c.bf16 %v8438, %v8435
      %v8751 = vpack.c.bf16 %v8446, %v8443
      %v8752 = vpack.c.bf16 %v8454, %v8451
      %v8753 = vpack.c.bf16 %v8462, %v8459
      %v8754 = vpack.c.bf16 %v8470, %v8467
      %v8755 = vpack.c.bf16 %v8478, %v8475
      %v8756 = vpack.c.bf16 %v8486, %v8483
      %v8757 = vpack.c.bf16 %v8494, %v8491
      %v8758 = vpack.c.bf16 %v8502, %v8499
      %v8759 = vpack.c.bf16 %v8510, %v8507
      %v8760 = vpack.c.bf16 %v8518, %v8515
      %v8761 = vpack.c.bf16 %v8526, %v8523
      %v8762 = vpack.c.bf16 %v8534, %v8531
      %8763 = vmatprep.subr.bf16.mxu0 0
      %8764 = vmatpush1.bf16.xpose.msra.mxu0 %v8747
      %8765 = vmatprep.subr.bf16.mxu0 0
      %8766 = vmatpush1.bf16.xpose.msra.mxu0 %v8748
      %8767 = vmatprep.subr.bf16.mxu0 0
      %8768 = vmatpush1.bf16.xpose.msra.mxu0 %v8749
      %8769 = vmatprep.subr.bf16.mxu0 0
      %8770 = vmatpush1.bf16.xpose.msra.mxu0 %v8750
      %8771 = vmatprep.subr.bf16.mxu0 0
      %8772 = vmatpush1.bf16.xpose.msra.mxu0 %v8751
      %8773 = vmatprep.subr.bf16.mxu0 0
      %8774 = vmatpush1.bf16.xpose.msra.mxu0 %v8752
      %8775 = vmatprep.subr.bf16.mxu0 0
      %8776 = vmatpush1.bf16.xpose.msra.mxu0 %v8753
      %8777 = vmatprep.subr.bf16.mxu0 0
      %8778 = vmatpush1.bf16.xpose.msra.mxu0 %v8754
      %8779 = vmatprep.subr.bf16.mxu0 0
      %8780 = vmatpush1.bf16.xpose.msra.mxu0 %v8755
      %8781 = vmatprep.subr.bf16.mxu0 0
      %8782 = vmatpush1.bf16.xpose.msra.mxu0 %v8756
      %8783 = vmatprep.subr.bf16.mxu0 0
      %8784 = vmatpush1.bf16.xpose.msra.mxu0 %v8757
      %8785 = vmatprep.subr.bf16.mxu0 0
      %8786 = vmatpush1.bf16.xpose.msra.mxu0 %v8758
      %8787 = vmatprep.subr.bf16.mxu0 0
      %8788 = vmatpush1.bf16.xpose.msra.mxu0 %v8759
      %8789 = vmatprep.subr.bf16.mxu0 0
      %8790 = vmatpush1.bf16.xpose.msra.mxu0 %v8760
      %8791 = vmatprep.subr.bf16.mxu0 0
      %8792 = vmatpush1.bf16.xpose.msra.mxu0 %v8761
      %8793 = vmatprep.subr.bf16.mxu0 0
      %8794 = vmatpush1.bf16.xpose.msra.mxu0 %v8762
      %8795 = vmatprep.mubr.bf16.mxu0 0
      %8796 = vmatmul.mubr.bf16.gmra.mrb[0].mxu0 %v8746
      %v8797 = vpop.f32.mrb[0].mxu0
      %v8798 = vadd.f32 0.0, %v8797
      %v8799 = vpop.f32.mrb[0].mxu0
      %v8800 = vadd.f32 0.0, %v8799
      %v8801 = vpop.f32.mrb[0].mxu0
      %v8802 = vpop.f32.mrb[0].mxu0
      %8803 = vdwg.mxu0
      %v8804 = vrot.slane %v8798, 4
      %v8805 = vmax.f32 %v8798, %v8804
      %v8806 = vrot.slane %v8805, 2
      %v8807 = vmax.f32 %v8805, %v8806
      %v8808 = vrot.slane %v8807, 1
      %v8809 = vmax.f32 %v8807, %v8808
      %v8810 = vrot.slane %v8800, 4
      %v8811 = vmax.f32 %v8800, %v8810
      %v8812 = vrot.slane %v8811, 2
      %v8813 = vmax.f32 %v8811, %v8812
      %v8814 = vrot.slane %v8813, 1
      %v8815 = vmax.f32 %v8813, %v8814
      %v8816 = vsub.f32 %v8798, %v8809
      %v8817 = vsub.f32 %v8800, %v8815
      %v8818 = vmul.f32 %v8816, 1.442695
      %v8819 = vpow.pop %v8818
      %v8820 = vmul.f32 %v8817, 1.442695
      %v8821 = vpow.pop %v8820
      %v8822 = vrot.slane %v8819, 4
      %v8823 = vadd.f32 %v8819, %v8822
      %v8824 = vrot.slane %v8823, 2
      %v8825 = vadd.f32 %v8823, %v8824
      %v8826 = vrot.slane %v8825, 1
      %v8827 = vadd.f32 %v8825, %v8826
      %v8828 = vrot.slane %v8821, 4
      %v8829 = vadd.f32 %v8821, %v8828
      %v8830 = vrot.slane %v8829, 2
      %v8831 = vadd.f32 %v8829, %v8830
      %v8832 = vrot.slane %v8831, 1
      %v8833 = vadd.f32 %v8831, %v8832
      %v8834 = vrcp.pop %v8827
      %v8835 = vrcp.pop %v8833
      %v8836 = vmul.f32 %v8819, %v8834
      %v8837 = vmul.f32 %v8821, %v8835
      %v8838 = vpack.c.bf16 %v8836, %v8836
      %v8839 = vpack.c.bf16 %v8837, %v8837
      %v8840 = vpack.c.bf16 %v8741, %v8741
      %8841 = vxpose.xlu0.c.b16.start [1/8] %v8838, 128
      %8842 = vxpose.xlu0.c.b16.cont [2/8] 0, 128
      %8843 = vxpose.xlu0.c.b16.cont [3/8] 0, 128
      %8844 = vxpose.xlu0.c.b16.cont [4/8] 0, 128
      %8845 = vxpose.xlu0.c.b16.cont [5/8] 0, 128
      %8846 = vxpose.xlu0.c.b16.cont [6/8] 0, 128
      %8847 = vxpose.xlu0.c.b16.cont [7/8] 0, 128
      %8848 = vxpose.xlu0.c.b16.end [8/8] 0, 128
      %v8849 = vpop.trf.xlu0
      %v8850 = vpop.trf.xlu0
      %v8851 = vpop.trf.xlu0
      %v8852 = vpop.trf.xlu0
      %v8853 = vpop.trf.xlu0
      %v8854 = vpop.trf.xlu0
      %v8855 = vpop.trf.xlu0
      %v8856 = vpop.trf.xlu0
      %8857 = vxpose.xlu0.c.b16.start [1/8] %v8839, 128
      %8858 = vxpose.xlu0.c.b16.cont [2/8] 0, 128
      %8859 = vxpose.xlu0.c.b16.cont [3/8] 0, 128
      %8860 = vxpose.xlu0.c.b16.cont [4/8] 0, 128
      %8861 = vxpose.xlu0.c.b16.cont [5/8] 0, 128
      %8862 = vxpose.xlu0.c.b16.cont [6/8] 0, 128
      %8863 = vxpose.xlu0.c.b16.cont [7/8] 0, 128
      %8864 = vxpose.xlu0.c.b16.end [8/8] 0, 128
      %v8865 = vpop.trf.xlu0
      %v8866 = vpop.trf.xlu0
      %v8867 = vpop.trf.xlu0
      %v8868 = vpop.trf.xlu0
      %v8869 = vpop.trf.xlu0
      %v8870 = vpop.trf.xlu0
      %v8871 = vpop.trf.xlu0
      %v8872 = vpop.trf.xlu0
      %vm8873 = vcmask 64512
      %v8875 = vsel %vm8873, %v8849, 0
      %v8878 = vsel %vm8873, %v8850, 0
      %v8881 = vsel %vm8873, %v8851, 0
      %v8884 = vsel %vm8873, %v8852, 0
      %v8887 = vsel %vm8873, %v8853, 0
      %v8890 = vsel %vm8873, %v8854, 0
      %v8893 = vsel %vm8873, %v8855, 0
      %v8896 = vsel %vm8873, %v8856, 0
      %v8899 = vsel %vm8873, %v8865, 0
      %v8902 = vsel %vm8873, %v8866, 0
      %v8905 = vsel %vm8873, %v8867, 0
      %v8908 = vsel %vm8873, %v8868, 0
      %v8911 = vsel %vm8873, %v8869, 0
      %v8914 = vsel %vm8873, %v8870, 0
      %v8917 = vsel %vm8873, %v8871, 0
      %v8920 = vsel %vm8873, %v8872, 0
      %v8923 = vsel %vm1808, %v8840, 0
      %8925 = vmatprep.subr.bf16.mxu0 0
      %8926 = vmatpush1.bf16.msra.mxu0 %v8923
      %8927 = vmatprep.subr.bf16.mxu0 0
      %8928 = vmatpush1.bf16.msra.mxu0 0
      %8929 = vmatprep.subr.bf16.mxu0 0
      %8930 = vmatpush1.bf16.msra.mxu0 0
      %8931 = vmatprep.subr.bf16.mxu0 0
      %8932 = vmatpush1.bf16.msra.mxu0 0
      %8933 = vmatprep.subr.bf16.mxu0 0
      %8934 = vmatpush1.bf16.msra.mxu0 0
      %8935 = vmatprep.subr.bf16.mxu0 0
      %8936 = vmatpush1.bf16.msra.mxu0 0
      %8937 = vmatprep.subr.bf16.mxu0 0
      %8938 = vmatpush1.bf16.msra.mxu0 0
      %8939 = vmatprep.subr.bf16.mxu0 0
      %8940 = vmatpush1.bf16.msra.mxu0 0
      %8941 = vmatprep.subr.bf16.mxu0 0
      %8942 = vmatpush1.bf16.msra.mxu0 0
      %8943 = vmatprep.subr.bf16.mxu0 0
      %8944 = vmatpush1.bf16.msra.mxu0 0
      %8945 = vmatprep.subr.bf16.mxu0 0
      %8946 = vmatpush1.bf16.msra.mxu0 0
      %8947 = vmatprep.subr.bf16.mxu0 0
      %8948 = vmatpush1.bf16.msra.mxu0 0
      %8949 = vmatprep.subr.bf16.mxu0 0
      %8950 = vmatpush1.bf16.msra.mxu0 0
      %8951 = vmatprep.subr.bf16.mxu0 0
      %8952 = vmatpush1.bf16.msra.mxu0 0
      %8953 = vmatprep.subr.bf16.mxu0 0
      %8954 = vmatpush1.bf16.msra.mxu0 0
      %8955 = vmatprep.subr.bf16.mxu0 0
      %8956 = vmatpush1.bf16.msra.mxu0 0
      %8957 = vmatprep.mubr.bf16.mxu0 0
      %8958 = vmatmul.mubr.bf16.gmra.mrb[0].mxu0 %v8875
      %v8959 = vpop.f32.mrb[0].mxu0
      %v8960 = vadd.f32 0.0, %v8959
      %v8961 = vpop.f32.mrb[0].mxu0
      %v8962 = vpop.f32.mrb[0].mxu0
      %v8963 = vadd.f32 0.0, %v8962
      %v8964 = vpop.f32.mrb[0].mxu0
      %8965 = vmatprep.mubr.bf16.mxu0 0
      %8966 = vmatmul.mubr.bf16.gmra.mrb[0].mxu0 %v8878
      %v8967 = vpop.f32.mrb[0].mxu0
      %v8968 = vadd.f32 0.0, %v8967
      %v8969 = vpop.f32.mrb[0].mxu0
      %v8970 = vpop.f32.mrb[0].mxu0
      %v8971 = vadd.f32 0.0, %v8970
      %v8972 = vpop.f32.mrb[0].mxu0
      %8973 = vmatprep.mubr.bf16.mxu0 0
      %8974 = vmatmul.mubr.bf16.gmra.mrb[0].mxu0 %v8881
      %v8975 = vpop.f32.mrb[0].mxu0
      %v8976 = vadd.f32 0.0, %v8975
      %v8977 = vpop.f32.mrb[0].mxu0
      %v8978 = vpop.f32.mrb[0].mxu0
      %v8979 = vadd.f32 0.0, %v8978
      %v8980 = vpop.f32.mrb[0].mxu0
      %8981 = vmatprep.mubr.bf16.mxu0 0
      %8982 = vmatmul.mubr.bf16.gmra.mrb[0].mxu0 %v8884
      %v8983 = vpop.f32.mrb[0].mxu0
      %v8984 = vadd.f32 0.0, %v8983
      %v8985 = vpop.f32.mrb[0].mxu0
      %v8986 = vpop.f32.mrb[0].mxu0
      %v8987 = vadd.f32 0.0, %v8986
      %v8988 = vpop.f32.mrb[0].mxu0
      %8989 = vmatprep.mubr.bf16.mxu0 0
      %8990 = vmatmul.mubr.bf16.gmra.mrb[0].mxu0 %v8887
      %v8991 = vpop.f32.mrb[0].mxu0
      %v8992 = vadd.f32 0.0, %v8991
      %v8993 = vpop.f32.mrb[0].mxu0
      %v8994 = vpop.f32.mrb[0].mxu0
      %v8995 = vadd.f32 0.0, %v8994
      %v8996 = vpop.f32.mrb[0].mxu0
      %8997 = vmatprep.mubr.bf16.mxu0 0
      %8998 = vmatmul.mubr.bf16.gmra.mrb[0].mxu0 %v8890
      %v8999 = vpop.f32.mrb[0].mxu0
      %v9000 = vadd.f32 0.0, %v8999
      %v9001 = vpop.f32.mrb[0].mxu0
      %v9002 = vpop.f32.mrb[0].mxu0
      %v9003 = vadd.f32 0.0, %v9002
      %v9004 = vpop.f32.mrb[0].mxu0
      %9005 = vmatprep.mubr.bf16.mxu0 0
      %9006 = vmatmul.mubr.bf16.gmra.mrb[0].mxu0 %v8893
      %v9007 = vpop.f32.mrb[0].mxu0
      %v9008 = vadd.f32 0.0, %v9007
      %v9009 = vpop.f32.mrb[0].mxu0
      %v9010 = vpop.f32.mrb[0].mxu0
      %v9011 = vadd.f32 0.0, %v9010
      %v9012 = vpop.f32.mrb[0].mxu0
      %9013 = vmatprep.mubr.bf16.mxu0 0
      %9014 = vmatmul.mubr.bf16.gmra.mrb[0].mxu0 %v8896
      %v9015 = vpop.f32.mrb[0].mxu0
      %v9016 = vadd.f32 0.0, %v9015
      %v9017 = vpop.f32.mrb[0].mxu0
      %v9018 = vpop.f32.mrb[0].mxu0
      %v9019 = vadd.f32 0.0, %v9018
      %v9020 = vpop.f32.mrb[0].mxu0
      %9021 = vmatprep.mubr.bf16.mxu0 0
      %9022 = vmatmul.mubr.bf16.gmra.mrb[0].mxu0 %v8899
      %v9023 = vpop.f32.mrb[0].mxu0
      %v9024 = vadd.f32 0.0, %v9023
      %v9025 = vpop.f32.mrb[0].mxu0
      %v9026 = vpop.f32.mrb[0].mxu0
      %v9027 = vadd.f32 0.0, %v9026
      %v9028 = vpop.f32.mrb[0].mxu0
      %9029 = vmatprep.mubr.bf16.mxu0 0
      %9030 = vmatmul.mubr.bf16.gmra.mrb[0].mxu0 %v8902
      %v9031 = vpop.f32.mrb[0].mxu0
      %v9032 = vadd.f32 0.0, %v9031
      %v9033 = vpop.f32.mrb[0].mxu0
      %v9034 = vpop.f32.mrb[0].mxu0
      %v9035 = vadd.f32 0.0, %v9034
      %v9036 = vpop.f32.mrb[0].mxu0
      %9037 = vmatprep.mubr.bf16.mxu0 0
      %9038 = vmatmul.mubr.bf16.gmra.mrb[0].mxu0 %v8905
      %v9039 = vpop.f32.mrb[0].mxu0
      %v9040 = vadd.f32 0.0, %v9039
      %v9041 = vpop.f32.mrb[0].mxu0
      %v9042 = vpop.f32.mrb[0].mxu0
      %v9043 = vadd.f32 0.0, %v9042
      %v9044 = vpop.f32.mrb[0].mxu0
      %9045 = vmatprep.mubr.bf16.mxu0 0
      %9046 = vmatmul.mubr.bf16.gmra.mrb[0].mxu0 %v8908
      %v9047 = vpop.f32.mrb[0].mxu0
      %v9048 = vadd.f32 0.0, %v9047
      %v9049 = vpop.f32.mrb[0].mxu0
      %v9050 = vpop.f32.mrb[0].mxu0
      %v9051 = vadd.f32 0.0, %v9050
      %v9052 = vpop.f32.mrb[0].mxu0
      %9053 = vmatprep.mubr.bf16.mxu0 0
      %9054 = vmatmul.mubr.bf16.gmra.mrb[0].mxu0 %v8911
      %v9055 = vpop.f32.mrb[0].mxu0
      %v9056 = vadd.f32 0.0, %v9055
      %v9057 = vpop.f32.mrb[0].mxu0
      %v9058 = vpop.f32.mrb[0].mxu0
      %v9059 = vadd.f32 0.0, %v9058
      %v9060 = vpop.f32.mrb[0].mxu0
      %9061 = vmatprep.mubr.bf16.mxu0 0
      %9062 = vmatmul.mubr.bf16.gmra.mrb[0].mxu0 %v8914
      %v9063 = vpop.f32.mrb[0].mxu0
      %v9064 = vadd.f32 0.0, %v9063
      %v9065 = vpop.f32.mrb[0].mxu0
      %v9066 = vpop.f32.mrb[0].mxu0
      %v9067 = vadd.f32 0.0, %v9066
      %v9068 = vpop.f32.mrb[0].mxu0
      %9069 = vmatprep.mubr.bf16.mxu0 0
      %9070 = vmatmul.mubr.bf16.gmra.mrb[0].mxu0 %v8917
      %v9071 = vpop.f32.mrb[0].mxu0
      %v9072 = vadd.f32 0.0, %v9071
      %v9073 = vpop.f32.mrb[0].mxu0
      %v9074 = vpop.f32.mrb[0].mxu0
      %v9075 = vadd.f32 0.0, %v9074
      %v9076 = vpop.f32.mrb[0].mxu0
      %9077 = vmatprep.mubr.bf16.mxu0 0
      %9078 = vmatmul.mubr.bf16.gmra.mrb[0].mxu0 %v8920
      %v9079 = vpop.f32.mrb[0].mxu0
      %v9080 = vadd.f32 0.0, %v9079
      %v9081 = vpop.f32.mrb[0].mxu0
      %v9082 = vpop.f32.mrb[0].mxu0
      %v9083 = vadd.f32 0.0, %v9082
      %v9084 = vpop.f32.mrb[0].mxu0
      %9085 = vdwg.mxu0
      %v9086 = vpack.c.bf16 %v8963, %v8960
      %v9087 = vpack.c.bf16 %v8971, %v8968
      %v9088 = vpack.c.bf16 %v8979, %v8976
      %v9089 = vpack.c.bf16 %v8987, %v8984
      %v9090 = vpack.c.bf16 %v8995, %v8992
      %v9091 = vpack.c.bf16 %v9003, %v9000
      %v9092 = vpack.c.bf16 %v9011, %v9008
      %v9093 = vpack.c.bf16 %v9019, %v9016
      %v9094 = vpack.c.bf16 %v9027, %v9024
      %v9095 = vpack.c.bf16 %v9035, %v9032
      %v9096 = vpack.c.bf16 %v9043, %v9040
      %v9097 = vpack.c.bf16 %v9051, %v9048
      %v9098 = vpack.c.bf16 %v9059, %v9056
      %v9099 = vpack.c.bf16 %v9067, %v9064
      %v9100 = vpack.c.bf16 %v9075, %v9072
      %v9101 = vpack.c.bf16 %v9083, %v9080
      %v9102 = vld [vmem:[%s53] sm:$0xf]
      %v9103 = vld [vmem:[%s53 + $0x4] sm:$0xf]
      %v9104 = vld [vmem:[%s53 + $0x8] sm:$0xf]
      %v9105 = vld [vmem:[%s53 + $0xc] sm:$0xf]
      %v9106 = vld [vmem:[%s53 + $0x10] sm:$0xf]
      %v9107 = vld [vmem:[%s53 + $0x14] sm:$0xf]
      %v9108 = vld [vmem:[%s53 + $0x18] sm:$0xf]
      %v9109 = vld [vmem:[%s53 + $0x1c] sm:$0xf]
      %v9110 = vld [vmem:[%s53 + $0x20] sm:$0xf]
      %v9111 = vld [vmem:[%s53 + $0x24] sm:$0xf]
      %v9112 = vld [vmem:[%s53 + $0x28] sm:$0xf]
      %v9113 = vld [vmem:[%s53 + $0x2c] sm:$0xf]
      %v9114 = vld [vmem:[%s53 + $0x30] sm:$0xf]
      %v9115 = vld [vmem:[%s53 + $0x34] sm:$0xf]
      %v9116 = vld [vmem:[%s53 + $0x38] sm:$0xf]
      %v9117 = vld [vmem:[%s53 + $0x3c] sm:$0xf]
      %v9118 = vld [vmem:[%s55] sm:$0x1]
      %v9120 = vlaneseq
      %v9121 = vshrl.u32 %v9120, 7
      %v9122 = vsub.s32 0, %v9121
      %v9123 = vrot.slane %v9118, %v9122
      %v9141 = vunpack.c.l.b16 %v9102
      %v9142 = vunpack.c.l.b16 %v9103
      %v9143 = vunpack.c.l.b16 %v9104
      %v9144 = vunpack.c.l.b16 %v9105
      %v9145 = vunpack.c.l.b16 %v9106
      %v9146 = vunpack.c.l.b16 %v9107
      %v9147 = vunpack.c.l.b16 %v9108
      %v9148 = vunpack.c.l.b16 %v9109
      %v9149 = vunpack.c.l.b16 %v9110
      %v9150 = vunpack.c.l.b16 %v9111
      %v9151 = vunpack.c.l.b16 %v9112
      %v9152 = vunpack.c.l.b16 %v9113
      %v9153 = vunpack.c.l.b16 %v9114
      %v9154 = vunpack.c.l.b16 %v9115
      %v9155 = vunpack.c.l.b16 %v9116
      %v9156 = vunpack.c.l.b16 %v9117
      %v9157 = vpack.c.b16 %v9142, %v9141
      %v9158 = vpack.c.b16 %v9144, %v9143
      %v9159 = vpack.c.b16 %v9146, %v9145
      %v9160 = vpack.c.b16 %v9148, %v9147
      %v9161 = vpack.c.b16 %v9150, %v9149
      %v9162 = vpack.c.b16 %v9152, %v9151
      %v9163 = vpack.c.b16 %v9154, %v9153
      %v9164 = vpack.c.b16 %v9156, %v9155
      %9173 = vmatprep.subr.bf16.mxu0 0
      %9174 = vmatpush1.bf16.msra.mxu0 %v9157
      %9175 = vmatprep.subr.bf16.mxu0 0
      %9176 = vmatpush1.bf16.msra.mxu0 %v9158
      %9177 = vmatprep.subr.bf16.mxu0 0
      %9178 = vmatpush1.bf16.msra.mxu0 %v9159
      %9179 = vmatprep.subr.bf16.mxu0 0
      %9180 = vmatpush1.bf16.msra.mxu0 %v9160
      %9181 = vmatprep.subr.bf16.mxu0 0
      %9182 = vmatpush1.bf16.msra.mxu0 %v9161
      %9183 = vmatprep.subr.bf16.mxu0 0
      %9184 = vmatpush1.bf16.msra.mxu0 %v9162
      %9185 = vmatprep.subr.bf16.mxu0 0
      %9186 = vmatpush1.bf16.msra.mxu0 %v9163
      %9187 = vmatprep.subr.bf16.mxu0 0
      %9188 = vmatpush1.bf16.msra.mxu0 %v9164
      %9189 = vmatprep.subr.bf16.mxu0 0
      %9190 = vmatpush1.bf16.msra.mxu0 0
      %9191 = vmatprep.subr.bf16.mxu0 0
      %9192 = vmatpush1.bf16.msra.mxu0 0
      %9193 = vmatprep.subr.bf16.mxu0 0
      %9194 = vmatpush1.bf16.msra.mxu0 0
      %9195 = vmatprep.subr.bf16.mxu0 0
      %9196 = vmatpush1.bf16.msra.mxu0 0
      %9197 = vmatprep.subr.bf16.mxu0 0
      %9198 = vmatpush1.bf16.msra.mxu0 0
      %9199 = vmatprep.subr.bf16.mxu0 0
      %9200 = vmatpush1.bf16.msra.mxu0 0
      %9201 = vmatprep.subr.bf16.mxu0 0
      %9202 = vmatpush1.bf16.msra.mxu0 0
      %9203 = vmatprep.subr.bf16.mxu0 0
      %9204 = vmatpush1.bf16.msra.mxu0 0
      %9205 = vmatprep.mubr.bf16.mxu0 0
      %9206 = vmatmul.mubr.bf16.gmra.mrb[0].mxu0 %v9086
      %v9207 = vpop.f32.mrb[0].mxu0
      %v9208 = vadd.f32 %v9123, %v9207
      %v9209 = vpop.f32.mrb[0].mxu0
      %v9210 = vpop.f32.mrb[0].mxu0
      %v9211 = vadd.f32 %v9123, %v9210
      %v9212 = vpop.f32.mrb[0].mxu0
      %9213 = vmatprep.mubr.bf16.mxu0 0
      %9214 = vmatmul.mubr.bf16.gmra.mrb[0].mxu0 %v9087
      %v9215 = vpop.f32.mrb[0].mxu0
      %v9216 = vadd.f32 %v9123, %v9215
      %v9217 = vpop.f32.mrb[0].mxu0
      %v9218 = vpop.f32.mrb[0].mxu0
      %v9219 = vadd.f32 %v9123, %v9218
      %v9220 = vpop.f32.mrb[0].mxu0
      %9221 = vmatprep.mubr.bf16.mxu0 0
      %9222 = vmatmul.mubr.bf16.gmra.mrb[0].mxu0 %v9088
      %v9223 = vpop.f32.mrb[0].mxu0
      %v9224 = vadd.f32 %v9123, %v9223
      %v9225 = vpop.f32.mrb[0].mxu0
      %v9226 = vpop.f32.mrb[0].mxu0
      %v9227 = vadd.f32 %v9123, %v9226
      %v9228 = vpop.f32.mrb[0].mxu0
      %9229 = vmatprep.mubr.bf16.mxu0 0
      %9230 = vmatmul.mubr.bf16.gmra.mrb[0].mxu0 %v9089
      %v9231 = vpop.f32.mrb[0].mxu0
      %v9232 = vadd.f32 %v9123, %v9231
      %v9233 = vpop.f32.mrb[0].mxu0
      %v9234 = vpop.f32.mrb[0].mxu0
      %v9235 = vadd.f32 %v9123, %v9234
      %v9236 = vpop.f32.mrb[0].mxu0
      %9237 = vmatprep.mubr.bf16.mxu0 0
      %9238 = vmatmul.mubr.bf16.gmra.mrb[0].mxu0 %v9090
      %v9239 = vpop.f32.mrb[0].mxu0
      %v9240 = vadd.f32 %v9123, %v9239
      %v9241 = vpop.f32.mrb[0].mxu0
      %v9242 = vpop.f32.mrb[0].mxu0
      %v9243 = vadd.f32 %v9123, %v9242
      %v9244 = vpop.f32.mrb[0].mxu0
      %9245 = vmatprep.mubr.bf16.mxu0 0
      %9246 = vmatmul.mubr.bf16.gmra.mrb[0].mxu0 %v9091
      %v9247 = vpop.f32.mrb[0].mxu0
      %v9248 = vadd.f32 %v9123, %v9247
      %v9249 = vpop.f32.mrb[0].mxu0
      %v9250 = vpop.f32.mrb[0].mxu0
      %v9251 = vadd.f32 %v9123, %v9250
      %v9252 = vpop.f32.mrb[0].mxu0
      %9253 = vmatprep.mubr.bf16.mxu0 0
      %9254 = vmatmul.mubr.bf16.gmra.mrb[0].mxu0 %v9092
      %v9255 = vpop.f32.mrb[0].mxu0
      %v9256 = vadd.f32 %v9123, %v9255
      %v9257 = vpop.f32.mrb[0].mxu0
      %v9258 = vpop.f32.mrb[0].mxu0
      %v9259 = vadd.f32 %v9123, %v9258
      %v9260 = vpop.f32.mrb[0].mxu0
      %9261 = vmatprep.mubr.bf16.mxu0 0
      %9262 = vmatmul.mubr.bf16.gmra.mrb[0].mxu0 %v9093
      %v9263 = vpop.f32.mrb[0].mxu0
      %v9264 = vadd.f32 %v9123, %v9263
      %v9265 = vpop.f32.mrb[0].mxu0
      %v9266 = vpop.f32.mrb[0].mxu0
      %v9267 = vadd.f32 %v9123, %v9266
      %v9268 = vpop.f32.mrb[0].mxu0
      %9269 = vmatprep.mubr.bf16.mxu0 0
      %9270 = vmatmul.mubr.bf16.gmra.mrb[0].mxu0 %v9094
      %v9271 = vpop.f32.mrb[0].mxu0
      %v9272 = vadd.f32 %v9123, %v9271
      %v9273 = vpop.f32.mrb[0].mxu0
      %v9274 = vpop.f32.mrb[0].mxu0
      %v9275 = vadd.f32 %v9123, %v9274
      %v9276 = vpop.f32.mrb[0].mxu0
      %9277 = vmatprep.mubr.bf16.mxu0 0
      %9278 = vmatmul.mubr.bf16.gmra.mrb[0].mxu0 %v9095
      %v9279 = vpop.f32.mrb[0].mxu0
      %v9280 = vadd.f32 %v9123, %v9279
      %v9281 = vpop.f32.mrb[0].mxu0
      %v9282 = vpop.f32.mrb[0].mxu0
      %v9283 = vadd.f32 %v9123, %v9282
      %v9284 = vpop.f32.mrb[0].mxu0
      %9285 = vmatprep.mubr.bf16.mxu0 0
      %9286 = vmatmul.mubr.bf16.gmra.mrb[0].mxu0 %v9096
      %v9287 = vpop.f32.mrb[0].mxu0
      %v9288 = vadd.f32 %v9123, %v9287
      %v9289 = vpop.f32.mrb[0].mxu0
      %v9290 = vpop.f32.mrb[0].mxu0
      %v9291 = vadd.f32 %v9123, %v9290
      %v9292 = vpop.f32.mrb[0].mxu0
      %9293 = vmatprep.mubr.bf16.mxu0 0
      %9294 = vmatmul.mubr.bf16.gmra.mrb[0].mxu0 %v9097
      %v9295 = vpop.f32.mrb[0].mxu0
      %v9296 = vadd.f32 %v9123, %v9295
      %v9297 = vpop.f32.mrb[0].mxu0
      %v9298 = vpop.f32.mrb[0].mxu0
      %v9299 = vadd.f32 %v9123, %v9298
      %v9300 = vpop.f32.mrb[0].mxu0
      %9301 = vmatprep.mubr.bf16.mxu0 0
      %9302 = vmatmul.mubr.bf16.gmra.mrb[0].mxu0 %v9098
      %v9303 = vpop.f32.mrb[0].mxu0
      %v9304 = vadd.f32 %v9123, %v9303
      %v9305 = vpop.f32.mrb[0].mxu0
      %v9306 = vpop.f32.mrb[0].mxu0
      %v9307 = vadd.f32 %v9123, %v9306
      %v9308 = vpop.f32.mrb[0].mxu0
      %9309 = vmatprep.mubr.bf16.mxu0 0
      %9310 = vmatmul.mubr.bf16.gmra.mrb[0].mxu0 %v9099
      %v9311 = vpop.f32.mrb[0].mxu0
      %v9312 = vadd.f32 %v9123, %v9311
      %v9313 = vpop.f32.mrb[0].mxu0
      %v9314 = vpop.f32.mrb[0].mxu0
      %v9315 = vadd.f32 %v9123, %v9314
      %v9316 = vpop.f32.mrb[0].mxu0
      %9317 = vmatprep.mubr.bf16.mxu0 0
      %9318 = vmatmul.mubr.bf16.gmra.mrb[0].mxu0 %v9100
      %v9319 = vpop.f32.mrb[0].mxu0
      %v9320 = vadd.f32 %v9123, %v9319
      %v9321 = vpop.f32.mrb[0].mxu0
      %v9322 = vpop.f32.mrb[0].mxu0
      %v9323 = vadd.f32 %v9123, %v9322
      %v9324 = vpop.f32.mrb[0].mxu0
      %9325 = vmatprep.mubr.bf16.mxu0 0
      %9326 = vmatmul.mubr.bf16.gmra.mrb[0].mxu0 %v9101
      %v9327 = vpop.f32.mrb[0].mxu0
      %v9328 = vadd.f32 %v9123, %v9327
      %v9329 = vpop.f32.mrb[0].mxu0
      %v9330 = vpop.f32.mrb[0].mxu0
      %v9331 = vadd.f32 %v9123, %v9330
      %v9332 = vpop.f32.mrb[0].mxu0
      %9333 = vdwg.mxu0
      %v9334 = vadd.f32 %v7916, %v9208
      %v9335 = vadd.f32 %v7917, %v9211
      %v9336 = vadd.f32 %v7918, %v9216
      %v9337 = vadd.f32 %v7919, %v9219
      %v9338 = vadd.f32 %v7920, %v9224
      %v9339 = vadd.f32 %v7921, %v9227
      %v9340 = vadd.f32 %v7922, %v9232
      %v9341 = vadd.f32 %v7923, %v9235
      %v9342 = vadd.f32 %v7924, %v9240
      %v9343 = vadd.f32 %v7925, %v9243
      %v9344 = vadd.f32 %v7926, %v9248
      %v9345 = vadd.f32 %v7927, %v9251
      %v9346 = vadd.f32 %v7928, %v9256
      %v9347 = vadd.f32 %v7929, %v9259
      %v9348 = vadd.f32 %v7930, %v9264
      %v9349 = vadd.f32 %v7931, %v9267
      %v9350 = vadd.f32 %v7932, %v9272
      %v9351 = vadd.f32 %v7933, %v9275
      %v9352 = vadd.f32 %v7934, %v9280
      %v9353 = vadd.f32 %v7935, %v9283
      %v9354 = vadd.f32 %v7936, %v9288
      %v9355 = vadd.f32 %v7937, %v9291
      %v9356 = vadd.f32 %v7938, %v9296
      %v9357 = vadd.f32 %v7939, %v9299
      %v9358 = vadd.f32 %v7940, %v9304
      %v9359 = vadd.f32 %v7941, %v9307
      %v9360 = vadd.f32 %v7942, %v9312
      %v9361 = vadd.f32 %v7943, %v9315
      %v9362 = vadd.f32 %v7944, %v9320
      %v9363 = vadd.f32 %v7945, %v9323
      %v9364 = vadd.f32 %v7946, %v9328
      %v9365 = vadd.f32 %v7947, %v9331
      %v9366 = vadd.f32 %v9334, %v9335
      %v9367 = vadd.f32 %v9366, %v9336
      %v9368 = vadd.f32 %v9367, %v9337
      %v9369 = vadd.f32 %v9368, %v9338
      %v9370 = vadd.f32 %v9369, %v9339
      %v9371 = vadd.f32 %v9370, %v9340
      %v9372 = vadd.f32 %v9371, %v9341
      %v9373 = vadd.f32 %v9372, %v9342
      %v9374 = vadd.f32 %v9373, %v9343
      %v9375 = vadd.f32 %v9374, %v9344
      %v9376 = vadd.f32 %v9375, %v9345
      %v9377 = vadd.f32 %v9376, %v9346
      %v9378 = vadd.f32 %v9377, %v9347
      %v9379 = vadd.f32 %v9378, %v9348
      %v9380 = vadd.f32 %v9379, %v9349
      %v9381 = vadd.f32 %v9380, %v9350
      %v9382 = vadd.f32 %v9381, %v9351
      %v9383 = vadd.f32 %v9382, %v9352
      %v9384 = vadd.f32 %v9383, %v9353
      %v9385 = vadd.f32 %v9384, %v9354
      %v9386 = vadd.f32 %v9385, %v9355
      %v9387 = vadd.f32 %v9386, %v9356
      %v9388 = vadd.f32 %v9387, %v9357
      %v9389 = vadd.f32 %v9388, %v9358
      %v9390 = vadd.f32 %v9389, %v9359
      %v9391 = vadd.f32 %v9390, %v9360
      %v9392 = vadd.f32 %v9391, %v9361
      %v9393 = vadd.f32 %v9392, %v9362
      %v9394 = vadd.f32 %v9393, %v9363
      %v9395 = vadd.f32 %v9394, %v9364
      %v9396 = vadd.f32 %v9395, %v9365
      %v9397 = vrot.slane %v9396, 4
      %v9398 = vadd.f32 %v9396, %v9397
      %v9399 = vrot.slane %v9398, 2
      %v9400 = vadd.f32 %v9398, %v9399
      %v9401 = vrot.slane %v9400, 1
      %v9402 = vadd.f32 %v9400, %v9401
      %v9403 = vmul.f32 %v9334, %v9334
      %v9404 = vmul.f32 %v9335, %v9335
      %v9405 = vmul.f32 %v9336, %v9336
      %v9406 = vmul.f32 %v9337, %v9337
      %v9407 = vmul.f32 %v9338, %v9338
      %v9408 = vmul.f32 %v9339, %v9339
      %v9409 = vmul.f32 %v9340, %v9340
      %v9410 = vmul.f32 %v9341, %v9341
      %v9411 = vmul.f32 %v9342, %v9342
      %v9412 = vmul.f32 %v9343, %v9343
      %v9413 = vmul.f32 %v9344, %v9344
      %v9414 = vmul.f32 %v9345, %v9345
      %v9415 = vmul.f32 %v9346, %v9346
      %v9416 = vmul.f32 %v9347, %v9347
      %v9417 = vmul.f32 %v9348, %v9348
      %v9418 = vmul.f32 %v9349, %v9349
      %v9419 = vmul.f32 %v9350, %v9350
      %v9420 = vmul.f32 %v9351, %v9351
      %v9421 = vmul.f32 %v9352, %v9352
      %v9422 = vmul.f32 %v9353, %v9353
      %v9423 = vmul.f32 %v9354, %v9354
      %v9424 = vmul.f32 %v9355, %v9355
      %v9425 = vmul.f32 %v9356, %v9356
      %v9426 = vmul.f32 %v9357, %v9357
      %v9427 = vmul.f32 %v9358, %v9358
      %v9428 = vmul.f32 %v9359, %v9359
      %v9429 = vmul.f32 %v9360, %v9360
      %v9430 = vmul.f32 %v9361, %v9361
      %v9431 = vmul.f32 %v9362, %v9362
      %v9432 = vmul.f32 %v9363, %v9363
      %v9433 = vmul.f32 %v9364, %v9364
      %v9434 = vmul.f32 %v9365, %v9365
      %v9435 = vadd.f32 %v9403, %v9404
      %v9436 = vadd.f32 %v9435, %v9405
      %v9437 = vadd.f32 %v9436, %v9406
      %v9438 = vadd.f32 %v9437, %v9407
      %v9439 = vadd.f32 %v9438, %v9408
      %v9440 = vadd.f32 %v9439, %v9409
      %v9441 = vadd.f32 %v9440, %v9410
      %v9442 = vadd.f32 %v9441, %v9411
      %v9443 = vadd.f32 %v9442, %v9412
      %v9444 = vadd.f32 %v9443, %v9413
      %v9445 = vadd.f32 %v9444, %v9414
      %v9446 = vadd.f32 %v9445, %v9415
      %v9447 = vadd.f32 %v9446, %v9416
      %v9448 = vadd.f32 %v9447, %v9417
      %v9449 = vadd.f32 %v9448, %v9418
      %v9450 = vadd.f32 %v9449, %v9419
      %v9451 = vadd.f32 %v9450, %v9420
      %v9452 = vadd.f32 %v9451, %v9421
      %v9453 = vadd.f32 %v9452, %v9422
      %v9454 = vadd.f32 %v9453, %v9423
      %v9455 = vadd.f32 %v9454, %v9424
      %v9456 = vadd.f32 %v9455, %v9425
      %v9457 = vadd.f32 %v9456, %v9426
      %v9458 = vadd.f32 %v9457, %v9427
      %v9459 = vadd.f32 %v9458, %v9428
      %v9460 = vadd.f32 %v9459, %v9429
      %v9461 = vadd.f32 %v9460, %v9430
      %v9462 = vadd.f32 %v9461, %v9431
      %v9463 = vadd.f32 %v9462, %v9432
      %v9464 = vadd.f32 %v9463, %v9433
      %v9465 = vadd.f32 %v9464, %v9434
      %v9466 = vrot.slane %v9465, 4
      %v9467 = vadd.f32 %v9465, %v9466
      %v9468 = vrot.slane %v9467, 2
      %v9469 = vadd.f32 %v9467, %v9468
      %v9470 = vrot.slane %v9469, 1
      %v9471 = vadd.f32 %v9469, %v9470
      %v9472 = vsel %vm1704, %v9402, %v9471
      %9473 = vmatprep.subr.mxu0 0.0
      %9474 = vmatpush1.msra.mxu0 %v1706
      %9475 = vmatprep.subr.mxu0 0.0
      %9476 = vmatpush1.msra.mxu0 %v1707
      %9477 = vmatprep.subr.mxu0 0.0
      %9478 = vmatpush1.msra.mxu0 %v1708
      %9479 = vmatprep.subr.mxu0 0.0
      %9480 = vmatpush1.msra.mxu0 %v1709
      %9481 = vmatprep.subr.mxu0 0.0
      %9482 = vmatpush1.msra.mxu0 %v1710
      %9483 = vmatprep.subr.mxu0 0.0
      %9484 = vmatpush1.msra.mxu0 %v1711
      %9485 = vmatprep.subr.mxu0 0.0
      %9486 = vmatpush1.msra.mxu0 %v1712
      %9487 = vmatprep.subr.mxu0 0.0
      %9488 = vmatpush1.msra.mxu0 %v1713
      %9489 = vmatprep.subr.mxu0 0.0
      %9490 = vmatpush1.msra.mxu0 %v1714
      %9491 = vmatprep.subr.mxu0 0.0
      %9492 = vmatpush1.msra.mxu0 %v1715
      %9493 = vmatprep.subr.mxu0 0.0
      %9494 = vmatpush1.msra.mxu0 %v1716
      %9495 = vmatprep.subr.mxu0 0.0
      %9496 = vmatpush1.msra.mxu0 %v1717
      %9497 = vmatprep.subr.mxu0 0.0
      %9498 = vmatpush1.msra.mxu0 %v1718
      %9499 = vmatprep.subr.mxu0 0.0
      %9500 = vmatpush1.msra.mxu0 %v1719
      %9501 = vmatprep.subr.mxu0 0.0
      %9502 = vmatpush1.msra.mxu0 %v1720
      %9503 = vmatprep.subr.mxu0 0.0
      %9504 = vmatpush1.msra.mxu0 %v1721
      %9505 = vmatprep.subr.mxu0 0.0
      %9506 = vmatpush1.msra.mxu0 0.0
      %9507 = vmatprep.subr.mxu0 0.0
      %9508 = vmatpush1.msra.mxu0 0.0
      %9509 = vmatprep.subr.mxu0 0.0
      %9510 = vmatpush1.msra.mxu0 0.0
      %9511 = vmatprep.subr.mxu0 0.0
      %9512 = vmatpush1.msra.mxu0 0.0
      %9513 = vmatprep.subr.mxu0 0.0
      %9514 = vmatpush1.msra.mxu0 0.0
      %9515 = vmatprep.subr.mxu0 0.0
      %9516 = vmatpush1.msra.mxu0 0.0
      %9517 = vmatprep.subr.mxu0 0.0
      %9518 = vmatpush1.msra.mxu0 0.0
      %9519 = vmatprep.subr.mxu0 0.0
      %9520 = vmatpush1.msra.mxu0 0.0
      %9521 = vmatprep.subr.mxu0 0.0
      %9522 = vmatpush1.msra.mxu0 0.0
      %9523 = vmatprep.subr.mxu0 0.0
      %9524 = vmatpush1.msra.mxu0 0.0
      %9525 = vmatprep.subr.mxu0 0.0
      %9526 = vmatpush1.msra.mxu0 0.0
      %9527 = vmatprep.subr.mxu0 0.0
      %9528 = vmatpush1.msra.mxu0 0.0
      %9529 = vmatprep.subr.mxu0 0.0
      %9530 = vmatpush1.msra.mxu0 0.0
      %9531 = vmatprep.subr.mxu0 0.0
      %9532 = vmatpush1.msra.mxu0 0.0
      %9533 = vmatprep.subr.mxu0 0.0
      %9534 = vmatpush1.msra.mxu0 0.0
      %9535 = vmatprep.subr.mxu0 0.0
      %9536 = vmatpush1.msra.mxu0 0.0
      %9537 = vmatprep.mubr.f32.mxu0 0.0
      %9538 = vmatmul.mubr.f32.gmra.mrb[0].mxu0 %v9472
      %v9539 = vpop.f32.mrb[0].mxu0
      %v9540 = vadd.f32 0.0, %v9539
      %v9541 = vpop.f32.mrb[0].mxu0
      %9542 = vdwg.mxu0
      %v9543 = vmul.f32 %v9540, %v1792
      %v9544 = vmul.f32 %v9543, %v9543
      %v9546 = vrot.slane %v9544, 7
      %v9548 = vsub.f32 %v9543, %v9546
      %v9549 = vmax.f32 %v9548, 0.0
      %v9550 = vadd.f32 %v9549, 1e-05
      %v9551 = vrsqrt.pop %v9550
      %v9552 = vsel %vm1704, %v9543, %v9551
      %v9554 = vsel %vm1804, %v9552, 0
      %9556 = vmatprep.subr.mxu0 0.0
      %9557 = vmatpush1.msra.mxu0 %v1810
      %9558 = vmatprep.subr.mxu0 0.0
      %9559 = vmatpush1.msra.mxu0 0.0
      %9560 = vmatprep.subr.mxu0 0.0
      %9561 = vmatpush1.msra.mxu0 0.0
      %9562 = vmatprep.subr.mxu0 0.0
      %9563 = vmatpush1.msra.mxu0 0.0
      %9564 = vmatprep.subr.mxu0 0.0
      %9565 = vmatpush1.msra.mxu0 0.0
      %9566 = vmatprep.subr.mxu0 0.0
      %9567 = vmatpush1.msra.mxu0 0.0
      %9568 = vmatprep.subr.mxu0 0.0
      %9569 = vmatpush1.msra.mxu0 0.0
      %9570 = vmatprep.subr.mxu0 0.0
      %9571 = vmatpush1.msra.mxu0 0.0
      %9572 = vmatprep.subr.mxu0 0.0
      %9573 = vmatpush1.msra.mxu0 0.0
      %9574 = vmatprep.subr.mxu0 0.0
      %9575 = vmatpush1.msra.mxu0 0.0
      %9576 = vmatprep.subr.mxu0 0.0
      %9577 = vmatpush1.msra.mxu0 0.0
      %9578 = vmatprep.subr.mxu0 0.0
      %9579 = vmatpush1.msra.mxu0 0.0
      %9580 = vmatprep.subr.mxu0 0.0
      %9581 = vmatpush1.msra.mxu0 0.0
      %9582 = vmatprep.subr.mxu0 0.0
      %9583 = vmatpush1.msra.mxu0 0.0
      %9584 = vmatprep.subr.mxu0 0.0
      %9585 = vmatpush1.msra.mxu0 0.0
      %9586 = vmatprep.subr.mxu0 0.0
      %9587 = vmatpush1.msra.mxu0 0.0
      %9588 = vmatprep.subr.mxu0 0.0
      %9589 = vmatpush1.msra.mxu0 0.0
      %9590 = vmatprep.subr.mxu0 0.0
      %9591 = vmatpush1.msra.mxu0 0.0
      %9592 = vmatprep.subr.mxu0 0.0
      %9593 = vmatpush1.msra.mxu0 0.0
      %9594 = vmatprep.subr.mxu0 0.0
      %9595 = vmatpush1.msra.mxu0 0.0
      %9596 = vmatprep.subr.mxu0 0.0
      %9597 = vmatpush1.msra.mxu0 0.0
      %9598 = vmatprep.subr.mxu0 0.0
      %9599 = vmatpush1.msra.mxu0 0.0
      %9600 = vmatprep.subr.mxu0 0.0
      %9601 = vmatpush1.msra.mxu0 0.0
      %9602 = vmatprep.subr.mxu0 0.0
      %9603 = vmatpush1.msra.mxu0 0.0
      %9604 = vmatprep.subr.mxu0 0.0
      %9605 = vmatpush1.msra.mxu0 0.0
      %9606 = vmatprep.subr.mxu0 0.0
      %9607 = vmatpush1.msra.mxu0 0.0
      %9608 = vmatprep.subr.mxu0 0.0
      %9609 = vmatpush1.msra.mxu0 0.0
      %9610 = vmatprep.subr.mxu0 0.0
      %9611 = vmatpush1.msra.mxu0 0.0
      %9612 = vmatprep.subr.mxu0 0.0
      %9613 = vmatpush1.msra.mxu0 0.0
      %9614 = vmatprep.subr.mxu0 0.0
      %9615 = vmatpush1.msra.mxu0 0.0
      %9616 = vmatprep.subr.mxu0 0.0
      %9617 = vmatpush1.msra.mxu0 0.0
      %9618 = vmatprep.subr.mxu0 0.0
      %9619 = vmatpush1.msra.mxu0 0.0
      %9620 = vmatprep.mubr.f32.mxu0 0.0
      %9621 = vmatmul.mubr.f32.gmra.mrb[0].mxu0 %v9554
      %v9622 = vpop.f32.mrb[0].mxu0
      %v9623 = vadd.f32 0.0, %v9622
      %v9624 = vpop.f32.mrb[0].mxu0
      %9625 = vdwg.mxu0
      %v9626 = vld [vmem:[%s57] sm:$0x1]
      %v9628 = vlaneseq
      %v9629 = vshrl.u32 %v9628, 7
      %v9630 = vsub.s32 0, %v9629
      %v9631 = vrot.slane %v9626, %v9630
      %v9633 = vmul.f32 %v9623, %v9631
      %v9634 = vld [vmem:[%s59] sm:$0x1]
      %v9636 = vrot.slane %v9633, 1
      %v9638 = vmul.f32 %v9623, %v9636
      %v9639 = vsub.f32 %v9634, %v9638
      %v9640 = vlaneseq
      %v9641 = vshrl.u32 %v9640, 7
      %v9642 = vsub.s32 1, %v9641
      %v9643 = vrot.slane %v9633, %v9642
      %v9644 = vmul.f32 %v9334, %v9643
      %v9645 = vmul.f32 %v9335, %v9643
      %v9646 = vmul.f32 %v9336, %v9643
      %v9647 = vmul.f32 %v9337, %v9643
      %v9648 = vmul.f32 %v9338, %v9643
      %v9649 = vmul.f32 %v9339, %v9643
      %v9650 = vmul.f32 %v9340, %v9643
      %v9651 = vmul.f32 %v9341, %v9643
      %v9652 = vmul.f32 %v9342, %v9643
      %v9653 = vmul.f32 %v9343, %v9643
      %v9654 = vmul.f32 %v9344, %v9643
      %v9655 = vmul.f32 %v9345, %v9643
      %v9656 = vmul.f32 %v9346, %v9643
      %v9657 = vmul.f32 %v9347, %v9643
      %v9658 = vmul.f32 %v9348, %v9643
      %v9659 = vmul.f32 %v9349, %v9643
      %v9660 = vmul.f32 %v9350, %v9643
      %v9661 = vmul.f32 %v9351, %v9643
      %v9662 = vmul.f32 %v9352, %v9643
      %v9663 = vmul.f32 %v9353, %v9643
      %v9664 = vmul.f32 %v9354, %v9643
      %v9665 = vmul.f32 %v9355, %v9643
      %v9666 = vmul.f32 %v9356, %v9643
      %v9667 = vmul.f32 %v9357, %v9643
      %v9668 = vmul.f32 %v9358, %v9643
      %v9669 = vmul.f32 %v9359, %v9643
      %v9670 = vmul.f32 %v9360, %v9643
      %v9671 = vmul.f32 %v9361, %v9643
      %v9672 = vmul.f32 %v9362, %v9643
      %v9673 = vmul.f32 %v9363, %v9643
      %v9674 = vmul.f32 %v9364, %v9643
      %v9675 = vmul.f32 %v9365, %v9643
      %v9677 = vlaneseq
      %v9678 = vshrl.u32 %v9677, 7
      %v9679 = vsub.s32 0, %v9678
      %v9680 = vrot.slane %v9639, %v9679
      %v9682 = vadd.f32 %v9644, %v9680
      %v9683 = vadd.f32 %v9645, %v9680
      %v9684 = vadd.f32 %v9646, %v9680
      %v9685 = vadd.f32 %v9647, %v9680
      %v9686 = vadd.f32 %v9648, %v9680
      %v9687 = vadd.f32 %v9649, %v9680
      %v9688 = vadd.f32 %v9650, %v9680
      %v9689 = vadd.f32 %v9651, %v9680
      %v9690 = vadd.f32 %v9652, %v9680
      %v9691 = vadd.f32 %v9653, %v9680
      %v9692 = vadd.f32 %v9654, %v9680
      %v9693 = vadd.f32 %v9655, %v9680
      %v9694 = vadd.f32 %v9656, %v9680
      %v9695 = vadd.f32 %v9657, %v9680
      %v9696 = vadd.f32 %v9658, %v9680
      %v9697 = vadd.f32 %v9659, %v9680
      %v9698 = vadd.f32 %v9660, %v9680
      %v9699 = vadd.f32 %v9661, %v9680
      %v9700 = vadd.f32 %v9662, %v9680
      %v9701 = vadd.f32 %v9663, %v9680
      %v9702 = vadd.f32 %v9664, %v9680
      %v9703 = vadd.f32 %v9665, %v9680
      %v9704 = vadd.f32 %v9666, %v9680
      %v9705 = vadd.f32 %v9667, %v9680
      %v9706 = vadd.f32 %v9668, %v9680
      %v9707 = vadd.f32 %v9669, %v9680
      %v9708 = vadd.f32 %v9670, %v9680
      %v9709 = vadd.f32 %v9671, %v9680
      %v9710 = vadd.f32 %v9672, %v9680
      %v9711 = vadd.f32 %v9673, %v9680
      %v9712 = vadd.f32 %v9674, %v9680
      %v9713 = vadd.f32 %v9675, %v9680
      %v9714 = vsub.f32 0.0, %v9682
      %v9715 = vsub.f32 0.0, %v9683
      %v9716 = vsub.f32 0.0, %v9684
      %v9717 = vsub.f32 0.0, %v9685
      %v9718 = vsub.f32 0.0, %v9686
      %v9719 = vsub.f32 0.0, %v9687
      %v9720 = vsub.f32 0.0, %v9688
      %v9721 = vsub.f32 0.0, %v9689
      %v9722 = vsub.f32 0.0, %v9690
      %v9723 = vsub.f32 0.0, %v9691
      %v9724 = vsub.f32 0.0, %v9692
      %v9725 = vsub.f32 0.0, %v9693
      %v9726 = vsub.f32 0.0, %v9694
      %v9727 = vsub.f32 0.0, %v9695
      %v9728 = vsub.f32 0.0, %v9696
      %v9729 = vsub.f32 0.0, %v9697
      %v9730 = vsub.f32 0.0, %v9698
      %v9731 = vsub.f32 0.0, %v9699
      %v9732 = vsub.f32 0.0, %v9700
      %v9733 = vsub.f32 0.0, %v9701
      %v9734 = vsub.f32 0.0, %v9702
      %v9735 = vsub.f32 0.0, %v9703
      %v9736 = vsub.f32 0.0, %v9704
      %v9737 = vsub.f32 0.0, %v9705
      %v9738 = vsub.f32 0.0, %v9706
      %v9739 = vsub.f32 0.0, %v9707
      %v9740 = vsub.f32 0.0, %v9708
      %v9741 = vsub.f32 0.0, %v9709
      %v9742 = vsub.f32 0.0, %v9710
      %v9743 = vsub.f32 0.0, %v9711
      %v9744 = vsub.f32 0.0, %v9712
      %v9745 = vsub.f32 0.0, %v9713
      %v9746 = vmul.f32 %v9714, 1.442695
      %v9747 = vpow.pop %v9746
      %v9748 = vmul.f32 %v9715, 1.442695
      %v9749 = vpow.pop %v9748
      %v9750 = vmul.f32 %v9716, 1.442695
      %v9751 = vpow.pop %v9750
      %v9752 = vmul.f32 %v9717, 1.442695
      %v9753 = vpow.pop %v9752
      %v9754 = vmul.f32 %v9718, 1.442695
      %v9755 = vpow.pop %v9754
      %v9756 = vmul.f32 %v9719, 1.442695
      %v9757 = vpow.pop %v9756
      %v9758 = vmul.f32 %v9720, 1.442695
      %v9759 = vpow.pop %v9758
      %v9760 = vmul.f32 %v9721, 1.442695
      %v9761 = vpow.pop %v9760
      %v9762 = vmul.f32 %v9722, 1.442695
      %v9763 = vpow.pop %v9762
      %v9764 = vmul.f32 %v9723, 1.442695
      %v9765 = vpow.pop %v9764
      %v9766 = vmul.f32 %v9724, 1.442695
      %v9767 = vpow.pop %v9766
      %v9768 = vmul.f32 %v9725, 1.442695
      %v9769 = vpow.pop %v9768
      %v9770 = vmul.f32 %v9726, 1.442695
      %v9771 = vpow.pop %v9770
      %v9772 = vmul.f32 %v9727, 1.442695
      %v9773 = vpow.pop %v9772
      %v9774 = vmul.f32 %v9728, 1.442695
      %v9775 = vpow.pop %v9774
      %v9776 = vmul.f32 %v9729, 1.442695
      %v9777 = vpow.pop %v9776
      %v9778 = vmul.f32 %v9730, 1.442695
      %v9779 = vpow.pop %v9778
      %v9780 = vmul.f32 %v9731, 1.442695
      %v9781 = vpow.pop %v9780
      %v9782 = vmul.f32 %v9732, 1.442695
      %v9783 = vpow.pop %v9782
      %v9784 = vmul.f32 %v9733, 1.442695
      %v9785 = vpow.pop %v9784
      %v9786 = vmul.f32 %v9734, 1.442695
      %v9787 = vpow.pop %v9786
      %v9788 = vmul.f32 %v9735, 1.442695
      %v9789 = vpow.pop %v9788
      %v9790 = vmul.f32 %v9736, 1.442695
      %v9791 = vpow.pop %v9790
      %v9792 = vmul.f32 %v9737, 1.442695
      %v9793 = vpow.pop %v9792
      %v9794 = vmul.f32 %v9738, 1.442695
      %v9795 = vpow.pop %v9794
      %v9796 = vmul.f32 %v9739, 1.442695
      %v9797 = vpow.pop %v9796
      %v9798 = vmul.f32 %v9740, 1.442695
      %v9799 = vpow.pop %v9798
      %v9800 = vmul.f32 %v9741, 1.442695
      %v9801 = vpow.pop %v9800
      %v9802 = vmul.f32 %v9742, 1.442695
      %v9803 = vpow.pop %v9802
      %v9804 = vmul.f32 %v9743, 1.442695
      %v9805 = vpow.pop %v9804
      %v9806 = vmul.f32 %v9744, 1.442695
      %v9807 = vpow.pop %v9806
      %v9808 = vmul.f32 %v9745, 1.442695
      %v9809 = vpow.pop %v9808
      %v9810 = vadd.f32 %v9747, 1.0
      %v9811 = vadd.f32 %v9749, 1.0
      %v9812 = vadd.f32 %v9751, 1.0
      %v9813 = vadd.f32 %v9753, 1.0
      %v9814 = vadd.f32 %v9755, 1.0
      %v9815 = vadd.f32 %v9757, 1.0
      %v9816 = vadd.f32 %v9759, 1.0
      %v9817 = vadd.f32 %v9761, 1.0
      %v9818 = vadd.f32 %v9763, 1.0
      %v9819 = vadd.f32 %v9765, 1.0
      %v9820 = vadd.f32 %v9767, 1.0
      %v9821 = vadd.f32 %v9769, 1.0
      %v9822 = vadd.f32 %v9771, 1.0
      %v9823 = vadd.f32 %v9773, 1.0
      %v9824 = vadd.f32 %v9775, 1.0
      %v9825 = vadd.f32 %v9777, 1.0
      %v9826 = vadd.f32 %v9779, 1.0
      %v9827 = vadd.f32 %v9781, 1.0
      %v9828 = vadd.f32 %v9783, 1.0
      %v9829 = vadd.f32 %v9785, 1.0
      %v9830 = vadd.f32 %v9787, 1.0
      %v9831 = vadd.f32 %v9789, 1.0
      %v9832 = vadd.f32 %v9791, 1.0
      %v9833 = vadd.f32 %v9793, 1.0
      %v9834 = vadd.f32 %v9795, 1.0
      %v9835 = vadd.f32 %v9797, 1.0
      %v9836 = vadd.f32 %v9799, 1.0
      %v9837 = vadd.f32 %v9801, 1.0
      %v9838 = vadd.f32 %v9803, 1.0
      %v9839 = vadd.f32 %v9805, 1.0
      %v9840 = vadd.f32 %v9807, 1.0
      %v9841 = vadd.f32 %v9809, 1.0
      %v9842 = vrcp.pop %v9810
      %v9843 = vrcp.pop %v9811
      %v9844 = vrcp.pop %v9812
      %v9845 = vrcp.pop %v9813
      %v9846 = vrcp.pop %v9814
      %v9847 = vrcp.pop %v9815
      %v9848 = vrcp.pop %v9816
      %v9849 = vrcp.pop %v9817
      %v9850 = vrcp.pop %v9818
      %v9851 = vrcp.pop %v9819
      %v9852 = vrcp.pop %v9820
      %v9853 = vrcp.pop %v9821
      %v9854 = vrcp.pop %v9822
      %v9855 = vrcp.pop %v9823
      %v9856 = vrcp.pop %v9824
      %v9857 = vrcp.pop %v9825
      %v9858 = vrcp.pop %v9826
      %v9859 = vrcp.pop %v9827
      %v9860 = vrcp.pop %v9828
      %v9861 = vrcp.pop %v9829
      %v9862 = vrcp.pop %v9830
      %v9863 = vrcp.pop %v9831
      %v9864 = vrcp.pop %v9832
      %v9865 = vrcp.pop %v9833
      %v9866 = vrcp.pop %v9834
      %v9867 = vrcp.pop %v9835
      %v9868 = vrcp.pop %v9836
      %v9869 = vrcp.pop %v9837
      %v9870 = vrcp.pop %v9838
      %v9871 = vrcp.pop %v9839
      %v9872 = vrcp.pop %v9840
      %v9873 = vrcp.pop %v9841
      %v9874 = vmul.f32 %v9682, %v9842
      %v9875 = vmul.f32 %v9683, %v9843
      %v9876 = vmul.f32 %v9684, %v9844
      %v9877 = vmul.f32 %v9685, %v9845
      %v9878 = vmul.f32 %v9686, %v9846
      %v9879 = vmul.f32 %v9687, %v9847
      %v9880 = vmul.f32 %v9688, %v9848
      %v9881 = vmul.f32 %v9689, %v9849
      %v9882 = vmul.f32 %v9690, %v9850
      %v9883 = vmul.f32 %v9691, %v9851
      %v9884 = vmul.f32 %v9692, %v9852
      %v9885 = vmul.f32 %v9693, %v9853
      %v9886 = vmul.f32 %v9694, %v9854
      %v9887 = vmul.f32 %v9695, %v9855
      %v9888 = vmul.f32 %v9696, %v9856
      %v9889 = vmul.f32 %v9697, %v9857
      %v9890 = vmul.f32 %v9698, %v9858
      %v9891 = vmul.f32 %v9699, %v9859
      %v9892 = vmul.f32 %v9700, %v9860
      %v9893 = vmul.f32 %v9701, %v9861
      %v9894 = vmul.f32 %v9702, %v9862
      %v9895 = vmul.f32 %v9703, %v9863
      %v9896 = vmul.f32 %v9704, %v9864
      %v9897 = vmul.f32 %v9705, %v9865
      %v9898 = vmul.f32 %v9706, %v9866
      %v9899 = vmul.f32 %v9707, %v9867
      %v9900 = vmul.f32 %v9708, %v9868
      %v9901 = vmul.f32 %v9709, %v9869
      %v9902 = vmul.f32 %v9710, %v9870
      %v9903 = vmul.f32 %v9711, %v9871
      %v9904 = vmul.f32 %v9712, %v9872
      %v9905 = vmul.f32 %v9713, %v9873
      %v9906 = vrot.slane %v9874, 7
      %v9907 = vrot.slane %v9876, 7
      %v9908 = vrot.slane %v9878, 7
      %v9909 = vrot.slane %v9880, 7
      %v9910 = vrot.slane %v9882, 7
      %v9911 = vrot.slane %v9884, 7
      %v9912 = vrot.slane %v9886, 7
      %v9913 = vrot.slane %v9888, 7
      %v9914 = vrot.slane %v9890, 7
      %v9915 = vrot.slane %v9892, 7
      %v9916 = vrot.slane %v9894, 7
      %v9917 = vrot.slane %v9896, 7
      %v9918 = vrot.slane %v9898, 7
      %v9919 = vrot.slane %v9900, 7
      %v9920 = vrot.slane %v9902, 7
      %v9921 = vrot.slane %v9904, 7
      %v9922 = vrot.slane %v9875, 7
      %v9923 = vrot.slane %v9877, 7
      %v9924 = vrot.slane %v9879, 7
      %v9925 = vrot.slane %v9881, 7
      %v9926 = vrot.slane %v9883, 7
      %v9927 = vrot.slane %v9885, 7
      %v9928 = vrot.slane %v9887, 7
      %v9929 = vrot.slane %v9889, 7
      %v9930 = vrot.slane %v9891, 7
      %v9931 = vrot.slane %v9893, 7
      %v9932 = vrot.slane %v9895, 7
      %v9933 = vrot.slane %v9897, 7
      %v9934 = vrot.slane %v9899, 7
      %v9935 = vrot.slane %v9901, 7
      %v9936 = vrot.slane %v9903, 7
      %v9937 = vrot.slane %v9905, 7
      %v9938 = vsel %vm2194, %v9906, %v9922
      %v9939 = vsel %vm2194, %v9907, %v9923
      %v9940 = vsel %vm2194, %v9908, %v9924
      %v9941 = vsel %vm2194, %v9909, %v9925
      %v9942 = vsel %vm2194, %v9910, %v9926
      %v9943 = vsel %vm2194, %v9911, %v9927
      %v9944 = vsel %vm2194, %v9912, %v9928
      %v9945 = vsel %vm2194, %v9913, %v9929
      %v9946 = vsel %vm2194, %v9914, %v9930
      %v9947 = vsel %vm2194, %v9915, %v9931
      %v9948 = vsel %vm2194, %v9916, %v9932
      %v9949 = vsel %vm2194, %v9917, %v9933
      %v9950 = vsel %vm2194, %v9918, %v9934
      %v9951 = vsel %vm2194, %v9919, %v9935
      %v9952 = vsel %vm2194, %v9920, %v9936
      %v9953 = vsel %vm2194, %v9921, %v9937
      %v9954 = vsel %vm2194, %v9922, %v9906
      %v9955 = vsel %vm2194, %v9923, %v9907
      %v9956 = vsel %vm2194, %v9924, %v9908
      %v9957 = vsel %vm2194, %v9925, %v9909
      %v9958 = vsel %vm2194, %v9926, %v9910
      %v9959 = vsel %vm2194, %v9927, %v9911
      %v9960 = vsel %vm2194, %v9928, %v9912
      %v9961 = vsel %vm2194, %v9929, %v9913
      %v9962 = vsel %vm2194, %v9930, %v9914
      %v9963 = vsel %vm2194, %v9931, %v9915
      %v9964 = vsel %vm2194, %v9932, %v9916
      %v9965 = vsel %vm2194, %v9933, %v9917
      %v9966 = vsel %vm2194, %v9934, %v9918
      %v9967 = vsel %vm2194, %v9935, %v9919
      %v9968 = vsel %vm2194, %v9936, %v9920
      %v9969 = vsel %vm2194, %v9937, %v9921
      %v9970 = vsel %vm2229, 0.0, %v9954
      %v9971 = vsel %vm2230, 0.0, %v9938
      %v9972 = vsel %vm2229, 0.0, %v9955
      %v9973 = vsel %vm2230, 0.0, %v9939
      %v9974 = vsel %vm2229, 0.0, %v9956
      %v9975 = vsel %vm2230, 0.0, %v9940
      %v9976 = vsel %vm2229, 0.0, %v9957
      %v9977 = vsel %vm2230, 0.0, %v9941
      %v9978 = vsel %vm2229, 0.0, %v9958
      %v9979 = vsel %vm2230, 0.0, %v9942
      %v9980 = vsel %vm2229, 0.0, %v9959
      %v9981 = vsel %vm2230, 0.0, %v9943
      %v9982 = vsel %vm2229, 0.0, %v9960
      %v9983 = vsel %vm2230, 0.0, %v9944
      %v9984 = vsel %vm2229, 0.0, %v9961
      %v9985 = vsel %vm2230, 0.0, %v9945
      %v9986 = vsel %vm2229, 0.0, %v9962
      %v9987 = vsel %vm2230, 0.0, %v9946
      %v9988 = vsel %vm2229, 0.0, %v9963
      %v9989 = vsel %vm2230, 0.0, %v9947
      %v9990 = vsel %vm2229, 0.0, %v9964
      %v9991 = vsel %vm2230, 0.0, %v9948
      %v9992 = vsel %vm2229, 0.0, %v9965
      %v9993 = vsel %vm2230, 0.0, %v9949
      %v9994 = vsel %vm2229, 0.0, %v9966
      %v9995 = vsel %vm2230, 0.0, %v9950
      %v9996 = vsel %vm2229, 0.0, %v9967
      %v9997 = vsel %vm2230, 0.0, %v9951
      %v9998 = vsel %vm2229, 0.0, %v9968
      %v9999 = vsel %vm2230, 0.0, %v9952
      %v10000 = vsel %vm2229, 0.0, %v9969
      %v10001 = vsel %vm2230, 0.0, %v9953
      %v10002 = vrot.slane %v9874, 1
      %v10003 = vrot.slane %v9876, 1
      %v10004 = vrot.slane %v9878, 1
      %v10005 = vrot.slane %v9880, 1
      %v10006 = vrot.slane %v9882, 1
      %v10007 = vrot.slane %v9884, 1
      %v10008 = vrot.slane %v9886, 1
      %v10009 = vrot.slane %v9888, 1
      %v10010 = vrot.slane %v9890, 1
      %v10011 = vrot.slane %v9892, 1
      %v10012 = vrot.slane %v9894, 1
      %v10013 = vrot.slane %v9896, 1
      %v10014 = vrot.slane %v9898, 1
      %v10015 = vrot.slane %v9900, 1
      %v10016 = vrot.slane %v9902, 1
      %v10017 = vrot.slane %v9904, 1
      %v10018 = vrot.slane %v9875, 1
      %v10019 = vrot.slane %v9877, 1
      %v10020 = vrot.slane %v9879, 1
      %v10021 = vrot.slane %v9881, 1
      %v10022 = vrot.slane %v9883, 1
      %v10023 = vrot.slane %v9885, 1
      %v10024 = vrot.slane %v9887, 1
      %v10025 = vrot.slane %v9889, 1
      %v10026 = vrot.slane %v9891, 1
      %v10027 = vrot.slane %v9893, 1
      %v10028 = vrot.slane %v9895, 1
      %v10029 = vrot.slane %v9897, 1
      %v10030 = vrot.slane %v9899, 1
      %v10031 = vrot.slane %v9901, 1
      %v10032 = vrot.slane %v9903, 1
      %v10033 = vrot.slane %v9905, 1
      %v10034 = vsel %vm2295, %v10002, %v10018
      %v10035 = vsel %vm2295, %v10003, %v10019
      %v10036 = vsel %vm2295, %v10004, %v10020
      %v10037 = vsel %vm2295, %v10005, %v10021
      %v10038 = vsel %vm2295, %v10006, %v10022
      %v10039 = vsel %vm2295, %v10007, %v10023
      %v10040 = vsel %vm2295, %v10008, %v10024
      %v10041 = vsel %vm2295, %v10009, %v10025
      %v10042 = vsel %vm2295, %v10010, %v10026
      %v10043 = vsel %vm2295, %v10011, %v10027
      %v10044 = vsel %vm2295, %v10012, %v10028
      %v10045 = vsel %vm2295, %v10013, %v10029
      %v10046 = vsel %vm2295, %v10014, %v10030
      %v10047 = vsel %vm2295, %v10015, %v10031
      %v10048 = vsel %vm2295, %v10016, %v10032
      %v10049 = vsel %vm2295, %v10017, %v10033
      %v10050 = vsel %vm2295, %v10018, %v10002
      %v10051 = vsel %vm2295, %v10019, %v10003
      %v10052 = vsel %vm2295, %v10020, %v10004
      %v10053 = vsel %vm2295, %v10021, %v10005
      %v10054 = vsel %vm2295, %v10022, %v10006
      %v10055 = vsel %vm2295, %v10023, %v10007
      %v10056 = vsel %vm2295, %v10024, %v10008
      %v10057 = vsel %vm2295, %v10025, %v10009
      %v10058 = vsel %vm2295, %v10026, %v10010
      %v10059 = vsel %vm2295, %v10027, %v10011
      %v10060 = vsel %vm2295, %v10028, %v10012
      %v10061 = vsel %vm2295, %v10029, %v10013
      %v10062 = vsel %vm2295, %v10030, %v10014
      %v10063 = vsel %vm2295, %v10031, %v10015
      %v10064 = vsel %vm2295, %v10032, %v10016
      %v10065 = vsel %vm2295, %v10033, %v10017
      %v10066 = vsel %vm2330, 0.0, %v10034
      %v10067 = vsel %vm2331, 0.0, %v10050
      %v10068 = vsel %vm2330, 0.0, %v10035
      %v10069 = vsel %vm2331, 0.0, %v10051
      %v10070 = vsel %vm2330, 0.0, %v10036
      %v10071 = vsel %vm2331, 0.0, %v10052
      %v10072 = vsel %vm2330, 0.0, %v10037
      %v10073 = vsel %vm2331, 0.0, %v10053
      %v10074 = vsel %vm2330, 0.0, %v10038
      %v10075 = vsel %vm2331, 0.0, %v10054
      %v10076 = vsel %vm2330, 0.0, %v10039
      %v10077 = vsel %vm2331, 0.0, %v10055
      %v10078 = vsel %vm2330, 0.0, %v10040
      %v10079 = vsel %vm2331, 0.0, %v10056
      %v10080 = vsel %vm2330, 0.0, %v10041
      %v10081 = vsel %vm2331, 0.0, %v10057
      %v10082 = vsel %vm2330, 0.0, %v10042
      %v10083 = vsel %vm2331, 0.0, %v10058
      %v10084 = vsel %vm2330, 0.0, %v10043
      %v10085 = vsel %vm2331, 0.0, %v10059
      %v10086 = vsel %vm2330, 0.0, %v10044
      %v10087 = vsel %vm2331, 0.0, %v10060
      %v10088 = vsel %vm2330, 0.0, %v10045
      %v10089 = vsel %vm2331, 0.0, %v10061
      %v10090 = vsel %vm2330, 0.0, %v10046
      %v10091 = vsel %vm2331, 0.0, %v10062
      %v10092 = vsel %vm2330, 0.0, %v10047
      %v10093 = vsel %vm2331, 0.0, %v10063
      %v10094 = vsel %vm2330, 0.0, %v10048
      %v10095 = vsel %vm2331, 0.0, %v10064
      %v10096 = vsel %vm2330, 0.0, %v10049
      %v10097 = vsel %vm2331, 0.0, %v10065
      %v10098 = vpack.c.bf16 %v9971, %v9970
      %v10099 = vpack.c.bf16 %v9973, %v9972
      %v10100 = vpack.c.bf16 %v9975, %v9974
      %v10101 = vpack.c.bf16 %v9977, %v9976
      %v10102 = vpack.c.bf16 %v9979, %v9978
      %v10103 = vpack.c.bf16 %v9981, %v9980
      %v10104 = vpack.c.bf16 %v9983, %v9982
      %v10105 = vpack.c.bf16 %v9985, %v9984
      %v10106 = vpack.c.bf16 %v9987, %v9986
      %v10107 = vpack.c.bf16 %v9989, %v9988
      %v10108 = vpack.c.bf16 %v9991, %v9990
      %v10109 = vpack.c.bf16 %v9993, %v9992
      %v10110 = vpack.c.bf16 %v9995, %v9994
      %v10111 = vpack.c.bf16 %v9997, %v9996
      %v10112 = vpack.c.bf16 %v9999, %v9998
      %v10113 = vpack.c.bf16 %v10001, %v10000
      %v10114 = vpack.c.bf16 %v9875, %v9874
      %v10115 = vpack.c.bf16 %v9877, %v9876
      %v10116 = vpack.c.bf16 %v9879, %v9878
      %v10117 = vpack.c.bf16 %v9881, %v9880
      %v10118 = vpack.c.bf16 %v9883, %v9882
      %v10119 = vpack.c.bf16 %v9885, %v9884
      %v10120 = vpack.c.bf16 %v9887, %v9886
      %v10121 = vpack.c.bf16 %v9889, %v9888
      %v10122 = vpack.c.bf16 %v9891, %v9890
      %v10123 = vpack.c.bf16 %v9893, %v9892
      %v10124 = vpack.c.bf16 %v9895, %v9894
      %v10125 = vpack.c.bf16 %v9897, %v9896
      %v10126 = vpack.c.bf16 %v9899, %v9898
      %v10127 = vpack.c.bf16 %v9901, %v9900
      %v10128 = vpack.c.bf16 %v9903, %v9902
      %v10129 = vpack.c.bf16 %v9905, %v9904
      %v10130 = vpack.c.bf16 %v10067, %v10066
      %v10131 = vpack.c.bf16 %v10069, %v10068
      %v10132 = vpack.c.bf16 %v10071, %v10070
      %v10133 = vpack.c.bf16 %v10073, %v10072
      %v10134 = vpack.c.bf16 %v10075, %v10074
      %v10135 = vpack.c.bf16 %v10077, %v10076
      %v10136 = vpack.c.bf16 %v10079, %v10078
      %v10137 = vpack.c.bf16 %v10081, %v10080
      %v10138 = vpack.c.bf16 %v10083, %v10082
      %v10139 = vpack.c.bf16 %v10085, %v10084
      %v10140 = vpack.c.bf16 %v10087, %v10086
      %v10141 = vpack.c.bf16 %v10089, %v10088
      %v10142 = vpack.c.bf16 %v10091, %v10090
      %v10143 = vpack.c.bf16 %v10093, %v10092
      %v10144 = vpack.c.bf16 %v10095, %v10094
      %v10145 = vpack.c.bf16 %v10097, %v10096
      %v10146 = vld [vmem:[%s61] sm:$0x3]
      %v10147 = vld [vmem:[%s61 + $0x2] sm:$0x3]
      %10148 = vmatprep.subr.bf16.mxu0 0
      %10149 = vmatpush1.bf16.xpose.msra.mxu0 0
      %10150 = vmatprep.subr.bf16.mxu0 0
      %10151 = vmatpush1.bf16.xpose.msra.mxu0 %v10114
      %10152 = vmatprep.subr.bf16.mxu0 0
      %10153 = vmatpush1.bf16.xpose.msra.mxu0 %v10115
      %10154 = vmatprep.subr.bf16.mxu0 0
      %10155 = vmatpush1.bf16.xpose.msra.mxu0 %v10116
      %10156 = vmatprep.subr.bf16.mxu0 0
      %10157 = vmatpush1.bf16.xpose.msra.mxu0 %v10117
      %10158 = vmatprep.subr.bf16.mxu0 0
      %10159 = vmatpush1.bf16.xpose.msra.mxu0 %v10118
      %10160 = vmatprep.subr.bf16.mxu0 0
      %10161 = vmatpush1.bf16.xpose.msra.mxu0 %v10119
      %10162 = vmatprep.subr.bf16.mxu0 0
      %10163 = vmatpush1.bf16.xpose.msra.mxu0 %v10120
      %10164 = vmatprep.subr.bf16.mxu0 0
      %10165 = vmatpush1.bf16.xpose.msra.mxu0 %v10121
      %10166 = vmatprep.subr.bf16.mxu0 0
      %10167 = vmatpush1.bf16.xpose.msra.mxu0 %v10122
      %10168 = vmatprep.subr.bf16.mxu0 0
      %10169 = vmatpush1.bf16.xpose.msra.mxu0 %v10123
      %10170 = vmatprep.subr.bf16.mxu0 0
      %10171 = vmatpush1.bf16.xpose.msra.mxu0 %v10124
      %10172 = vmatprep.subr.bf16.mxu0 0
      %10173 = vmatpush1.bf16.xpose.msra.mxu0 %v10125
      %10174 = vmatprep.subr.bf16.mxu0 0
      %10175 = vmatpush1.bf16.xpose.msra.mxu0 %v10126
      %10176 = vmatprep.subr.bf16.mxu0 0
      %10177 = vmatpush1.bf16.xpose.msra.mxu0 %v10127
      %10178 = vmatprep.subr.bf16.mxu0 0
      %10179 = vmatpush1.bf16.xpose.msra.mxu0 %v10128
      %10180 = vmatprep.mubr.bf16.mxu0 0
      %10181 = vmatmul.mubr.bf16.gmra.mrb[0].mxu0 %v10147
      %v10182 = vpop.f32.mrb[0].mxu0
      %v10183 = vadd.f32 0.0, %v10182
      %v10184 = vpop.f32.mrb[0].mxu0
      %v10185 = vadd.f32 0.0, %v10184
      %v10186 = vpop.f32.mrb[0].mxu0
      %v10187 = vpop.f32.mrb[0].mxu0
      %10188 = vdwg.mxu0
      %10189 = vmatprep.subr.bf16.mxu0 0
      %10190 = vmatpush1.bf16.xpose.msra.mxu0 0
      %10191 = vmatprep.subr.bf16.mxu0 0
      %10192 = vmatpush1.bf16.xpose.msra.mxu0 %v10098
      %10193 = vmatprep.subr.bf16.mxu0 0
      %10194 = vmatpush1.bf16.xpose.msra.mxu0 %v10099
      %10195 = vmatprep.subr.bf16.mxu0 0
      %10196 = vmatpush1.bf16.xpose.msra.mxu0 %v10100
      %10197 = vmatprep.subr.bf16.mxu0 0
      %10198 = vmatpush1.bf16.xpose.msra.mxu0 %v10101
      %10199 = vmatprep.subr.bf16.mxu0 0
      %10200 = vmatpush1.bf16.xpose.msra.mxu0 %v10102
      %10201 = vmatprep.subr.bf16.mxu0 0
      %10202 = vmatpush1.bf16.xpose.msra.mxu0 %v10103
      %10203 = vmatprep.subr.bf16.mxu0 0
      %10204 = vmatpush1.bf16.xpose.msra.mxu0 %v10104
      %10205 = vmatprep.subr.bf16.mxu0 0
      %10206 = vmatpush1.bf16.xpose.msra.mxu0 %v10105
      %10207 = vmatprep.subr.bf16.mxu0 0
      %10208 = vmatpush1.bf16.xpose.msra.mxu0 %v10106
      %10209 = vmatprep.subr.bf16.mxu0 0
      %10210 = vmatpush1.bf16.xpose.msra.mxu0 %v10107
      %10211 = vmatprep.subr.bf16.mxu0 0
      %10212 = vmatpush1.bf16.xpose.msra.mxu0 %v10108
      %10213 = vmatprep.subr.bf16.mxu0 0
      %10214 = vmatpush1.bf16.xpose.msra.mxu0 %v10109
      %10215 = vmatprep.subr.bf16.mxu0 0
      %10216 = vmatpush1.bf16.xpose.msra.mxu0 %v10110
      %10217 = vmatprep.subr.bf16.mxu0 0
      %10218 = vmatpush1.bf16.xpose.msra.mxu0 %v10111
      %10219 = vmatprep.subr.bf16.mxu0 0
      %10220 = vmatpush1.bf16.xpose.msra.mxu0 %v10112
      %10221 = vmatprep.mubr.bf16.mxu0 0
      %10222 = vmatmul.mubr.bf16.gmra.mrb[0].mxu0 %v10146
      %v10223 = vpop.f32.mrb[0].mxu0
      %v10224 = vadd.f32 %v10183, %v10223
      %v10225 = vpop.f32.mrb[0].mxu0
      %v10226 = vadd.f32 %v10185, %v10225
      %v10227 = vpop.f32.mrb[0].mxu0
      %v10228 = vpop.f32.mrb[0].mxu0
      %10229 = vdwg.mxu0
      %v10230 = vld [vmem:[%s61 + $0x4] sm:$0x3]
      %10231 = vmatprep.subr.bf16.mxu0 0
      %10232 = vmatpush1.bf16.xpose.msra.mxu0 0
      %10233 = vmatprep.subr.bf16.mxu0 0
      %10234 = vmatpush1.bf16.xpose.msra.mxu0 %v10130
      %10235 = vmatprep.subr.bf16.mxu0 0
      %10236 = vmatpush1.bf16.xpose.msra.mxu0 %v10131
      %10237 = vmatprep.subr.bf16.mxu0 0
      %10238 = vmatpush1.bf16.xpose.msra.mxu0 %v10132
      %10239 = vmatprep.subr.bf16.mxu0 0
      %10240 = vmatpush1.bf16.xpose.msra.mxu0 %v10133
      %10241 = vmatprep.subr.bf16.mxu0 0
      %10242 = vmatpush1.bf16.xpose.msra.mxu0 %v10134
      %10243 = vmatprep.subr.bf16.mxu0 0
      %10244 = vmatpush1.bf16.xpose.msra.mxu0 %v10135
      %10245 = vmatprep.subr.bf16.mxu0 0
      %10246 = vmatpush1.bf16.xpose.msra.mxu0 %v10136
      %10247 = vmatprep.subr.bf16.mxu0 0
      %10248 = vmatpush1.bf16.xpose.msra.mxu0 %v10137
      %10249 = vmatprep.subr.bf16.mxu0 0
      %10250 = vmatpush1.bf16.xpose.msra.mxu0 %v10138
      %10251 = vmatprep.subr.bf16.mxu0 0
      %10252 = vmatpush1.bf16.xpose.msra.mxu0 %v10139
      %10253 = vmatprep.subr.bf16.mxu0 0
      %10254 = vmatpush1.bf16.xpose.msra.mxu0 %v10140
      %10255 = vmatprep.subr.bf16.mxu0 0
      %10256 = vmatpush1.bf16.xpose.msra.mxu0 %v10141
      %10257 = vmatprep.subr.bf16.mxu0 0
      %10258 = vmatpush1.bf16.xpose.msra.mxu0 %v10142
      %10259 = vmatprep.subr.bf16.mxu0 0
      %10260 = vmatpush1.bf16.xpose.msra.mxu0 %v10143
      %10261 = vmatprep.subr.bf16.mxu0 0
      %10262 = vmatpush1.bf16.xpose.msra.mxu0 %v10144
      %10263 = vmatprep.mubr.bf16.mxu0 0
      %10264 = vmatmul.mubr.bf16.gmra.mrb[0].mxu0 %v10230
      %v10265 = vpop.f32.mrb[0].mxu0
      %v10266 = vadd.f32 0.0, %v10265
      %v10267 = vpop.f32.mrb[0].mxu0
      %v10268 = vadd.f32 0.0, %v10267
      %v10269 = vpop.f32.mrb[0].mxu0
      %v10270 = vpop.f32.mrb[0].mxu0
      %10271 = vdwg.mxu0
      %v10272 = vadd.f32 %v10224, %v10266
      %v10273 = vadd.f32 %v10226, %v10268
      %v10274 = vld [vmem:[%s61 + $0x6] sm:$0x3]
      %10275 = vmatprep.subr.bf16.mxu0 0
      %10276 = vmatpush1.bf16.xpose.msra.mxu0 %v10098
      %10277 = vmatprep.subr.bf16.mxu0 0
      %10278 = vmatpush1.bf16.xpose.msra.mxu0 %v10099
      %10279 = vmatprep.subr.bf16.mxu0 0
      %10280 = vmatpush1.bf16.xpose.msra.mxu0 %v10100
      %10281 = vmatprep.subr.bf16.mxu0 0
      %10282 = vmatpush1.bf16.xpose.msra.mxu0 %v10101
      %10283 = vmatprep.subr.bf16.mxu0 0
      %10284 = vmatpush1.bf16.xpose.msra.mxu0 %v10102
      %10285 = vmatprep.subr.bf16.mxu0 0
      %10286 = vmatpush1.bf16.xpose.msra.mxu0 %v10103
      %10287 = vmatprep.subr.bf16.mxu0 0
      %10288 = vmatpush1.bf16.xpose.msra.mxu0 %v10104
      %10289 = vmatprep.subr.bf16.mxu0 0
      %10290 = vmatpush1.bf16.xpose.msra.mxu0 %v10105
      %10291 = vmatprep.subr.bf16.mxu0 0
      %10292 = vmatpush1.bf16.xpose.msra.mxu0 %v10106
      %10293 = vmatprep.subr.bf16.mxu0 0
      %10294 = vmatpush1.bf16.xpose.msra.mxu0 %v10107
      %10295 = vmatprep.subr.bf16.mxu0 0
      %10296 = vmatpush1.bf16.xpose.msra.mxu0 %v10108
      %10297 = vmatprep.subr.bf16.mxu0 0
      %10298 = vmatpush1.bf16.xpose.msra.mxu0 %v10109
      %10299 = vmatprep.subr.bf16.mxu0 0
      %10300 = vmatpush1.bf16.xpose.msra.mxu0 %v10110
      %10301 = vmatprep.subr.bf16.mxu0 0
      %10302 = vmatpush1.bf16.xpose.msra.mxu0 %v10111
      %10303 = vmatprep.subr.bf16.mxu0 0
      %10304 = vmatpush1.bf16.xpose.msra.mxu0 %v10112
      %10305 = vmatprep.subr.bf16.mxu0 0
      %10306 = vmatpush1.bf16.xpose.msra.mxu0 %v10113
      %10307 = vmatprep.mubr.bf16.mxu0 0
      %10308 = vmatmul.mubr.bf16.gmra.mrb[0].mxu0 %v10274
      %v10309 = vpop.f32.mrb[0].mxu0
      %v10310 = vadd.f32 0.0, %v10309
      %v10311 = vpop.f32.mrb[0].mxu0
      %v10312 = vadd.f32 0.0, %v10311
      %v10313 = vpop.f32.mrb[0].mxu0
      %v10314 = vpop.f32.mrb[0].mxu0
      %10315 = vdwg.mxu0
      %v10316 = vadd.f32 %v10272, %v10310
      %v10317 = vadd.f32 %v10273, %v10312
      %v10318 = vld [vmem:[%s61 + $0x8] sm:$0x3]
      %10319 = vmatprep.subr.bf16.mxu0 0
      %10320 = vmatpush1.bf16.xpose.msra.mxu0 %v10114
      %10321 = vmatprep.subr.bf16.mxu0 0
      %10322 = vmatpush1.bf16.xpose.msra.mxu0 %v10115
      %10323 = vmatprep.subr.bf16.mxu0 0
      %10324 = vmatpush1.bf16.xpose.msra.mxu0 %v10116
      %10325 = vmatprep.subr.bf16.mxu0 0
      %10326 = vmatpush1.bf16.xpose.msra.mxu0 %v10117
      %10327 = vmatprep.subr.bf16.mxu0 0
      %10328 = vmatpush1.bf16.xpose.msra.mxu0 %v10118
      %10329 = vmatprep.subr.bf16.mxu0 0
      %10330 = vmatpush1.bf16.xpose.msra.mxu0 %v10119
      %10331 = vmatprep.subr.bf16.mxu0 0
      %10332 = vmatpush1.bf16.xpose.msra.mxu0 %v10120
      %10333 = vmatprep.subr.bf16.mxu0 0
      %10334 = vmatpush1.bf16.xpose.msra.mxu0 %v10121
      %10335 = vmatprep.subr.bf16.mxu0 0
      %10336 = vmatpush1.bf16.xpose.msra.mxu0 %v10122
      %10337 = vmatprep.subr.bf16.mxu0 0
      %10338 = vmatpush1.bf16.xpose.msra.mxu0 %v10123
      %10339 = vmatprep.subr.bf16.mxu0 0
      %10340 = vmatpush1.bf16.xpose.msra.mxu0 %v10124
      %10341 = vmatprep.subr.bf16.mxu0 0
      %10342 = vmatpush1.bf16.xpose.msra.mxu0 %v10125
      %10343 = vmatprep.subr.bf16.mxu0 0
      %10344 = vmatpush1.bf16.xpose.msra.mxu0 %v10126
      %10345 = vmatprep.subr.bf16.mxu0 0
      %10346 = vmatpush1.bf16.xpose.msra.mxu0 %v10127
      %10347 = vmatprep.subr.bf16.mxu0 0
      %10348 = vmatpush1.bf16.xpose.msra.mxu0 %v10128
      %10349 = vmatprep.subr.bf16.mxu0 0
      %10350 = vmatpush1.bf16.xpose.msra.mxu0 %v10129
      %10351 = vmatprep.mubr.bf16.mxu0 0
      %10352 = vmatmul.mubr.bf16.gmra.mrb[0].mxu0 %v10318
      %v10353 = vpop.f32.mrb[0].mxu0
      %v10354 = vadd.f32 0.0, %v10353
      %v10355 = vpop.f32.mrb[0].mxu0
      %v10356 = vadd.f32 0.0, %v10355
      %v10357 = vpop.f32.mrb[0].mxu0
      %v10358 = vpop.f32.mrb[0].mxu0
      %10359 = vdwg.mxu0
      %v10360 = vadd.f32 %v10316, %v10354
      %v10361 = vadd.f32 %v10317, %v10356
      %v10362 = vld [vmem:[%s61 + $0xa] sm:$0x3]
      %10363 = vmatprep.subr.bf16.mxu0 0
      %10364 = vmatpush1.bf16.xpose.msra.mxu0 %v10130
      %10365 = vmatprep.subr.bf16.mxu0 0
      %10366 = vmatpush1.bf16.xpose.msra.mxu0 %v10131
      %10367 = vmatprep.subr.bf16.mxu0 0
      %10368 = vmatpush1.bf16.xpose.msra.mxu0 %v10132
      %10369 = vmatprep.subr.bf16.mxu0 0
      %10370 = vmatpush1.bf16.xpose.msra.mxu0 %v10133
      %10371 = vmatprep.subr.bf16.mxu0 0
      %10372 = vmatpush1.bf16.xpose.msra.mxu0 %v10134
      %10373 = vmatprep.subr.bf16.mxu0 0
      %10374 = vmatpush1.bf16.xpose.msra.mxu0 %v10135
      %10375 = vmatprep.subr.bf16.mxu0 0
      %10376 = vmatpush1.bf16.xpose.msra.mxu0 %v10136
      %10377 = vmatprep.subr.bf16.mxu0 0
      %10378 = vmatpush1.bf16.xpose.msra.mxu0 %v10137
      %10379 = vmatprep.subr.bf16.mxu0 0
      %10380 = vmatpush1.bf16.xpose.msra.mxu0 %v10138
      %10381 = vmatprep.subr.bf16.mxu0 0
      %10382 = vmatpush1.bf16.xpose.msra.mxu0 %v10139
      %10383 = vmatprep.subr.bf16.mxu0 0
      %10384 = vmatpush1.bf16.xpose.msra.mxu0 %v10140
      %10385 = vmatprep.subr.bf16.mxu0 0
      %10386 = vmatpush1.bf16.xpose.msra.mxu0 %v10141
      %10387 = vmatprep.subr.bf16.mxu0 0
      %10388 = vmatpush1.bf16.xpose.msra.mxu0 %v10142
      %10389 = vmatprep.subr.bf16.mxu0 0
      %10390 = vmatpush1.bf16.xpose.msra.mxu0 %v10143
      %10391 = vmatprep.subr.bf16.mxu0 0
      %10392 = vmatpush1.bf16.xpose.msra.mxu0 %v10144
      %10393 = vmatprep.subr.bf16.mxu0 0
      %10394 = vmatpush1.bf16.xpose.msra.mxu0 %v10145
      %10395 = vmatprep.mubr.bf16.mxu0 0
      %10396 = vmatmul.mubr.bf16.gmra.mrb[0].mxu0 %v10362
      %v10397 = vpop.f32.mrb[0].mxu0
      %v10398 = vadd.f32 0.0, %v10397
      %v10399 = vpop.f32.mrb[0].mxu0
      %v10400 = vadd.f32 0.0, %v10399
      %v10401 = vpop.f32.mrb[0].mxu0
      %v10402 = vpop.f32.mrb[0].mxu0
      %10403 = vdwg.mxu0
      %v10404 = vadd.f32 %v10360, %v10398
      %v10405 = vadd.f32 %v10361, %v10400
      %v10406 = vld [vmem:[%s61 + $0xc] sm:$0x3]
      %10407 = vmatprep.subr.bf16.mxu0 0
      %10408 = vmatpush1.bf16.xpose.msra.mxu0 %v10099
      %10409 = vmatprep.subr.bf16.mxu0 0
      %10410 = vmatpush1.bf16.xpose.msra.mxu0 %v10100
      %10411 = vmatprep.subr.bf16.mxu0 0
      %10412 = vmatpush1.bf16.xpose.msra.mxu0 %v10101
      %10413 = vmatprep.subr.bf16.mxu0 0
      %10414 = vmatpush1.bf16.xpose.msra.mxu0 %v10102
      %10415 = vmatprep.subr.bf16.mxu0 0
      %10416 = vmatpush1.bf16.xpose.msra.mxu0 %v10103
      %10417 = vmatprep.subr.bf16.mxu0 0
      %10418 = vmatpush1.bf16.xpose.msra.mxu0 %v10104
      %10419 = vmatprep.subr.bf16.mxu0 0
      %10420 = vmatpush1.bf16.xpose.msra.mxu0 %v10105
      %10421 = vmatprep.subr.bf16.mxu0 0
      %10422 = vmatpush1.bf16.xpose.msra.mxu0 %v10106
      %10423 = vmatprep.subr.bf16.mxu0 0
      %10424 = vmatpush1.bf16.xpose.msra.mxu0 %v10107
      %10425 = vmatprep.subr.bf16.mxu0 0
      %10426 = vmatpush1.bf16.xpose.msra.mxu0 %v10108
      %10427 = vmatprep.subr.bf16.mxu0 0
      %10428 = vmatpush1.bf16.xpose.msra.mxu0 %v10109
      %10429 = vmatprep.subr.bf16.mxu0 0
      %10430 = vmatpush1.bf16.xpose.msra.mxu0 %v10110
      %10431 = vmatprep.subr.bf16.mxu0 0
      %10432 = vmatpush1.bf16.xpose.msra.mxu0 %v10111
      %10433 = vmatprep.subr.bf16.mxu0 0
      %10434 = vmatpush1.bf16.xpose.msra.mxu0 %v10112
      %10435 = vmatprep.subr.bf16.mxu0 0
      %10436 = vmatpush1.bf16.xpose.msra.mxu0 %v10113
      %10437 = vmatprep.subr.bf16.mxu0 0
      %10438 = vmatpush1.bf16.xpose.msra.mxu0 0
      %10439 = vmatprep.mubr.bf16.mxu0 0
      %10440 = vmatmul.mubr.bf16.gmra.mrb[0].mxu0 %v10406
      %v10441 = vpop.f32.mrb[0].mxu0
      %v10442 = vadd.f32 0.0, %v10441
      %v10443 = vpop.f32.mrb[0].mxu0
      %v10444 = vadd.f32 0.0, %v10443
      %v10445 = vpop.f32.mrb[0].mxu0
      %v10446 = vpop.f32.mrb[0].mxu0
      %10447 = vdwg.mxu0
      %v10448 = vadd.f32 %v10404, %v10442
      %v10449 = vadd.f32 %v10405, %v10444
      %v10450 = vld [vmem:[%s61 + $0xe] sm:$0x3]
      %10451 = vmatprep.subr.bf16.mxu0 0
      %10452 = vmatpush1.bf16.xpose.msra.mxu0 %v10115
      %10453 = vmatprep.subr.bf16.mxu0 0
      %10454 = vmatpush1.bf16.xpose.msra.mxu0 %v10116
      %10455 = vmatprep.subr.bf16.mxu0 0
      %10456 = vmatpush1.bf16.xpose.msra.mxu0 %v10117
      %10457 = vmatprep.subr.bf16.mxu0 0
      %10458 = vmatpush1.bf16.xpose.msra.mxu0 %v10118
      %10459 = vmatprep.subr.bf16.mxu0 0
      %10460 = vmatpush1.bf16.xpose.msra.mxu0 %v10119
      %10461 = vmatprep.subr.bf16.mxu0 0
      %10462 = vmatpush1.bf16.xpose.msra.mxu0 %v10120
      %10463 = vmatprep.subr.bf16.mxu0 0
      %10464 = vmatpush1.bf16.xpose.msra.mxu0 %v10121
      %10465 = vmatprep.subr.bf16.mxu0 0
      %10466 = vmatpush1.bf16.xpose.msra.mxu0 %v10122
      %10467 = vmatprep.subr.bf16.mxu0 0
      %10468 = vmatpush1.bf16.xpose.msra.mxu0 %v10123
      %10469 = vmatprep.subr.bf16.mxu0 0
      %10470 = vmatpush1.bf16.xpose.msra.mxu0 %v10124
      %10471 = vmatprep.subr.bf16.mxu0 0
      %10472 = vmatpush1.bf16.xpose.msra.mxu0 %v10125
      %10473 = vmatprep.subr.bf16.mxu0 0
      %10474 = vmatpush1.bf16.xpose.msra.mxu0 %v10126
      %10475 = vmatprep.subr.bf16.mxu0 0
      %10476 = vmatpush1.bf16.xpose.msra.mxu0 %v10127
      %10477 = vmatprep.subr.bf16.mxu0 0
      %10478 = vmatpush1.bf16.xpose.msra.mxu0 %v10128
      %10479 = vmatprep.subr.bf16.mxu0 0
      %10480 = vmatpush1.bf16.xpose.msra.mxu0 %v10129
      %10481 = vmatprep.subr.bf16.mxu0 0
      %10482 = vmatpush1.bf16.xpose.msra.mxu0 0
      %10483 = vmatprep.mubr.bf16.mxu0 0
      %10484 = vmatmul.mubr.bf16.gmra.mrb[0].mxu0 %v10450
      %v10485 = vpop.f32.mrb[0].mxu0
      %v10486 = vadd.f32 0.0, %v10485
      %v10487 = vpop.f32.mrb[0].mxu0
      %v10488 = vadd.f32 0.0, %v10487
      %v10489 = vpop.f32.mrb[0].mxu0
      %v10490 = vpop.f32.mrb[0].mxu0
      %10491 = vdwg.mxu0
      %v10492 = vadd.f32 %v10448, %v10486
      %v10493 = vadd.f32 %v10449, %v10488
      %v10494 = vld [vmem:[%s61 + $0x10] sm:$0x3]
      %10495 = vmatprep.subr.bf16.mxu0 0
      %10496 = vmatpush1.bf16.xpose.msra.mxu0 %v10131
      %10497 = vmatprep.subr.bf16.mxu0 0
      %10498 = vmatpush1.bf16.xpose.msra.mxu0 %v10132
      %10499 = vmatprep.subr.bf16.mxu0 0
      %10500 = vmatpush1.bf16.xpose.msra.mxu0 %v10133
      %10501 = vmatprep.subr.bf16.mxu0 0
      %10502 = vmatpush1.bf16.xpose.msra.mxu0 %v10134
      %10503 = vmatprep.subr.bf16.mxu0 0
      %10504 = vmatpush1.bf16.xpose.msra.mxu0 %v10135
      %10505 = vmatprep.subr.bf16.mxu0 0
      %10506 = vmatpush1.bf16.xpose.msra.mxu0 %v10136
      %10507 = vmatprep.subr.bf16.mxu0 0
      %10508 = vmatpush1.bf16.xpose.msra.mxu0 %v10137
      %10509 = vmatprep.subr.bf16.mxu0 0
      %10510 = vmatpush1.bf16.xpose.msra.mxu0 %v10138
      %10511 = vmatprep.subr.bf16.mxu0 0
      %10512 = vmatpush1.bf16.xpose.msra.mxu0 %v10139
      %10513 = vmatprep.subr.bf16.mxu0 0
      %10514 = vmatpush1.bf16.xpose.msra.mxu0 %v10140
      %10515 = vmatprep.subr.bf16.mxu0 0
      %10516 = vmatpush1.bf16.xpose.msra.mxu0 %v10141
      %10517 = vmatprep.subr.bf16.mxu0 0
      %10518 = vmatpush1.bf16.xpose.msra.mxu0 %v10142
      %10519 = vmatprep.subr.bf16.mxu0 0
      %10520 = vmatpush1.bf16.xpose.msra.mxu0 %v10143
      %10521 = vmatprep.subr.bf16.mxu0 0
      %10522 = vmatpush1.bf16.xpose.msra.mxu0 %v10144
      %10523 = vmatprep.subr.bf16.mxu0 0
      %10524 = vmatpush1.bf16.xpose.msra.mxu0 %v10145
      %10525 = vmatprep.subr.bf16.mxu0 0
      %10526 = vmatpush1.bf16.xpose.msra.mxu0 0
      %10527 = vmatprep.mubr.bf16.mxu0 0
      %10528 = vmatmul.mubr.bf16.gmra.mrb[0].mxu0 %v10494
      %v10529 = vpop.f32.mrb[0].mxu0
      %v10530 = vadd.f32 0.0, %v10529
      %v10531 = vpop.f32.mrb[0].mxu0
      %v10532 = vadd.f32 0.0, %v10531
      %v10533 = vpop.f32.mrb[0].mxu0
      %v10534 = vpop.f32.mrb[0].mxu0
      %10535 = vdwg.mxu0
      %v10536 = vadd.f32 %v10492, %v10530
      %v10537 = vadd.f32 %v10493, %v10532
      %v10538 = vld [vmem:[%s63] sm:$0xf]
      %10540 = vset.pattern.permute.xlu0 0
      %10541 = vperm.xlu0 %10540, %v10538
      %v10542 = vpop.permute.xlu0 %10541
      %v10544 = vadd.f32 %v10536, %v10542
      %v10545 = vadd.f32 %v10537, %v10542
      %v10548 = vcombine.low %v10544, %v10545
      %10550 = vst [vmem:[%s1017] sm:$0xff] %v10548
      %p10551 = scmp.lt.s32.totalorder %s76, 1
      %s10552 = scalar_select %p10551, %s76, 1
      %s10553 = smul.addr %s10552, 2
      %s10554 = smul.addr %s10553, 4
      %s10555 = scalar_lea.vmem %s65, %s10554
      // Predicated region
      $region149: #{unet_forward.1} parent=147 // pred_check
        %p10556 = pneg %p781
      $region150: #{unet_forward.1} parent=147 // pred_check_branch
        %10558 = sbr.rel (%p10556) target = $region152
      $region151: #{unet_forward.1} parent=147 // pred_region
        _
      $region152: #{unet_forward.1} parent=147 // pred_fallthru
        _
    $region148: #{unet_forward.1} parent=5 // pred_fallthru
      _
    %p10559 = scmp.le.s32.totalorder 2, %s71
    // Predicated region
    $region153: #{unet_forward.1} parent=5 // pred_check
      %p10560 = pneg %p10559
    $region154: #{unet_forward.1} parent=5 // pred_check_branch
      %10562 = sbr.rel (%p10560) target = $region156
    $region155: #{unet_forward.1} parent=5 // pred_region
      %s10563 = ssub.s32 %s71, 2
      // Predicated region
      $region157: #{unet_forward.1} parent=155 // pred_check
        %p10564 = pneg %p787
      $region158: #{unet_forward.1} parent=155 // pred_check_branch
        %10566 = sbr.rel (%p10564) target = $region160
      $region159: #{unet_forward.1} parent=155 // pred_region
        %p10567 = scmp.lt.s32.totalorder %s77, 1
        %s10568 = scalar_select %p10567, %s77, 1
        %s10569 = smul.addr %s10568, 2
        %s10570 = smul.addr %s10569, 4
        %s10571 = scalar_lea.vmem %s65, %s10570
      $region160: #{unet_forward.1} parent=155 // pred_fallthru
        _
    $region156: #{unet_forward.1} parent=5 // pred_fallthru
      _
  $region6: #{unet_forward.1} parent=0 // loop_footer
    %s75 = sadd.s32 1, %s71
  $region7: #{unet_forward.1} parent=0 // loop_footer_branch
    %70 = sbr.rel target = $region3
  $region8: #{unet_forward.1} parent=0 // loop_exit
    _

</llo_original>
